<compile_context>
chip_gen: v6e
topology: v6e:2x2x1
jax: 0.10.0
libtpu: 0.0.40
codegen_flags: <defaults>
</compile_context>

<pallas_src>
import jax
import jax.numpy as jnp
import numpy as np
from jax.experimental import pallas as pl
from jax.experimental.pallas import tpu as pltpu


def _path_encoder_kernel(idx_ref, sub_emb_ref, w_xg_ref, w_hh_ref, b_ref,
                         w_from_ref, w_h_ref, w_to_ref, out_ref):
    TP, L3 = idx_ref.shape
    L = L3 // 3
    V_sub = sub_emb_ref.shape[0]
    V_type = w_xg_ref.shape[0]
    H = w_hh_ref.shape[0]
    f32 = jnp.float32
    mxu_dt = sub_emb_ref.dtype

    idx = idx_ref[...]                      # single packed index load
    starts = idx[:, 0:L]
    paths = idx[:, L:2 * L]
    ends = idx[:, 2 * L:3 * L]

    # --- subtoken embedding lookup + sum, fused for from/to: one stacked count matmul.
    #     (one-hot counts @ table on the MXU; padding row 0 of the table is zero, so pads
    #     contribute nothing — identical to nn.Embedding(padding_idx=0).sum(0).)
    st = jnp.concatenate([starts, ends], axis=0)                         # (2*TP, L)
    sub_iota = jax.lax.broadcasted_iota(jnp.int32, (2 * TP, V_sub), 1)
    counts = jnp.zeros((2 * TP, V_sub), f32)
    for t in range(L):                                                   # L small & static
        counts = counts + (st[:, t:t + 1] == sub_iota).astype(f32)
    tok = jnp.dot(counts.astype(mxu_dt), sub_emb_ref[...],
                  preferred_element_type=f32)                            # (2*TP, E)
    enc_from = tok[:TP]
    enc_to = tok[TP:]

    # --- path lengths, exactly as `(path_types != pad_id).sum(0)`.
    lengths = (paths != 0).astype(jnp.int32).sum(axis=1)                 # (TP,)

    # --- hoisted LSTM input projection: one big one-hot matmul against the pre-folded
    #     (type_emb @ W_ih) weights; bias added once (not per unrolled step).
    p_cols = jnp.concatenate([paths[:, t:t + 1] for t in range(L)], axis=0)  # (L*TP, 1)
    type_iota = jax.lax.broadcasted_iota(jnp.int32, (L * TP, V_type), 1)
    oh_all = (p_cols == type_iota).astype(mxu_dt)                        # (L*TP, V_type)
    bias = b_ref[...]
    xg_all = jnp.dot(oh_all, w_xg_ref[...], preferred_element_type=f32) + bias  # (L*TP, 4H)

    # --- LSTM recurrence: only h @ W_hh + activations on the serial path.
    w_hh = w_hh_ref[...]
    h = jnp.zeros((TP, H), f32)
    c = jnp.zeros((TP, H), f32)
    for t in range(L):
        gates = xg_all[t * TP:(t + 1) * TP, :] + jnp.dot(
            h.astype(mxu_dt), w_hh, preferred_element_type=f32)          # (TP, 4H)
        i_g = jax.nn.sigmoid(gates[:, 0:H])
        f_g = jax.nn.sigmoid(gates[:, H:2 * H])
        g_g = jnp.tanh(gates[:, 2 * H:3 * H])
        o_g = jax.nn.sigmoid(gates[:, 3 * H:4 * H])
        c_new = f_g * c + i_g * g_g
        h_new = o_g * jnp.tanh(c_new)
        valid = (lengths > t)[:, None]
        h = jnp.where(valid, h_new, h)
        c = jnp.where(valid, c_new, c)

    # dropout_rnn / output_concat: eval-mode identity.
    # --- split-w_lin output: three partial matmuls summed (no lane-axis concat),
    #     output column dim padded to 128 lanes by the wrapper (unmasked stores).
    out = (jnp.dot(enc_from.astype(mxu_dt), w_from_ref[...], preferred_element_type=f32)
           + jnp.dot(h.astype(mxu_dt), w_h_ref[...], preferred_element_type=f32)
           + jnp.dot(enc_to.astype(mxu_dt), w_to_ref[...], preferred_element_type=f32))
    out_ref[...] = out.astype(out_ref.dtype)


def path_encoder_forward(starts, paths, ends, params, *, tile_p=128,
                         mxu_dtype=jnp.float32):
    B, N, L = starts.shape
    P = B * N
    f32 = jnp.float32

    # Pack the three index tensors into one [P, 3*L] array: one index DMA per grid step.
    idx = jnp.concatenate([starts.reshape(P, L), paths.reshape(P, L),
                           ends.reshape(P, L)], axis=1).astype(jnp.int32)

    # Pad P to a multiple of tile_p (padded rows: all-zero ids -> zero output, sliced off).
    P_pad = ((P + tile_p - 1) // tile_p) * tile_p
    if P_pad != P:
        idx = jnp.pad(idx, ((0, P_pad - P), (0, 0)))

    sub_emb = params["sub_emb"].astype(f32)      # [V_sub, E]
    type_emb = params["type_emb"].astype(f32)    # [V_type, E]
    w_ih = params["w_ih"].astype(f32)            # [E, 4H]
    w_hh = params["w_hh"].astype(f32)            # [H, 4H]
    b = params["b"].astype(f32).reshape(1, -1)   # [1, 4H]
    w_lin = params["w_lin"].astype(f32)          # [2E + H, ENC]

    E = sub_emb.shape[1]
    H = w_hh.shape[0]
    ENC = w_lin.shape[1]

    # Fold type embedding into the LSTM input projection: x@W_ih == onehot @ (type_emb@W_ih).
    w_xg = type_emb @ w_ih                       # [V_type, 4H]

    # Split w_lin rows (from / h / to) and zero-pad output columns to a multiple of 128.
    ENC_pad = ((ENC + 127) // 128) * 128
    w_lin_p = jnp.pad(w_lin, ((0, 0), (0, ENC_pad - ENC))) if ENC_pad != ENC else w_lin
    w_from = w_lin_p[:E]
    w_h = w_lin_p[E:E + H]
    w_to = w_lin_p[E + H:]

    # MXU operands in mxu_dtype (bf16 on v6e/v7x); accumulation stays f32.
    mx = mxu_dtype
    sub_emb_c = sub_emb.astype(mx)
    w_xg_c = w_xg.astype(mx)
    w_hh_c = w_hh.astype(mx)
    w_from_c, w_h_c, w_to_c = w_from.astype(mx), w_h.astype(mx), w_to.astype(mx)

    def full_spec(arr):  # whole array broadcast to every grid step (constant block index)
        nd = arr.ndim
        return pl.BlockSpec(arr.shape, lambda i, _nd=nd: (0,) * _nd)

    # VMEM footprint is tiny here (<2 MiB per step); when scaling tile_p / vocabs on v7x
    # (64 MiB VMEM) set vmem_limit_bytes accordingly.
    out = pl.pallas_call(
        _path_encoder_kernel,
        out_shape=jax.ShapeDtypeStruct((P_pad, ENC_pad), f32),
        grid_spec=pltpu.PrefetchScalarGridSpec(
            num_scalar_prefetch=0,
            grid=(P_pad // tile_p,),
            in_specs=[
                pl.BlockSpec((tile_p, 3 * L), lambda i: (i, 0)),
                full_spec(sub_emb_c), full_spec(w_xg_c), full_spec(w_hh_c),
                full_spec(b), full_spec(w_from_c), full_spec(w_h_c), full_spec(w_to_c),
            ],
            out_specs=pl.BlockSpec((tile_p, ENC_pad), lambda i: (i, 0)),
        ),
        compiler_params=pltpu.CompilerParams(dimension_semantics=("parallel",)),
    )(idx, sub_emb_c, w_xg_c, w_hh_c, b, w_from_c, w_h_c, w_to_c)

    return out[:P, :ENC]


def reference_forward(starts, paths, ends, params):
    """Pure-JAX f32 reference mirroring the PyTorch forward (eval mode)."""
    B, N, L = starts.shape
    P = B * N
    s = starts.reshape(P, L)
    p = paths.reshape(P, L)
    e = ends.reshape(P, L)
    enc_from = jnp.take(params["sub_emb"], s, axis=0).sum(axis=1)
    enc_to = jnp.take(params["sub_emb"], e, axis=0).sum(axis=1)
    x = jnp.take(params["type_emb"], p, axis=0)        # [P, L, E]
    lengths = (p != 0).sum(axis=1)
    H = params["w_hh"].shape[0]
    h = jnp.zeros((P, H), jnp.float32)
    c = jnp.zeros((P, H), jnp.float32)
    for t in range(L):
        gates = x[:, t] @ params["w_ih"] + h @ params["w_hh"] + params["b"]
        i_g = jax.nn.sigmoid(gates[:, :H])
        f_g = jax.nn.sigmoid(gates[:, H:2 * H])
        g_g = jnp.tanh(gates[:, 2 * H:3 * H])
        o_g = jax.nn.sigmoid(gates[:, 3 * H:])
        c_new = f_g * c + i_g * g_g
        h_new = o_g * jnp.tanh(c_new)
        valid = (lengths > t)[:, None]
        h = jnp.where(valid, h_new, h)
        c = jnp.where(valid, c_new, c)
    concat = jnp.concatenate([enc_from, h, enc_to], axis=-1)
    return concat @ params["w_lin"]


if __name__ == "__main__":
    # option: terminal_count=32, terminal_embed_size=16, node_count=24,
    #         path_embed_size=16, path_rnn_size=32, encode_size=64,
    #         use_bi_rnn=False, rnn_num_layers=1, dropouts -> eval identity.
    # N=128 paths/example so P=256 -> tile_p=128 gives grid=2 (keeps both v7x TCs busy).
    B, N, L = 2, 128, 8
    V_SUB, V_TYPE = 32, 24
    E, H, ENC = 16, 32, 64
    CONCAT = E * 2 + H

    key = jax.random.PRNGKey(0)
    ks = jax.random.split(key, 9)

    def make_ids(k, vocab):
        kid, klen = jax.random.split(k)
        ids = jax.random.randint(kid, (B, N, L), 1, vocab)
        lens = jax.random.randint(klen, (B, N, 1), 1, L + 1)   # lengths >= 1
        pos = jnp.arange(L)[None, None, :]
        return jnp.where(pos < lens, ids, 0).astype(jnp.int32)  # trailing padding, pad id 0

    starts = make_ids(ks[0], V_SUB)
    ends = make_ids(ks[1], V_SUB)
    paths = make_ids(ks[2], V_TYPE)

    sub_emb = (0.1 * jax.random.normal(ks[3], (V_SUB, E), jnp.float32)).at[0].set(0.0)
    type_emb = (0.1 * jax.random.normal(ks[4], (V_TYPE, E), jnp.float32)).at[0].set(0.0)
    w_ih = 0.1 * jax.random.normal(ks[5], (E, 4 * H), jnp.float32)
    w_hh = 0.1 * jax.random.normal(ks[6], (H, 4 * H), jnp.float32)
    b = 0.1 * jax.random.normal(ks[7], (1, 4 * H), jnp.float32)
    w_lin = 0.1 * jax.random.normal(ks[8], (CONCAT, ENC), jnp.float32)

    params = dict(sub_emb=sub_emb, type_emb=type_emb,
                  w_ih=w_ih, w_hh=w_hh, b=b, w_lin=w_lin)

    # bf16 MXU operands on v6e/v7x; f32 everywhere on v5e / unknown (no bf16 VPU/EUP there).
    try:
        kind = jax.devices()[0].device_kind.lower()
    except Exception:
        kind = ""
    use_bf16 = any(tag in kind for tag in ("v6", "v7", "tpu6", "tpu7"))
    mxu_dtype = jnp.bfloat16 if use_bf16 else jnp.float32

    out = path_encoder_forward(starts, paths, ends, params, tile_p=128,
                               mxu_dtype=mxu_dtype)
    out = jax.block_until_ready(out)

    ref = jax.block_until_ready(reference_forward(starts, paths, ends, params))
    tol = 2e-2 if use_bf16 else 5e-3
    np.testing.assert_allclose(np.asarray(out), np.asarray(ref), rtol=tol, atol=tol)

    print("KERNEL_OK")
</pallas_src>

<mosaic_0001>
module attributes {stable_mosaic.version = 11 : i64} {
  func.func @_path_encoder_kernel(%arg0: i32, %arg1: memref<128x24xi32, #tpu.memory_space<vmem>>, %arg2: memref<32x16xf32, #tpu.memory_space<vmem>>, %arg3: memref<24x128xf32, #tpu.memory_space<vmem>>, %arg4: memref<32x128xf32, #tpu.memory_space<vmem>>, %arg5: memref<1x128xf32, #tpu.memory_space<vmem>>, %arg6: memref<16x128xf32, #tpu.memory_space<vmem>>, %arg7: memref<32x128xf32, #tpu.memory_space<vmem>>, %arg8: memref<16x128xf32, #tpu.memory_space<vmem>>, %arg9: memref<128x128xf32, #tpu.memory_space<vmem>>) attributes {dimension_semantics = [#tpu.dimension_semantics<parallel>], iteration_bounds = array<i64: 2>, scalar_prefetch = 0 : i64, scratch_operands = 0 : i64, tpu.core_type = #tpu.core_type<tc>, window_params = [{transform_indices = @transform_0, window_bounds = array<i64: 128, 24>}, {pipeline_mode = #tpu.pipeline_mode<synchronous>, transform_indices = @transform_1, window_bounds = array<i64: 32, 16>}, {pipeline_mode = #tpu.pipeline_mode<synchronous>, transform_indices = @transform_2, window_bounds = array<i64: 24, 128>}, {pipeline_mode = #tpu.pipeline_mode<synchronous>, transform_indices = @transform_3, window_bounds = array<i64: 32, 128>}, {pipeline_mode = #tpu.pipeline_mode<synchronous>, transform_indices = @transform_4, window_bounds = array<i64: 1, 128>}, {pipeline_mode = #tpu.pipeline_mode<synchronous>, transform_indices = @transform_5, window_bounds = array<i64: 16, 128>}, {pipeline_mode = #tpu.pipeline_mode<synchronous>, transform_indices = @transform_6, window_bounds = array<i64: 32, 128>}, {pipeline_mode = #tpu.pipeline_mode<synchronous>, transform_indices = @transform_7, window_bounds = array<i64: 16, 128>}, {transform_indices = @transform_8, window_bounds = array<i64: 128, 128>}]} {
    %c0 = arith.constant 0 : index
    %c0_0 = arith.constant 0 : index
    %0 = vector.load %arg1[%c0, %c0_0] : memref<128x24xi32, #tpu.memory_space<vmem>>, vector<128x24xi32>
    %1 = vector.extract_strided_slice %0 {offsets = [0, 0], sizes = [128, 8], strides = [1, 1]} : vector<128x24xi32> to vector<128x8xi32>
    %2 = vector.extract_strided_slice %0 {offsets = [0, 8], sizes = [128, 8], strides = [1, 1]} : vector<128x24xi32> to vector<128x8xi32>
    %3 = vector.extract_strided_slice %0 {offsets = [0, 16], sizes = [128, 8], strides = [1, 1]} : vector<128x24xi32> to vector<128x8xi32>
    %4 = tpu.concatenate %1, %3 in 0 : vector<128x8xi32>, vector<128x8xi32> -> vector<256x8xi32>
    %5 = tpu.iota {dimensions = array<i32: 1>} : vector<256x32xi32>
    %cst = arith.constant 0.000000e+00 : f32
    %6 = vector.broadcast %cst : f32 to vector<256x32xf32>
    %7 = vector.extract_strided_slice %4 {offsets = [0, 0], sizes = [256, 1], strides = [1, 1]} : vector<256x8xi32> to vector<256x1xi32>
    %8 = vector.broadcast %7 : vector<256x1xi32> to vector<256x32xi32>
    %9 = arith.cmpi eq, %8, %5 : vector<256x32xi32>
    %10 = arith.extui %9 : vector<256x32xi1> to vector<256x32xi32>
    %11 = arith.sitofp %10 : vector<256x32xi32> to vector<256x32xf32>
    %12 = arith.addf %6, %11 : vector<256x32xf32>
    %13 = vector.extract_strided_slice %4 {offsets = [0, 1], sizes = [256, 1], strides = [1, 1]} : vector<256x8xi32> to vector<256x1xi32>
    %14 = vector.broadcast %13 : vector<256x1xi32> to vector<256x32xi32>
    %15 = arith.cmpi eq, %14, %5 : vector<256x32xi32>
    %16 = arith.extui %15 : vector<256x32xi1> to vector<256x32xi32>
    %17 = arith.sitofp %16 : vector<256x32xi32> to vector<256x32xf32>
    %18 = arith.addf %12, %17 : vector<256x32xf32>
    %19 = vector.extract_strided_slice %4 {offsets = [0, 2], sizes = [256, 1], strides = [1, 1]} : vector<256x8xi32> to vector<256x1xi32>
    %20 = vector.broadcast %19 : vector<256x1xi32> to vector<256x32xi32>
    %21 = arith.cmpi eq, %20, %5 : vector<256x32xi32>
    %22 = arith.extui %21 : vector<256x32xi1> to vector<256x32xi32>
    %23 = arith.sitofp %22 : vector<256x32xi32> to vector<256x32xf32>
    %24 = arith.addf %18, %23 : vector<256x32xf32>
    %25 = vector.extract_strided_slice %4 {offsets = [0, 3], sizes = [256, 1], strides = [1, 1]} : vector<256x8xi32> to vector<256x1xi32>
    %26 = vector.broadcast %25 : vector<256x1xi32> to vector<256x32xi32>
    %27 = arith.cmpi eq, %26, %5 : vector<256x32xi32>
    %28 = arith.extui %27 : vector<256x32xi1> to vector<256x32xi32>
    %29 = arith.sitofp %28 : vector<256x32xi32> to vector<256x32xf32>
    %30 = arith.addf %24, %29 : vector<256x32xf32>
    %31 = vector.extract_strided_slice %4 {offsets = [0, 4], sizes = [256, 1], strides = [1, 1]} : vector<256x8xi32> to vector<256x1xi32>
    %32 = vector.broadcast %31 : vector<256x1xi32> to vector<256x32xi32>
    %33 = arith.cmpi eq, %32, %5 : vector<256x32xi32>
    %34 = arith.extui %33 : vector<256x32xi1> to vector<256x32xi32>
    %35 = arith.sitofp %34 : vector<256x32xi32> to vector<256x32xf32>
    %36 = arith.addf %30, %35 : vector<256x32xf32>
    %37 = vector.extract_strided_slice %4 {offsets = [0, 5], sizes = [256, 1], strides = [1, 1]} : vector<256x8xi32> to vector<256x1xi32>
    %38 = vector.broadcast %37 : vector<256x1xi32> to vector<256x32xi32>
    %39 = arith.cmpi eq, %38, %5 : vector<256x32xi32>
    %40 = arith.extui %39 : vector<256x32xi1> to vector<256x32xi32>
    %41 = arith.sitofp %40 : vector<256x32xi32> to vector<256x32xf32>
    %42 = arith.addf %36, %41 : vector<256x32xf32>
    %43 = vector.extract_strided_slice %4 {offsets = [0, 6], sizes = [256, 1], strides = [1, 1]} : vector<256x8xi32> to vector<256x1xi32>
    %44 = vector.broadcast %43 : vector<256x1xi32> to vector<256x32xi32>
    %45 = arith.cmpi eq, %44, %5 : vector<256x32xi32>
    %46 = arith.extui %45 : vector<256x32xi1> to vector<256x32xi32>
    %47 = arith.sitofp %46 : vector<256x32xi32> to vector<256x32xf32>
    %48 = arith.addf %42, %47 : vector<256x32xf32>
    %49 = vector.extract_strided_slice %4 {offsets = [0, 7], sizes = [256, 1], strides = [1, 1]} : vector<256x8xi32> to vector<256x1xi32>
    %50 = vector.broadcast %49 : vector<256x1xi32> to vector<256x32xi32>
    %51 = arith.cmpi eq, %50, %5 : vector<256x32xi32>
    %52 = arith.extui %51 : vector<256x32xi1> to vector<256x32xi32>
    %53 = arith.sitofp %52 : vector<256x32xi32> to vector<256x32xf32>
    %54 = arith.addf %48, %53 : vector<256x32xf32>
    %c0_1 = arith.constant 0 : index
    %c0_2 = arith.constant 0 : index
    %55 = vector.load %arg2[%c0_1, %c0_2] : memref<32x16xf32, #tpu.memory_space<vmem>>, vector<32x16xf32>
    %cst_3 = arith.constant dense<0.000000e+00> : vector<256x16xf32>
    %56 = tpu.matmul %54, %55, %cst_3 {dimension_numbers = #tpu.dot_dimension_numbers<[1], [0], [0], [1], [0, 0, 1, 1], [], []>} : vector<256x32xf32>, vector<32x16xf32>, vector<256x16xf32> -> vector<256x16xf32>
    %57 = vector.extract_strided_slice %56 {offsets = [0, 0], sizes = [128, 16], strides = [1, 1]} : vector<256x16xf32> to vector<128x16xf32>
    %58 = vector.extract_strided_slice %56 {offsets = [128, 0], sizes = [128, 16], strides = [1, 1]} : vector<256x16xf32> to vector<128x16xf32>
    %c0_i32 = arith.constant 0 : i32
    %59 = vector.broadcast %c0_i32 : i32 to vector<128x8xi32>
    %60 = arith.cmpi ne, %2, %59 : vector<128x8xi32>
    %61 = arith.extui %60 : vector<128x8xi1> to vector<128x8xi32>
    %cst_4 = arith.constant dense<0> : vector<128xi32>
    %62 = vector.multi_reduction <add>, %61, %cst_4 [1] : vector<128x8xi32> to vector<128xi32>
    %63 = vector.extract_strided_slice %2 {offsets = [0, 0], sizes = [128, 1], strides = [1, 1]} : vector<128x8xi32> to vector<128x1xi32>
    %64 = vector.extract_strided_slice %2 {offsets = [0, 1], sizes = [128, 1], strides = [1, 1]} : vector<128x8xi32> to vector<128x1xi32>
    %65 = vector.extract_strided_slice %2 {offsets = [0, 2], sizes = [128, 1], strides = [1, 1]} : vector<128x8xi32> to vector<128x1xi32>
    %66 = vector.extract_strided_slice %2 {offsets = [0, 3], sizes = [128, 1], strides = [1, 1]} : vector<128x8xi32> to vector<128x1xi32>
    %67 = vector.extract_strided_slice %2 {offsets = [0, 4], sizes = [128, 1], strides = [1, 1]} : vector<128x8xi32> to vector<128x1xi32>
    %68 = vector.extract_strided_slice %2 {offsets = [0, 5], sizes = [128, 1], strides = [1, 1]} : vector<128x8xi32> to vector<128x1xi32>
    %69 = vector.extract_strided_slice %2 {offsets = [0, 6], sizes = [128, 1], strides = [1, 1]} : vector<128x8xi32> to vector<128x1xi32>
    %70 = vector.extract_strided_slice %2 {offsets = [0, 7], sizes = [128, 1], strides = [1, 1]} : vector<128x8xi32> to vector<128x1xi32>
    %71 = tpu.concatenate %63, %64, %65, %66, %67, %68, %69, %70 in 0 : vector<128x1xi32>, vector<128x1xi32>, vector<128x1xi32>, vector<128x1xi32>, vector<128x1xi32>, vector<128x1xi32>, vector<128x1xi32>, vector<128x1xi32> -> vector<1024x1xi32>
    %72 = tpu.iota {dimensions = array<i32: 1>} : vector<1024x24xi32>
    %73 = vector.broadcast %71 : vector<1024x1xi32> to vector<1024x24xi32>
    %74 = arith.cmpi eq, %73, %72 : vector<1024x24xi32>
    %75 = arith.extui %74 : vector<1024x24xi1> to vector<1024x24xi32>
    %76 = arith.sitofp %75 : vector<1024x24xi32> to vector<1024x24xf32>
    %c0_5 = arith.constant 0 : index
    %c0_6 = arith.constant 0 : index
    %77 = vector.load %arg5[%c0_5, %c0_6] : memref<1x128xf32, #tpu.memory_space<vmem>>, vector<1x128xf32>
    %c0_7 = arith.constant 0 : index
    %c0_8 = arith.constant 0 : index
    %78 = vector.load %arg3[%c0_7, %c0_8] : memref<24x128xf32, #tpu.memory_space<vmem>>, vector<24x128xf32>
    %cst_9 = arith.constant dense<0.000000e+00> : vector<1024x128xf32>
    %79 = tpu.matmul %76, %78, %cst_9 {dimension_numbers = #tpu.dot_dimension_numbers<[1], [0], [0], [1], [0, 0, 1, 1], [], []>} : vector<1024x24xf32>, vector<24x128xf32>, vector<1024x128xf32> -> vector<1024x128xf32>
    %80 = vector.broadcast %77 : vector<1x128xf32> to vector<1024x128xf32>
    %81 = arith.addf %79, %80 : vector<1024x128xf32>
    %c0_10 = arith.constant 0 : index
    %c0_11 = arith.constant 0 : index
    %82 = vector.load %arg4[%c0_10, %c0_11] : memref<32x128xf32, #tpu.memory_space<vmem>>, vector<32x128xf32>
    %cst_12 = arith.constant 0.000000e+00 : f32
    %83 = vector.broadcast %cst_12 : f32 to vector<128x32xf32>
    %cst_13 = arith.constant 0.000000e+00 : f32
    %84 = vector.broadcast %cst_13 : f32 to vector<128x32xf32>
    %85 = vector.extract_strided_slice %81 {offsets = [0, 0], sizes = [128, 128], strides = [1, 1]} : vector<1024x128xf32> to vector<128x128xf32>
    %cst_14 = arith.constant dense<0.000000e+00> : vector<128x128xf32>
    %86 = tpu.matmul %83, %82, %cst_14 {dimension_numbers = #tpu.dot_dimension_numbers<[1], [0], [0], [1], [0, 0, 1, 1], [], []>} : vector<128x32xf32>, vector<32x128xf32>, vector<128x128xf32> -> vector<128x128xf32>
    %87 = arith.addf %85, %86 : vector<128x128xf32>
    %88 = vector.extract_strided_slice %87 {offsets = [0, 0], sizes = [128, 32], strides = [1, 1]} : vector<128x128xf32> to vector<128x32xf32>
    %89 = arith.negf %88 : vector<128x32xf32>
    %90 = math.exp %89 : vector<128x32xf32>
    %cst_15 = arith.constant 1.000000e+00 : f32
    %91 = vector.broadcast %cst_15 : f32 to vector<128x32xf32>
    %92 = arith.addf %91, %90 : vector<128x32xf32>
    %93 = arith.divf %91, %92 : vector<128x32xf32>
    %94 = vector.extract_strided_slice %87 {offsets = [0, 32], sizes = [128, 32], strides = [1, 1]} : vector<128x128xf32> to vector<128x32xf32>
    %95 = arith.negf %94 : vector<128x32xf32>
    %96 = math.exp %95 : vector<128x32xf32>
    %cst_16 = arith.constant 1.000000e+00 : f32
    %97 = vector.broadcast %cst_16 : f32 to vector<128x32xf32>
    %98 = arith.addf %97, %96 : vector<128x32xf32>
    %99 = arith.divf %97, %98 : vector<128x32xf32>
    %100 = vector.extract_strided_slice %87 {offsets = [0, 64], sizes = [128, 32], strides = [1, 1]} : vector<128x128xf32> to vector<128x32xf32>
    %101 = math.tanh %100 : vector<128x32xf32>
    %102 = vector.extract_strided_slice %87 {offsets = [0, 96], sizes = [128, 32], strides = [1, 1]} : vector<128x128xf32> to vector<128x32xf32>
    %103 = arith.negf %102 : vector<128x32xf32>
    %104 = math.exp %103 : vector<128x32xf32>
    %cst_17 = arith.constant 1.000000e+00 : f32
    %105 = vector.broadcast %cst_17 : f32 to vector<128x32xf32>
    %106 = arith.addf %105, %104 : vector<128x32xf32>
    %107 = arith.divf %105, %106 : vector<128x32xf32>
    %108 = arith.mulf %99, %84 : vector<128x32xf32>
    %109 = arith.mulf %93, %101 : vector<128x32xf32>
    %110 = arith.addf %108, %109 : vector<128x32xf32>
    %111 = math.tanh %110 : vector<128x32xf32>
    %112 = arith.mulf %107, %111 : vector<128x32xf32>
    %c0_i32_18 = arith.constant 0 : i32
    %113 = vector.broadcast %c0_i32_18 : i32 to vector<128xi32>
    %114 = arith.cmpi sgt, %62, %113 : vector<128xi32>
    %115 = vector.shape_cast %114 : vector<128xi1> to vector<128x1xi1>
    %116 = vector.shape_cast %115 : vector<128x1xi1> to vector<128x1xi1>
    %117 = vector.broadcast %116 : vector<128x1xi1> to vector<128x32xi1>
    %118 = arith.select %117, %112, %83 : vector<128x32xi1>, vector<128x32xf32>
    %119 = vector.shape_cast %115 : vector<128x1xi1> to vector<128x1xi1>
    %120 = vector.broadcast %119 : vector<128x1xi1> to vector<128x32xi1>
    %121 = arith.select %120, %110, %84 : vector<128x32xi1>, vector<128x32xf32>
    %122 = vector.extract_strided_slice %81 {offsets = [128, 0], sizes = [128, 128], strides = [1, 1]} : vector<1024x128xf32> to vector<128x128xf32>
    %cst_19 = arith.constant dense<0.000000e+00> : vector<128x128xf32>
    %123 = tpu.matmul %118, %82, %cst_19 {dimension_numbers = #tpu.dot_dimension_numbers<[1], [0], [0], [1], [0, 0, 1, 1], [], []>} : vector<128x32xf32>, vector<32x128xf32>, vector<128x128xf32> -> vector<128x128xf32>
    %124 = arith.addf %122, %123 : vector<128x128xf32>
    %125 = vector.extract_strided_slice %124 {offsets = [0, 0], sizes = [128, 32], strides = [1, 1]} : vector<128x128xf32> to vector<128x32xf32>
    %126 = arith.negf %125 : vector<128x32xf32>
    %127 = math.exp %126 : vector<128x32xf32>
    %cst_20 = arith.constant 1.000000e+00 : f32
    %128 = vector.broadcast %cst_20 : f32 to vector<128x32xf32>
    %129 = arith.addf %128, %127 : vector<128x32xf32>
    %130 = arith.divf %128, %129 : vector<128x32xf32>
    %131 = vector.extract_strided_slice %124 {offsets = [0, 32], sizes = [128, 32], strides = [1, 1]} : vector<128x128xf32> to vector<128x32xf32>
    %132 = arith.negf %131 : vector<128x32xf32>
    %133 = math.exp %132 : vector<128x32xf32>
    %cst_21 = arith.constant 1.000000e+00 : f32
    %134 = vector.broadcast %cst_21 : f32 to vector<128x32xf32>
    %135 = arith.addf %134, %133 : vector<128x32xf32>
    %136 = arith.divf %134, %135 : vector<128x32xf32>
    %137 = vector.extract_strided_slice %124 {offsets = [0, 64], sizes = [128, 32], strides = [1, 1]} : vector<128x128xf32> to vector<128x32xf32>
    %138 = math.tanh %137 : vector<128x32xf32>
    %139 = vector.extract_strided_slice %124 {offsets = [0, 96], sizes = [128, 32], strides = [1, 1]} : vector<128x128xf32> to vector<128x32xf32>
    %140 = arith.negf %139 : vector<128x32xf32>
    %141 = math.exp %140 : vector<128x32xf32>
    %cst_22 = arith.constant 1.000000e+00 : f32
    %142 = vector.broadcast %cst_22 : f32 to vector<128x32xf32>
    %143 = arith.addf %142, %141 : vector<128x32xf32>
    %144 = arith.divf %142, %143 : vector<128x32xf32>
    %145 = arith.mulf %136, %121 : vector<128x32xf32>
    %146 = arith.mulf %130, %138 : vector<128x32xf32>
    %147 = arith.addf %145, %146 : vector<128x32xf32>
    %148 = math.tanh %147 : vector<128x32xf32>
    %149 = arith.mulf %144, %148 : vector<128x32xf32>
    %c1_i32 = arith.constant 1 : i32
    %150 = vector.broadcast %c1_i32 : i32 to vector<128xi32>
    %151 = arith.cmpi sgt, %62, %150 : vector<128xi32>
    %152 = vector.shape_cast %151 : vector<128xi1> to vector<128x1xi1>
    %153 = vector.shape_cast %152 : vector<128x1xi1> to vector<128x1xi1>
    %154 = vector.broadcast %153 : vector<128x1xi1> to vector<128x32xi1>
    %155 = arith.select %154, %149, %118 : vector<128x32xi1>, vector<128x32xf32>
    %156 = vector.shape_cast %152 : vector<128x1xi1> to vector<128x1xi1>
    %157 = vector.broadcast %156 : vector<128x1xi1> to vector<128x32xi1>
    %158 = arith.select %157, %147, %121 : vector<128x32xi1>, vector<128x32xf32>
    %159 = vector.extract_strided_slice %81 {offsets = [256, 0], sizes = [128, 128], strides = [1, 1]} : vector<1024x128xf32> to vector<128x128xf32>
    %cst_23 = arith.constant dense<0.000000e+00> : vector<128x128xf32>
    %160 = tpu.matmul %155, %82, %cst_23 {dimension_numbers = #tpu.dot_dimension_numbers<[1], [0], [0], [1], [0, 0, 1, 1], [], []>} : vector<128x32xf32>, vector<32x128xf32>, vector<128x128xf32> -> vector<128x128xf32>
    %161 = arith.addf %159, %160 : vector<128x128xf32>
    %162 = vector.extract_strided_slice %161 {offsets = [0, 0], sizes = [128, 32], strides = [1, 1]} : vector<128x128xf32> to vector<128x32xf32>
    %163 = arith.negf %162 : vector<128x32xf32>
    %164 = math.exp %163 : vector<128x32xf32>
    %cst_24 = arith.constant 1.000000e+00 : f32
    %165 = vector.broadcast %cst_24 : f32 to vector<128x32xf32>
    %166 = arith.addf %165, %164 : vector<128x32xf32>
    %167 = arith.divf %165, %166 : vector<128x32xf32>
    %168 = vector.extract_strided_slice %161 {offsets = [0, 32], sizes = [128, 32], strides = [1, 1]} : vector<128x128xf32> to vector<128x32xf32>
    %169 = arith.negf %168 : vector<128x32xf32>
    %170 = math.exp %169 : vector<128x32xf32>
    %cst_25 = arith.constant 1.000000e+00 : f32
    %171 = vector.broadcast %cst_25 : f32 to vector<128x32xf32>
    %172 = arith.addf %171, %170 : vector<128x32xf32>
    %173 = arith.divf %171, %172 : vector<128x32xf32>
    %174 = vector.extract_strided_slice %161 {offsets = [0, 64], sizes = [128, 32], strides = [1, 1]} : vector<128x128xf32> to vector<128x32xf32>
    %175 = math.tanh %174 : vector<128x32xf32>
    %176 = vector.extract_strided_slice %161 {offsets = [0, 96], sizes = [128, 32], strides = [1, 1]} : vector<128x128xf32> to vector<128x32xf32>
    %177 = arith.negf %176 : vector<128x32xf32>
    %178 = math.exp %177 : vector<128x32xf32>
    %cst_26 = arith.constant 1.000000e+00 : f32
    %179 = vector.broadcast %cst_26 : f32 to vector<128x32xf32>
    %180 = arith.addf %179, %178 : vector<128x32xf32>
    %181 = arith.divf %179, %180 : vector<128x32xf32>
    %182 = arith.mulf %173, %158 : vector<128x32xf32>
    %183 = arith.mulf %167, %175 : vector<128x32xf32>
    %184 = arith.addf %182, %183 : vector<128x32xf32>
    %185 = math.tanh %184 : vector<128x32xf32>
    %186 = arith.mulf %181, %185 : vector<128x32xf32>
    %c2_i32 = arith.constant 2 : i32
    %187 = vector.broadcast %c2_i32 : i32 to vector<128xi32>
    %188 = arith.cmpi sgt, %62, %187 : vector<128xi32>
    %189 = vector.shape_cast %188 : vector<128xi1> to vector<128x1xi1>
    %190 = vector.shape_cast %189 : vector<128x1xi1> to vector<128x1xi1>
    %191 = vector.broadcast %190 : vector<128x1xi1> to vector<128x32xi1>
    %192 = arith.select %191, %186, %155 : vector<128x32xi1>, vector<128x32xf32>
    %193 = vector.shape_cast %189 : vector<128x1xi1> to vector<128x1xi1>
    %194 = vector.broadcast %193 : vector<128x1xi1> to vector<128x32xi1>
    %195 = arith.select %194, %184, %158 : vector<128x32xi1>, vector<128x32xf32>
    %196 = vector.extract_strided_slice %81 {offsets = [384, 0], sizes = [128, 128], strides = [1, 1]} : vector<1024x128xf32> to vector<128x128xf32>
    %cst_27 = arith.constant dense<0.000000e+00> : vector<128x128xf32>
    %197 = tpu.matmul %192, %82, %cst_27 {dimension_numbers = #tpu.dot_dimension_numbers<[1], [0], [0], [1], [0, 0, 1, 1], [], []>} : vector<128x32xf32>, vector<32x128xf32>, vector<128x128xf32> -> vector<128x128xf32>
    %198 = arith.addf %196, %197 : vector<128x128xf32>
    %199 = vector.extract_strided_slice %198 {offsets = [0, 0], sizes = [128, 32], strides = [1, 1]} : vector<128x128xf32> to vector<128x32xf32>
    %200 = arith.negf %199 : vector<128x32xf32>
    %201 = math.exp %200 : vector<128x32xf32>
    %cst_28 = arith.constant 1.000000e+00 : f32
    %202 = vector.broadcast %cst_28 : f32 to vector<128x32xf32>
    %203 = arith.addf %202, %201 : vector<128x32xf32>
    %204 = arith.divf %202, %203 : vector<128x32xf32>
    %205 = vector.extract_strided_slice %198 {offsets = [0, 32], sizes = [128, 32], strides = [1, 1]} : vector<128x128xf32> to vector<128x32xf32>
    %206 = arith.negf %205 : vector<128x32xf32>
    %207 = math.exp %206 : vector<128x32xf32>
    %cst_29 = arith.constant 1.000000e+00 : f32
    %208 = vector.broadcast %cst_29 : f32 to vector<128x32xf32>
    %209 = arith.addf %208, %207 : vector<128x32xf32>
    %210 = arith.divf %208, %209 : vector<128x32xf32>
    %211 = vector.extract_strided_slice %198 {offsets = [0, 64], sizes = [128, 32], strides = [1, 1]} : vector<128x128xf32> to vector<128x32xf32>
    %212 = math.tanh %211 : vector<128x32xf32>
    %213 = vector.extract_strided_slice %198 {offsets = [0, 96], sizes = [128, 32], strides = [1, 1]} : vector<128x128xf32> to vector<128x32xf32>
    %214 = arith.negf %213 : vector<128x32xf32>
    %215 = math.exp %214 : vector<128x32xf32>
    %cst_30 = arith.constant 1.000000e+00 : f32
    %216 = vector.broadcast %cst_30 : f32 to vector<128x32xf32>
    %217 = arith.addf %216, %215 : vector<128x32xf32>
    %218 = arith.divf %216, %217 : vector<128x32xf32>
    %219 = arith.mulf %210, %195 : vector<128x32xf32>
    %220 = arith.mulf %204, %212 : vector<128x32xf32>
    %221 = arith.addf %219, %220 : vector<128x32xf32>
    %222 = math.tanh %221 : vector<128x32xf32>
    %223 = arith.mulf %218, %222 : vector<128x32xf32>
    %c3_i32 = arith.constant 3 : i32
    %224 = vector.broadcast %c3_i32 : i32 to vector<128xi32>
    %225 = arith.cmpi sgt, %62, %224 : vector<128xi32>
    %226 = vector.shape_cast %225 : vector<128xi1> to vector<128x1xi1>
    %227 = vector.shape_cast %226 : vector<128x1xi1> to vector<128x1xi1>
    %228 = vector.broadcast %227 : vector<128x1xi1> to vector<128x32xi1>
    %229 = arith.select %228, %223, %192 : vector<128x32xi1>, vector<128x32xf32>
    %230 = vector.shape_cast %226 : vector<128x1xi1> to vector<128x1xi1>
    %231 = vector.broadcast %230 : vector<128x1xi1> to vector<128x32xi1>
    %232 = arith.select %231, %221, %195 : vector<128x32xi1>, vector<128x32xf32>
    %233 = vector.extract_strided_slice %81 {offsets = [512, 0], sizes = [128, 128], strides = [1, 1]} : vector<1024x128xf32> to vector<128x128xf32>
    %cst_31 = arith.constant dense<0.000000e+00> : vector<128x128xf32>
    %234 = tpu.matmul %229, %82, %cst_31 {dimension_numbers = #tpu.dot_dimension_numbers<[1], [0], [0], [1], [0, 0, 1, 1], [], []>} : vector<128x32xf32>, vector<32x128xf32>, vector<128x128xf32> -> vector<128x128xf32>
    %235 = arith.addf %233, %234 : vector<128x128xf32>
    %236 = vector.extract_strided_slice %235 {offsets = [0, 0], sizes = [128, 32], strides = [1, 1]} : vector<128x128xf32> to vector<128x32xf32>
    %237 = arith.negf %236 : vector<128x32xf32>
    %238 = math.exp %237 : vector<128x32xf32>
    %cst_32 = arith.constant 1.000000e+00 : f32
    %239 = vector.broadcast %cst_32 : f32 to vector<128x32xf32>
    %240 = arith.addf %239, %238 : vector<128x32xf32>
    %241 = arith.divf %239, %240 : vector<128x32xf32>
    %242 = vector.extract_strided_slice %235 {offsets = [0, 32], sizes = [128, 32], strides = [1, 1]} : vector<128x128xf32> to vector<128x32xf32>
    %243 = arith.negf %242 : vector<128x32xf32>
    %244 = math.exp %243 : vector<128x32xf32>
    %cst_33 = arith.constant 1.000000e+00 : f32
    %245 = vector.broadcast %cst_33 : f32 to vector<128x32xf32>
    %246 = arith.addf %245, %244 : vector<128x32xf32>
    %247 = arith.divf %245, %246 : vector<128x32xf32>
    %248 = vector.extract_strided_slice %235 {offsets = [0, 64], sizes = [128, 32], strides = [1, 1]} : vector<128x128xf32> to vector<128x32xf32>
    %249 = math.tanh %248 : vector<128x32xf32>
    %250 = vector.extract_strided_slice %235 {offsets = [0, 96], sizes = [128, 32], strides = [1, 1]} : vector<128x128xf32> to vector<128x32xf32>
    %251 = arith.negf %250 : vector<128x32xf32>
    %252 = math.exp %251 : vector<128x32xf32>
    %cst_34 = arith.constant 1.000000e+00 : f32
    %253 = vector.broadcast %cst_34 : f32 to vector<128x32xf32>
    %254 = arith.addf %253, %252 : vector<128x32xf32>
    %255 = arith.divf %253, %254 : vector<128x32xf32>
    %256 = arith.mulf %247, %232 : vector<128x32xf32>
    %257 = arith.mulf %241, %249 : vector<128x32xf32>
    %258 = arith.addf %256, %257 : vector<128x32xf32>
    %259 = math.tanh %258 : vector<128x32xf32>
    %260 = arith.mulf %255, %259 : vector<128x32xf32>
    %c4_i32 = arith.constant 4 : i32
    %261 = vector.broadcast %c4_i32 : i32 to vector<128xi32>
    %262 = arith.cmpi sgt, %62, %261 : vector<128xi32>
    %263 = vector.shape_cast %262 : vector<128xi1> to vector<128x1xi1>
    %264 = vector.shape_cast %263 : vector<128x1xi1> to vector<128x1xi1>
    %265 = vector.broadcast %264 : vector<128x1xi1> to vector<128x32xi1>
    %266 = arith.select %265, %260, %229 : vector<128x32xi1>, vector<128x32xf32>
    %267 = vector.shape_cast %263 : vector<128x1xi1> to vector<128x1xi1>
    %268 = vector.broadcast %267 : vector<128x1xi1> to vector<128x32xi1>
    %269 = arith.select %268, %258, %232 : vector<128x32xi1>, vector<128x32xf32>
    %270 = vector.extract_strided_slice %81 {offsets = [640, 0], sizes = [128, 128], strides = [1, 1]} : vector<1024x128xf32> to vector<128x128xf32>
    %cst_35 = arith.constant dense<0.000000e+00> : vector<128x128xf32>
    %271 = tpu.matmul %266, %82, %cst_35 {dimension_numbers = #tpu.dot_dimension_numbers<[1], [0], [0], [1], [0, 0, 1, 1], [], []>} : vector<128x32xf32>, vector<32x128xf32>, vector<128x128xf32> -> vector<128x128xf32>
    %272 = arith.addf %270, %271 : vector<128x128xf32>
    %273 = vector.extract_strided_slice %272 {offsets = [0, 0], sizes = [128, 32], strides = [1, 1]} : vector<128x128xf32> to vector<128x32xf32>
    %274 = arith.negf %273 : vector<128x32xf32>
    %275 = math.exp %274 : vector<128x32xf32>
    %cst_36 = arith.constant 1.000000e+00 : f32
    %276 = vector.broadcast %cst_36 : f32 to vector<128x32xf32>
    %277 = arith.addf %276, %275 : vector<128x32xf32>
    %278 = arith.divf %276, %277 : vector<128x32xf32>
    %279 = vector.extract_strided_slice %272 {offsets = [0, 32], sizes = [128, 32], strides = [1, 1]} : vector<128x128xf32> to vector<128x32xf32>
    %280 = arith.negf %279 : vector<128x32xf32>
    %281 = math.exp %280 : vector<128x32xf32>
    %cst_37 = arith.constant 1.000000e+00 : f32
    %282 = vector.broadcast %cst_37 : f32 to vector<128x32xf32>
    %283 = arith.addf %282, %281 : vector<128x32xf32>
    %284 = arith.divf %282, %283 : vector<128x32xf32>
    %285 = vector.extract_strided_slice %272 {offsets = [0, 64], sizes = [128, 32], strides = [1, 1]} : vector<128x128xf32> to vector<128x32xf32>
    %286 = math.tanh %285 : vector<128x32xf32>
    %287 = vector.extract_strided_slice %272 {offsets = [0, 96], sizes = [128, 32], strides = [1, 1]} : vector<128x128xf32> to vector<128x32xf32>
    %288 = arith.negf %287 : vector<128x32xf32>
    %289 = math.exp %288 : vector<128x32xf32>
    %cst_38 = arith.constant 1.000000e+00 : f32
    %290 = vector.broadcast %cst_38 : f32 to vector<128x32xf32>
    %291 = arith.addf %290, %289 : vector<128x32xf32>
    %292 = arith.divf %290, %291 : vector<128x32xf32>
    %293 = arith.mulf %284, %269 : vector<128x32xf32>
    %294 = arith.mulf %278, %286 : vector<128x32xf32>
    %295 = arith.addf %293, %294 : vector<128x32xf32>
    %296 = math.tanh %295 : vector<128x32xf32>
    %297 = arith.mulf %292, %296 : vector<128x32xf32>
    %c5_i32 = arith.constant 5 : i32
    %298 = vector.broadcast %c5_i32 : i32 to vector<128xi32>
    %299 = arith.cmpi sgt, %62, %298 : vector<128xi32>
    %300 = vector.shape_cast %299 : vector<128xi1> to vector<128x1xi1>
    %301 = vector.shape_cast %300 : vector<128x1xi1> to vector<128x1xi1>
    %302 = vector.broadcast %301 : vector<128x1xi1> to vector<128x32xi1>
    %303 = arith.select %302, %297, %266 : vector<128x32xi1>, vector<128x32xf32>
    %304 = vector.shape_cast %300 : vector<128x1xi1> to vector<128x1xi1>
    %305 = vector.broadcast %304 : vector<128x1xi1> to vector<128x32xi1>
    %306 = arith.select %305, %295, %269 : vector<128x32xi1>, vector<128x32xf32>
    %307 = vector.extract_strided_slice %81 {offsets = [768, 0], sizes = [128, 128], strides = [1, 1]} : vector<1024x128xf32> to vector<128x128xf32>
    %cst_39 = arith.constant dense<0.000000e+00> : vector<128x128xf32>
    %308 = tpu.matmul %303, %82, %cst_39 {dimension_numbers = #tpu.dot_dimension_numbers<[1], [0], [0], [1], [0, 0, 1, 1], [], []>} : vector<128x32xf32>, vector<32x128xf32>, vector<128x128xf32> -> vector<128x128xf32>
    %309 = arith.addf %307, %308 : vector<128x128xf32>
    %310 = vector.extract_strided_slice %309 {offsets = [0, 0], sizes = [128, 32], strides = [1, 1]} : vector<128x128xf32> to vector<128x32xf32>
    %311 = arith.negf %310 : vector<128x32xf32>
    %312 = math.exp %311 : vector<128x32xf32>
    %cst_40 = arith.constant 1.000000e+00 : f32
    %313 = vector.broadcast %cst_40 : f32 to vector<128x32xf32>
    %314 = arith.addf %313, %312 : vector<128x32xf32>
    %315 = arith.divf %313, %314 : vector<128x32xf32>
    %316 = vector.extract_strided_slice %309 {offsets = [0, 32], sizes = [128, 32], strides = [1, 1]} : vector<128x128xf32> to vector<128x32xf32>
    %317 = arith.negf %316 : vector<128x32xf32>
    %318 = math.exp %317 : vector<128x32xf32>
    %cst_41 = arith.constant 1.000000e+00 : f32
    %319 = vector.broadcast %cst_41 : f32 to vector<128x32xf32>
    %320 = arith.addf %319, %318 : vector<128x32xf32>
    %321 = arith.divf %319, %320 : vector<128x32xf32>
    %322 = vector.extract_strided_slice %309 {offsets = [0, 64], sizes = [128, 32], strides = [1, 1]} : vector<128x128xf32> to vector<128x32xf32>
    %323 = math.tanh %322 : vector<128x32xf32>
    %324 = vector.extract_strided_slice %309 {offsets = [0, 96], sizes = [128, 32], strides = [1, 1]} : vector<128x128xf32> to vector<128x32xf32>
    %325 = arith.negf %324 : vector<128x32xf32>
    %326 = math.exp %325 : vector<128x32xf32>
    %cst_42 = arith.constant 1.000000e+00 : f32
    %327 = vector.broadcast %cst_42 : f32 to vector<128x32xf32>
    %328 = arith.addf %327, %326 : vector<128x32xf32>
    %329 = arith.divf %327, %328 : vector<128x32xf32>
    %330 = arith.mulf %321, %306 : vector<128x32xf32>
    %331 = arith.mulf %315, %323 : vector<128x32xf32>
    %332 = arith.addf %330, %331 : vector<128x32xf32>
    %333 = math.tanh %332 : vector<128x32xf32>
    %334 = arith.mulf %329, %333 : vector<128x32xf32>
    %c6_i32 = arith.constant 6 : i32
    %335 = vector.broadcast %c6_i32 : i32 to vector<128xi32>
    %336 = arith.cmpi sgt, %62, %335 : vector<128xi32>
    %337 = vector.shape_cast %336 : vector<128xi1> to vector<128x1xi1>
    %338 = vector.shape_cast %337 : vector<128x1xi1> to vector<128x1xi1>
    %339 = vector.broadcast %338 : vector<128x1xi1> to vector<128x32xi1>
    %340 = arith.select %339, %334, %303 : vector<128x32xi1>, vector<128x32xf32>
    %341 = vector.shape_cast %337 : vector<128x1xi1> to vector<128x1xi1>
    %342 = vector.broadcast %341 : vector<128x1xi1> to vector<128x32xi1>
    %343 = arith.select %342, %332, %306 : vector<128x32xi1>, vector<128x32xf32>
    %344 = vector.extract_strided_slice %81 {offsets = [896, 0], sizes = [128, 128], strides = [1, 1]} : vector<1024x128xf32> to vector<128x128xf32>
    %cst_43 = arith.constant dense<0.000000e+00> : vector<128x128xf32>
    %345 = tpu.matmul %340, %82, %cst_43 {dimension_numbers = #tpu.dot_dimension_numbers<[1], [0], [0], [1], [0, 0, 1, 1], [], []>} : vector<128x32xf32>, vector<32x128xf32>, vector<128x128xf32> -> vector<128x128xf32>
    %346 = arith.addf %344, %345 : vector<128x128xf32>
    %347 = vector.extract_strided_slice %346 {offsets = [0, 0], sizes = [128, 32], strides = [1, 1]} : vector<128x128xf32> to vector<128x32xf32>
    %348 = arith.negf %347 : vector<128x32xf32>
    %349 = math.exp %348 : vector<128x32xf32>
    %cst_44 = arith.constant 1.000000e+00 : f32
    %350 = vector.broadcast %cst_44 : f32 to vector<128x32xf32>
    %351 = arith.addf %350, %349 : vector<128x32xf32>
    %352 = arith.divf %350, %351 : vector<128x32xf32>
    %353 = vector.extract_strided_slice %346 {offsets = [0, 32], sizes = [128, 32], strides = [1, 1]} : vector<128x128xf32> to vector<128x32xf32>
    %354 = arith.negf %353 : vector<128x32xf32>
    %355 = math.exp %354 : vector<128x32xf32>
    %cst_45 = arith.constant 1.000000e+00 : f32
    %356 = vector.broadcast %cst_45 : f32 to vector<128x32xf32>
    %357 = arith.addf %356, %355 : vector<128x32xf32>
    %358 = arith.divf %356, %357 : vector<128x32xf32>
    %359 = vector.extract_strided_slice %346 {offsets = [0, 64], sizes = [128, 32], strides = [1, 1]} : vector<128x128xf32> to vector<128x32xf32>
    %360 = math.tanh %359 : vector<128x32xf32>
    %361 = vector.extract_strided_slice %346 {offsets = [0, 96], sizes = [128, 32], strides = [1, 1]} : vector<128x128xf32> to vector<128x32xf32>
    %362 = arith.negf %361 : vector<128x32xf32>
    %363 = math.exp %362 : vector<128x32xf32>
    %cst_46 = arith.constant 1.000000e+00 : f32
    %364 = vector.broadcast %cst_46 : f32 to vector<128x32xf32>
    %365 = arith.addf %364, %363 : vector<128x32xf32>
    %366 = arith.divf %364, %365 : vector<128x32xf32>
    %367 = arith.mulf %358, %343 : vector<128x32xf32>
    %368 = arith.mulf %352, %360 : vector<128x32xf32>
    %369 = arith.addf %367, %368 : vector<128x32xf32>
    %370 = math.tanh %369 : vector<128x32xf32>
    %371 = arith.mulf %366, %370 : vector<128x32xf32>
    %c7_i32 = arith.constant 7 : i32
    %372 = vector.broadcast %c7_i32 : i32 to vector<128xi32>
    %373 = arith.cmpi sgt, %62, %372 : vector<128xi32>
    %374 = vector.shape_cast %373 : vector<128xi1> to vector<128x1xi1>
    %375 = vector.shape_cast %374 : vector<128x1xi1> to vector<128x1xi1>
    %376 = vector.broadcast %375 : vector<128x1xi1> to vector<128x32xi1>
    %377 = arith.select %376, %371, %340 : vector<128x32xi1>, vector<128x32xf32>
    %c0_47 = arith.constant 0 : index
    %c0_48 = arith.constant 0 : index
    %378 = vector.load %arg6[%c0_47, %c0_48] : memref<16x128xf32, #tpu.memory_space<vmem>>, vector<16x128xf32>
    %cst_49 = arith.constant dense<0.000000e+00> : vector<128x128xf32>
    %379 = tpu.matmul %57, %378, %cst_49 {dimension_numbers = #tpu.dot_dimension_numbers<[1], [0], [0], [1], [0, 0, 1, 1], [], []>} : vector<128x16xf32>, vector<16x128xf32>, vector<128x128xf32> -> vector<128x128xf32>
    %c0_50 = arith.constant 0 : index
    %c0_51 = arith.constant 0 : index
    %380 = vector.load %arg7[%c0_50, %c0_51] : memref<32x128xf32, #tpu.memory_space<vmem>>, vector<32x128xf32>
    %cst_52 = arith.constant dense<0.000000e+00> : vector<128x128xf32>
    %381 = tpu.matmul %377, %380, %cst_52 {dimension_numbers = #tpu.dot_dimension_numbers<[1], [0], [0], [1], [0, 0, 1, 1], [], []>} : vector<128x32xf32>, vector<32x128xf32>, vector<128x128xf32> -> vector<128x128xf32>
    %382 = arith.addf %379, %381 : vector<128x128xf32>
    %c0_53 = arith.constant 0 : index
    %c0_54 = arith.constant 0 : index
    %383 = vector.load %arg8[%c0_53, %c0_54] : memref<16x128xf32, #tpu.memory_space<vmem>>, vector<16x128xf32>
    %cst_55 = arith.constant dense<0.000000e+00> : vector<128x128xf32>
    %384 = tpu.matmul %58, %383, %cst_55 {dimension_numbers = #tpu.dot_dimension_numbers<[1], [0], [0], [1], [0, 0, 1, 1], [], []>} : vector<128x16xf32>, vector<16x128xf32>, vector<128x128xf32> -> vector<128x128xf32>
    %385 = arith.addf %382, %384 : vector<128x128xf32>
    %c0_56 = arith.constant 0 : index
    %c0_57 = arith.constant 0 : index
    %386 = vector.load %arg9[%c0_56, %c0_57] : memref<128x128xf32, #tpu.memory_space<vmem>>, vector<128x128xf32>
    tpu.vector_store %arg9[%c0_56, %c0_57], %385 {strides = array<i32>} : memref<128x128xf32, #tpu.memory_space<vmem>>, vector<128x128xf32>,
    return
  }
  func.func @transform_0(%arg0: i32) -> (i32, i32) {
    %c0_i32 = arith.constant 0 : i32
    %c0_i32_0 = arith.constant 0 : i32
    return %arg0, %c0_i32 : i32, i32
  }
  func.func @transform_1(%arg0: i32) -> (i32, i32) {
    %c0_i32 = arith.constant 0 : i32
    %c0_i32_0 = arith.constant 0 : i32
    %c0_i32_1 = arith.constant 0 : i32
    return %c0_i32, %c0_i32_0 : i32, i32
  }
  func.func @transform_2(%arg0: i32) -> (i32, i32) {
    %c0_i32 = arith.constant 0 : i32
    %c0_i32_0 = arith.constant 0 : i32
    %c0_i32_1 = arith.constant 0 : i32
    return %c0_i32, %c0_i32_0 : i32, i32
  }
  func.func @transform_3(%arg0: i32) -> (i32, i32) {
    %c0_i32 = arith.constant 0 : i32
    %c0_i32_0 = arith.constant 0 : i32
    %c0_i32_1 = arith.constant 0 : i32
    return %c0_i32, %c0_i32_0 : i32, i32
  }
  func.func @transform_4(%arg0: i32) -> (i32, i32) {
    %c0_i32 = arith.constant 0 : i32
    %c0_i32_0 = arith.constant 0 : i32
    %c0_i32_1 = arith.constant 0 : i32
    return %c0_i32, %c0_i32_0 : i32, i32
  }
  func.func @transform_5(%arg0: i32) -> (i32, i32) {
    %c0_i32 = arith.constant 0 : i32
    %c0_i32_0 = arith.constant 0 : i32
    %c0_i32_1 = arith.constant 0 : i32
    return %c0_i32, %c0_i32_0 : i32, i32
  }
  func.func @transform_6(%arg0: i32) -> (i32, i32) {
    %c0_i32 = arith.constant 0 : i32
    %c0_i32_0 = arith.constant 0 : i32
    %c0_i32_1 = arith.constant 0 : i32
    return %c0_i32, %c0_i32_0 : i32, i32
  }
  func.func @transform_7(%arg0: i32) -> (i32, i32) {
    %c0_i32 = arith.constant 0 : i32
    %c0_i32_0 = arith.constant 0 : i32
    %c0_i32_1 = arith.constant 0 : i32
    return %c0_i32, %c0_i32_0 : i32, i32
  }
  func.func @transform_8(%arg0: i32) -> (i32, i32) {
    %c0_i32 = arith.constant 0 : i32
    %c0_i32_0 = arith.constant 0 : i32
    return %arg0, %c0_i32 : i32, i32
  }
}

</mosaic_0001>

<llo_original>
// kernel: tpu_custom_call.1
$region0: #{tpu_custom_call.1}
  #allocation0 [shape = 'u32[]', space=smem, size = 0x4, offset = 0x4, fixed_abs, tag = 'smem constant byte address 0x4 - core index']
  #allocation1 [shape = 'u32[144,128]{1,0:T(1,128)}', space=vmem, size = 0x12000, scoped, tag = 'internal scratch']
  %s0 = inlined_call_operand.vmem [shape: s32[256,24], index: 0, kind: input, shape index: {}]
  %s1 = inlined_call_operand.vmem [shape: f32[32,16], index: 1, kind: input, shape index: {}]
  %s2 = inlined_call_operand.vmem [shape: f32[24,128], index: 2, kind: input, shape index: {}]
  %s3 = inlined_call_operand.vmem [shape: f32[32,128], index: 3, kind: input, shape index: {}]
  %s4 = inlined_call_operand.vmem [shape: f32[1,128], index: 4, kind: input, shape index: {}]
  %s5 = inlined_call_operand.vmem [shape: f32[16,128], index: 5, kind: input, shape index: {}]
  %s6 = inlined_call_operand.vmem [shape: f32[32,128], index: 6, kind: input, shape index: {}]
  %s7 = inlined_call_operand.vmem [shape: f32[16,128], index: 7, kind: input, shape index: {}]
  %s8 = inlined_call_operand.hbm [shape: f32[256,128], index: 8, kind: output, shape index: {}]
  %s9 = sld [smem:[#allocation0]]
  $region65: #{tpu_custom_call.1} parent=0
    _
  %s11 = ssub.s32 1, %s9
  %s12 = scalar_select 0, %s11, %s9
  $region1: #{tpu_custom_call.1} parent=0
    #allocation2 [shape = 'u8[131072]{0}', space=vmem, size = 0x20000, scoped, tag = 'output window, operand 0']
    #allocation3 [shape = 's32[2]{0}', space=sflag, size = 0x8, scoped, tag = 'scoped memory for tpu_custom_call.1']
    %13 = vsyncpa [#allocation3], 0
    %s14 = scalar_lea.sflag [#allocation3], 1
    %15 = vsyncpa %s14, 0
    loop: start=0, step=1, limit=4
    $region2: #{tpu_custom_call.1} parent=1 // loop_pre_header
      _
    $region3: #{tpu_custom_call.1} parent=1 // loop_header
      %s17 = sphi 0, %s21
      %p18 = scmp.ge.s32.totalorder %s17, 4
      %s27 = sphi 0, %s29
      %s30 = sphi 0, %s27
      %s31 = sphi 0, %s30
      %s47 = sphi 0, %s31
      %s51 = sphi 0, %s51
      %s53 = sphi 0, %s51
      %s54 = sphi 0, %s53
      %s68 = sphi 0, %s54
      %s72 = sphi 0, %s72
      %s74 = sphi 0, %s72
      %s75 = sphi 0, %s74
      %s89 = sphi 0, %s75
      %s93 = sphi 0, %s93
      %s95 = sphi 0, %s93
      %s96 = sphi 0, %s95
      %s110 = sphi 0, %s96
      %s114 = sphi 0, %s114
      %s116 = sphi 0, %s114
      %s117 = sphi 0, %s116
      %s131 = sphi 0, %s117
      %s135 = sphi 0, %s135
      %s137 = sphi 0, %s135
      %s138 = sphi 0, %s137
      %s152 = sphi 0, %s138
      %s156 = sphi 0, %s156
      %s158 = sphi 0, %s156
      %s159 = sphi 0, %s158
      %s173 = sphi 0, %s159
      %s177 = sphi 0, %s177
      %s179 = sphi 0, %s177
      %s180 = sphi 0, %s179
      %s194 = sphi 0, %s180
      %s200 = sphi 0, %s202
      %s203 = sphi 0, %s200
      %s204 = sphi 0, %s203
      %s220 = sphi 0, %s204
    $region4: #{tpu_custom_call.1} parent=1 // loop_header_branch
      %20 = sbr.rel (%p18) target = $region8
    $region5: #{tpu_custom_call.1} parent=1 // loop_body
      %s22 = ssub.s32 %s17, 1
      %s23 = ssub.s32 %s17, 2
      %s24 = sadd.s32 %s17, 1
      %s25 = ssub.s32 %s17, %s24
      %p26 = scmp.eq.s32.totalorder %s25, 0
      %s28 = sadd.s32 %s27, 1
      %s29 = scalar_select %p26, %s27, %s28
      %p32 = pneg %p26
      %p33 = scmp.eq.s32.totalorder %s17, 1
      %p34 = por %p32, %p33
      %p35 = scmp.ne.s32.totalorder %s27, %s30
      %p36 = scmp.eq.s32.totalorder %s17, 0
      %p37 = por %p35, %p36
      %p38 = scmp.ne.s32.totalorder %s27, %s30
      %p39 = scmp.eq.s32.totalorder %s22, 1
      %p40 = por %p38, %p39
      %p41 = scmp.ne.s32.totalorder %s30, %s31
      %p42 = scmp.eq.s32.totalorder %s22, 0
      %p43 = por %p41, %p42
      %p44 = scmp.ne.s32.totalorder %s30, %s31
      %p45 = scmp.eq.s32.totalorder %s23, 1
      %p46 = por %p44, %p45
      %p48 = scmp.ne.s32.totalorder %s31, %s47
      %p49 = scmp.eq.s32.totalorder %s23, 0
      %p50 = por %p48, %p49
      %s52 = sadd.s32 %s51, 1
      %p55 = scmp.eq.s32.totalorder %s17, 1
      %p56 = scmp.ne.s32.totalorder %s51, %s53
      %p57 = scmp.eq.s32.totalorder %s17, 0
      %p58 = por %p56, %p57
      %p59 = scmp.ne.s32.totalorder %s51, %s53
      %p60 = scmp.eq.s32.totalorder %s22, 1
      %p61 = por %p59, %p60
      %p62 = scmp.ne.s32.totalorder %s53, %s54
      %p63 = scmp.eq.s32.totalorder %s22, 0
      %p64 = por %p62, %p63
      %p65 = scmp.ne.s32.totalorder %s53, %s54
      %p66 = scmp.eq.s32.totalorder %s23, 1
      %p67 = por %p65, %p66
      %p69 = scmp.ne.s32.totalorder %s54, %s68
      %p70 = scmp.eq.s32.totalorder %s23, 0
      %p71 = por %p69, %p70
      %s73 = sadd.s32 %s72, 1
      %p76 = scmp.eq.s32.totalorder %s17, 1
      %p77 = scmp.ne.s32.totalorder %s72, %s74
      %p78 = scmp.eq.s32.totalorder %s17, 0
      %p79 = por %p77, %p78
      %p80 = scmp.ne.s32.totalorder %s72, %s74
      %p81 = scmp.eq.s32.totalorder %s22, 1
      %p82 = por %p80, %p81
      %p83 = scmp.ne.s32.totalorder %s74, %s75
      %p84 = scmp.eq.s32.totalorder %s22, 0
      %p85 = por %p83, %p84
      %p86 = scmp.ne.s32.totalorder %s74, %s75
      %p87 = scmp.eq.s32.totalorder %s23, 1
      %p88 = por %p86, %p87
      %p90 = scmp.ne.s32.totalorder %s75, %s89
      %p91 = scmp.eq.s32.totalorder %s23, 0
      %p92 = por %p90, %p91
      %s94 = sadd.s32 %s93, 1
      %p97 = scmp.eq.s32.totalorder %s17, 1
      %p98 = scmp.ne.s32.totalorder %s93, %s95
      %p99 = scmp.eq.s32.totalorder %s17, 0
      %p100 = por %p98, %p99
      %p101 = scmp.ne.s32.totalorder %s93, %s95
      %p102 = scmp.eq.s32.totalorder %s22, 1
      %p103 = por %p101, %p102
      %p104 = scmp.ne.s32.totalorder %s95, %s96
      %p105 = scmp.eq.s32.totalorder %s22, 0
      %p106 = por %p104, %p105
      %p107 = scmp.ne.s32.totalorder %s95, %s96
      %p108 = scmp.eq.s32.totalorder %s23, 1
      %p109 = por %p107, %p108
      %p111 = scmp.ne.s32.totalorder %s96, %s110
      %p112 = scmp.eq.s32.totalorder %s23, 0
      %p113 = por %p111, %p112
      %s115 = sadd.s32 %s114, 1
      %p118 = scmp.eq.s32.totalorder %s17, 1
      %p119 = scmp.ne.s32.totalorder %s114, %s116
      %p120 = scmp.eq.s32.totalorder %s17, 0
      %p121 = por %p119, %p120
      %p122 = scmp.ne.s32.totalorder %s114, %s116
      %p123 = scmp.eq.s32.totalorder %s22, 1
      %p124 = por %p122, %p123
      %p125 = scmp.ne.s32.totalorder %s116, %s117
      %p126 = scmp.eq.s32.totalorder %s22, 0
      %p127 = por %p125, %p126
      %p128 = scmp.ne.s32.totalorder %s116, %s117
      %p129 = scmp.eq.s32.totalorder %s23, 1
      %p130 = por %p128, %p129
      %p132 = scmp.ne.s32.totalorder %s117, %s131
      %p133 = scmp.eq.s32.totalorder %s23, 0
      %p134 = por %p132, %p133
      %s136 = sadd.s32 %s135, 1
      %p139 = scmp.eq.s32.totalorder %s17, 1
      %p140 = scmp.ne.s32.totalorder %s135, %s137
      %p141 = scmp.eq.s32.totalorder %s17, 0
      %p142 = por %p140, %p141
      %p143 = scmp.ne.s32.totalorder %s135, %s137
      %p144 = scmp.eq.s32.totalorder %s22, 1
      %p145 = por %p143, %p144
      %p146 = scmp.ne.s32.totalorder %s137, %s138
      %p147 = scmp.eq.s32.totalorder %s22, 0
      %p148 = por %p146, %p147
      %p149 = scmp.ne.s32.totalorder %s137, %s138
      %p150 = scmp.eq.s32.totalorder %s23, 1
      %p151 = por %p149, %p150
      %p153 = scmp.ne.s32.totalorder %s138, %s152
      %p154 = scmp.eq.s32.totalorder %s23, 0
      %p155 = por %p153, %p154
      %s157 = sadd.s32 %s156, 1
      %p160 = scmp.eq.s32.totalorder %s17, 1
      %p161 = scmp.ne.s32.totalorder %s156, %s158
      %p162 = scmp.eq.s32.totalorder %s17, 0
      %p163 = por %p161, %p162
      %p164 = scmp.ne.s32.totalorder %s156, %s158
      %p165 = scmp.eq.s32.totalorder %s22, 1
      %p166 = por %p164, %p165
      %p167 = scmp.ne.s32.totalorder %s158, %s159
      %p168 = scmp.eq.s32.totalorder %s22, 0
      %p169 = por %p167, %p168
      %p170 = scmp.ne.s32.totalorder %s158, %s159
      %p171 = scmp.eq.s32.totalorder %s23, 1
      %p172 = por %p170, %p171
      %p174 = scmp.ne.s32.totalorder %s159, %s173
      %p175 = scmp.eq.s32.totalorder %s23, 0
      %p176 = por %p174, %p175
      %s178 = sadd.s32 %s177, 1
      %p181 = scmp.eq.s32.totalorder %s17, 1
      %p182 = scmp.ne.s32.totalorder %s177, %s179
      %p183 = scmp.eq.s32.totalorder %s17, 0
      %p184 = por %p182, %p183
      %p185 = scmp.ne.s32.totalorder %s177, %s179
      %p186 = scmp.eq.s32.totalorder %s22, 1
      %p187 = por %p185, %p186
      %p188 = scmp.ne.s32.totalorder %s179, %s180
      %p189 = scmp.eq.s32.totalorder %s22, 0
      %p190 = por %p188, %p189
      %p191 = scmp.ne.s32.totalorder %s179, %s180
      %p192 = scmp.eq.s32.totalorder %s23, 1
      %p193 = por %p191, %p192
      %p195 = scmp.ne.s32.totalorder %s180, %s194
      %p196 = scmp.eq.s32.totalorder %s23, 0
      %p197 = por %p195, %p196
      %s198 = ssub.s32 %s17, %s24
      %p199 = scmp.eq.s32.totalorder %s198, 0
      %s201 = sadd.s32 %s200, 1
      %s202 = scalar_select %p199, %s200, %s201
      %p205 = pneg %p199
      %p206 = scmp.eq.s32.totalorder %s17, 1
      %p207 = por %p205, %p206
      %p208 = scmp.ne.s32.totalorder %s200, %s203
      %p209 = scmp.eq.s32.totalorder %s17, 0
      %p210 = por %p208, %p209
      %p211 = scmp.ne.s32.totalorder %s200, %s203
      %p212 = scmp.eq.s32.totalorder %s22, 1
      %p213 = por %p211, %p212
      %p214 = scmp.ne.s32.totalorder %s203, %s204
      %p215 = scmp.eq.s32.totalorder %s22, 0
      %p216 = por %p214, %p215
      %p217 = scmp.ne.s32.totalorder %s203, %s204
      %p218 = scmp.eq.s32.totalorder %s23, 1
      %p219 = por %p217, %p218
      %p221 = scmp.ne.s32.totalorder %s204, %s220
      %p222 = scmp.eq.s32.totalorder %s23, 0
      %p223 = por %p221, %p222
      %p224 = scmp.le.s32.totalorder 1, %s17
      %p225 = scmp.lt.s32.totalorder %s17, 3
      %p226 = pnand %p224, %p225
      %p227 = pneg %p226
      // Predicated region
      $region9: #{tpu_custom_call.1} parent=5 // pred_check
        _
      $region10: #{tpu_custom_call.1} parent=5 // pred_check_branch
        %229 = sbr.rel (%p226) target = $region12
      $region11: #{tpu_custom_call.1} parent=5 // pred_region
        %s230 = ssub.s32 %s17, 1
        // Predicated region
        $region13: #{tpu_custom_call.1} parent=11 // pred_check
          %p231 = pneg %p64
        $region14: #{tpu_custom_call.1} parent=11 // pred_check_branch
          %233 = sbr.rel (%p231) target = $region16
        $region15: #{tpu_custom_call.1} parent=11 // pred_region
          _
        $region16: #{tpu_custom_call.1} parent=11 // pred_fallthru
          _
        // Predicated region
        $region17: #{tpu_custom_call.1} parent=11 // pred_check
          %p234 = pneg %p85
        $region18: #{tpu_custom_call.1} parent=11 // pred_check_branch
          %236 = sbr.rel (%p234) target = $region20
        $region19: #{tpu_custom_call.1} parent=11 // pred_region
          _
        $region20: #{tpu_custom_call.1} parent=11 // pred_fallthru
          _
        // Predicated region
        $region21: #{tpu_custom_call.1} parent=11 // pred_check
          %p237 = pneg %p106
        $region22: #{tpu_custom_call.1} parent=11 // pred_check_branch
          %239 = sbr.rel (%p237) target = $region24
        $region23: #{tpu_custom_call.1} parent=11 // pred_region
          _
        $region24: #{tpu_custom_call.1} parent=11 // pred_fallthru
          _
        // Predicated region
        $region25: #{tpu_custom_call.1} parent=11 // pred_check
          %p240 = pneg %p127
        $region26: #{tpu_custom_call.1} parent=11 // pred_check_branch
          %242 = sbr.rel (%p240) target = $region28
        $region27: #{tpu_custom_call.1} parent=11 // pred_region
          _
        $region28: #{tpu_custom_call.1} parent=11 // pred_fallthru
          _
        // Predicated region
        $region29: #{tpu_custom_call.1} parent=11 // pred_check
          %p243 = pneg %p148
        $region30: #{tpu_custom_call.1} parent=11 // pred_check_branch
          %245 = sbr.rel (%p243) target = $region32
        $region31: #{tpu_custom_call.1} parent=11 // pred_region
          _
        $region32: #{tpu_custom_call.1} parent=11 // pred_fallthru
          _
        // Predicated region
        $region33: #{tpu_custom_call.1} parent=11 // pred_check
          %p246 = pneg %p169
        $region34: #{tpu_custom_call.1} parent=11 // pred_check_branch
          %248 = sbr.rel (%p246) target = $region36
        $region35: #{tpu_custom_call.1} parent=11 // pred_region
          _
        $region36: #{tpu_custom_call.1} parent=11 // pred_fallthru
          _
        // Predicated region
        $region37: #{tpu_custom_call.1} parent=11 // pred_check
          %p249 = pneg %p190
        $region38: #{tpu_custom_call.1} parent=11 // pred_check_branch
          %251 = sbr.rel (%p249) target = $region40
        $region39: #{tpu_custom_call.1} parent=11 // pred_region
          _
        $region40: #{tpu_custom_call.1} parent=11 // pred_fallthru
          _
      $region12: #{tpu_custom_call.1} parent=5 // pred_fallthru
        _
      %p252 = scmp.lt.s32.totalorder %s17, 2
      // Predicated region
      $region41: #{tpu_custom_call.1} parent=5 // pred_check
        %p253 = pneg %p252
      $region42: #{tpu_custom_call.1} parent=5 // pred_check_branch
        %255 = sbr.rel (%p253) target = $region44
      $region43: #{tpu_custom_call.1} parent=5 // pred_region
        // Predicated region
        $region45: #{tpu_custom_call.1} parent=43 // pred_check
          %p256 = pneg %p37
        $region46: #{tpu_custom_call.1} parent=43 // pred_check_branch
          %258 = sbr.rel (%p256) target = $region48
        $region47: #{tpu_custom_call.1} parent=43 // pred_region
          %s259 = smul.u32 16, %s17
          %p260 = scmp.lt.s32.totalorder %s259, 31
          %s261 = scalar_select %p260, %s259, 31
          %s262 = smul.addr %s261, 8
          %s263 = scalar_lea.vmem %s0, %s262
          %s264 = smul.u32 16, %s17
        $region48: #{tpu_custom_call.1} parent=43 // pred_fallthru
          _
      $region44: #{tpu_custom_call.1} parent=5 // pred_fallthru
        _
      %p265 = scmp.le.s32.totalorder 1, %s17
      %p266 = scmp.lt.s32.totalorder %s17, 3
      %p267 = pnand %p265, %p266
      %p268 = pneg %p267
      // Predicated region
      $region49: #{tpu_custom_call.1} parent=5 // pred_check
        _
      $region50: #{tpu_custom_call.1} parent=5 // pred_check_branch
        %270 = sbr.rel (%p267) target = $region52
      $region51: #{tpu_custom_call.1} parent=5 // pred_region
        %s271 = ssub.s32 %s17, 1
        %s272 = smul.u32 16, %s22
        %p273 = scmp.lt.s32.totalorder %s272, 31
        %s274 = scalar_select %p273, %s272, 31
        %s275 = smul.addr %s274, 8
        %s276 = scalar_lea.vmem %s0, %s275
        %p277 = pneg %p43
        %p278 = pneg %p40
        %p279 = pneg %p64
        %p280 = pneg %p61
        %p281 = pneg %p85
        %p282 = pneg %p82
        %p283 = pneg %p106
        %p284 = pneg %p103
        %p285 = pneg %p127
        %p286 = pneg %p124
        %p287 = pneg %p148
        %p288 = pneg %p145
        %p289 = pneg %p169
        %p290 = pneg %p166
        %p291 = pneg %p190
        %p292 = pneg %p187
        %p293 = pneg %p216
        %p294 = pneg %p213
        %s295 = sand.u32 %s203, 1
        %s296 = scalar_lea.sflag [#allocation3], %s295
        %s297 = sand.u32 %s203, 1
        %s298 = smul.addr %s297, 128
        %s299 = scalar_lea.vmem [#allocation2], %s298
        %s300 = smul.u32 16, %s22
        %p301 = scmp.lt.s32.totalorder %s300, 31
        %s302 = scalar_select %p301, %s300, 31
        %s303 = smul.addr %s302, 8
        %s304 = scalar_lea.vmem %s0, %s303
        %s305 = smul.u32 16, %s22
        %s306 = smul.u32 16, %s22
        %v307 = vld [vmem:[%s304] sm:$0xff]
        %v308 = vld [vmem:[%s304 + $0x8] sm:$0xff]
        %v309 = vld [vmem:[%s304 + $0x10] sm:$0xff]
        %v310 = vld [vmem:[%s304 + $0x18] sm:$0xff]
        %v311 = vld [vmem:[%s304 + $0x20] sm:$0xff]
        %v312 = vld [vmem:[%s304 + $0x28] sm:$0xff]
        %v313 = vld [vmem:[%s304 + $0x30] sm:$0xff]
        %v314 = vld [vmem:[%s304 + $0x38] sm:$0xff]
        %v315 = vld [vmem:[%s304 + $0x40] sm:$0xff]
        %v316 = vld [vmem:[%s304 + $0x48] sm:$0xff]
        %v317 = vld [vmem:[%s304 + $0x50] sm:$0xff]
        %v318 = vld [vmem:[%s304 + $0x58] sm:$0xff]
        %v319 = vld [vmem:[%s304 + $0x60] sm:$0xff]
        %v320 = vld [vmem:[%s304 + $0x68] sm:$0xff]
        %v321 = vld [vmem:[%s304 + $0x70] sm:$0xff]
        %v322 = vld [vmem:[%s304 + $0x78] sm:$0xff]
        %323 = vrot.lane.b32.xlu0 %v307, 112
        %v324 = vpop.permute.xlu0 %323
        %325 = vrot.lane.b32.xlu0 %v308, 112
        %v326 = vpop.permute.xlu0 %325
        %327 = vrot.lane.b32.xlu0 %v309, 112
        %v328 = vpop.permute.xlu0 %327
        %329 = vrot.lane.b32.xlu0 %v310, 112
        %v330 = vpop.permute.xlu0 %329
        %331 = vrot.lane.b32.xlu0 %v311, 112
        %v332 = vpop.permute.xlu0 %331
        %333 = vrot.lane.b32.xlu0 %v312, 112
        %v334 = vpop.permute.xlu0 %333
        %335 = vrot.lane.b32.xlu0 %v313, 112
        %v336 = vpop.permute.xlu0 %335
        %337 = vrot.lane.b32.xlu0 %v314, 112
        %v338 = vpop.permute.xlu0 %337
        %339 = vrot.lane.b32.xlu0 %v315, 112
        %v340 = vpop.permute.xlu0 %339
        %341 = vrot.lane.b32.xlu0 %v316, 112
        %v342 = vpop.permute.xlu0 %341
        %343 = vrot.lane.b32.xlu0 %v317, 112
        %v344 = vpop.permute.xlu0 %343
        %345 = vrot.lane.b32.xlu0 %v318, 112
        %v346 = vpop.permute.xlu0 %345
        %347 = vrot.lane.b32.xlu0 %v319, 112
        %v348 = vpop.permute.xlu0 %347
        %349 = vrot.lane.b32.xlu0 %v320, 112
        %v350 = vpop.permute.xlu0 %349
        %351 = vrot.lane.b32.xlu0 %v321, 112
        %v352 = vpop.permute.xlu0 %351
        %353 = vrot.lane.b32.xlu0 %v322, 112
        %v354 = vpop.permute.xlu0 %353
        %v355 = vlaneseq
        %v356 = vand.u32 %v355, 127
        %357 = vset.pattern.permute.xlu0 0
        %358 = vperm.xlu0 %357, %v307
        %v359 = vpop.permute.xlu0 %358
        %360 = vset.pattern.permute.xlu0 0
        %361 = vperm.xlu0 %360, %v308
        %v362 = vpop.permute.xlu0 %361
        %363 = vset.pattern.permute.xlu0 0
        %364 = vperm.xlu0 %363, %v309
        %v365 = vpop.permute.xlu0 %364
        %366 = vset.pattern.permute.xlu0 0
        %367 = vperm.xlu0 %366, %v310
        %v368 = vpop.permute.xlu0 %367
        %369 = vset.pattern.permute.xlu0 0
        %370 = vperm.xlu0 %369, %v311
        %v371 = vpop.permute.xlu0 %370
        %372 = vset.pattern.permute.xlu0 0
        %373 = vperm.xlu0 %372, %v312
        %v374 = vpop.permute.xlu0 %373
        %375 = vset.pattern.permute.xlu0 0
        %376 = vperm.xlu0 %375, %v313
        %v377 = vpop.permute.xlu0 %376
        %378 = vset.pattern.permute.xlu0 0
        %379 = vperm.xlu0 %378, %v314
        %v380 = vpop.permute.xlu0 %379
        %381 = vset.pattern.permute.xlu0 0
        %382 = vperm.xlu0 %381, %v315
        %v383 = vpop.permute.xlu0 %382
        %384 = vset.pattern.permute.xlu0 0
        %385 = vperm.xlu0 %384, %v316
        %v386 = vpop.permute.xlu0 %385
        %387 = vset.pattern.permute.xlu0 0
        %388 = vperm.xlu0 %387, %v317
        %v389 = vpop.permute.xlu0 %388
        %390 = vset.pattern.permute.xlu0 0
        %391 = vperm.xlu0 %390, %v318
        %v392 = vpop.permute.xlu0 %391
        %393 = vset.pattern.permute.xlu0 0
        %394 = vperm.xlu0 %393, %v319
        %v395 = vpop.permute.xlu0 %394
        %396 = vset.pattern.permute.xlu0 0
        %397 = vperm.xlu0 %396, %v320
        %v398 = vpop.permute.xlu0 %397
        %399 = vset.pattern.permute.xlu0 0
        %400 = vperm.xlu0 %399, %v321
        %v401 = vpop.permute.xlu0 %400
        %402 = vset.pattern.permute.xlu0 0
        %403 = vperm.xlu0 %402, %v322
        %v404 = vpop.permute.xlu0 %403
        %405 = vset.pattern.permute.xlu0 0
        %406 = vperm.xlu0 %405, %v324
        %v407 = vpop.permute.xlu0 %406
        %408 = vset.pattern.permute.xlu0 0
        %409 = vperm.xlu0 %408, %v326
        %v410 = vpop.permute.xlu0 %409
        %411 = vset.pattern.permute.xlu0 0
        %412 = vperm.xlu0 %411, %v328
        %v413 = vpop.permute.xlu0 %412
        %414 = vset.pattern.permute.xlu0 0
        %415 = vperm.xlu0 %414, %v330
        %v416 = vpop.permute.xlu0 %415
        %417 = vset.pattern.permute.xlu0 0
        %418 = vperm.xlu0 %417, %v332
        %v419 = vpop.permute.xlu0 %418
        %420 = vset.pattern.permute.xlu0 0
        %421 = vperm.xlu0 %420, %v334
        %v422 = vpop.permute.xlu0 %421
        %423 = vset.pattern.permute.xlu0 0
        %424 = vperm.xlu0 %423, %v336
        %v425 = vpop.permute.xlu0 %424
        %426 = vset.pattern.permute.xlu0 0
        %427 = vperm.xlu0 %426, %v338
        %v428 = vpop.permute.xlu0 %427
        %429 = vset.pattern.permute.xlu0 0
        %430 = vperm.xlu0 %429, %v340
        %v431 = vpop.permute.xlu0 %430
        %432 = vset.pattern.permute.xlu0 0
        %433 = vperm.xlu0 %432, %v342
        %v434 = vpop.permute.xlu0 %433
        %435 = vset.pattern.permute.xlu0 0
        %436 = vperm.xlu0 %435, %v344
        %v437 = vpop.permute.xlu0 %436
        %438 = vset.pattern.permute.xlu0 0
        %439 = vperm.xlu0 %438, %v346
        %v440 = vpop.permute.xlu0 %439
        %441 = vset.pattern.permute.xlu0 0
        %442 = vperm.xlu0 %441, %v348
        %v443 = vpop.permute.xlu0 %442
        %444 = vset.pattern.permute.xlu0 0
        %445 = vperm.xlu0 %444, %v350
        %v446 = vpop.permute.xlu0 %445
        %447 = vset.pattern.permute.xlu0 0
        %448 = vperm.xlu0 %447, %v352
        %v449 = vpop.permute.xlu0 %448
        %450 = vset.pattern.permute.xlu0 0
        %451 = vperm.xlu0 %450, %v354
        %v452 = vpop.permute.xlu0 %451
        %vm453 = vcmp.eq.s32.totalorder %v359, %v356
        %vm454 = vcmp.eq.s32.totalorder %v362, %v356
        %vm455 = vcmp.eq.s32.totalorder %v365, %v356
        %vm456 = vcmp.eq.s32.totalorder %v368, %v356
        %vm457 = vcmp.eq.s32.totalorder %v371, %v356
        %vm458 = vcmp.eq.s32.totalorder %v374, %v356
        %vm459 = vcmp.eq.s32.totalorder %v377, %v356
        %vm460 = vcmp.eq.s32.totalorder %v380, %v356
        %vm461 = vcmp.eq.s32.totalorder %v383, %v356
        %vm462 = vcmp.eq.s32.totalorder %v386, %v356
        %vm463 = vcmp.eq.s32.totalorder %v389, %v356
        %vm464 = vcmp.eq.s32.totalorder %v392, %v356
        %vm465 = vcmp.eq.s32.totalorder %v395, %v356
        %vm466 = vcmp.eq.s32.totalorder %v398, %v356
        %vm467 = vcmp.eq.s32.totalorder %v401, %v356
        %vm468 = vcmp.eq.s32.totalorder %v404, %v356
        %vm469 = vcmp.eq.s32.totalorder %v407, %v356
        %vm470 = vcmp.eq.s32.totalorder %v410, %v356
        %vm471 = vcmp.eq.s32.totalorder %v413, %v356
        %vm472 = vcmp.eq.s32.totalorder %v416, %v356
        %vm473 = vcmp.eq.s32.totalorder %v419, %v356
        %vm474 = vcmp.eq.s32.totalorder %v422, %v356
        %vm475 = vcmp.eq.s32.totalorder %v425, %v356
        %vm476 = vcmp.eq.s32.totalorder %v428, %v356
        %vm477 = vcmp.eq.s32.totalorder %v431, %v356
        %vm478 = vcmp.eq.s32.totalorder %v434, %v356
        %vm479 = vcmp.eq.s32.totalorder %v437, %v356
        %vm480 = vcmp.eq.s32.totalorder %v440, %v356
        %vm481 = vcmp.eq.s32.totalorder %v443, %v356
        %vm482 = vcmp.eq.s32.totalorder %v446, %v356
        %vm483 = vcmp.eq.s32.totalorder %v449, %v356
        %vm484 = vcmp.eq.s32.totalorder %v452, %v356
        %v485 = vsel %vm453, 1, 0
        %v486 = vsel %vm454, 1, 0
        %v487 = vsel %vm455, 1, 0
        %v488 = vsel %vm456, 1, 0
        %v489 = vsel %vm457, 1, 0
        %v490 = vsel %vm458, 1, 0
        %v491 = vsel %vm459, 1, 0
        %v492 = vsel %vm460, 1, 0
        %v493 = vsel %vm461, 1, 0
        %v494 = vsel %vm462, 1, 0
        %v495 = vsel %vm463, 1, 0
        %v496 = vsel %vm464, 1, 0
        %v497 = vsel %vm465, 1, 0
        %v498 = vsel %vm466, 1, 0
        %v499 = vsel %vm467, 1, 0
        %v500 = vsel %vm468, 1, 0
        %v501 = vsel %vm469, 1, 0
        %v502 = vsel %vm470, 1, 0
        %v503 = vsel %vm471, 1, 0
        %v504 = vsel %vm472, 1, 0
        %v505 = vsel %vm473, 1, 0
        %v506 = vsel %vm474, 1, 0
        %v507 = vsel %vm475, 1, 0
        %v508 = vsel %vm476, 1, 0
        %v509 = vsel %vm477, 1, 0
        %v510 = vsel %vm478, 1, 0
        %v511 = vsel %vm479, 1, 0
        %v512 = vsel %vm480, 1, 0
        %v513 = vsel %vm481, 1, 0
        %v514 = vsel %vm482, 1, 0
        %v515 = vsel %vm483, 1, 0
        %v516 = vsel %vm484, 1, 0
        %v517 = vcvt.s32.f32 %v485
        %v518 = vcvt.s32.f32 %v486
        %v519 = vcvt.s32.f32 %v487
        %v520 = vcvt.s32.f32 %v488
        %v521 = vcvt.s32.f32 %v489
        %v522 = vcvt.s32.f32 %v490
        %v523 = vcvt.s32.f32 %v491
        %v524 = vcvt.s32.f32 %v492
        %v525 = vcvt.s32.f32 %v493
        %v526 = vcvt.s32.f32 %v494
        %v527 = vcvt.s32.f32 %v495
        %v528 = vcvt.s32.f32 %v496
        %v529 = vcvt.s32.f32 %v497
        %v530 = vcvt.s32.f32 %v498
        %v531 = vcvt.s32.f32 %v499
        %v532 = vcvt.s32.f32 %v500
        %v533 = vcvt.s32.f32 %v501
        %v534 = vcvt.s32.f32 %v502
        %v535 = vcvt.s32.f32 %v503
        %v536 = vcvt.s32.f32 %v504
        %v537 = vcvt.s32.f32 %v505
        %v538 = vcvt.s32.f32 %v506
        %v539 = vcvt.s32.f32 %v507
        %v540 = vcvt.s32.f32 %v508
        %v541 = vcvt.s32.f32 %v509
        %v542 = vcvt.s32.f32 %v510
        %v543 = vcvt.s32.f32 %v511
        %v544 = vcvt.s32.f32 %v512
        %v545 = vcvt.s32.f32 %v513
        %v546 = vcvt.s32.f32 %v514
        %v547 = vcvt.s32.f32 %v515
        %v548 = vcvt.s32.f32 %v516
        %v549 = vadd.f32 %v517, 0.0
        %v550 = vadd.f32 %v518, 0.0
        %v551 = vadd.f32 %v519, 0.0
        %v552 = vadd.f32 %v520, 0.0
        %v553 = vadd.f32 %v521, 0.0
        %v554 = vadd.f32 %v522, 0.0
        %v555 = vadd.f32 %v523, 0.0
        %v556 = vadd.f32 %v524, 0.0
        %v557 = vadd.f32 %v525, 0.0
        %v558 = vadd.f32 %v526, 0.0
        %v559 = vadd.f32 %v527, 0.0
        %v560 = vadd.f32 %v528, 0.0
        %v561 = vadd.f32 %v529, 0.0
        %v562 = vadd.f32 %v530, 0.0
        %v563 = vadd.f32 %v531, 0.0
        %v564 = vadd.f32 %v532, 0.0
        %v565 = vadd.f32 %v533, 0.0
        %v566 = vadd.f32 %v534, 0.0
        %v567 = vadd.f32 %v535, 0.0
        %v568 = vadd.f32 %v536, 0.0
        %v569 = vadd.f32 %v537, 0.0
        %v570 = vadd.f32 %v538, 0.0
        %v571 = vadd.f32 %v539, 0.0
        %v572 = vadd.f32 %v540, 0.0
        %v573 = vadd.f32 %v541, 0.0
        %v574 = vadd.f32 %v542, 0.0
        %v575 = vadd.f32 %v543, 0.0
        %v576 = vadd.f32 %v544, 0.0
        %v577 = vadd.f32 %v545, 0.0
        %v578 = vadd.f32 %v546, 0.0
        %v579 = vadd.f32 %v547, 0.0
        %v580 = vadd.f32 %v548, 0.0
        %581 = vset.pattern.permute.xlu0 1
        %582 = vperm.xlu0 %581, %v307
        %v583 = vpop.permute.xlu0 %582
        %584 = vset.pattern.permute.xlu0 1
        %585 = vperm.xlu0 %584, %v308
        %v586 = vpop.permute.xlu0 %585
        %587 = vset.pattern.permute.xlu0 1
        %588 = vperm.xlu0 %587, %v309
        %v589 = vpop.permute.xlu0 %588
        %590 = vset.pattern.permute.xlu0 1
        %591 = vperm.xlu0 %590, %v310
        %v592 = vpop.permute.xlu0 %591
        %593 = vset.pattern.permute.xlu0 1
        %594 = vperm.xlu0 %593, %v311
        %v595 = vpop.permute.xlu0 %594
        %596 = vset.pattern.permute.xlu0 1
        %597 = vperm.xlu0 %596, %v312
        %v598 = vpop.permute.xlu0 %597
        %599 = vset.pattern.permute.xlu0 1
        %600 = vperm.xlu0 %599, %v313
        %v601 = vpop.permute.xlu0 %600
        %602 = vset.pattern.permute.xlu0 1
        %603 = vperm.xlu0 %602, %v314
        %v604 = vpop.permute.xlu0 %603
        %605 = vset.pattern.permute.xlu0 1
        %606 = vperm.xlu0 %605, %v315
        %v607 = vpop.permute.xlu0 %606
        %608 = vset.pattern.permute.xlu0 1
        %609 = vperm.xlu0 %608, %v316
        %v610 = vpop.permute.xlu0 %609
        %611 = vset.pattern.permute.xlu0 1
        %612 = vperm.xlu0 %611, %v317
        %v613 = vpop.permute.xlu0 %612
        %614 = vset.pattern.permute.xlu0 1
        %615 = vperm.xlu0 %614, %v318
        %v616 = vpop.permute.xlu0 %615
        %617 = vset.pattern.permute.xlu0 1
        %618 = vperm.xlu0 %617, %v319
        %v619 = vpop.permute.xlu0 %618
        %620 = vset.pattern.permute.xlu0 1
        %621 = vperm.xlu0 %620, %v320
        %v622 = vpop.permute.xlu0 %621
        %623 = vset.pattern.permute.xlu0 1
        %624 = vperm.xlu0 %623, %v321
        %v625 = vpop.permute.xlu0 %624
        %626 = vset.pattern.permute.xlu0 1
        %627 = vperm.xlu0 %626, %v322
        %v628 = vpop.permute.xlu0 %627
        %629 = vset.pattern.permute.xlu0 1
        %630 = vperm.xlu0 %629, %v324
        %v631 = vpop.permute.xlu0 %630
        %632 = vset.pattern.permute.xlu0 1
        %633 = vperm.xlu0 %632, %v326
        %v634 = vpop.permute.xlu0 %633
        %635 = vset.pattern.permute.xlu0 1
        %636 = vperm.xlu0 %635, %v328
        %v637 = vpop.permute.xlu0 %636
        %638 = vset.pattern.permute.xlu0 1
        %639 = vperm.xlu0 %638, %v330
        %v640 = vpop.permute.xlu0 %639
        %641 = vset.pattern.permute.xlu0 1
        %642 = vperm.xlu0 %641, %v332
        %v643 = vpop.permute.xlu0 %642
        %644 = vset.pattern.permute.xlu0 1
        %645 = vperm.xlu0 %644, %v334
        %v646 = vpop.permute.xlu0 %645
        %647 = vset.pattern.permute.xlu0 1
        %648 = vperm.xlu0 %647, %v336
        %v649 = vpop.permute.xlu0 %648
        %650 = vset.pattern.permute.xlu0 1
        %651 = vperm.xlu0 %650, %v338
        %v652 = vpop.permute.xlu0 %651
        %653 = vset.pattern.permute.xlu0 1
        %654 = vperm.xlu0 %653, %v340
        %v655 = vpop.permute.xlu0 %654
        %656 = vset.pattern.permute.xlu0 1
        %657 = vperm.xlu0 %656, %v342
        %v658 = vpop.permute.xlu0 %657
        %659 = vset.pattern.permute.xlu0 1
        %660 = vperm.xlu0 %659, %v344
        %v661 = vpop.permute.xlu0 %660
        %662 = vset.pattern.permute.xlu0 1
        %663 = vperm.xlu0 %662, %v346
        %v664 = vpop.permute.xlu0 %663
        %665 = vset.pattern.permute.xlu0 1
        %666 = vperm.xlu0 %665, %v348
        %v667 = vpop.permute.xlu0 %666
        %668 = vset.pattern.permute.xlu0 1
        %669 = vperm.xlu0 %668, %v350
        %v670 = vpop.permute.xlu0 %669
        %671 = vset.pattern.permute.xlu0 1
        %672 = vperm.xlu0 %671, %v352
        %v673 = vpop.permute.xlu0 %672
        %674 = vset.pattern.permute.xlu0 1
        %675 = vperm.xlu0 %674, %v354
        %v676 = vpop.permute.xlu0 %675
        %vm677 = vcmp.eq.s32.totalorder %v583, %v356
        %vm678 = vcmp.eq.s32.totalorder %v586, %v356
        %vm679 = vcmp.eq.s32.totalorder %v589, %v356
        %vm680 = vcmp.eq.s32.totalorder %v592, %v356
        %vm681 = vcmp.eq.s32.totalorder %v595, %v356
        %vm682 = vcmp.eq.s32.totalorder %v598, %v356
        %vm683 = vcmp.eq.s32.totalorder %v601, %v356
        %vm684 = vcmp.eq.s32.totalorder %v604, %v356
        %vm685 = vcmp.eq.s32.totalorder %v607, %v356
        %vm686 = vcmp.eq.s32.totalorder %v610, %v356
        %vm687 = vcmp.eq.s32.totalorder %v613, %v356
        %vm688 = vcmp.eq.s32.totalorder %v616, %v356
        %vm689 = vcmp.eq.s32.totalorder %v619, %v356
        %vm690 = vcmp.eq.s32.totalorder %v622, %v356
        %vm691 = vcmp.eq.s32.totalorder %v625, %v356
        %vm692 = vcmp.eq.s32.totalorder %v628, %v356
        %vm693 = vcmp.eq.s32.totalorder %v631, %v356
        %vm694 = vcmp.eq.s32.totalorder %v634, %v356
        %vm695 = vcmp.eq.s32.totalorder %v637, %v356
        %vm696 = vcmp.eq.s32.totalorder %v640, %v356
        %vm697 = vcmp.eq.s32.totalorder %v643, %v356
        %vm698 = vcmp.eq.s32.totalorder %v646, %v356
        %vm699 = vcmp.eq.s32.totalorder %v649, %v356
        %vm700 = vcmp.eq.s32.totalorder %v652, %v356
        %vm701 = vcmp.eq.s32.totalorder %v655, %v356
        %vm702 = vcmp.eq.s32.totalorder %v658, %v356
        %vm703 = vcmp.eq.s32.totalorder %v661, %v356
        %vm704 = vcmp.eq.s32.totalorder %v664, %v356
        %vm705 = vcmp.eq.s32.totalorder %v667, %v356
        %vm706 = vcmp.eq.s32.totalorder %v670, %v356
        %vm707 = vcmp.eq.s32.totalorder %v673, %v356
        %vm708 = vcmp.eq.s32.totalorder %v676, %v356
        %v709 = vsel %vm677, 1, 0
        %v710 = vsel %vm678, 1, 0
        %v711 = vsel %vm679, 1, 0
        %v712 = vsel %vm680, 1, 0
        %v713 = vsel %vm681, 1, 0
        %v714 = vsel %vm682, 1, 0
        %v715 = vsel %vm683, 1, 0
        %v716 = vsel %vm684, 1, 0
        %v717 = vsel %vm685, 1, 0
        %v718 = vsel %vm686, 1, 0
        %v719 = vsel %vm687, 1, 0
        %v720 = vsel %vm688, 1, 0
        %v721 = vsel %vm689, 1, 0
        %v722 = vsel %vm690, 1, 0
        %v723 = vsel %vm691, 1, 0
        %v724 = vsel %vm692, 1, 0
        %v725 = vsel %vm693, 1, 0
        %v726 = vsel %vm694, 1, 0
        %v727 = vsel %vm695, 1, 0
        %v728 = vsel %vm696, 1, 0
        %v729 = vsel %vm697, 1, 0
        %v730 = vsel %vm698, 1, 0
        %v731 = vsel %vm699, 1, 0
        %v732 = vsel %vm700, 1, 0
        %v733 = vsel %vm701, 1, 0
        %v734 = vsel %vm702, 1, 0
        %v735 = vsel %vm703, 1, 0
        %v736 = vsel %vm704, 1, 0
        %v737 = vsel %vm705, 1, 0
        %v738 = vsel %vm706, 1, 0
        %v739 = vsel %vm707, 1, 0
        %v740 = vsel %vm708, 1, 0
        %v741 = vcvt.s32.f32 %v709
        %v742 = vcvt.s32.f32 %v710
        %v743 = vcvt.s32.f32 %v711
        %v744 = vcvt.s32.f32 %v712
        %v745 = vcvt.s32.f32 %v713
        %v746 = vcvt.s32.f32 %v714
        %v747 = vcvt.s32.f32 %v715
        %v748 = vcvt.s32.f32 %v716
        %v749 = vcvt.s32.f32 %v717
        %v750 = vcvt.s32.f32 %v718
        %v751 = vcvt.s32.f32 %v719
        %v752 = vcvt.s32.f32 %v720
        %v753 = vcvt.s32.f32 %v721
        %v754 = vcvt.s32.f32 %v722
        %v755 = vcvt.s32.f32 %v723
        %v756 = vcvt.s32.f32 %v724
        %v757 = vcvt.s32.f32 %v725
        %v758 = vcvt.s32.f32 %v726
        %v759 = vcvt.s32.f32 %v727
        %v760 = vcvt.s32.f32 %v728
        %v761 = vcvt.s32.f32 %v729
        %v762 = vcvt.s32.f32 %v730
        %v763 = vcvt.s32.f32 %v731
        %v764 = vcvt.s32.f32 %v732
        %v765 = vcvt.s32.f32 %v733
        %v766 = vcvt.s32.f32 %v734
        %v767 = vcvt.s32.f32 %v735
        %v768 = vcvt.s32.f32 %v736
        %v769 = vcvt.s32.f32 %v737
        %v770 = vcvt.s32.f32 %v738
        %v771 = vcvt.s32.f32 %v739
        %v772 = vcvt.s32.f32 %v740
        %v773 = vadd.f32 %v549, %v741
        %v774 = vadd.f32 %v550, %v742
        %v775 = vadd.f32 %v551, %v743
        %v776 = vadd.f32 %v552, %v744
        %v777 = vadd.f32 %v553, %v745
        %v778 = vadd.f32 %v554, %v746
        %v779 = vadd.f32 %v555, %v747
        %v780 = vadd.f32 %v556, %v748
        %v781 = vadd.f32 %v557, %v749
        %v782 = vadd.f32 %v558, %v750
        %v783 = vadd.f32 %v559, %v751
        %v784 = vadd.f32 %v560, %v752
        %v785 = vadd.f32 %v561, %v753
        %v786 = vadd.f32 %v562, %v754
        %v787 = vadd.f32 %v563, %v755
        %v788 = vadd.f32 %v564, %v756
        %v789 = vadd.f32 %v565, %v757
        %v790 = vadd.f32 %v566, %v758
        %v791 = vadd.f32 %v567, %v759
        %v792 = vadd.f32 %v568, %v760
        %v793 = vadd.f32 %v569, %v761
        %v794 = vadd.f32 %v570, %v762
        %v795 = vadd.f32 %v571, %v763
        %v796 = vadd.f32 %v572, %v764
        %v797 = vadd.f32 %v573, %v765
        %v798 = vadd.f32 %v574, %v766
        %v799 = vadd.f32 %v575, %v767
        %v800 = vadd.f32 %v576, %v768
        %v801 = vadd.f32 %v577, %v769
        %v802 = vadd.f32 %v578, %v770
        %v803 = vadd.f32 %v579, %v771
        %v804 = vadd.f32 %v580, %v772
        %805 = vset.pattern.permute.xlu0 2
        %806 = vperm.xlu0 %805, %v307
        %v807 = vpop.permute.xlu0 %806
        %808 = vset.pattern.permute.xlu0 2
        %809 = vperm.xlu0 %808, %v308
        %v810 = vpop.permute.xlu0 %809
        %811 = vset.pattern.permute.xlu0 2
        %812 = vperm.xlu0 %811, %v309
        %v813 = vpop.permute.xlu0 %812
        %814 = vset.pattern.permute.xlu0 2
        %815 = vperm.xlu0 %814, %v310
        %v816 = vpop.permute.xlu0 %815
        %817 = vset.pattern.permute.xlu0 2
        %818 = vperm.xlu0 %817, %v311
        %v819 = vpop.permute.xlu0 %818
        %820 = vset.pattern.permute.xlu0 2
        %821 = vperm.xlu0 %820, %v312
        %v822 = vpop.permute.xlu0 %821
        %823 = vset.pattern.permute.xlu0 2
        %824 = vperm.xlu0 %823, %v313
        %v825 = vpop.permute.xlu0 %824
        %826 = vset.pattern.permute.xlu0 2
        %827 = vperm.xlu0 %826, %v314
        %v828 = vpop.permute.xlu0 %827
        %829 = vset.pattern.permute.xlu0 2
        %830 = vperm.xlu0 %829, %v315
        %v831 = vpop.permute.xlu0 %830
        %832 = vset.pattern.permute.xlu0 2
        %833 = vperm.xlu0 %832, %v316
        %v834 = vpop.permute.xlu0 %833
        %835 = vset.pattern.permute.xlu0 2
        %836 = vperm.xlu0 %835, %v317
        %v837 = vpop.permute.xlu0 %836
        %838 = vset.pattern.permute.xlu0 2
        %839 = vperm.xlu0 %838, %v318
        %v840 = vpop.permute.xlu0 %839
        %841 = vset.pattern.permute.xlu0 2
        %842 = vperm.xlu0 %841, %v319
        %v843 = vpop.permute.xlu0 %842
        %844 = vset.pattern.permute.xlu0 2
        %845 = vperm.xlu0 %844, %v320
        %v846 = vpop.permute.xlu0 %845
        %847 = vset.pattern.permute.xlu0 2
        %848 = vperm.xlu0 %847, %v321
        %v849 = vpop.permute.xlu0 %848
        %850 = vset.pattern.permute.xlu0 2
        %851 = vperm.xlu0 %850, %v322
        %v852 = vpop.permute.xlu0 %851
        %853 = vset.pattern.permute.xlu0 2
        %854 = vperm.xlu0 %853, %v324
        %v855 = vpop.permute.xlu0 %854
        %856 = vset.pattern.permute.xlu0 2
        %857 = vperm.xlu0 %856, %v326
        %v858 = vpop.permute.xlu0 %857
        %859 = vset.pattern.permute.xlu0 2
        %860 = vperm.xlu0 %859, %v328
        %v861 = vpop.permute.xlu0 %860
        %862 = vset.pattern.permute.xlu0 2
        %863 = vperm.xlu0 %862, %v330
        %v864 = vpop.permute.xlu0 %863
        %865 = vset.pattern.permute.xlu0 2
        %866 = vperm.xlu0 %865, %v332
        %v867 = vpop.permute.xlu0 %866
        %868 = vset.pattern.permute.xlu0 2
        %869 = vperm.xlu0 %868, %v334
        %v870 = vpop.permute.xlu0 %869
        %871 = vset.pattern.permute.xlu0 2
        %872 = vperm.xlu0 %871, %v336
        %v873 = vpop.permute.xlu0 %872
        %874 = vset.pattern.permute.xlu0 2
        %875 = vperm.xlu0 %874, %v338
        %v876 = vpop.permute.xlu0 %875
        %877 = vset.pattern.permute.xlu0 2
        %878 = vperm.xlu0 %877, %v340
        %v879 = vpop.permute.xlu0 %878
        %880 = vset.pattern.permute.xlu0 2
        %881 = vperm.xlu0 %880, %v342
        %v882 = vpop.permute.xlu0 %881
        %883 = vset.pattern.permute.xlu0 2
        %884 = vperm.xlu0 %883, %v344
        %v885 = vpop.permute.xlu0 %884
        %886 = vset.pattern.permute.xlu0 2
        %887 = vperm.xlu0 %886, %v346
        %v888 = vpop.permute.xlu0 %887
        %889 = vset.pattern.permute.xlu0 2
        %890 = vperm.xlu0 %889, %v348
        %v891 = vpop.permute.xlu0 %890
        %892 = vset.pattern.permute.xlu0 2
        %893 = vperm.xlu0 %892, %v350
        %v894 = vpop.permute.xlu0 %893
        %895 = vset.pattern.permute.xlu0 2
        %896 = vperm.xlu0 %895, %v352
        %v897 = vpop.permute.xlu0 %896
        %898 = vset.pattern.permute.xlu0 2
        %899 = vperm.xlu0 %898, %v354
        %v900 = vpop.permute.xlu0 %899
        %vm901 = vcmp.eq.s32.totalorder %v807, %v356
        %vm902 = vcmp.eq.s32.totalorder %v810, %v356
        %vm903 = vcmp.eq.s32.totalorder %v813, %v356
        %vm904 = vcmp.eq.s32.totalorder %v816, %v356
        %vm905 = vcmp.eq.s32.totalorder %v819, %v356
        %vm906 = vcmp.eq.s32.totalorder %v822, %v356
        %vm907 = vcmp.eq.s32.totalorder %v825, %v356
        %vm908 = vcmp.eq.s32.totalorder %v828, %v356
        %vm909 = vcmp.eq.s32.totalorder %v831, %v356
        %vm910 = vcmp.eq.s32.totalorder %v834, %v356
        %vm911 = vcmp.eq.s32.totalorder %v837, %v356
        %vm912 = vcmp.eq.s32.totalorder %v840, %v356
        %vm913 = vcmp.eq.s32.totalorder %v843, %v356
        %vm914 = vcmp.eq.s32.totalorder %v846, %v356
        %vm915 = vcmp.eq.s32.totalorder %v849, %v356
        %vm916 = vcmp.eq.s32.totalorder %v852, %v356
        %vm917 = vcmp.eq.s32.totalorder %v855, %v356
        %vm918 = vcmp.eq.s32.totalorder %v858, %v356
        %vm919 = vcmp.eq.s32.totalorder %v861, %v356
        %vm920 = vcmp.eq.s32.totalorder %v864, %v356
        %vm921 = vcmp.eq.s32.totalorder %v867, %v356
        %vm922 = vcmp.eq.s32.totalorder %v870, %v356
        %vm923 = vcmp.eq.s32.totalorder %v873, %v356
        %vm924 = vcmp.eq.s32.totalorder %v876, %v356
        %vm925 = vcmp.eq.s32.totalorder %v879, %v356
        %vm926 = vcmp.eq.s32.totalorder %v882, %v356
        %vm927 = vcmp.eq.s32.totalorder %v885, %v356
        %vm928 = vcmp.eq.s32.totalorder %v888, %v356
        %vm929 = vcmp.eq.s32.totalorder %v891, %v356
        %vm930 = vcmp.eq.s32.totalorder %v894, %v356
        %vm931 = vcmp.eq.s32.totalorder %v897, %v356
        %vm932 = vcmp.eq.s32.totalorder %v900, %v356
        %v933 = vsel %vm901, 1, 0
        %v934 = vsel %vm902, 1, 0
        %v935 = vsel %vm903, 1, 0
        %v936 = vsel %vm904, 1, 0
        %v937 = vsel %vm905, 1, 0
        %v938 = vsel %vm906, 1, 0
        %v939 = vsel %vm907, 1, 0
        %v940 = vsel %vm908, 1, 0
        %v941 = vsel %vm909, 1, 0
        %v942 = vsel %vm910, 1, 0
        %v943 = vsel %vm911, 1, 0
        %v944 = vsel %vm912, 1, 0
        %v945 = vsel %vm913, 1, 0
        %v946 = vsel %vm914, 1, 0
        %v947 = vsel %vm915, 1, 0
        %v948 = vsel %vm916, 1, 0
        %v949 = vsel %vm917, 1, 0
        %v950 = vsel %vm918, 1, 0
        %v951 = vsel %vm919, 1, 0
        %v952 = vsel %vm920, 1, 0
        %v953 = vsel %vm921, 1, 0
        %v954 = vsel %vm922, 1, 0
        %v955 = vsel %vm923, 1, 0
        %v956 = vsel %vm924, 1, 0
        %v957 = vsel %vm925, 1, 0
        %v958 = vsel %vm926, 1, 0
        %v959 = vsel %vm927, 1, 0
        %v960 = vsel %vm928, 1, 0
        %v961 = vsel %vm929, 1, 0
        %v962 = vsel %vm930, 1, 0
        %v963 = vsel %vm931, 1, 0
        %v964 = vsel %vm932, 1, 0
        %v965 = vcvt.s32.f32 %v933
        %v966 = vcvt.s32.f32 %v934
        %v967 = vcvt.s32.f32 %v935
        %v968 = vcvt.s32.f32 %v936
        %v969 = vcvt.s32.f32 %v937
        %v970 = vcvt.s32.f32 %v938
        %v971 = vcvt.s32.f32 %v939
        %v972 = vcvt.s32.f32 %v940
        %v973 = vcvt.s32.f32 %v941
        %v974 = vcvt.s32.f32 %v942
        %v975 = vcvt.s32.f32 %v943
        %v976 = vcvt.s32.f32 %v944
        %v977 = vcvt.s32.f32 %v945
        %v978 = vcvt.s32.f32 %v946
        %v979 = vcvt.s32.f32 %v947
        %v980 = vcvt.s32.f32 %v948
        %v981 = vcvt.s32.f32 %v949
        %v982 = vcvt.s32.f32 %v950
        %v983 = vcvt.s32.f32 %v951
        %v984 = vcvt.s32.f32 %v952
        %v985 = vcvt.s32.f32 %v953
        %v986 = vcvt.s32.f32 %v954
        %v987 = vcvt.s32.f32 %v955
        %v988 = vcvt.s32.f32 %v956
        %v989 = vcvt.s32.f32 %v957
        %v990 = vcvt.s32.f32 %v958
        %v991 = vcvt.s32.f32 %v959
        %v992 = vcvt.s32.f32 %v960
        %v993 = vcvt.s32.f32 %v961
        %v994 = vcvt.s32.f32 %v962
        %v995 = vcvt.s32.f32 %v963
        %v996 = vcvt.s32.f32 %v964
        %v997 = vadd.f32 %v773, %v965
        %v998 = vadd.f32 %v774, %v966
        %v999 = vadd.f32 %v775, %v967
        %v1000 = vadd.f32 %v776, %v968
        %v1001 = vadd.f32 %v777, %v969
        %v1002 = vadd.f32 %v778, %v970
        %v1003 = vadd.f32 %v779, %v971
        %v1004 = vadd.f32 %v780, %v972
        %v1005 = vadd.f32 %v781, %v973
        %v1006 = vadd.f32 %v782, %v974
        %v1007 = vadd.f32 %v783, %v975
        %v1008 = vadd.f32 %v784, %v976
        %v1009 = vadd.f32 %v785, %v977
        %v1010 = vadd.f32 %v786, %v978
        %v1011 = vadd.f32 %v787, %v979
        %v1012 = vadd.f32 %v788, %v980
        %v1013 = vadd.f32 %v789, %v981
        %v1014 = vadd.f32 %v790, %v982
        %v1015 = vadd.f32 %v791, %v983
        %v1016 = vadd.f32 %v792, %v984
        %v1017 = vadd.f32 %v793, %v985
        %v1018 = vadd.f32 %v794, %v986
        %v1019 = vadd.f32 %v795, %v987
        %v1020 = vadd.f32 %v796, %v988
        %v1021 = vadd.f32 %v797, %v989
        %v1022 = vadd.f32 %v798, %v990
        %v1023 = vadd.f32 %v799, %v991
        %v1024 = vadd.f32 %v800, %v992
        %v1025 = vadd.f32 %v801, %v993
        %v1026 = vadd.f32 %v802, %v994
        %v1027 = vadd.f32 %v803, %v995
        %v1028 = vadd.f32 %v804, %v996
        %1029 = vset.pattern.permute.xlu0 3
        %1030 = vperm.xlu0 %1029, %v307
        %v1031 = vpop.permute.xlu0 %1030
        %1032 = vset.pattern.permute.xlu0 3
        %1033 = vperm.xlu0 %1032, %v308
        %v1034 = vpop.permute.xlu0 %1033
        %1035 = vset.pattern.permute.xlu0 3
        %1036 = vperm.xlu0 %1035, %v309
        %v1037 = vpop.permute.xlu0 %1036
        %1038 = vset.pattern.permute.xlu0 3
        %1039 = vperm.xlu0 %1038, %v310
        %v1040 = vpop.permute.xlu0 %1039
        %1041 = vset.pattern.permute.xlu0 3
        %1042 = vperm.xlu0 %1041, %v311
        %v1043 = vpop.permute.xlu0 %1042
        %1044 = vset.pattern.permute.xlu0 3
        %1045 = vperm.xlu0 %1044, %v312
        %v1046 = vpop.permute.xlu0 %1045
        %1047 = vset.pattern.permute.xlu0 3
        %1048 = vperm.xlu0 %1047, %v313
        %v1049 = vpop.permute.xlu0 %1048
        %1050 = vset.pattern.permute.xlu0 3
        %1051 = vperm.xlu0 %1050, %v314
        %v1052 = vpop.permute.xlu0 %1051
        %1053 = vset.pattern.permute.xlu0 3
        %1054 = vperm.xlu0 %1053, %v315
        %v1055 = vpop.permute.xlu0 %1054
        %1056 = vset.pattern.permute.xlu0 3
        %1057 = vperm.xlu0 %1056, %v316
        %v1058 = vpop.permute.xlu0 %1057
        %1059 = vset.pattern.permute.xlu0 3
        %1060 = vperm.xlu0 %1059, %v317
        %v1061 = vpop.permute.xlu0 %1060
        %1062 = vset.pattern.permute.xlu0 3
        %1063 = vperm.xlu0 %1062, %v318
        %v1064 = vpop.permute.xlu0 %1063
        %1065 = vset.pattern.permute.xlu0 3
        %1066 = vperm.xlu0 %1065, %v319
        %v1067 = vpop.permute.xlu0 %1066
        %1068 = vset.pattern.permute.xlu0 3
        %1069 = vperm.xlu0 %1068, %v320
        %v1070 = vpop.permute.xlu0 %1069
        %1071 = vset.pattern.permute.xlu0 3
        %1072 = vperm.xlu0 %1071, %v321
        %v1073 = vpop.permute.xlu0 %1072
        %1074 = vset.pattern.permute.xlu0 3
        %1075 = vperm.xlu0 %1074, %v322
        %v1076 = vpop.permute.xlu0 %1075
        %1077 = vset.pattern.permute.xlu0 3
        %1078 = vperm.xlu0 %1077, %v324
        %v1079 = vpop.permute.xlu0 %1078
        %1080 = vset.pattern.permute.xlu0 3
        %1081 = vperm.xlu0 %1080, %v326
        %v1082 = vpop.permute.xlu0 %1081
        %1083 = vset.pattern.permute.xlu0 3
        %1084 = vperm.xlu0 %1083, %v328
        %v1085 = vpop.permute.xlu0 %1084
        %1086 = vset.pattern.permute.xlu0 3
        %1087 = vperm.xlu0 %1086, %v330
        %v1088 = vpop.permute.xlu0 %1087
        %1089 = vset.pattern.permute.xlu0 3
        %1090 = vperm.xlu0 %1089, %v332
        %v1091 = vpop.permute.xlu0 %1090
        %1092 = vset.pattern.permute.xlu0 3
        %1093 = vperm.xlu0 %1092, %v334
        %v1094 = vpop.permute.xlu0 %1093
        %1095 = vset.pattern.permute.xlu0 3
        %1096 = vperm.xlu0 %1095, %v336
        %v1097 = vpop.permute.xlu0 %1096
        %1098 = vset.pattern.permute.xlu0 3
        %1099 = vperm.xlu0 %1098, %v338
        %v1100 = vpop.permute.xlu0 %1099
        %1101 = vset.pattern.permute.xlu0 3
        %1102 = vperm.xlu0 %1101, %v340
        %v1103 = vpop.permute.xlu0 %1102
        %1104 = vset.pattern.permute.xlu0 3
        %1105 = vperm.xlu0 %1104, %v342
        %v1106 = vpop.permute.xlu0 %1105
        %1107 = vset.pattern.permute.xlu0 3
        %1108 = vperm.xlu0 %1107, %v344
        %v1109 = vpop.permute.xlu0 %1108
        %1110 = vset.pattern.permute.xlu0 3
        %1111 = vperm.xlu0 %1110, %v346
        %v1112 = vpop.permute.xlu0 %1111
        %1113 = vset.pattern.permute.xlu0 3
        %1114 = vperm.xlu0 %1113, %v348
        %v1115 = vpop.permute.xlu0 %1114
        %1116 = vset.pattern.permute.xlu0 3
        %1117 = vperm.xlu0 %1116, %v350
        %v1118 = vpop.permute.xlu0 %1117
        %1119 = vset.pattern.permute.xlu0 3
        %1120 = vperm.xlu0 %1119, %v352
        %v1121 = vpop.permute.xlu0 %1120
        %1122 = vset.pattern.permute.xlu0 3
        %1123 = vperm.xlu0 %1122, %v354
        %v1124 = vpop.permute.xlu0 %1123
        %vm1125 = vcmp.eq.s32.totalorder %v1031, %v356
        %vm1126 = vcmp.eq.s32.totalorder %v1034, %v356
        %vm1127 = vcmp.eq.s32.totalorder %v1037, %v356
        %vm1128 = vcmp.eq.s32.totalorder %v1040, %v356
        %vm1129 = vcmp.eq.s32.totalorder %v1043, %v356
        %vm1130 = vcmp.eq.s32.totalorder %v1046, %v356
        %vm1131 = vcmp.eq.s32.totalorder %v1049, %v356
        %vm1132 = vcmp.eq.s32.totalorder %v1052, %v356
        %vm1133 = vcmp.eq.s32.totalorder %v1055, %v356
        %vm1134 = vcmp.eq.s32.totalorder %v1058, %v356
        %vm1135 = vcmp.eq.s32.totalorder %v1061, %v356
        %vm1136 = vcmp.eq.s32.totalorder %v1064, %v356
        %vm1137 = vcmp.eq.s32.totalorder %v1067, %v356
        %vm1138 = vcmp.eq.s32.totalorder %v1070, %v356
        %vm1139 = vcmp.eq.s32.totalorder %v1073, %v356
        %vm1140 = vcmp.eq.s32.totalorder %v1076, %v356
        %vm1141 = vcmp.eq.s32.totalorder %v1079, %v356
        %vm1142 = vcmp.eq.s32.totalorder %v1082, %v356
        %vm1143 = vcmp.eq.s32.totalorder %v1085, %v356
        %vm1144 = vcmp.eq.s32.totalorder %v1088, %v356
        %vm1145 = vcmp.eq.s32.totalorder %v1091, %v356
        %vm1146 = vcmp.eq.s32.totalorder %v1094, %v356
        %vm1147 = vcmp.eq.s32.totalorder %v1097, %v356
        %vm1148 = vcmp.eq.s32.totalorder %v1100, %v356
        %vm1149 = vcmp.eq.s32.totalorder %v1103, %v356
        %vm1150 = vcmp.eq.s32.totalorder %v1106, %v356
        %vm1151 = vcmp.eq.s32.totalorder %v1109, %v356
        %vm1152 = vcmp.eq.s32.totalorder %v1112, %v356
        %vm1153 = vcmp.eq.s32.totalorder %v1115, %v356
        %vm1154 = vcmp.eq.s32.totalorder %v1118, %v356
        %vm1155 = vcmp.eq.s32.totalorder %v1121, %v356
        %vm1156 = vcmp.eq.s32.totalorder %v1124, %v356
        %v1157 = vsel %vm1125, 1, 0
        %v1158 = vsel %vm1126, 1, 0
        %v1159 = vsel %vm1127, 1, 0
        %v1160 = vsel %vm1128, 1, 0
        %v1161 = vsel %vm1129, 1, 0
        %v1162 = vsel %vm1130, 1, 0
        %v1163 = vsel %vm1131, 1, 0
        %v1164 = vsel %vm1132, 1, 0
        %v1165 = vsel %vm1133, 1, 0
        %v1166 = vsel %vm1134, 1, 0
        %v1167 = vsel %vm1135, 1, 0
        %v1168 = vsel %vm1136, 1, 0
        %v1169 = vsel %vm1137, 1, 0
        %v1170 = vsel %vm1138, 1, 0
        %v1171 = vsel %vm1139, 1, 0
        %v1172 = vsel %vm1140, 1, 0
        %v1173 = vsel %vm1141, 1, 0
        %v1174 = vsel %vm1142, 1, 0
        %v1175 = vsel %vm1143, 1, 0
        %v1176 = vsel %vm1144, 1, 0
        %v1177 = vsel %vm1145, 1, 0
        %v1178 = vsel %vm1146, 1, 0
        %v1179 = vsel %vm1147, 1, 0
        %v1180 = vsel %vm1148, 1, 0
        %v1181 = vsel %vm1149, 1, 0
        %v1182 = vsel %vm1150, 1, 0
        %v1183 = vsel %vm1151, 1, 0
        %v1184 = vsel %vm1152, 1, 0
        %v1185 = vsel %vm1153, 1, 0
        %v1186 = vsel %vm1154, 1, 0
        %v1187 = vsel %vm1155, 1, 0
        %v1188 = vsel %vm1156, 1, 0
        %v1189 = vcvt.s32.f32 %v1157
        %v1190 = vcvt.s32.f32 %v1158
        %v1191 = vcvt.s32.f32 %v1159
        %v1192 = vcvt.s32.f32 %v1160
        %v1193 = vcvt.s32.f32 %v1161
        %v1194 = vcvt.s32.f32 %v1162
        %v1195 = vcvt.s32.f32 %v1163
        %v1196 = vcvt.s32.f32 %v1164
        %v1197 = vcvt.s32.f32 %v1165
        %v1198 = vcvt.s32.f32 %v1166
        %v1199 = vcvt.s32.f32 %v1167
        %v1200 = vcvt.s32.f32 %v1168
        %v1201 = vcvt.s32.f32 %v1169
        %v1202 = vcvt.s32.f32 %v1170
        %v1203 = vcvt.s32.f32 %v1171
        %v1204 = vcvt.s32.f32 %v1172
        %v1205 = vcvt.s32.f32 %v1173
        %v1206 = vcvt.s32.f32 %v1174
        %v1207 = vcvt.s32.f32 %v1175
        %v1208 = vcvt.s32.f32 %v1176
        %v1209 = vcvt.s32.f32 %v1177
        %v1210 = vcvt.s32.f32 %v1178
        %v1211 = vcvt.s32.f32 %v1179
        %v1212 = vcvt.s32.f32 %v1180
        %v1213 = vcvt.s32.f32 %v1181
        %v1214 = vcvt.s32.f32 %v1182
        %v1215 = vcvt.s32.f32 %v1183
        %v1216 = vcvt.s32.f32 %v1184
        %v1217 = vcvt.s32.f32 %v1185
        %v1218 = vcvt.s32.f32 %v1186
        %v1219 = vcvt.s32.f32 %v1187
        %v1220 = vcvt.s32.f32 %v1188
        %v1221 = vadd.f32 %v997, %v1189
        %v1222 = vadd.f32 %v998, %v1190
        %v1223 = vadd.f32 %v999, %v1191
        %v1224 = vadd.f32 %v1000, %v1192
        %v1225 = vadd.f32 %v1001, %v1193
        %v1226 = vadd.f32 %v1002, %v1194
        %v1227 = vadd.f32 %v1003, %v1195
        %v1228 = vadd.f32 %v1004, %v1196
        %v1229 = vadd.f32 %v1005, %v1197
        %v1230 = vadd.f32 %v1006, %v1198
        %v1231 = vadd.f32 %v1007, %v1199
        %v1232 = vadd.f32 %v1008, %v1200
        %v1233 = vadd.f32 %v1009, %v1201
        %v1234 = vadd.f32 %v1010, %v1202
        %v1235 = vadd.f32 %v1011, %v1203
        %v1236 = vadd.f32 %v1012, %v1204
        %v1237 = vadd.f32 %v1013, %v1205
        %v1238 = vadd.f32 %v1014, %v1206
        %v1239 = vadd.f32 %v1015, %v1207
        %v1240 = vadd.f32 %v1016, %v1208
        %v1241 = vadd.f32 %v1017, %v1209
        %v1242 = vadd.f32 %v1018, %v1210
        %v1243 = vadd.f32 %v1019, %v1211
        %v1244 = vadd.f32 %v1020, %v1212
        %v1245 = vadd.f32 %v1021, %v1213
        %v1246 = vadd.f32 %v1022, %v1214
        %v1247 = vadd.f32 %v1023, %v1215
        %v1248 = vadd.f32 %v1024, %v1216
        %v1249 = vadd.f32 %v1025, %v1217
        %v1250 = vadd.f32 %v1026, %v1218
        %v1251 = vadd.f32 %v1027, %v1219
        %v1252 = vadd.f32 %v1028, %v1220
        %1253 = vset.pattern.permute.xlu0 4
        %1254 = vperm.xlu0 %1253, %v307
        %v1255 = vpop.permute.xlu0 %1254
        %1256 = vset.pattern.permute.xlu0 4
        %1257 = vperm.xlu0 %1256, %v308
        %v1258 = vpop.permute.xlu0 %1257
        %1259 = vset.pattern.permute.xlu0 4
        %1260 = vperm.xlu0 %1259, %v309
        %v1261 = vpop.permute.xlu0 %1260
        %1262 = vset.pattern.permute.xlu0 4
        %1263 = vperm.xlu0 %1262, %v310
        %v1264 = vpop.permute.xlu0 %1263
        %1265 = vset.pattern.permute.xlu0 4
        %1266 = vperm.xlu0 %1265, %v311
        %v1267 = vpop.permute.xlu0 %1266
        %1268 = vset.pattern.permute.xlu0 4
        %1269 = vperm.xlu0 %1268, %v312
        %v1270 = vpop.permute.xlu0 %1269
        %1271 = vset.pattern.permute.xlu0 4
        %1272 = vperm.xlu0 %1271, %v313
        %v1273 = vpop.permute.xlu0 %1272
        %1274 = vset.pattern.permute.xlu0 4
        %1275 = vperm.xlu0 %1274, %v314
        %v1276 = vpop.permute.xlu0 %1275
        %1277 = vset.pattern.permute.xlu0 4
        %1278 = vperm.xlu0 %1277, %v315
        %v1279 = vpop.permute.xlu0 %1278
        %1280 = vset.pattern.permute.xlu0 4
        %1281 = vperm.xlu0 %1280, %v316
        %v1282 = vpop.permute.xlu0 %1281
        %1283 = vset.pattern.permute.xlu0 4
        %1284 = vperm.xlu0 %1283, %v317
        %v1285 = vpop.permute.xlu0 %1284
        %1286 = vset.pattern.permute.xlu0 4
        %1287 = vperm.xlu0 %1286, %v318
        %v1288 = vpop.permute.xlu0 %1287
        %1289 = vset.pattern.permute.xlu0 4
        %1290 = vperm.xlu0 %1289, %v319
        %v1291 = vpop.permute.xlu0 %1290
        %1292 = vset.pattern.permute.xlu0 4
        %1293 = vperm.xlu0 %1292, %v320
        %v1294 = vpop.permute.xlu0 %1293
        %1295 = vset.pattern.permute.xlu0 4
        %1296 = vperm.xlu0 %1295, %v321
        %v1297 = vpop.permute.xlu0 %1296
        %1298 = vset.pattern.permute.xlu0 4
        %1299 = vperm.xlu0 %1298, %v322
        %v1300 = vpop.permute.xlu0 %1299
        %1301 = vset.pattern.permute.xlu0 4
        %1302 = vperm.xlu0 %1301, %v324
        %v1303 = vpop.permute.xlu0 %1302
        %1304 = vset.pattern.permute.xlu0 4
        %1305 = vperm.xlu0 %1304, %v326
        %v1306 = vpop.permute.xlu0 %1305
        %1307 = vset.pattern.permute.xlu0 4
        %1308 = vperm.xlu0 %1307, %v328
        %v1309 = vpop.permute.xlu0 %1308
        %1310 = vset.pattern.permute.xlu0 4
        %1311 = vperm.xlu0 %1310, %v330
        %v1312 = vpop.permute.xlu0 %1311
        %1313 = vset.pattern.permute.xlu0 4
        %1314 = vperm.xlu0 %1313, %v332
        %v1315 = vpop.permute.xlu0 %1314
        %1316 = vset.pattern.permute.xlu0 4
        %1317 = vperm.xlu0 %1316, %v334
        %v1318 = vpop.permute.xlu0 %1317
        %1319 = vset.pattern.permute.xlu0 4
        %1320 = vperm.xlu0 %1319, %v336
        %v1321 = vpop.permute.xlu0 %1320
        %1322 = vset.pattern.permute.xlu0 4
        %1323 = vperm.xlu0 %1322, %v338
        %v1324 = vpop.permute.xlu0 %1323
        %1325 = vset.pattern.permute.xlu0 4
        %1326 = vperm.xlu0 %1325, %v340
        %v1327 = vpop.permute.xlu0 %1326
        %1328 = vset.pattern.permute.xlu0 4
        %1329 = vperm.xlu0 %1328, %v342
        %v1330 = vpop.permute.xlu0 %1329
        %1331 = vset.pattern.permute.xlu0 4
        %1332 = vperm.xlu0 %1331, %v344
        %v1333 = vpop.permute.xlu0 %1332
        %1334 = vset.pattern.permute.xlu0 4
        %1335 = vperm.xlu0 %1334, %v346
        %v1336 = vpop.permute.xlu0 %1335
        %1337 = vset.pattern.permute.xlu0 4
        %1338 = vperm.xlu0 %1337, %v348
        %v1339 = vpop.permute.xlu0 %1338
        %1340 = vset.pattern.permute.xlu0 4
        %1341 = vperm.xlu0 %1340, %v350
        %v1342 = vpop.permute.xlu0 %1341
        %1343 = vset.pattern.permute.xlu0 4
        %1344 = vperm.xlu0 %1343, %v352
        %v1345 = vpop.permute.xlu0 %1344
        %1346 = vset.pattern.permute.xlu0 4
        %1347 = vperm.xlu0 %1346, %v354
        %v1348 = vpop.permute.xlu0 %1347
        %vm1349 = vcmp.eq.s32.totalorder %v1255, %v356
        %vm1350 = vcmp.eq.s32.totalorder %v1258, %v356
        %vm1351 = vcmp.eq.s32.totalorder %v1261, %v356
        %vm1352 = vcmp.eq.s32.totalorder %v1264, %v356
        %vm1353 = vcmp.eq.s32.totalorder %v1267, %v356
        %vm1354 = vcmp.eq.s32.totalorder %v1270, %v356
        %vm1355 = vcmp.eq.s32.totalorder %v1273, %v356
        %vm1356 = vcmp.eq.s32.totalorder %v1276, %v356
        %vm1357 = vcmp.eq.s32.totalorder %v1279, %v356
        %vm1358 = vcmp.eq.s32.totalorder %v1282, %v356
        %vm1359 = vcmp.eq.s32.totalorder %v1285, %v356
        %vm1360 = vcmp.eq.s32.totalorder %v1288, %v356
        %vm1361 = vcmp.eq.s32.totalorder %v1291, %v356
        %vm1362 = vcmp.eq.s32.totalorder %v1294, %v356
        %vm1363 = vcmp.eq.s32.totalorder %v1297, %v356
        %vm1364 = vcmp.eq.s32.totalorder %v1300, %v356
        %vm1365 = vcmp.eq.s32.totalorder %v1303, %v356
        %vm1366 = vcmp.eq.s32.totalorder %v1306, %v356
        %vm1367 = vcmp.eq.s32.totalorder %v1309, %v356
        %vm1368 = vcmp.eq.s32.totalorder %v1312, %v356
        %vm1369 = vcmp.eq.s32.totalorder %v1315, %v356
        %vm1370 = vcmp.eq.s32.totalorder %v1318, %v356
        %vm1371 = vcmp.eq.s32.totalorder %v1321, %v356
        %vm1372 = vcmp.eq.s32.totalorder %v1324, %v356
        %vm1373 = vcmp.eq.s32.totalorder %v1327, %v356
        %vm1374 = vcmp.eq.s32.totalorder %v1330, %v356
        %vm1375 = vcmp.eq.s32.totalorder %v1333, %v356
        %vm1376 = vcmp.eq.s32.totalorder %v1336, %v356
        %vm1377 = vcmp.eq.s32.totalorder %v1339, %v356
        %vm1378 = vcmp.eq.s32.totalorder %v1342, %v356
        %vm1379 = vcmp.eq.s32.totalorder %v1345, %v356
        %vm1380 = vcmp.eq.s32.totalorder %v1348, %v356
        %v1381 = vsel %vm1349, 1, 0
        %v1382 = vsel %vm1350, 1, 0
        %v1383 = vsel %vm1351, 1, 0
        %v1384 = vsel %vm1352, 1, 0
        %v1385 = vsel %vm1353, 1, 0
        %v1386 = vsel %vm1354, 1, 0
        %v1387 = vsel %vm1355, 1, 0
        %v1388 = vsel %vm1356, 1, 0
        %v1389 = vsel %vm1357, 1, 0
        %v1390 = vsel %vm1358, 1, 0
        %v1391 = vsel %vm1359, 1, 0
        %v1392 = vsel %vm1360, 1, 0
        %v1393 = vsel %vm1361, 1, 0
        %v1394 = vsel %vm1362, 1, 0
        %v1395 = vsel %vm1363, 1, 0
        %v1396 = vsel %vm1364, 1, 0
        %v1397 = vsel %vm1365, 1, 0
        %v1398 = vsel %vm1366, 1, 0
        %v1399 = vsel %vm1367, 1, 0
        %v1400 = vsel %vm1368, 1, 0
        %v1401 = vsel %vm1369, 1, 0
        %v1402 = vsel %vm1370, 1, 0
        %v1403 = vsel %vm1371, 1, 0
        %v1404 = vsel %vm1372, 1, 0
        %v1405 = vsel %vm1373, 1, 0
        %v1406 = vsel %vm1374, 1, 0
        %v1407 = vsel %vm1375, 1, 0
        %v1408 = vsel %vm1376, 1, 0
        %v1409 = vsel %vm1377, 1, 0
        %v1410 = vsel %vm1378, 1, 0
        %v1411 = vsel %vm1379, 1, 0
        %v1412 = vsel %vm1380, 1, 0
        %v1413 = vcvt.s32.f32 %v1381
        %v1414 = vcvt.s32.f32 %v1382
        %v1415 = vcvt.s32.f32 %v1383
        %v1416 = vcvt.s32.f32 %v1384
        %v1417 = vcvt.s32.f32 %v1385
        %v1418 = vcvt.s32.f32 %v1386
        %v1419 = vcvt.s32.f32 %v1387
        %v1420 = vcvt.s32.f32 %v1388
        %v1421 = vcvt.s32.f32 %v1389
        %v1422 = vcvt.s32.f32 %v1390
        %v1423 = vcvt.s32.f32 %v1391
        %v1424 = vcvt.s32.f32 %v1392
        %v1425 = vcvt.s32.f32 %v1393
        %v1426 = vcvt.s32.f32 %v1394
        %v1427 = vcvt.s32.f32 %v1395
        %v1428 = vcvt.s32.f32 %v1396
        %v1429 = vcvt.s32.f32 %v1397
        %v1430 = vcvt.s32.f32 %v1398
        %v1431 = vcvt.s32.f32 %v1399
        %v1432 = vcvt.s32.f32 %v1400
        %v1433 = vcvt.s32.f32 %v1401
        %v1434 = vcvt.s32.f32 %v1402
        %v1435 = vcvt.s32.f32 %v1403
        %v1436 = vcvt.s32.f32 %v1404
        %v1437 = vcvt.s32.f32 %v1405
        %v1438 = vcvt.s32.f32 %v1406
        %v1439 = vcvt.s32.f32 %v1407
        %v1440 = vcvt.s32.f32 %v1408
        %v1441 = vcvt.s32.f32 %v1409
        %v1442 = vcvt.s32.f32 %v1410
        %v1443 = vcvt.s32.f32 %v1411
        %v1444 = vcvt.s32.f32 %v1412
        %v1445 = vadd.f32 %v1221, %v1413
        %v1446 = vadd.f32 %v1222, %v1414
        %v1447 = vadd.f32 %v1223, %v1415
        %v1448 = vadd.f32 %v1224, %v1416
        %v1449 = vadd.f32 %v1225, %v1417
        %v1450 = vadd.f32 %v1226, %v1418
        %v1451 = vadd.f32 %v1227, %v1419
        %v1452 = vadd.f32 %v1228, %v1420
        %v1453 = vadd.f32 %v1229, %v1421
        %v1454 = vadd.f32 %v1230, %v1422
        %v1455 = vadd.f32 %v1231, %v1423
        %v1456 = vadd.f32 %v1232, %v1424
        %v1457 = vadd.f32 %v1233, %v1425
        %v1458 = vadd.f32 %v1234, %v1426
        %v1459 = vadd.f32 %v1235, %v1427
        %v1460 = vadd.f32 %v1236, %v1428
        %v1461 = vadd.f32 %v1237, %v1429
        %v1462 = vadd.f32 %v1238, %v1430
        %v1463 = vadd.f32 %v1239, %v1431
        %v1464 = vadd.f32 %v1240, %v1432
        %v1465 = vadd.f32 %v1241, %v1433
        %v1466 = vadd.f32 %v1242, %v1434
        %v1467 = vadd.f32 %v1243, %v1435
        %v1468 = vadd.f32 %v1244, %v1436
        %v1469 = vadd.f32 %v1245, %v1437
        %v1470 = vadd.f32 %v1246, %v1438
        %v1471 = vadd.f32 %v1247, %v1439
        %v1472 = vadd.f32 %v1248, %v1440
        %v1473 = vadd.f32 %v1249, %v1441
        %v1474 = vadd.f32 %v1250, %v1442
        %v1475 = vadd.f32 %v1251, %v1443
        %v1476 = vadd.f32 %v1252, %v1444
        %1477 = vset.pattern.permute.xlu0 5
        %1478 = vperm.xlu0 %1477, %v307
        %v1479 = vpop.permute.xlu0 %1478
        %1480 = vset.pattern.permute.xlu0 5
        %1481 = vperm.xlu0 %1480, %v308
        %v1482 = vpop.permute.xlu0 %1481
        %1483 = vset.pattern.permute.xlu0 5
        %1484 = vperm.xlu0 %1483, %v309
        %v1485 = vpop.permute.xlu0 %1484
        %1486 = vset.pattern.permute.xlu0 5
        %1487 = vperm.xlu0 %1486, %v310
        %v1488 = vpop.permute.xlu0 %1487
        %1489 = vset.pattern.permute.xlu0 5
        %1490 = vperm.xlu0 %1489, %v311
        %v1491 = vpop.permute.xlu0 %1490
        %1492 = vset.pattern.permute.xlu0 5
        %1493 = vperm.xlu0 %1492, %v312
        %v1494 = vpop.permute.xlu0 %1493
        %1495 = vset.pattern.permute.xlu0 5
        %1496 = vperm.xlu0 %1495, %v313
        %v1497 = vpop.permute.xlu0 %1496
        %1498 = vset.pattern.permute.xlu0 5
        %1499 = vperm.xlu0 %1498, %v314
        %v1500 = vpop.permute.xlu0 %1499
        %1501 = vset.pattern.permute.xlu0 5
        %1502 = vperm.xlu0 %1501, %v315
        %v1503 = vpop.permute.xlu0 %1502
        %1504 = vset.pattern.permute.xlu0 5
        %1505 = vperm.xlu0 %1504, %v316
        %v1506 = vpop.permute.xlu0 %1505
        %1507 = vset.pattern.permute.xlu0 5
        %1508 = vperm.xlu0 %1507, %v317
        %v1509 = vpop.permute.xlu0 %1508
        %1510 = vset.pattern.permute.xlu0 5
        %1511 = vperm.xlu0 %1510, %v318
        %v1512 = vpop.permute.xlu0 %1511
        %1513 = vset.pattern.permute.xlu0 5
        %1514 = vperm.xlu0 %1513, %v319
        %v1515 = vpop.permute.xlu0 %1514
        %1516 = vset.pattern.permute.xlu0 5
        %1517 = vperm.xlu0 %1516, %v320
        %v1518 = vpop.permute.xlu0 %1517
        %1519 = vset.pattern.permute.xlu0 5
        %1520 = vperm.xlu0 %1519, %v321
        %v1521 = vpop.permute.xlu0 %1520
        %1522 = vset.pattern.permute.xlu0 5
        %1523 = vperm.xlu0 %1522, %v322
        %v1524 = vpop.permute.xlu0 %1523
        %1525 = vset.pattern.permute.xlu0 5
        %1526 = vperm.xlu0 %1525, %v324
        %v1527 = vpop.permute.xlu0 %1526
        %1528 = vset.pattern.permute.xlu0 5
        %1529 = vperm.xlu0 %1528, %v326
        %v1530 = vpop.permute.xlu0 %1529
        %1531 = vset.pattern.permute.xlu0 5
        %1532 = vperm.xlu0 %1531, %v328
        %v1533 = vpop.permute.xlu0 %1532
        %1534 = vset.pattern.permute.xlu0 5
        %1535 = vperm.xlu0 %1534, %v330
        %v1536 = vpop.permute.xlu0 %1535
        %1537 = vset.pattern.permute.xlu0 5
        %1538 = vperm.xlu0 %1537, %v332
        %v1539 = vpop.permute.xlu0 %1538
        %1540 = vset.pattern.permute.xlu0 5
        %1541 = vperm.xlu0 %1540, %v334
        %v1542 = vpop.permute.xlu0 %1541
        %1543 = vset.pattern.permute.xlu0 5
        %1544 = vperm.xlu0 %1543, %v336
        %v1545 = vpop.permute.xlu0 %1544
        %1546 = vset.pattern.permute.xlu0 5
        %1547 = vperm.xlu0 %1546, %v338
        %v1548 = vpop.permute.xlu0 %1547
        %1549 = vset.pattern.permute.xlu0 5
        %1550 = vperm.xlu0 %1549, %v340
        %v1551 = vpop.permute.xlu0 %1550
        %1552 = vset.pattern.permute.xlu0 5
        %1553 = vperm.xlu0 %1552, %v342
        %v1554 = vpop.permute.xlu0 %1553
        %1555 = vset.pattern.permute.xlu0 5
        %1556 = vperm.xlu0 %1555, %v344
        %v1557 = vpop.permute.xlu0 %1556
        %1558 = vset.pattern.permute.xlu0 5
        %1559 = vperm.xlu0 %1558, %v346
        %v1560 = vpop.permute.xlu0 %1559
        %1561 = vset.pattern.permute.xlu0 5
        %1562 = vperm.xlu0 %1561, %v348
        %v1563 = vpop.permute.xlu0 %1562
        %1564 = vset.pattern.permute.xlu0 5
        %1565 = vperm.xlu0 %1564, %v350
        %v1566 = vpop.permute.xlu0 %1565
        %1567 = vset.pattern.permute.xlu0 5
        %1568 = vperm.xlu0 %1567, %v352
        %v1569 = vpop.permute.xlu0 %1568
        %1570 = vset.pattern.permute.xlu0 5
        %1571 = vperm.xlu0 %1570, %v354
        %v1572 = vpop.permute.xlu0 %1571
        %vm1573 = vcmp.eq.s32.totalorder %v1479, %v356
        %vm1574 = vcmp.eq.s32.totalorder %v1482, %v356
        %vm1575 = vcmp.eq.s32.totalorder %v1485, %v356
        %vm1576 = vcmp.eq.s32.totalorder %v1488, %v356
        %vm1577 = vcmp.eq.s32.totalorder %v1491, %v356
        %vm1578 = vcmp.eq.s32.totalorder %v1494, %v356
        %vm1579 = vcmp.eq.s32.totalorder %v1497, %v356
        %vm1580 = vcmp.eq.s32.totalorder %v1500, %v356
        %vm1581 = vcmp.eq.s32.totalorder %v1503, %v356
        %vm1582 = vcmp.eq.s32.totalorder %v1506, %v356
        %vm1583 = vcmp.eq.s32.totalorder %v1509, %v356
        %vm1584 = vcmp.eq.s32.totalorder %v1512, %v356
        %vm1585 = vcmp.eq.s32.totalorder %v1515, %v356
        %vm1586 = vcmp.eq.s32.totalorder %v1518, %v356
        %vm1587 = vcmp.eq.s32.totalorder %v1521, %v356
        %vm1588 = vcmp.eq.s32.totalorder %v1524, %v356
        %vm1589 = vcmp.eq.s32.totalorder %v1527, %v356
        %vm1590 = vcmp.eq.s32.totalorder %v1530, %v356
        %vm1591 = vcmp.eq.s32.totalorder %v1533, %v356
        %vm1592 = vcmp.eq.s32.totalorder %v1536, %v356
        %vm1593 = vcmp.eq.s32.totalorder %v1539, %v356
        %vm1594 = vcmp.eq.s32.totalorder %v1542, %v356
        %vm1595 = vcmp.eq.s32.totalorder %v1545, %v356
        %vm1596 = vcmp.eq.s32.totalorder %v1548, %v356
        %vm1597 = vcmp.eq.s32.totalorder %v1551, %v356
        %vm1598 = vcmp.eq.s32.totalorder %v1554, %v356
        %vm1599 = vcmp.eq.s32.totalorder %v1557, %v356
        %vm1600 = vcmp.eq.s32.totalorder %v1560, %v356
        %vm1601 = vcmp.eq.s32.totalorder %v1563, %v356
        %vm1602 = vcmp.eq.s32.totalorder %v1566, %v356
        %vm1603 = vcmp.eq.s32.totalorder %v1569, %v356
        %vm1604 = vcmp.eq.s32.totalorder %v1572, %v356
        %v1605 = vsel %vm1573, 1, 0
        %v1606 = vsel %vm1574, 1, 0
        %v1607 = vsel %vm1575, 1, 0
        %v1608 = vsel %vm1576, 1, 0
        %v1609 = vsel %vm1577, 1, 0
        %v1610 = vsel %vm1578, 1, 0
        %v1611 = vsel %vm1579, 1, 0
        %v1612 = vsel %vm1580, 1, 0
        %v1613 = vsel %vm1581, 1, 0
        %v1614 = vsel %vm1582, 1, 0
        %v1615 = vsel %vm1583, 1, 0
        %v1616 = vsel %vm1584, 1, 0
        %v1617 = vsel %vm1585, 1, 0
        %v1618 = vsel %vm1586, 1, 0
        %v1619 = vsel %vm1587, 1, 0
        %v1620 = vsel %vm1588, 1, 0
        %v1621 = vsel %vm1589, 1, 0
        %v1622 = vsel %vm1590, 1, 0
        %v1623 = vsel %vm1591, 1, 0
        %v1624 = vsel %vm1592, 1, 0
        %v1625 = vsel %vm1593, 1, 0
        %v1626 = vsel %vm1594, 1, 0
        %v1627 = vsel %vm1595, 1, 0
        %v1628 = vsel %vm1596, 1, 0
        %v1629 = vsel %vm1597, 1, 0
        %v1630 = vsel %vm1598, 1, 0
        %v1631 = vsel %vm1599, 1, 0
        %v1632 = vsel %vm1600, 1, 0
        %v1633 = vsel %vm1601, 1, 0
        %v1634 = vsel %vm1602, 1, 0
        %v1635 = vsel %vm1603, 1, 0
        %v1636 = vsel %vm1604, 1, 0
        %v1637 = vcvt.s32.f32 %v1605
        %v1638 = vcvt.s32.f32 %v1606
        %v1639 = vcvt.s32.f32 %v1607
        %v1640 = vcvt.s32.f32 %v1608
        %v1641 = vcvt.s32.f32 %v1609
        %v1642 = vcvt.s32.f32 %v1610
        %v1643 = vcvt.s32.f32 %v1611
        %v1644 = vcvt.s32.f32 %v1612
        %v1645 = vcvt.s32.f32 %v1613
        %v1646 = vcvt.s32.f32 %v1614
        %v1647 = vcvt.s32.f32 %v1615
        %v1648 = vcvt.s32.f32 %v1616
        %v1649 = vcvt.s32.f32 %v1617
        %v1650 = vcvt.s32.f32 %v1618
        %v1651 = vcvt.s32.f32 %v1619
        %v1652 = vcvt.s32.f32 %v1620
        %v1653 = vcvt.s32.f32 %v1621
        %v1654 = vcvt.s32.f32 %v1622
        %v1655 = vcvt.s32.f32 %v1623
        %v1656 = vcvt.s32.f32 %v1624
        %v1657 = vcvt.s32.f32 %v1625
        %v1658 = vcvt.s32.f32 %v1626
        %v1659 = vcvt.s32.f32 %v1627
        %v1660 = vcvt.s32.f32 %v1628
        %v1661 = vcvt.s32.f32 %v1629
        %v1662 = vcvt.s32.f32 %v1630
        %v1663 = vcvt.s32.f32 %v1631
        %v1664 = vcvt.s32.f32 %v1632
        %v1665 = vcvt.s32.f32 %v1633
        %v1666 = vcvt.s32.f32 %v1634
        %v1667 = vcvt.s32.f32 %v1635
        %v1668 = vcvt.s32.f32 %v1636
        %v1669 = vadd.f32 %v1445, %v1637
        %v1670 = vadd.f32 %v1446, %v1638
        %v1671 = vadd.f32 %v1447, %v1639
        %v1672 = vadd.f32 %v1448, %v1640
        %v1673 = vadd.f32 %v1449, %v1641
        %v1674 = vadd.f32 %v1450, %v1642
        %v1675 = vadd.f32 %v1451, %v1643
        %v1676 = vadd.f32 %v1452, %v1644
        %v1677 = vadd.f32 %v1453, %v1645
        %v1678 = vadd.f32 %v1454, %v1646
        %v1679 = vadd.f32 %v1455, %v1647
        %v1680 = vadd.f32 %v1456, %v1648
        %v1681 = vadd.f32 %v1457, %v1649
        %v1682 = vadd.f32 %v1458, %v1650
        %v1683 = vadd.f32 %v1459, %v1651
        %v1684 = vadd.f32 %v1460, %v1652
        %v1685 = vadd.f32 %v1461, %v1653
        %v1686 = vadd.f32 %v1462, %v1654
        %v1687 = vadd.f32 %v1463, %v1655
        %v1688 = vadd.f32 %v1464, %v1656
        %v1689 = vadd.f32 %v1465, %v1657
        %v1690 = vadd.f32 %v1466, %v1658
        %v1691 = vadd.f32 %v1467, %v1659
        %v1692 = vadd.f32 %v1468, %v1660
        %v1693 = vadd.f32 %v1469, %v1661
        %v1694 = vadd.f32 %v1470, %v1662
        %v1695 = vadd.f32 %v1471, %v1663
        %v1696 = vadd.f32 %v1472, %v1664
        %v1697 = vadd.f32 %v1473, %v1665
        %v1698 = vadd.f32 %v1474, %v1666
        %v1699 = vadd.f32 %v1475, %v1667
        %v1700 = vadd.f32 %v1476, %v1668
        %1701 = vset.pattern.permute.xlu0 6
        %1702 = vperm.xlu0 %1701, %v307
        %v1703 = vpop.permute.xlu0 %1702
        %1704 = vset.pattern.permute.xlu0 6
        %1705 = vperm.xlu0 %1704, %v308
        %v1706 = vpop.permute.xlu0 %1705
        %1707 = vset.pattern.permute.xlu0 6
        %1708 = vperm.xlu0 %1707, %v309
        %v1709 = vpop.permute.xlu0 %1708
        %1710 = vset.pattern.permute.xlu0 6
        %1711 = vperm.xlu0 %1710, %v310
        %v1712 = vpop.permute.xlu0 %1711
        %1713 = vset.pattern.permute.xlu0 6
        %1714 = vperm.xlu0 %1713, %v311
        %v1715 = vpop.permute.xlu0 %1714
        %1716 = vset.pattern.permute.xlu0 6
        %1717 = vperm.xlu0 %1716, %v312
        %v1718 = vpop.permute.xlu0 %1717
        %1719 = vset.pattern.permute.xlu0 6
        %1720 = vperm.xlu0 %1719, %v313
        %v1721 = vpop.permute.xlu0 %1720
        %1722 = vset.pattern.permute.xlu0 6
        %1723 = vperm.xlu0 %1722, %v314
        %v1724 = vpop.permute.xlu0 %1723
        %1725 = vset.pattern.permute.xlu0 6
        %1726 = vperm.xlu0 %1725, %v315
        %v1727 = vpop.permute.xlu0 %1726
        %1728 = vset.pattern.permute.xlu0 6
        %1729 = vperm.xlu0 %1728, %v316
        %v1730 = vpop.permute.xlu0 %1729
        %1731 = vset.pattern.permute.xlu0 6
        %1732 = vperm.xlu0 %1731, %v317
        %v1733 = vpop.permute.xlu0 %1732
        %1734 = vset.pattern.permute.xlu0 6
        %1735 = vperm.xlu0 %1734, %v318
        %v1736 = vpop.permute.xlu0 %1735
        %1737 = vset.pattern.permute.xlu0 6
        %1738 = vperm.xlu0 %1737, %v319
        %v1739 = vpop.permute.xlu0 %1738
        %1740 = vset.pattern.permute.xlu0 6
        %1741 = vperm.xlu0 %1740, %v320
        %v1742 = vpop.permute.xlu0 %1741
        %1743 = vset.pattern.permute.xlu0 6
        %1744 = vperm.xlu0 %1743, %v321
        %v1745 = vpop.permute.xlu0 %1744
        %1746 = vset.pattern.permute.xlu0 6
        %1747 = vperm.xlu0 %1746, %v322
        %v1748 = vpop.permute.xlu0 %1747
        %1749 = vset.pattern.permute.xlu0 6
        %1750 = vperm.xlu0 %1749, %v324
        %v1751 = vpop.permute.xlu0 %1750
        %1752 = vset.pattern.permute.xlu0 6
        %1753 = vperm.xlu0 %1752, %v326
        %v1754 = vpop.permute.xlu0 %1753
        %1755 = vset.pattern.permute.xlu0 6
        %1756 = vperm.xlu0 %1755, %v328
        %v1757 = vpop.permute.xlu0 %1756
        %1758 = vset.pattern.permute.xlu0 6
        %1759 = vperm.xlu0 %1758, %v330
        %v1760 = vpop.permute.xlu0 %1759
        %1761 = vset.pattern.permute.xlu0 6
        %1762 = vperm.xlu0 %1761, %v332
        %v1763 = vpop.permute.xlu0 %1762
        %1764 = vset.pattern.permute.xlu0 6
        %1765 = vperm.xlu0 %1764, %v334
        %v1766 = vpop.permute.xlu0 %1765
        %1767 = vset.pattern.permute.xlu0 6
        %1768 = vperm.xlu0 %1767, %v336
        %v1769 = vpop.permute.xlu0 %1768
        %1770 = vset.pattern.permute.xlu0 6
        %1771 = vperm.xlu0 %1770, %v338
        %v1772 = vpop.permute.xlu0 %1771
        %1773 = vset.pattern.permute.xlu0 6
        %1774 = vperm.xlu0 %1773, %v340
        %v1775 = vpop.permute.xlu0 %1774
        %1776 = vset.pattern.permute.xlu0 6
        %1777 = vperm.xlu0 %1776, %v342
        %v1778 = vpop.permute.xlu0 %1777
        %1779 = vset.pattern.permute.xlu0 6
        %1780 = vperm.xlu0 %1779, %v344
        %v1781 = vpop.permute.xlu0 %1780
        %1782 = vset.pattern.permute.xlu0 6
        %1783 = vperm.xlu0 %1782, %v346
        %v1784 = vpop.permute.xlu0 %1783
        %1785 = vset.pattern.permute.xlu0 6
        %1786 = vperm.xlu0 %1785, %v348
        %v1787 = vpop.permute.xlu0 %1786
        %1788 = vset.pattern.permute.xlu0 6
        %1789 = vperm.xlu0 %1788, %v350
        %v1790 = vpop.permute.xlu0 %1789
        %1791 = vset.pattern.permute.xlu0 6
        %1792 = vperm.xlu0 %1791, %v352
        %v1793 = vpop.permute.xlu0 %1792
        %1794 = vset.pattern.permute.xlu0 6
        %1795 = vperm.xlu0 %1794, %v354
        %v1796 = vpop.permute.xlu0 %1795
        %vm1797 = vcmp.eq.s32.totalorder %v1703, %v356
        %vm1798 = vcmp.eq.s32.totalorder %v1706, %v356
        %vm1799 = vcmp.eq.s32.totalorder %v1709, %v356
        %vm1800 = vcmp.eq.s32.totalorder %v1712, %v356
        %vm1801 = vcmp.eq.s32.totalorder %v1715, %v356
        %vm1802 = vcmp.eq.s32.totalorder %v1718, %v356
        %vm1803 = vcmp.eq.s32.totalorder %v1721, %v356
        %vm1804 = vcmp.eq.s32.totalorder %v1724, %v356
        %vm1805 = vcmp.eq.s32.totalorder %v1727, %v356
        %vm1806 = vcmp.eq.s32.totalorder %v1730, %v356
        %vm1807 = vcmp.eq.s32.totalorder %v1733, %v356
        %vm1808 = vcmp.eq.s32.totalorder %v1736, %v356
        %vm1809 = vcmp.eq.s32.totalorder %v1739, %v356
        %vm1810 = vcmp.eq.s32.totalorder %v1742, %v356
        %vm1811 = vcmp.eq.s32.totalorder %v1745, %v356
        %vm1812 = vcmp.eq.s32.totalorder %v1748, %v356
        %vm1813 = vcmp.eq.s32.totalorder %v1751, %v356
        %vm1814 = vcmp.eq.s32.totalorder %v1754, %v356
        %vm1815 = vcmp.eq.s32.totalorder %v1757, %v356
        %vm1816 = vcmp.eq.s32.totalorder %v1760, %v356
        %vm1817 = vcmp.eq.s32.totalorder %v1763, %v356
        %vm1818 = vcmp.eq.s32.totalorder %v1766, %v356
        %vm1819 = vcmp.eq.s32.totalorder %v1769, %v356
        %vm1820 = vcmp.eq.s32.totalorder %v1772, %v356
        %vm1821 = vcmp.eq.s32.totalorder %v1775, %v356
        %vm1822 = vcmp.eq.s32.totalorder %v1778, %v356
        %vm1823 = vcmp.eq.s32.totalorder %v1781, %v356
        %vm1824 = vcmp.eq.s32.totalorder %v1784, %v356
        %vm1825 = vcmp.eq.s32.totalorder %v1787, %v356
        %vm1826 = vcmp.eq.s32.totalorder %v1790, %v356
        %vm1827 = vcmp.eq.s32.totalorder %v1793, %v356
        %vm1828 = vcmp.eq.s32.totalorder %v1796, %v356
        %v1829 = vsel %vm1797, 1, 0
        %v1830 = vsel %vm1798, 1, 0
        %v1831 = vsel %vm1799, 1, 0
        %v1832 = vsel %vm1800, 1, 0
        %v1833 = vsel %vm1801, 1, 0
        %v1834 = vsel %vm1802, 1, 0
        %v1835 = vsel %vm1803, 1, 0
        %v1836 = vsel %vm1804, 1, 0
        %v1837 = vsel %vm1805, 1, 0
        %v1838 = vsel %vm1806, 1, 0
        %v1839 = vsel %vm1807, 1, 0
        %v1840 = vsel %vm1808, 1, 0
        %v1841 = vsel %vm1809, 1, 0
        %v1842 = vsel %vm1810, 1, 0
        %v1843 = vsel %vm1811, 1, 0
        %v1844 = vsel %vm1812, 1, 0
        %v1845 = vsel %vm1813, 1, 0
        %v1846 = vsel %vm1814, 1, 0
        %v1847 = vsel %vm1815, 1, 0
        %v1848 = vsel %vm1816, 1, 0
        %v1849 = vsel %vm1817, 1, 0
        %v1850 = vsel %vm1818, 1, 0
        %v1851 = vsel %vm1819, 1, 0
        %v1852 = vsel %vm1820, 1, 0
        %v1853 = vsel %vm1821, 1, 0
        %v1854 = vsel %vm1822, 1, 0
        %v1855 = vsel %vm1823, 1, 0
        %v1856 = vsel %vm1824, 1, 0
        %v1857 = vsel %vm1825, 1, 0
        %v1858 = vsel %vm1826, 1, 0
        %v1859 = vsel %vm1827, 1, 0
        %v1860 = vsel %vm1828, 1, 0
        %v1861 = vcvt.s32.f32 %v1829
        %v1862 = vcvt.s32.f32 %v1830
        %v1863 = vcvt.s32.f32 %v1831
        %v1864 = vcvt.s32.f32 %v1832
        %v1865 = vcvt.s32.f32 %v1833
        %v1866 = vcvt.s32.f32 %v1834
        %v1867 = vcvt.s32.f32 %v1835
        %v1868 = vcvt.s32.f32 %v1836
        %v1869 = vcvt.s32.f32 %v1837
        %v1870 = vcvt.s32.f32 %v1838
        %v1871 = vcvt.s32.f32 %v1839
        %v1872 = vcvt.s32.f32 %v1840
        %v1873 = vcvt.s32.f32 %v1841
        %v1874 = vcvt.s32.f32 %v1842
        %v1875 = vcvt.s32.f32 %v1843
        %v1876 = vcvt.s32.f32 %v1844
        %v1877 = vcvt.s32.f32 %v1845
        %v1878 = vcvt.s32.f32 %v1846
        %v1879 = vcvt.s32.f32 %v1847
        %v1880 = vcvt.s32.f32 %v1848
        %v1881 = vcvt.s32.f32 %v1849
        %v1882 = vcvt.s32.f32 %v1850
        %v1883 = vcvt.s32.f32 %v1851
        %v1884 = vcvt.s32.f32 %v1852
        %v1885 = vcvt.s32.f32 %v1853
        %v1886 = vcvt.s32.f32 %v1854
        %v1887 = vcvt.s32.f32 %v1855
        %v1888 = vcvt.s32.f32 %v1856
        %v1889 = vcvt.s32.f32 %v1857
        %v1890 = vcvt.s32.f32 %v1858
        %v1891 = vcvt.s32.f32 %v1859
        %v1892 = vcvt.s32.f32 %v1860
        %v1893 = vadd.f32 %v1669, %v1861
        %v1894 = vadd.f32 %v1670, %v1862
        %v1895 = vadd.f32 %v1671, %v1863
        %v1896 = vadd.f32 %v1672, %v1864
        %v1897 = vadd.f32 %v1673, %v1865
        %v1898 = vadd.f32 %v1674, %v1866
        %v1899 = vadd.f32 %v1675, %v1867
        %v1900 = vadd.f32 %v1676, %v1868
        %v1901 = vadd.f32 %v1677, %v1869
        %v1902 = vadd.f32 %v1678, %v1870
        %v1903 = vadd.f32 %v1679, %v1871
        %v1904 = vadd.f32 %v1680, %v1872
        %v1905 = vadd.f32 %v1681, %v1873
        %v1906 = vadd.f32 %v1682, %v1874
        %v1907 = vadd.f32 %v1683, %v1875
        %v1908 = vadd.f32 %v1684, %v1876
        %v1909 = vadd.f32 %v1685, %v1877
        %v1910 = vadd.f32 %v1686, %v1878
        %v1911 = vadd.f32 %v1687, %v1879
        %v1912 = vadd.f32 %v1688, %v1880
        %v1913 = vadd.f32 %v1689, %v1881
        %v1914 = vadd.f32 %v1690, %v1882
        %v1915 = vadd.f32 %v1691, %v1883
        %v1916 = vadd.f32 %v1692, %v1884
        %v1917 = vadd.f32 %v1693, %v1885
        %v1918 = vadd.f32 %v1694, %v1886
        %v1919 = vadd.f32 %v1695, %v1887
        %v1920 = vadd.f32 %v1696, %v1888
        %v1921 = vadd.f32 %v1697, %v1889
        %v1922 = vadd.f32 %v1698, %v1890
        %v1923 = vadd.f32 %v1699, %v1891
        %v1924 = vadd.f32 %v1700, %v1892
        %1925 = vset.pattern.permute.xlu0 7
        %1926 = vperm.xlu0 %1925, %v307
        %v1927 = vpop.permute.xlu0 %1926
        %1928 = vset.pattern.permute.xlu0 7
        %1929 = vperm.xlu0 %1928, %v308
        %v1930 = vpop.permute.xlu0 %1929
        %1931 = vset.pattern.permute.xlu0 7
        %1932 = vperm.xlu0 %1931, %v309
        %v1933 = vpop.permute.xlu0 %1932
        %1934 = vset.pattern.permute.xlu0 7
        %1935 = vperm.xlu0 %1934, %v310
        %v1936 = vpop.permute.xlu0 %1935
        %1937 = vset.pattern.permute.xlu0 7
        %1938 = vperm.xlu0 %1937, %v311
        %v1939 = vpop.permute.xlu0 %1938
        %1940 = vset.pattern.permute.xlu0 7
        %1941 = vperm.xlu0 %1940, %v312
        %v1942 = vpop.permute.xlu0 %1941
        %1943 = vset.pattern.permute.xlu0 7
        %1944 = vperm.xlu0 %1943, %v313
        %v1945 = vpop.permute.xlu0 %1944
        %1946 = vset.pattern.permute.xlu0 7
        %1947 = vperm.xlu0 %1946, %v314
        %v1948 = vpop.permute.xlu0 %1947
        %1949 = vset.pattern.permute.xlu0 7
        %1950 = vperm.xlu0 %1949, %v315
        %v1951 = vpop.permute.xlu0 %1950
        %1952 = vset.pattern.permute.xlu0 7
        %1953 = vperm.xlu0 %1952, %v316
        %v1954 = vpop.permute.xlu0 %1953
        %1955 = vset.pattern.permute.xlu0 7
        %1956 = vperm.xlu0 %1955, %v317
        %v1957 = vpop.permute.xlu0 %1956
        %1958 = vset.pattern.permute.xlu0 7
        %1959 = vperm.xlu0 %1958, %v318
        %v1960 = vpop.permute.xlu0 %1959
        %1961 = vset.pattern.permute.xlu0 7
        %1962 = vperm.xlu0 %1961, %v319
        %v1963 = vpop.permute.xlu0 %1962
        %1964 = vset.pattern.permute.xlu0 7
        %1965 = vperm.xlu0 %1964, %v320
        %v1966 = vpop.permute.xlu0 %1965
        %1967 = vset.pattern.permute.xlu0 7
        %1968 = vperm.xlu0 %1967, %v321
        %v1969 = vpop.permute.xlu0 %1968
        %1970 = vset.pattern.permute.xlu0 7
        %1971 = vperm.xlu0 %1970, %v322
        %v1972 = vpop.permute.xlu0 %1971
        %1973 = vset.pattern.permute.xlu0 7
        %1974 = vperm.xlu0 %1973, %v324
        %v1975 = vpop.permute.xlu0 %1974
        %1976 = vset.pattern.permute.xlu0 7
        %1977 = vperm.xlu0 %1976, %v326
        %v1978 = vpop.permute.xlu0 %1977
        %1979 = vset.pattern.permute.xlu0 7
        %1980 = vperm.xlu0 %1979, %v328
        %v1981 = vpop.permute.xlu0 %1980
        %1982 = vset.pattern.permute.xlu0 7
        %1983 = vperm.xlu0 %1982, %v330
        %v1984 = vpop.permute.xlu0 %1983
        %1985 = vset.pattern.permute.xlu0 7
        %1986 = vperm.xlu0 %1985, %v332
        %v1987 = vpop.permute.xlu0 %1986
        %1988 = vset.pattern.permute.xlu0 7
        %1989 = vperm.xlu0 %1988, %v334
        %v1990 = vpop.permute.xlu0 %1989
        %1991 = vset.pattern.permute.xlu0 7
        %1992 = vperm.xlu0 %1991, %v336
        %v1993 = vpop.permute.xlu0 %1992
        %1994 = vset.pattern.permute.xlu0 7
        %1995 = vperm.xlu0 %1994, %v338
        %v1996 = vpop.permute.xlu0 %1995
        %1997 = vset.pattern.permute.xlu0 7
        %1998 = vperm.xlu0 %1997, %v340
        %v1999 = vpop.permute.xlu0 %1998
        %2000 = vset.pattern.permute.xlu0 7
        %2001 = vperm.xlu0 %2000, %v342
        %v2002 = vpop.permute.xlu0 %2001
        %2003 = vset.pattern.permute.xlu0 7
        %2004 = vperm.xlu0 %2003, %v344
        %v2005 = vpop.permute.xlu0 %2004
        %2006 = vset.pattern.permute.xlu0 7
        %2007 = vperm.xlu0 %2006, %v346
        %v2008 = vpop.permute.xlu0 %2007
        %2009 = vset.pattern.permute.xlu0 7
        %2010 = vperm.xlu0 %2009, %v348
        %v2011 = vpop.permute.xlu0 %2010
        %2012 = vset.pattern.permute.xlu0 7
        %2013 = vperm.xlu0 %2012, %v350
        %v2014 = vpop.permute.xlu0 %2013
        %2015 = vset.pattern.permute.xlu0 7
        %2016 = vperm.xlu0 %2015, %v352
        %v2017 = vpop.permute.xlu0 %2016
        %2018 = vset.pattern.permute.xlu0 7
        %2019 = vperm.xlu0 %2018, %v354
        %v2020 = vpop.permute.xlu0 %2019
        %vm2021 = vcmp.eq.s32.totalorder %v1927, %v356
        %vm2022 = vcmp.eq.s32.totalorder %v1930, %v356
        %vm2023 = vcmp.eq.s32.totalorder %v1933, %v356
        %vm2024 = vcmp.eq.s32.totalorder %v1936, %v356
        %vm2025 = vcmp.eq.s32.totalorder %v1939, %v356
        %vm2026 = vcmp.eq.s32.totalorder %v1942, %v356
        %vm2027 = vcmp.eq.s32.totalorder %v1945, %v356
        %vm2028 = vcmp.eq.s32.totalorder %v1948, %v356
        %vm2029 = vcmp.eq.s32.totalorder %v1951, %v356
        %vm2030 = vcmp.eq.s32.totalorder %v1954, %v356
        %vm2031 = vcmp.eq.s32.totalorder %v1957, %v356
        %vm2032 = vcmp.eq.s32.totalorder %v1960, %v356
        %vm2033 = vcmp.eq.s32.totalorder %v1963, %v356
        %vm2034 = vcmp.eq.s32.totalorder %v1966, %v356
        %vm2035 = vcmp.eq.s32.totalorder %v1969, %v356
        %vm2036 = vcmp.eq.s32.totalorder %v1972, %v356
        %vm2037 = vcmp.eq.s32.totalorder %v1975, %v356
        %vm2038 = vcmp.eq.s32.totalorder %v1978, %v356
        %vm2039 = vcmp.eq.s32.totalorder %v1981, %v356
        %vm2040 = vcmp.eq.s32.totalorder %v1984, %v356
        %vm2041 = vcmp.eq.s32.totalorder %v1987, %v356
        %vm2042 = vcmp.eq.s32.totalorder %v1990, %v356
        %vm2043 = vcmp.eq.s32.totalorder %v1993, %v356
        %vm2044 = vcmp.eq.s32.totalorder %v1996, %v356
        %vm2045 = vcmp.eq.s32.totalorder %v1999, %v356
        %vm2046 = vcmp.eq.s32.totalorder %v2002, %v356
        %vm2047 = vcmp.eq.s32.totalorder %v2005, %v356
        %vm2048 = vcmp.eq.s32.totalorder %v2008, %v356
        %vm2049 = vcmp.eq.s32.totalorder %v2011, %v356
        %vm2050 = vcmp.eq.s32.totalorder %v2014, %v356
        %vm2051 = vcmp.eq.s32.totalorder %v2017, %v356
        %vm2052 = vcmp.eq.s32.totalorder %v2020, %v356
        %v2053 = vsel %vm2021, 1, 0
        %v2054 = vsel %vm2022, 1, 0
        %v2055 = vsel %vm2023, 1, 0
        %v2056 = vsel %vm2024, 1, 0
        %v2057 = vsel %vm2025, 1, 0
        %v2058 = vsel %vm2026, 1, 0
        %v2059 = vsel %vm2027, 1, 0
        %v2060 = vsel %vm2028, 1, 0
        %v2061 = vsel %vm2029, 1, 0
        %v2062 = vsel %vm2030, 1, 0
        %v2063 = vsel %vm2031, 1, 0
        %v2064 = vsel %vm2032, 1, 0
        %v2065 = vsel %vm2033, 1, 0
        %v2066 = vsel %vm2034, 1, 0
        %v2067 = vsel %vm2035, 1, 0
        %v2068 = vsel %vm2036, 1, 0
        %v2069 = vsel %vm2037, 1, 0
        %v2070 = vsel %vm2038, 1, 0
        %v2071 = vsel %vm2039, 1, 0
        %v2072 = vsel %vm2040, 1, 0
        %v2073 = vsel %vm2041, 1, 0
        %v2074 = vsel %vm2042, 1, 0
        %v2075 = vsel %vm2043, 1, 0
        %v2076 = vsel %vm2044, 1, 0
        %v2077 = vsel %vm2045, 1, 0
        %v2078 = vsel %vm2046, 1, 0
        %v2079 = vsel %vm2047, 1, 0
        %v2080 = vsel %vm2048, 1, 0
        %v2081 = vsel %vm2049, 1, 0
        %v2082 = vsel %vm2050, 1, 0
        %v2083 = vsel %vm2051, 1, 0
        %v2084 = vsel %vm2052, 1, 0
        %v2085 = vcvt.s32.f32 %v2053
        %v2086 = vcvt.s32.f32 %v2054
        %v2087 = vcvt.s32.f32 %v2055
        %v2088 = vcvt.s32.f32 %v2056
        %v2089 = vcvt.s32.f32 %v2057
        %v2090 = vcvt.s32.f32 %v2058
        %v2091 = vcvt.s32.f32 %v2059
        %v2092 = vcvt.s32.f32 %v2060
        %v2093 = vcvt.s32.f32 %v2061
        %v2094 = vcvt.s32.f32 %v2062
        %v2095 = vcvt.s32.f32 %v2063
        %v2096 = vcvt.s32.f32 %v2064
        %v2097 = vcvt.s32.f32 %v2065
        %v2098 = vcvt.s32.f32 %v2066
        %v2099 = vcvt.s32.f32 %v2067
        %v2100 = vcvt.s32.f32 %v2068
        %v2101 = vcvt.s32.f32 %v2069
        %v2102 = vcvt.s32.f32 %v2070
        %v2103 = vcvt.s32.f32 %v2071
        %v2104 = vcvt.s32.f32 %v2072
        %v2105 = vcvt.s32.f32 %v2073
        %v2106 = vcvt.s32.f32 %v2074
        %v2107 = vcvt.s32.f32 %v2075
        %v2108 = vcvt.s32.f32 %v2076
        %v2109 = vcvt.s32.f32 %v2077
        %v2110 = vcvt.s32.f32 %v2078
        %v2111 = vcvt.s32.f32 %v2079
        %v2112 = vcvt.s32.f32 %v2080
        %v2113 = vcvt.s32.f32 %v2081
        %v2114 = vcvt.s32.f32 %v2082
        %v2115 = vcvt.s32.f32 %v2083
        %v2116 = vcvt.s32.f32 %v2084
        %v2117 = vadd.f32 %v1893, %v2085
        %v2118 = vadd.f32 %v1894, %v2086
        %v2119 = vadd.f32 %v1895, %v2087
        %v2120 = vadd.f32 %v1896, %v2088
        %v2121 = vadd.f32 %v1897, %v2089
        %v2122 = vadd.f32 %v1898, %v2090
        %v2123 = vadd.f32 %v1899, %v2091
        %v2124 = vadd.f32 %v1900, %v2092
        %v2125 = vadd.f32 %v1901, %v2093
        %v2126 = vadd.f32 %v1902, %v2094
        %v2127 = vadd.f32 %v1903, %v2095
        %v2128 = vadd.f32 %v1904, %v2096
        %v2129 = vadd.f32 %v1905, %v2097
        %v2130 = vadd.f32 %v1906, %v2098
        %v2131 = vadd.f32 %v1907, %v2099
        %v2132 = vadd.f32 %v1908, %v2100
        %v2133 = vadd.f32 %v1909, %v2101
        %v2134 = vadd.f32 %v1910, %v2102
        %v2135 = vadd.f32 %v1911, %v2103
        %v2136 = vadd.f32 %v1912, %v2104
        %v2137 = vadd.f32 %v1913, %v2105
        %v2138 = vadd.f32 %v1914, %v2106
        %v2139 = vadd.f32 %v1915, %v2107
        %v2140 = vadd.f32 %v1916, %v2108
        %v2141 = vadd.f32 %v1917, %v2109
        %v2142 = vadd.f32 %v1918, %v2110
        %v2143 = vadd.f32 %v1919, %v2111
        %v2144 = vadd.f32 %v1920, %v2112
        %v2145 = vadd.f32 %v1921, %v2113
        %v2146 = vadd.f32 %v1922, %v2114
        %v2147 = vadd.f32 %v1923, %v2115
        %v2148 = vadd.f32 %v1924, %v2116
        %v2149 = vld [vmem:[%s1] sm:$0xff]
        %v2150 = vld [vmem:[%s1 + $0x8] sm:$0xff]
        %v2151 = vld [vmem:[%s1 + $0x10] sm:$0xff]
        %v2152 = vld [vmem:[%s1 + $0x18] sm:$0xff]
        %vm2153 = vcmask 261120
        %v2155 = vsel %vm2153, %v2117, 0
        %v2158 = vsel %vm2153, %v2118, 0
        %v2161 = vsel %vm2153, %v2119, 0
        %v2164 = vsel %vm2153, %v2120, 0
        %v2167 = vsel %vm2153, %v2121, 0
        %v2170 = vsel %vm2153, %v2122, 0
        %v2173 = vsel %vm2153, %v2123, 0
        %v2176 = vsel %vm2153, %v2124, 0
        %v2179 = vsel %vm2153, %v2125, 0
        %v2182 = vsel %vm2153, %v2126, 0
        %v2185 = vsel %vm2153, %v2127, 0
        %v2188 = vsel %vm2153, %v2128, 0
        %v2191 = vsel %vm2153, %v2129, 0
        %v2194 = vsel %vm2153, %v2130, 0
        %v2197 = vsel %vm2153, %v2131, 0
        %v2200 = vsel %vm2153, %v2132, 0
        %v2203 = vsel %vm2153, %v2133, 0
        %v2206 = vsel %vm2153, %v2134, 0
        %v2209 = vsel %vm2153, %v2135, 0
        %v2212 = vsel %vm2153, %v2136, 0
        %v2215 = vsel %vm2153, %v2137, 0
        %v2218 = vsel %vm2153, %v2138, 0
        %v2221 = vsel %vm2153, %v2139, 0
        %v2224 = vsel %vm2153, %v2140, 0
        %v2227 = vsel %vm2153, %v2141, 0
        %v2230 = vsel %vm2153, %v2142, 0
        %v2233 = vsel %vm2153, %v2143, 0
        %v2236 = vsel %vm2153, %v2144, 0
        %v2239 = vsel %vm2153, %v2145, 0
        %v2242 = vsel %vm2153, %v2146, 0
        %v2245 = vsel %vm2153, %v2147, 0
        %v2248 = vsel %vm2153, %v2148, 0
        %2250 = vmatprep.subr.mxu0 0.0
        %2251 = vmatpush1.msra.mxu0 0.0
        %2252 = vmatprep.subr.mxu0 0.0
        %2253 = vmatpush1.msra.mxu0 0.0
        %2254 = vmatprep.subr.mxu0 0.0
        %2255 = vmatpush1.msra.mxu0 0.0
        %2256 = vmatprep.subr.mxu0 0.0
        %2257 = vmatpush1.msra.mxu0 0.0
        %2258 = vmatprep.subr.mxu0 0.0
        %2259 = vmatpush1.msra.mxu0 0.0
        %2260 = vmatprep.subr.mxu0 0.0
        %2261 = vmatpush1.msra.mxu0 0.0
        %2262 = vmatprep.subr.mxu0 0.0
        %2263 = vmatpush1.msra.mxu0 0.0
        %2264 = vmatprep.subr.mxu0 0.0
        %2265 = vmatpush1.msra.mxu0 0.0
        %2266 = vmatprep.subr.mxu0 0.0
        %2267 = vmatpush1.msra.mxu0 0.0
        %2268 = vmatprep.subr.mxu0 0.0
        %2269 = vmatpush1.msra.mxu0 0.0
        %2270 = vmatprep.subr.mxu0 0.0
        %2271 = vmatpush1.msra.mxu0 0.0
        %2272 = vmatprep.subr.mxu0 0.0
        %2273 = vmatpush1.msra.mxu0 0.0
        %2274 = vmatprep.subr.mxu0 0.0
        %2275 = vmatpush1.msra.mxu0 %v2152
        %2276 = vmatprep.subr.mxu0 0.0
        %2277 = vmatpush1.msra.mxu0 %v2151
        %2278 = vmatprep.subr.mxu0 0.0
        %2279 = vmatpush1.msra.mxu0 %v2150
        %2280 = vmatprep.subr.mxu0 0.0
        %2281 = vmatpush1.msra.mxu0 %v2149
        %2282 = vmatprep.subr.mxu0 0.0
        %2283 = vmatpush2.msra.mxu0 0.0
        %2284 = vmatprep.subr.mxu0 0.0
        %2285 = vmatpush2.msra.mxu0 0.0
        %2286 = vmatprep.subr.mxu0 0.0
        %2287 = vmatpush2.msra.mxu0 0.0
        %2288 = vmatprep.subr.mxu0 0.0
        %2289 = vmatpush2.msra.mxu0 0.0
        %2290 = vmatprep.subr.mxu0 0.0
        %2291 = vmatpush2.msra.mxu0 0.0
        %2292 = vmatprep.subr.mxu0 0.0
        %2293 = vmatpush2.msra.mxu0 0.0
        %2294 = vmatprep.subr.mxu0 0.0
        %2295 = vmatpush2.msra.mxu0 0.0
        %2296 = vmatprep.subr.mxu0 0.0
        %2297 = vmatpush2.msra.mxu0 0.0
        %2298 = vmatprep.subr.mxu0 0.0
        %2299 = vmatpush2.msra.mxu0 0.0
        %2300 = vmatprep.subr.mxu0 0.0
        %2301 = vmatpush2.msra.mxu0 0.0
        %2302 = vmatprep.subr.mxu0 0.0
        %2303 = vmatpush2.msra.mxu0 0.0
        %2304 = vmatprep.subr.mxu0 0.0
        %2305 = vmatpush2.msra.mxu0 0.0
        %2306 = vmatprep.subr.mxu0 0.0
        %2307 = vmatpush2.msra.mxu0 0.0
        %2308 = vmatprep.subr.mxu0 0.0
        %2309 = vmatpush2.msra.mxu0 0.0
        %2310 = vmatprep.subr.mxu0 0.0
        %2311 = vmatpush2.msra.mxu0 0.0
        %2312 = vmatprep.subr.mxu0 0.0
        %2313 = vmatpush2.msra.mxu0 0.0
        %2314 = vmatprep.mubr.f32.mxu0 0.0
        %2315 = vmatmul.mubr.f32.gmra.mxu0 %v2155
        %v2316 = vpop.f32.mrf.mxu0
        %v2317 = vadd.f32 0.0, %v2316
        %v2318 = vpop.f32.mrf.mxu0
        %2319 = vmatprep.mubr.f32.mxu0 0.0
        %2320 = vmatmul.mubr.f32.gmra.mxu0 %v2158
        %v2321 = vpop.f32.mrf.mxu0
        %v2322 = vadd.f32 0.0, %v2321
        %v2323 = vpop.f32.mrf.mxu0
        %2324 = vmatprep.mubr.f32.mxu0 0.0
        %2325 = vmatmul.mubr.f32.gmra.mxu0 %v2161
        %v2326 = vpop.f32.mrf.mxu0
        %v2327 = vadd.f32 0.0, %v2326
        %v2328 = vpop.f32.mrf.mxu0
        %2329 = vmatprep.mubr.f32.mxu0 0.0
        %2330 = vmatmul.mubr.f32.gmra.mxu0 %v2164
        %v2331 = vpop.f32.mrf.mxu0
        %v2332 = vadd.f32 0.0, %v2331
        %v2333 = vpop.f32.mrf.mxu0
        %2334 = vmatprep.mubr.f32.mxu0 0.0
        %2335 = vmatmul.mubr.f32.gmra.mxu0 %v2167
        %v2336 = vpop.f32.mrf.mxu0
        %v2337 = vadd.f32 0.0, %v2336
        %v2338 = vpop.f32.mrf.mxu0
        %2339 = vmatprep.mubr.f32.mxu0 0.0
        %2340 = vmatmul.mubr.f32.gmra.mxu0 %v2170
        %v2341 = vpop.f32.mrf.mxu0
        %v2342 = vadd.f32 0.0, %v2341
        %v2343 = vpop.f32.mrf.mxu0
        %2344 = vmatprep.mubr.f32.mxu0 0.0
        %2345 = vmatmul.mubr.f32.gmra.mxu0 %v2173
        %v2346 = vpop.f32.mrf.mxu0
        %v2347 = vadd.f32 0.0, %v2346
        %v2348 = vpop.f32.mrf.mxu0
        %2349 = vmatprep.mubr.f32.mxu0 0.0
        %2350 = vmatmul.mubr.f32.gmra.mxu0 %v2176
        %v2351 = vpop.f32.mrf.mxu0
        %v2352 = vadd.f32 0.0, %v2351
        %v2353 = vpop.f32.mrf.mxu0
        %2354 = vmatprep.mubr.f32.mxu0 0.0
        %2355 = vmatmul.mubr.f32.gmra.mxu0 %v2179
        %v2356 = vpop.f32.mrf.mxu0
        %v2357 = vadd.f32 0.0, %v2356
        %v2358 = vpop.f32.mrf.mxu0
        %2359 = vmatprep.mubr.f32.mxu0 0.0
        %2360 = vmatmul.mubr.f32.gmra.mxu0 %v2182
        %v2361 = vpop.f32.mrf.mxu0
        %v2362 = vadd.f32 0.0, %v2361
        %v2363 = vpop.f32.mrf.mxu0
        %2364 = vmatprep.mubr.f32.mxu0 0.0
        %2365 = vmatmul.mubr.f32.gmra.mxu0 %v2185
        %v2366 = vpop.f32.mrf.mxu0
        %v2367 = vadd.f32 0.0, %v2366
        %v2368 = vpop.f32.mrf.mxu0
        %2369 = vmatprep.mubr.f32.mxu0 0.0
        %2370 = vmatmul.mubr.f32.gmra.mxu0 %v2188
        %v2371 = vpop.f32.mrf.mxu0
        %v2372 = vadd.f32 0.0, %v2371
        %v2373 = vpop.f32.mrf.mxu0
        %2374 = vmatprep.mubr.f32.mxu0 0.0
        %2375 = vmatmul.mubr.f32.gmra.mxu0 %v2191
        %v2376 = vpop.f32.mrf.mxu0
        %v2377 = vadd.f32 0.0, %v2376
        %v2378 = vpop.f32.mrf.mxu0
        %2379 = vmatprep.mubr.f32.mxu0 0.0
        %2380 = vmatmul.mubr.f32.gmra.mxu0 %v2194
        %v2381 = vpop.f32.mrf.mxu0
        %v2382 = vadd.f32 0.0, %v2381
        %v2383 = vpop.f32.mrf.mxu0
        %2384 = vmatprep.mubr.f32.mxu0 0.0
        %2385 = vmatmul.mubr.f32.gmra.mxu0 %v2197
        %v2386 = vpop.f32.mrf.mxu0
        %v2387 = vadd.f32 0.0, %v2386
        %v2388 = vpop.f32.mrf.mxu0
        %2389 = vmatprep.mubr.f32.mxu0 0.0
        %2390 = vmatmul.mubr.f32.gmra.mxu0 %v2200
        %v2391 = vpop.f32.mrf.mxu0
        %v2392 = vadd.f32 0.0, %v2391
        %v2393 = vpop.f32.mrf.mxu0
        %2394 = vmatprep.mubr.f32.mxu0 0.0
        %2395 = vmatmul.mubr.f32.gmra.mxu0 %v2203
        %v2396 = vpop.f32.mrf.mxu0
        %v2397 = vadd.f32 0.0, %v2396
        %v2398 = vpop.f32.mrf.mxu0
        %2399 = vmatprep.mubr.f32.mxu0 0.0
        %2400 = vmatmul.mubr.f32.gmra.mxu0 %v2206
        %v2401 = vpop.f32.mrf.mxu0
        %v2402 = vadd.f32 0.0, %v2401
        %v2403 = vpop.f32.mrf.mxu0
        %2404 = vmatprep.mubr.f32.mxu0 0.0
        %2405 = vmatmul.mubr.f32.gmra.mxu0 %v2209
        %v2406 = vpop.f32.mrf.mxu0
        %v2407 = vadd.f32 0.0, %v2406
        %v2408 = vpop.f32.mrf.mxu0
        %2409 = vmatprep.mubr.f32.mxu0 0.0
        %2410 = vmatmul.mubr.f32.gmra.mxu0 %v2212
        %v2411 = vpop.f32.mrf.mxu0
        %v2412 = vadd.f32 0.0, %v2411
        %v2413 = vpop.f32.mrf.mxu0
        %2414 = vmatprep.mubr.f32.mxu0 0.0
        %2415 = vmatmul.mubr.f32.gmra.mxu0 %v2215
        %v2416 = vpop.f32.mrf.mxu0
        %v2417 = vadd.f32 0.0, %v2416
        %v2418 = vpop.f32.mrf.mxu0
        %2419 = vmatprep.mubr.f32.mxu0 0.0
        %2420 = vmatmul.mubr.f32.gmra.mxu0 %v2218
        %v2421 = vpop.f32.mrf.mxu0
        %v2422 = vadd.f32 0.0, %v2421
        %v2423 = vpop.f32.mrf.mxu0
        %2424 = vmatprep.mubr.f32.mxu0 0.0
        %2425 = vmatmul.mubr.f32.gmra.mxu0 %v2221
        %v2426 = vpop.f32.mrf.mxu0
        %v2427 = vadd.f32 0.0, %v2426
        %v2428 = vpop.f32.mrf.mxu0
        %2429 = vmatprep.mubr.f32.mxu0 0.0
        %2430 = vmatmul.mubr.f32.gmra.mxu0 %v2224
        %v2431 = vpop.f32.mrf.mxu0
        %v2432 = vadd.f32 0.0, %v2431
        %v2433 = vpop.f32.mrf.mxu0
        %2434 = vmatprep.mubr.f32.mxu0 0.0
        %2435 = vmatmul.mubr.f32.gmra.mxu0 %v2227
        %v2436 = vpop.f32.mrf.mxu0
        %v2437 = vadd.f32 0.0, %v2436
        %v2438 = vpop.f32.mrf.mxu0
        %2439 = vmatprep.mubr.f32.mxu0 0.0
        %2440 = vmatmul.mubr.f32.gmra.mxu0 %v2230
        %v2441 = vpop.f32.mrf.mxu0
        %v2442 = vadd.f32 0.0, %v2441
        %v2443 = vpop.f32.mrf.mxu0
        %2444 = vmatprep.mubr.f32.mxu0 0.0
        %2445 = vmatmul.mubr.f32.gmra.mxu0 %v2233
        %v2446 = vpop.f32.mrf.mxu0
        %v2447 = vadd.f32 0.0, %v2446
        %v2448 = vpop.f32.mrf.mxu0
        %2449 = vmatprep.mubr.f32.mxu0 0.0
        %2450 = vmatmul.mubr.f32.gmra.mxu0 %v2236
        %v2451 = vpop.f32.mrf.mxu0
        %v2452 = vadd.f32 0.0, %v2451
        %v2453 = vpop.f32.mrf.mxu0
        %2454 = vmatprep.mubr.f32.mxu0 0.0
        %2455 = vmatmul.mubr.f32.gmra.mxu0 %v2239
        %v2456 = vpop.f32.mrf.mxu0
        %v2457 = vadd.f32 0.0, %v2456
        %v2458 = vpop.f32.mrf.mxu0
        %2459 = vmatprep.mubr.f32.mxu0 0.0
        %2460 = vmatmul.mubr.f32.gmra.mxu0 %v2242
        %v2461 = vpop.f32.mrf.mxu0
        %v2462 = vadd.f32 0.0, %v2461
        %v2463 = vpop.f32.mrf.mxu0
        %2464 = vmatprep.mubr.f32.mxu0 0.0
        %2465 = vmatmul.mubr.f32.gmra.mxu0 %v2245
        %v2466 = vpop.f32.mrf.mxu0
        %v2467 = vadd.f32 0.0, %v2466
        %v2468 = vpop.f32.mrf.mxu0
        %2469 = vmatprep.mubr.f32.mxu0 0.0
        %2470 = vmatmul.mubr.f32.gmra.mxu0 %v2248
        %v2471 = vpop.f32.mrf.mxu0
        %v2472 = vadd.f32 0.0, %v2471
        %v2473 = vpop.f32.mrf.mxu0
        %2474 = vdwg.mxu0
        %vm2475 = vcmp.ne.s32.totalorder %v307, 0
        %vm2476 = vcmp.ne.s32.totalorder %v308, 0
        %vm2477 = vcmp.ne.s32.totalorder %v309, 0
        %vm2478 = vcmp.ne.s32.totalorder %v310, 0
        %vm2479 = vcmp.ne.s32.totalorder %v311, 0
        %vm2480 = vcmp.ne.s32.totalorder %v312, 0
        %vm2481 = vcmp.ne.s32.totalorder %v313, 0
        %vm2482 = vcmp.ne.s32.totalorder %v314, 0
        %vm2483 = vcmp.ne.s32.totalorder %v315, 0
        %vm2484 = vcmp.ne.s32.totalorder %v316, 0
        %vm2485 = vcmp.ne.s32.totalorder %v317, 0
        %vm2486 = vcmp.ne.s32.totalorder %v318, 0
        %vm2487 = vcmp.ne.s32.totalorder %v319, 0
        %vm2488 = vcmp.ne.s32.totalorder %v320, 0
        %vm2489 = vcmp.ne.s32.totalorder %v321, 0
        %vm2490 = vcmp.ne.s32.totalorder %v322, 0
        %v2491 = vsel %vm2475, 1, 0
        %v2492 = vsel %vm2476, 1, 0
        %v2493 = vsel %vm2477, 1, 0
        %v2494 = vsel %vm2478, 1, 0
        %v2495 = vsel %vm2479, 1, 0
        %v2496 = vsel %vm2480, 1, 0
        %v2497 = vsel %vm2481, 1, 0
        %v2498 = vsel %vm2482, 1, 0
        %v2499 = vsel %vm2483, 1, 0
        %v2500 = vsel %vm2484, 1, 0
        %v2501 = vsel %vm2485, 1, 0
        %v2502 = vsel %vm2486, 1, 0
        %v2503 = vsel %vm2487, 1, 0
        %v2504 = vsel %vm2488, 1, 0
        %v2505 = vsel %vm2489, 1, 0
        %v2506 = vsel %vm2490, 1, 0
        %vm2507 = vcmask 130112
        %v2508 = vsel %vm2507, %v2491, 0
        %v2509 = vand.u32 %v2508, 65535
        %v2510 = vshrl.u32 %v2508, 16
        %v2511 = vcvt.s32.f32 %v2509
        %v2512 = vcvt.s32.f32 %v2510
        %2513 = vadd.xlane.f32.xlu0 %v2511
        %v2514 = vpop.xlane.xlu0 %2513
        %2515 = vadd.xlane.f32.xlu0 %v2512
        %v2516 = vpop.xlane.xlu0 %2515
        %v2517 = vcvt.f32.s32 %v2514
        %v2518 = vcvt.f32.s32 %v2516
        %v2519 = vshll.u32 %v2518, 16
        %v2520 = vadd.s32 %v2519, %v2517
        %v2521 = vsel %vm2507, %v2492, 0
        %v2522 = vand.u32 %v2521, 65535
        %v2523 = vshrl.u32 %v2521, 16
        %v2524 = vcvt.s32.f32 %v2522
        %v2525 = vcvt.s32.f32 %v2523
        %2526 = vadd.xlane.f32.xlu0 %v2524
        %v2527 = vpop.xlane.xlu0 %2526
        %2528 = vadd.xlane.f32.xlu0 %v2525
        %v2529 = vpop.xlane.xlu0 %2528
        %v2530 = vcvt.f32.s32 %v2527
        %v2531 = vcvt.f32.s32 %v2529
        %v2532 = vshll.u32 %v2531, 16
        %v2533 = vadd.s32 %v2532, %v2530
        %v2534 = vsel %vm2507, %v2493, 0
        %v2535 = vand.u32 %v2534, 65535
        %v2536 = vshrl.u32 %v2534, 16
        %v2537 = vcvt.s32.f32 %v2535
        %v2538 = vcvt.s32.f32 %v2536
        %2539 = vadd.xlane.f32.xlu0 %v2537
        %v2540 = vpop.xlane.xlu0 %2539
        %2541 = vadd.xlane.f32.xlu0 %v2538
        %v2542 = vpop.xlane.xlu0 %2541
        %v2543 = vcvt.f32.s32 %v2540
        %v2544 = vcvt.f32.s32 %v2542
        %v2545 = vshll.u32 %v2544, 16
        %v2546 = vadd.s32 %v2545, %v2543
        %v2547 = vsel %vm2507, %v2494, 0
        %v2548 = vand.u32 %v2547, 65535
        %v2549 = vshrl.u32 %v2547, 16
        %v2550 = vcvt.s32.f32 %v2548
        %v2551 = vcvt.s32.f32 %v2549
        %2552 = vadd.xlane.f32.xlu0 %v2550
        %v2553 = vpop.xlane.xlu0 %2552
        %2554 = vadd.xlane.f32.xlu0 %v2551
        %v2555 = vpop.xlane.xlu0 %2554
        %v2556 = vcvt.f32.s32 %v2553
        %v2557 = vcvt.f32.s32 %v2555
        %v2558 = vshll.u32 %v2557, 16
        %v2559 = vadd.s32 %v2558, %v2556
        %v2560 = vsel %vm2507, %v2495, 0
        %v2561 = vand.u32 %v2560, 65535
        %v2562 = vshrl.u32 %v2560, 16
        %v2563 = vcvt.s32.f32 %v2561
        %v2564 = vcvt.s32.f32 %v2562
        %2565 = vadd.xlane.f32.xlu0 %v2563
        %v2566 = vpop.xlane.xlu0 %2565
        %2567 = vadd.xlane.f32.xlu0 %v2564
        %v2568 = vpop.xlane.xlu0 %2567
        %v2569 = vcvt.f32.s32 %v2566
        %v2570 = vcvt.f32.s32 %v2568
        %v2571 = vshll.u32 %v2570, 16
        %v2572 = vadd.s32 %v2571, %v2569
        %v2573 = vsel %vm2507, %v2496, 0
        %v2574 = vand.u32 %v2573, 65535
        %v2575 = vshrl.u32 %v2573, 16
        %v2576 = vcvt.s32.f32 %v2574
        %v2577 = vcvt.s32.f32 %v2575
        %2578 = vadd.xlane.f32.xlu0 %v2576
        %v2579 = vpop.xlane.xlu0 %2578
        %2580 = vadd.xlane.f32.xlu0 %v2577
        %v2581 = vpop.xlane.xlu0 %2580
        %v2582 = vcvt.f32.s32 %v2579
        %v2583 = vcvt.f32.s32 %v2581
        %v2584 = vshll.u32 %v2583, 16
        %v2585 = vadd.s32 %v2584, %v2582
        %v2586 = vsel %vm2507, %v2497, 0
        %v2587 = vand.u32 %v2586, 65535
        %v2588 = vshrl.u32 %v2586, 16
        %v2589 = vcvt.s32.f32 %v2587
        %v2590 = vcvt.s32.f32 %v2588
        %2591 = vadd.xlane.f32.xlu0 %v2589
        %v2592 = vpop.xlane.xlu0 %2591
        %2593 = vadd.xlane.f32.xlu0 %v2590
        %v2594 = vpop.xlane.xlu0 %2593
        %v2595 = vcvt.f32.s32 %v2592
        %v2596 = vcvt.f32.s32 %v2594
        %v2597 = vshll.u32 %v2596, 16
        %v2598 = vadd.s32 %v2597, %v2595
        %v2599 = vsel %vm2507, %v2498, 0
        %v2600 = vand.u32 %v2599, 65535
        %v2601 = vshrl.u32 %v2599, 16
        %v2602 = vcvt.s32.f32 %v2600
        %v2603 = vcvt.s32.f32 %v2601
        %2604 = vadd.xlane.f32.xlu0 %v2602
        %v2605 = vpop.xlane.xlu0 %2604
        %2606 = vadd.xlane.f32.xlu0 %v2603
        %v2607 = vpop.xlane.xlu0 %2606
        %v2608 = vcvt.f32.s32 %v2605
        %v2609 = vcvt.f32.s32 %v2607
        %v2610 = vshll.u32 %v2609, 16
        %v2611 = vadd.s32 %v2610, %v2608
        %v2612 = vsel %vm2507, %v2499, 0
        %v2613 = vand.u32 %v2612, 65535
        %v2614 = vshrl.u32 %v2612, 16
        %v2615 = vcvt.s32.f32 %v2613
        %v2616 = vcvt.s32.f32 %v2614
        %2617 = vadd.xlane.f32.xlu0 %v2615
        %v2618 = vpop.xlane.xlu0 %2617
        %2619 = vadd.xlane.f32.xlu0 %v2616
        %v2620 = vpop.xlane.xlu0 %2619
        %v2621 = vcvt.f32.s32 %v2618
        %v2622 = vcvt.f32.s32 %v2620
        %v2623 = vshll.u32 %v2622, 16
        %v2624 = vadd.s32 %v2623, %v2621
        %v2625 = vsel %vm2507, %v2500, 0
        %v2626 = vand.u32 %v2625, 65535
        %v2627 = vshrl.u32 %v2625, 16
        %v2628 = vcvt.s32.f32 %v2626
        %v2629 = vcvt.s32.f32 %v2627
        %2630 = vadd.xlane.f32.xlu0 %v2628
        %v2631 = vpop.xlane.xlu0 %2630
        %2632 = vadd.xlane.f32.xlu0 %v2629
        %v2633 = vpop.xlane.xlu0 %2632
        %v2634 = vcvt.f32.s32 %v2631
        %v2635 = vcvt.f32.s32 %v2633
        %v2636 = vshll.u32 %v2635, 16
        %v2637 = vadd.s32 %v2636, %v2634
        %v2638 = vsel %vm2507, %v2501, 0
        %v2639 = vand.u32 %v2638, 65535
        %v2640 = vshrl.u32 %v2638, 16
        %v2641 = vcvt.s32.f32 %v2639
        %v2642 = vcvt.s32.f32 %v2640
        %2643 = vadd.xlane.f32.xlu0 %v2641
        %v2644 = vpop.xlane.xlu0 %2643
        %2645 = vadd.xlane.f32.xlu0 %v2642
        %v2646 = vpop.xlane.xlu0 %2645
        %v2647 = vcvt.f32.s32 %v2644
        %v2648 = vcvt.f32.s32 %v2646
        %v2649 = vshll.u32 %v2648, 16
        %v2650 = vadd.s32 %v2649, %v2647
        %v2651 = vsel %vm2507, %v2502, 0
        %v2652 = vand.u32 %v2651, 65535
        %v2653 = vshrl.u32 %v2651, 16
        %v2654 = vcvt.s32.f32 %v2652
        %v2655 = vcvt.s32.f32 %v2653
        %2656 = vadd.xlane.f32.xlu0 %v2654
        %v2657 = vpop.xlane.xlu0 %2656
        %2658 = vadd.xlane.f32.xlu0 %v2655
        %v2659 = vpop.xlane.xlu0 %2658
        %v2660 = vcvt.f32.s32 %v2657
        %v2661 = vcvt.f32.s32 %v2659
        %v2662 = vshll.u32 %v2661, 16
        %v2663 = vadd.s32 %v2662, %v2660
        %v2664 = vsel %vm2507, %v2503, 0
        %v2665 = vand.u32 %v2664, 65535
        %v2666 = vshrl.u32 %v2664, 16
        %v2667 = vcvt.s32.f32 %v2665
        %v2668 = vcvt.s32.f32 %v2666
        %2669 = vadd.xlane.f32.xlu0 %v2667
        %v2670 = vpop.xlane.xlu0 %2669
        %2671 = vadd.xlane.f32.xlu0 %v2668
        %v2672 = vpop.xlane.xlu0 %2671
        %v2673 = vcvt.f32.s32 %v2670
        %v2674 = vcvt.f32.s32 %v2672
        %v2675 = vshll.u32 %v2674, 16
        %v2676 = vadd.s32 %v2675, %v2673
        %v2677 = vsel %vm2507, %v2504, 0
        %v2678 = vand.u32 %v2677, 65535
        %v2679 = vshrl.u32 %v2677, 16
        %v2680 = vcvt.s32.f32 %v2678
        %v2681 = vcvt.s32.f32 %v2679
        %2682 = vadd.xlane.f32.xlu0 %v2680
        %v2683 = vpop.xlane.xlu0 %2682
        %2684 = vadd.xlane.f32.xlu0 %v2681
        %v2685 = vpop.xlane.xlu0 %2684
        %v2686 = vcvt.f32.s32 %v2683
        %v2687 = vcvt.f32.s32 %v2685
        %v2688 = vshll.u32 %v2687, 16
        %v2689 = vadd.s32 %v2688, %v2686
        %v2690 = vsel %vm2507, %v2505, 0
        %v2691 = vand.u32 %v2690, 65535
        %v2692 = vshrl.u32 %v2690, 16
        %v2693 = vcvt.s32.f32 %v2691
        %v2694 = vcvt.s32.f32 %v2692
        %2695 = vadd.xlane.f32.xlu0 %v2693
        %v2696 = vpop.xlane.xlu0 %2695
        %2697 = vadd.xlane.f32.xlu0 %v2694
        %v2698 = vpop.xlane.xlu0 %2697
        %v2699 = vcvt.f32.s32 %v2696
        %v2700 = vcvt.f32.s32 %v2698
        %v2701 = vshll.u32 %v2700, 16
        %v2702 = vadd.s32 %v2701, %v2699
        %v2703 = vsel %vm2507, %v2506, 0
        %v2704 = vand.u32 %v2703, 65535
        %v2705 = vshrl.u32 %v2703, 16
        %v2706 = vcvt.s32.f32 %v2704
        %v2707 = vcvt.s32.f32 %v2705
        %2708 = vadd.xlane.f32.xlu0 %v2706
        %v2709 = vpop.xlane.xlu0 %2708
        %2710 = vadd.xlane.f32.xlu0 %v2707
        %v2711 = vpop.xlane.xlu0 %2710
        %v2712 = vcvt.f32.s32 %v2709
        %v2713 = vcvt.f32.s32 %v2711
        %v2714 = vshll.u32 %v2713, 16
        %v2715 = vadd.s32 %v2714, %v2712
        %2716 = vrot.lane.b32.xlu0 %v307, 127
        %v2717 = vpop.permute.xlu0 %2716
        %2718 = vrot.lane.b32.xlu0 %v308, 127
        %v2719 = vpop.permute.xlu0 %2718
        %2720 = vrot.lane.b32.xlu0 %v309, 127
        %v2721 = vpop.permute.xlu0 %2720
        %2722 = vrot.lane.b32.xlu0 %v310, 127
        %v2723 = vpop.permute.xlu0 %2722
        %2724 = vrot.lane.b32.xlu0 %v311, 127
        %v2725 = vpop.permute.xlu0 %2724
        %2726 = vrot.lane.b32.xlu0 %v312, 127
        %v2727 = vpop.permute.xlu0 %2726
        %2728 = vrot.lane.b32.xlu0 %v313, 127
        %v2729 = vpop.permute.xlu0 %2728
        %2730 = vrot.lane.b32.xlu0 %v314, 127
        %v2731 = vpop.permute.xlu0 %2730
        %2732 = vrot.lane.b32.xlu0 %v315, 127
        %v2733 = vpop.permute.xlu0 %2732
        %2734 = vrot.lane.b32.xlu0 %v316, 127
        %v2735 = vpop.permute.xlu0 %2734
        %2736 = vrot.lane.b32.xlu0 %v317, 127
        %v2737 = vpop.permute.xlu0 %2736
        %2738 = vrot.lane.b32.xlu0 %v318, 127
        %v2739 = vpop.permute.xlu0 %2738
        %2740 = vrot.lane.b32.xlu0 %v319, 127
        %v2741 = vpop.permute.xlu0 %2740
        %2742 = vrot.lane.b32.xlu0 %v320, 127
        %v2743 = vpop.permute.xlu0 %2742
        %2744 = vrot.lane.b32.xlu0 %v321, 127
        %v2745 = vpop.permute.xlu0 %2744
        %2746 = vrot.lane.b32.xlu0 %v322, 127
        %v2747 = vpop.permute.xlu0 %2746
        %2748 = vrot.lane.b32.xlu0 %v307, 126
        %v2749 = vpop.permute.xlu0 %2748
        %2750 = vrot.lane.b32.xlu0 %v308, 126
        %v2751 = vpop.permute.xlu0 %2750
        %2752 = vrot.lane.b32.xlu0 %v309, 126
        %v2753 = vpop.permute.xlu0 %2752
        %2754 = vrot.lane.b32.xlu0 %v310, 126
        %v2755 = vpop.permute.xlu0 %2754
        %2756 = vrot.lane.b32.xlu0 %v311, 126
        %v2757 = vpop.permute.xlu0 %2756
        %2758 = vrot.lane.b32.xlu0 %v312, 126
        %v2759 = vpop.permute.xlu0 %2758
        %2760 = vrot.lane.b32.xlu0 %v313, 126
        %v2761 = vpop.permute.xlu0 %2760
        %2762 = vrot.lane.b32.xlu0 %v314, 126
        %v2763 = vpop.permute.xlu0 %2762
        %2764 = vrot.lane.b32.xlu0 %v315, 126
        %v2765 = vpop.permute.xlu0 %2764
        %2766 = vrot.lane.b32.xlu0 %v316, 126
        %v2767 = vpop.permute.xlu0 %2766
        %2768 = vrot.lane.b32.xlu0 %v317, 126
        %v2769 = vpop.permute.xlu0 %2768
        %2770 = vrot.lane.b32.xlu0 %v318, 126
        %v2771 = vpop.permute.xlu0 %2770
        %2772 = vrot.lane.b32.xlu0 %v319, 126
        %v2773 = vpop.permute.xlu0 %2772
        %2774 = vrot.lane.b32.xlu0 %v320, 126
        %v2775 = vpop.permute.xlu0 %2774
        %2776 = vrot.lane.b32.xlu0 %v321, 126
        %v2777 = vpop.permute.xlu0 %2776
        %2778 = vrot.lane.b32.xlu0 %v322, 126
        %v2779 = vpop.permute.xlu0 %2778
        %2780 = vrot.lane.b32.xlu0 %v307, 125
        %v2781 = vpop.permute.xlu0 %2780
        %2782 = vrot.lane.b32.xlu0 %v308, 125
        %v2783 = vpop.permute.xlu0 %2782
        %2784 = vrot.lane.b32.xlu0 %v309, 125
        %v2785 = vpop.permute.xlu0 %2784
        %2786 = vrot.lane.b32.xlu0 %v310, 125
        %v2787 = vpop.permute.xlu0 %2786
        %2788 = vrot.lane.b32.xlu0 %v311, 125
        %v2789 = vpop.permute.xlu0 %2788
        %2790 = vrot.lane.b32.xlu0 %v312, 125
        %v2791 = vpop.permute.xlu0 %2790
        %2792 = vrot.lane.b32.xlu0 %v313, 125
        %v2793 = vpop.permute.xlu0 %2792
        %2794 = vrot.lane.b32.xlu0 %v314, 125
        %v2795 = vpop.permute.xlu0 %2794
        %2796 = vrot.lane.b32.xlu0 %v315, 125
        %v2797 = vpop.permute.xlu0 %2796
        %2798 = vrot.lane.b32.xlu0 %v316, 125
        %v2799 = vpop.permute.xlu0 %2798
        %2800 = vrot.lane.b32.xlu0 %v317, 125
        %v2801 = vpop.permute.xlu0 %2800
        %2802 = vrot.lane.b32.xlu0 %v318, 125
        %v2803 = vpop.permute.xlu0 %2802
        %2804 = vrot.lane.b32.xlu0 %v319, 125
        %v2805 = vpop.permute.xlu0 %2804
        %2806 = vrot.lane.b32.xlu0 %v320, 125
        %v2807 = vpop.permute.xlu0 %2806
        %2808 = vrot.lane.b32.xlu0 %v321, 125
        %v2809 = vpop.permute.xlu0 %2808
        %2810 = vrot.lane.b32.xlu0 %v322, 125
        %v2811 = vpop.permute.xlu0 %2810
        %2812 = vrot.lane.b32.xlu0 %v307, 124
        %v2813 = vpop.permute.xlu0 %2812
        %2814 = vrot.lane.b32.xlu0 %v308, 124
        %v2815 = vpop.permute.xlu0 %2814
        %2816 = vrot.lane.b32.xlu0 %v309, 124
        %v2817 = vpop.permute.xlu0 %2816
        %2818 = vrot.lane.b32.xlu0 %v310, 124
        %v2819 = vpop.permute.xlu0 %2818
        %2820 = vrot.lane.b32.xlu0 %v311, 124
        %v2821 = vpop.permute.xlu0 %2820
        %2822 = vrot.lane.b32.xlu0 %v312, 124
        %v2823 = vpop.permute.xlu0 %2822
        %2824 = vrot.lane.b32.xlu0 %v313, 124
        %v2825 = vpop.permute.xlu0 %2824
        %2826 = vrot.lane.b32.xlu0 %v314, 124
        %v2827 = vpop.permute.xlu0 %2826
        %2828 = vrot.lane.b32.xlu0 %v315, 124
        %v2829 = vpop.permute.xlu0 %2828
        %2830 = vrot.lane.b32.xlu0 %v316, 124
        %v2831 = vpop.permute.xlu0 %2830
        %2832 = vrot.lane.b32.xlu0 %v317, 124
        %v2833 = vpop.permute.xlu0 %2832
        %2834 = vrot.lane.b32.xlu0 %v318, 124
        %v2835 = vpop.permute.xlu0 %2834
        %2836 = vrot.lane.b32.xlu0 %v319, 124
        %v2837 = vpop.permute.xlu0 %2836
        %2838 = vrot.lane.b32.xlu0 %v320, 124
        %v2839 = vpop.permute.xlu0 %2838
        %2840 = vrot.lane.b32.xlu0 %v321, 124
        %v2841 = vpop.permute.xlu0 %2840
        %2842 = vrot.lane.b32.xlu0 %v322, 124
        %v2843 = vpop.permute.xlu0 %2842
        %2844 = vrot.lane.b32.xlu0 %v307, 123
        %v2845 = vpop.permute.xlu0 %2844
        %2846 = vrot.lane.b32.xlu0 %v308, 123
        %v2847 = vpop.permute.xlu0 %2846
        %2848 = vrot.lane.b32.xlu0 %v309, 123
        %v2849 = vpop.permute.xlu0 %2848
        %2850 = vrot.lane.b32.xlu0 %v310, 123
        %v2851 = vpop.permute.xlu0 %2850
        %2852 = vrot.lane.b32.xlu0 %v311, 123
        %v2853 = vpop.permute.xlu0 %2852
        %2854 = vrot.lane.b32.xlu0 %v312, 123
        %v2855 = vpop.permute.xlu0 %2854
        %2856 = vrot.lane.b32.xlu0 %v313, 123
        %v2857 = vpop.permute.xlu0 %2856
        %2858 = vrot.lane.b32.xlu0 %v314, 123
        %v2859 = vpop.permute.xlu0 %2858
        %2860 = vrot.lane.b32.xlu0 %v315, 123
        %v2861 = vpop.permute.xlu0 %2860
        %2862 = vrot.lane.b32.xlu0 %v316, 123
        %v2863 = vpop.permute.xlu0 %2862
        %2864 = vrot.lane.b32.xlu0 %v317, 123
        %v2865 = vpop.permute.xlu0 %2864
        %2866 = vrot.lane.b32.xlu0 %v318, 123
        %v2867 = vpop.permute.xlu0 %2866
        %2868 = vrot.lane.b32.xlu0 %v319, 123
        %v2869 = vpop.permute.xlu0 %2868
        %2870 = vrot.lane.b32.xlu0 %v320, 123
        %v2871 = vpop.permute.xlu0 %2870
        %2872 = vrot.lane.b32.xlu0 %v321, 123
        %v2873 = vpop.permute.xlu0 %2872
        %2874 = vrot.lane.b32.xlu0 %v322, 123
        %v2875 = vpop.permute.xlu0 %2874
        %2876 = vrot.lane.b32.xlu0 %v307, 122
        %v2877 = vpop.permute.xlu0 %2876
        %2878 = vrot.lane.b32.xlu0 %v308, 122
        %v2879 = vpop.permute.xlu0 %2878
        %2880 = vrot.lane.b32.xlu0 %v309, 122
        %v2881 = vpop.permute.xlu0 %2880
        %2882 = vrot.lane.b32.xlu0 %v310, 122
        %v2883 = vpop.permute.xlu0 %2882
        %2884 = vrot.lane.b32.xlu0 %v311, 122
        %v2885 = vpop.permute.xlu0 %2884
        %2886 = vrot.lane.b32.xlu0 %v312, 122
        %v2887 = vpop.permute.xlu0 %2886
        %2888 = vrot.lane.b32.xlu0 %v313, 122
        %v2889 = vpop.permute.xlu0 %2888
        %2890 = vrot.lane.b32.xlu0 %v314, 122
        %v2891 = vpop.permute.xlu0 %2890
        %2892 = vrot.lane.b32.xlu0 %v315, 122
        %v2893 = vpop.permute.xlu0 %2892
        %2894 = vrot.lane.b32.xlu0 %v316, 122
        %v2895 = vpop.permute.xlu0 %2894
        %2896 = vrot.lane.b32.xlu0 %v317, 122
        %v2897 = vpop.permute.xlu0 %2896
        %2898 = vrot.lane.b32.xlu0 %v318, 122
        %v2899 = vpop.permute.xlu0 %2898
        %2900 = vrot.lane.b32.xlu0 %v319, 122
        %v2901 = vpop.permute.xlu0 %2900
        %2902 = vrot.lane.b32.xlu0 %v320, 122
        %v2903 = vpop.permute.xlu0 %2902
        %2904 = vrot.lane.b32.xlu0 %v321, 122
        %v2905 = vpop.permute.xlu0 %2904
        %2906 = vrot.lane.b32.xlu0 %v322, 122
        %v2907 = vpop.permute.xlu0 %2906
        %2908 = vrot.lane.b32.xlu0 %v307, 121
        %v2909 = vpop.permute.xlu0 %2908
        %2910 = vrot.lane.b32.xlu0 %v308, 121
        %v2911 = vpop.permute.xlu0 %2910
        %2912 = vrot.lane.b32.xlu0 %v309, 121
        %v2913 = vpop.permute.xlu0 %2912
        %2914 = vrot.lane.b32.xlu0 %v310, 121
        %v2915 = vpop.permute.xlu0 %2914
        %2916 = vrot.lane.b32.xlu0 %v311, 121
        %v2917 = vpop.permute.xlu0 %2916
        %2918 = vrot.lane.b32.xlu0 %v312, 121
        %v2919 = vpop.permute.xlu0 %2918
        %2920 = vrot.lane.b32.xlu0 %v313, 121
        %v2921 = vpop.permute.xlu0 %2920
        %2922 = vrot.lane.b32.xlu0 %v314, 121
        %v2923 = vpop.permute.xlu0 %2922
        %2924 = vrot.lane.b32.xlu0 %v315, 121
        %v2925 = vpop.permute.xlu0 %2924
        %2926 = vrot.lane.b32.xlu0 %v316, 121
        %v2927 = vpop.permute.xlu0 %2926
        %2928 = vrot.lane.b32.xlu0 %v317, 121
        %v2929 = vpop.permute.xlu0 %2928
        %2930 = vrot.lane.b32.xlu0 %v318, 121
        %v2931 = vpop.permute.xlu0 %2930
        %2932 = vrot.lane.b32.xlu0 %v319, 121
        %v2933 = vpop.permute.xlu0 %2932
        %2934 = vrot.lane.b32.xlu0 %v320, 121
        %v2935 = vpop.permute.xlu0 %2934
        %2936 = vrot.lane.b32.xlu0 %v321, 121
        %v2937 = vpop.permute.xlu0 %2936
        %2938 = vrot.lane.b32.xlu0 %v322, 121
        %v2939 = vpop.permute.xlu0 %2938
        %2940 = vset.pattern.permute.xlu0 8
        %2941 = vperm.xlu0 %2940, %v307
        %v2942 = vpop.permute.xlu0 %2941
        %2943 = vset.pattern.permute.xlu0 8
        %2944 = vperm.xlu0 %2943, %v308
        %v2945 = vpop.permute.xlu0 %2944
        %2946 = vset.pattern.permute.xlu0 8
        %2947 = vperm.xlu0 %2946, %v309
        %v2948 = vpop.permute.xlu0 %2947
        %2949 = vset.pattern.permute.xlu0 8
        %2950 = vperm.xlu0 %2949, %v310
        %v2951 = vpop.permute.xlu0 %2950
        %2952 = vset.pattern.permute.xlu0 8
        %2953 = vperm.xlu0 %2952, %v311
        %v2954 = vpop.permute.xlu0 %2953
        %2955 = vset.pattern.permute.xlu0 8
        %2956 = vperm.xlu0 %2955, %v312
        %v2957 = vpop.permute.xlu0 %2956
        %2958 = vset.pattern.permute.xlu0 8
        %2959 = vperm.xlu0 %2958, %v313
        %v2960 = vpop.permute.xlu0 %2959
        %2961 = vset.pattern.permute.xlu0 8
        %2962 = vperm.xlu0 %2961, %v314
        %v2963 = vpop.permute.xlu0 %2962
        %2964 = vset.pattern.permute.xlu0 8
        %2965 = vperm.xlu0 %2964, %v315
        %v2966 = vpop.permute.xlu0 %2965
        %2967 = vset.pattern.permute.xlu0 8
        %2968 = vperm.xlu0 %2967, %v316
        %v2969 = vpop.permute.xlu0 %2968
        %2970 = vset.pattern.permute.xlu0 8
        %2971 = vperm.xlu0 %2970, %v317
        %v2972 = vpop.permute.xlu0 %2971
        %2973 = vset.pattern.permute.xlu0 8
        %2974 = vperm.xlu0 %2973, %v318
        %v2975 = vpop.permute.xlu0 %2974
        %2976 = vset.pattern.permute.xlu0 8
        %2977 = vperm.xlu0 %2976, %v319
        %v2978 = vpop.permute.xlu0 %2977
        %2979 = vset.pattern.permute.xlu0 8
        %2980 = vperm.xlu0 %2979, %v320
        %v2981 = vpop.permute.xlu0 %2980
        %2982 = vset.pattern.permute.xlu0 8
        %2983 = vperm.xlu0 %2982, %v321
        %v2984 = vpop.permute.xlu0 %2983
        %2985 = vset.pattern.permute.xlu0 8
        %2986 = vperm.xlu0 %2985, %v322
        %v2987 = vpop.permute.xlu0 %2986
        %2988 = vset.pattern.permute.xlu0 8
        %2989 = vperm.xlu0 %2988, %v2717
        %v2990 = vpop.permute.xlu0 %2989
        %2991 = vset.pattern.permute.xlu0 8
        %2992 = vperm.xlu0 %2991, %v2719
        %v2993 = vpop.permute.xlu0 %2992
        %2994 = vset.pattern.permute.xlu0 8
        %2995 = vperm.xlu0 %2994, %v2721
        %v2996 = vpop.permute.xlu0 %2995
        %2997 = vset.pattern.permute.xlu0 8
        %2998 = vperm.xlu0 %2997, %v2723
        %v2999 = vpop.permute.xlu0 %2998
        %3000 = vset.pattern.permute.xlu0 8
        %3001 = vperm.xlu0 %3000, %v2725
        %v3002 = vpop.permute.xlu0 %3001
        %3003 = vset.pattern.permute.xlu0 8
        %3004 = vperm.xlu0 %3003, %v2727
        %v3005 = vpop.permute.xlu0 %3004
        %3006 = vset.pattern.permute.xlu0 8
        %3007 = vperm.xlu0 %3006, %v2729
        %v3008 = vpop.permute.xlu0 %3007
        %3009 = vset.pattern.permute.xlu0 8
        %3010 = vperm.xlu0 %3009, %v2731
        %v3011 = vpop.permute.xlu0 %3010
        %3012 = vset.pattern.permute.xlu0 8
        %3013 = vperm.xlu0 %3012, %v2733
        %v3014 = vpop.permute.xlu0 %3013
        %3015 = vset.pattern.permute.xlu0 8
        %3016 = vperm.xlu0 %3015, %v2735
        %v3017 = vpop.permute.xlu0 %3016
        %3018 = vset.pattern.permute.xlu0 8
        %3019 = vperm.xlu0 %3018, %v2737
        %v3020 = vpop.permute.xlu0 %3019
        %3021 = vset.pattern.permute.xlu0 8
        %3022 = vperm.xlu0 %3021, %v2739
        %v3023 = vpop.permute.xlu0 %3022
        %3024 = vset.pattern.permute.xlu0 8
        %3025 = vperm.xlu0 %3024, %v2741
        %v3026 = vpop.permute.xlu0 %3025
        %3027 = vset.pattern.permute.xlu0 8
        %3028 = vperm.xlu0 %3027, %v2743
        %v3029 = vpop.permute.xlu0 %3028
        %3030 = vset.pattern.permute.xlu0 8
        %3031 = vperm.xlu0 %3030, %v2745
        %v3032 = vpop.permute.xlu0 %3031
        %3033 = vset.pattern.permute.xlu0 8
        %3034 = vperm.xlu0 %3033, %v2747
        %v3035 = vpop.permute.xlu0 %3034
        %3036 = vset.pattern.permute.xlu0 8
        %3037 = vperm.xlu0 %3036, %v2749
        %v3038 = vpop.permute.xlu0 %3037
        %3039 = vset.pattern.permute.xlu0 8
        %3040 = vperm.xlu0 %3039, %v2751
        %v3041 = vpop.permute.xlu0 %3040
        %3042 = vset.pattern.permute.xlu0 8
        %3043 = vperm.xlu0 %3042, %v2753
        %v3044 = vpop.permute.xlu0 %3043
        %3045 = vset.pattern.permute.xlu0 8
        %3046 = vperm.xlu0 %3045, %v2755
        %v3047 = vpop.permute.xlu0 %3046
        %3048 = vset.pattern.permute.xlu0 8
        %3049 = vperm.xlu0 %3048, %v2757
        %v3050 = vpop.permute.xlu0 %3049
        %3051 = vset.pattern.permute.xlu0 8
        %3052 = vperm.xlu0 %3051, %v2759
        %v3053 = vpop.permute.xlu0 %3052
        %3054 = vset.pattern.permute.xlu0 8
        %3055 = vperm.xlu0 %3054, %v2761
        %v3056 = vpop.permute.xlu0 %3055
        %3057 = vset.pattern.permute.xlu0 8
        %3058 = vperm.xlu0 %3057, %v2763
        %v3059 = vpop.permute.xlu0 %3058
        %3060 = vset.pattern.permute.xlu0 8
        %3061 = vperm.xlu0 %3060, %v2765
        %v3062 = vpop.permute.xlu0 %3061
        %3063 = vset.pattern.permute.xlu0 8
        %3064 = vperm.xlu0 %3063, %v2767
        %v3065 = vpop.permute.xlu0 %3064
        %3066 = vset.pattern.permute.xlu0 8
        %3067 = vperm.xlu0 %3066, %v2769
        %v3068 = vpop.permute.xlu0 %3067
        %3069 = vset.pattern.permute.xlu0 8
        %3070 = vperm.xlu0 %3069, %v2771
        %v3071 = vpop.permute.xlu0 %3070
        %3072 = vset.pattern.permute.xlu0 8
        %3073 = vperm.xlu0 %3072, %v2773
        %v3074 = vpop.permute.xlu0 %3073
        %3075 = vset.pattern.permute.xlu0 8
        %3076 = vperm.xlu0 %3075, %v2775
        %v3077 = vpop.permute.xlu0 %3076
        %3078 = vset.pattern.permute.xlu0 8
        %3079 = vperm.xlu0 %3078, %v2777
        %v3080 = vpop.permute.xlu0 %3079
        %3081 = vset.pattern.permute.xlu0 8
        %3082 = vperm.xlu0 %3081, %v2779
        %v3083 = vpop.permute.xlu0 %3082
        %3084 = vset.pattern.permute.xlu0 8
        %3085 = vperm.xlu0 %3084, %v2781
        %v3086 = vpop.permute.xlu0 %3085
        %3087 = vset.pattern.permute.xlu0 8
        %3088 = vperm.xlu0 %3087, %v2783
        %v3089 = vpop.permute.xlu0 %3088
        %3090 = vset.pattern.permute.xlu0 8
        %3091 = vperm.xlu0 %3090, %v2785
        %v3092 = vpop.permute.xlu0 %3091
        %3093 = vset.pattern.permute.xlu0 8
        %3094 = vperm.xlu0 %3093, %v2787
        %v3095 = vpop.permute.xlu0 %3094
        %3096 = vset.pattern.permute.xlu0 8
        %3097 = vperm.xlu0 %3096, %v2789
        %v3098 = vpop.permute.xlu0 %3097
        %3099 = vset.pattern.permute.xlu0 8
        %3100 = vperm.xlu0 %3099, %v2791
        %v3101 = vpop.permute.xlu0 %3100
        %3102 = vset.pattern.permute.xlu0 8
        %3103 = vperm.xlu0 %3102, %v2793
        %v3104 = vpop.permute.xlu0 %3103
        %3105 = vset.pattern.permute.xlu0 8
        %3106 = vperm.xlu0 %3105, %v2795
        %v3107 = vpop.permute.xlu0 %3106
        %3108 = vset.pattern.permute.xlu0 8
        %3109 = vperm.xlu0 %3108, %v2797
        %v3110 = vpop.permute.xlu0 %3109
        %3111 = vset.pattern.permute.xlu0 8
        %3112 = vperm.xlu0 %3111, %v2799
        %v3113 = vpop.permute.xlu0 %3112
        %3114 = vset.pattern.permute.xlu0 8
        %3115 = vperm.xlu0 %3114, %v2801
        %v3116 = vpop.permute.xlu0 %3115
        %3117 = vset.pattern.permute.xlu0 8
        %3118 = vperm.xlu0 %3117, %v2803
        %v3119 = vpop.permute.xlu0 %3118
        %3120 = vset.pattern.permute.xlu0 8
        %3121 = vperm.xlu0 %3120, %v2805
        %v3122 = vpop.permute.xlu0 %3121
        %3123 = vset.pattern.permute.xlu0 8
        %3124 = vperm.xlu0 %3123, %v2807
        %v3125 = vpop.permute.xlu0 %3124
        %3126 = vset.pattern.permute.xlu0 8
        %3127 = vperm.xlu0 %3126, %v2809
        %v3128 = vpop.permute.xlu0 %3127
        %3129 = vset.pattern.permute.xlu0 8
        %3130 = vperm.xlu0 %3129, %v2811
        %v3131 = vpop.permute.xlu0 %3130
        %3132 = vset.pattern.permute.xlu0 8
        %3133 = vperm.xlu0 %3132, %v2813
        %v3134 = vpop.permute.xlu0 %3133
        %3135 = vset.pattern.permute.xlu0 8
        %3136 = vperm.xlu0 %3135, %v2815
        %v3137 = vpop.permute.xlu0 %3136
        %3138 = vset.pattern.permute.xlu0 8
        %3139 = vperm.xlu0 %3138, %v2817
        %v3140 = vpop.permute.xlu0 %3139
        %3141 = vset.pattern.permute.xlu0 8
        %3142 = vperm.xlu0 %3141, %v2819
        %v3143 = vpop.permute.xlu0 %3142
        %3144 = vset.pattern.permute.xlu0 8
        %3145 = vperm.xlu0 %3144, %v2821
        %v3146 = vpop.permute.xlu0 %3145
        %3147 = vset.pattern.permute.xlu0 8
        %3148 = vperm.xlu0 %3147, %v2823
        %v3149 = vpop.permute.xlu0 %3148
        %3150 = vset.pattern.permute.xlu0 8
        %3151 = vperm.xlu0 %3150, %v2825
        %v3152 = vpop.permute.xlu0 %3151
        %3153 = vset.pattern.permute.xlu0 8
        %3154 = vperm.xlu0 %3153, %v2827
        %v3155 = vpop.permute.xlu0 %3154
        %3156 = vset.pattern.permute.xlu0 8
        %3157 = vperm.xlu0 %3156, %v2829
        %v3158 = vpop.permute.xlu0 %3157
        %3159 = vset.pattern.permute.xlu0 8
        %3160 = vperm.xlu0 %3159, %v2831
        %v3161 = vpop.permute.xlu0 %3160
        %3162 = vset.pattern.permute.xlu0 8
        %3163 = vperm.xlu0 %3162, %v2833
        %v3164 = vpop.permute.xlu0 %3163
        %3165 = vset.pattern.permute.xlu0 8
        %3166 = vperm.xlu0 %3165, %v2835
        %v3167 = vpop.permute.xlu0 %3166
        %3168 = vset.pattern.permute.xlu0 8
        %3169 = vperm.xlu0 %3168, %v2837
        %v3170 = vpop.permute.xlu0 %3169
        %3171 = vset.pattern.permute.xlu0 8
        %3172 = vperm.xlu0 %3171, %v2839
        %v3173 = vpop.permute.xlu0 %3172
        %3174 = vset.pattern.permute.xlu0 8
        %3175 = vperm.xlu0 %3174, %v2841
        %v3176 = vpop.permute.xlu0 %3175
        %3177 = vset.pattern.permute.xlu0 8
        %3178 = vperm.xlu0 %3177, %v2843
        %v3179 = vpop.permute.xlu0 %3178
        %3180 = vset.pattern.permute.xlu0 8
        %3181 = vperm.xlu0 %3180, %v2845
        %v3182 = vpop.permute.xlu0 %3181
        %3183 = vset.pattern.permute.xlu0 8
        %3184 = vperm.xlu0 %3183, %v2847
        %v3185 = vpop.permute.xlu0 %3184
        %3186 = vset.pattern.permute.xlu0 8
        %3187 = vperm.xlu0 %3186, %v2849
        %v3188 = vpop.permute.xlu0 %3187
        %3189 = vset.pattern.permute.xlu0 8
        %3190 = vperm.xlu0 %3189, %v2851
        %v3191 = vpop.permute.xlu0 %3190
        %3192 = vset.pattern.permute.xlu0 8
        %3193 = vperm.xlu0 %3192, %v2853
        %v3194 = vpop.permute.xlu0 %3193
        %3195 = vset.pattern.permute.xlu0 8
        %3196 = vperm.xlu0 %3195, %v2855
        %v3197 = vpop.permute.xlu0 %3196
        %3198 = vset.pattern.permute.xlu0 8
        %3199 = vperm.xlu0 %3198, %v2857
        %v3200 = vpop.permute.xlu0 %3199
        %3201 = vset.pattern.permute.xlu0 8
        %3202 = vperm.xlu0 %3201, %v2859
        %v3203 = vpop.permute.xlu0 %3202
        %3204 = vset.pattern.permute.xlu0 8
        %3205 = vperm.xlu0 %3204, %v2861
        %v3206 = vpop.permute.xlu0 %3205
        %3207 = vset.pattern.permute.xlu0 8
        %3208 = vperm.xlu0 %3207, %v2863
        %v3209 = vpop.permute.xlu0 %3208
        %3210 = vset.pattern.permute.xlu0 8
        %3211 = vperm.xlu0 %3210, %v2865
        %v3212 = vpop.permute.xlu0 %3211
        %3213 = vset.pattern.permute.xlu0 8
        %3214 = vperm.xlu0 %3213, %v2867
        %v3215 = vpop.permute.xlu0 %3214
        %3216 = vset.pattern.permute.xlu0 8
        %3217 = vperm.xlu0 %3216, %v2869
        %v3218 = vpop.permute.xlu0 %3217
        %3219 = vset.pattern.permute.xlu0 8
        %3220 = vperm.xlu0 %3219, %v2871
        %v3221 = vpop.permute.xlu0 %3220
        %3222 = vset.pattern.permute.xlu0 8
        %3223 = vperm.xlu0 %3222, %v2873
        %v3224 = vpop.permute.xlu0 %3223
        %3225 = vset.pattern.permute.xlu0 8
        %3226 = vperm.xlu0 %3225, %v2875
        %v3227 = vpop.permute.xlu0 %3226
        %3228 = vset.pattern.permute.xlu0 8
        %3229 = vperm.xlu0 %3228, %v2877
        %v3230 = vpop.permute.xlu0 %3229
        %3231 = vset.pattern.permute.xlu0 8
        %3232 = vperm.xlu0 %3231, %v2879
        %v3233 = vpop.permute.xlu0 %3232
        %3234 = vset.pattern.permute.xlu0 8
        %3235 = vperm.xlu0 %3234, %v2881
        %v3236 = vpop.permute.xlu0 %3235
        %3237 = vset.pattern.permute.xlu0 8
        %3238 = vperm.xlu0 %3237, %v2883
        %v3239 = vpop.permute.xlu0 %3238
        %3240 = vset.pattern.permute.xlu0 8
        %3241 = vperm.xlu0 %3240, %v2885
        %v3242 = vpop.permute.xlu0 %3241
        %3243 = vset.pattern.permute.xlu0 8
        %3244 = vperm.xlu0 %3243, %v2887
        %v3245 = vpop.permute.xlu0 %3244
        %3246 = vset.pattern.permute.xlu0 8
        %3247 = vperm.xlu0 %3246, %v2889
        %v3248 = vpop.permute.xlu0 %3247
        %3249 = vset.pattern.permute.xlu0 8
        %3250 = vperm.xlu0 %3249, %v2891
        %v3251 = vpop.permute.xlu0 %3250
        %3252 = vset.pattern.permute.xlu0 8
        %3253 = vperm.xlu0 %3252, %v2893
        %v3254 = vpop.permute.xlu0 %3253
        %3255 = vset.pattern.permute.xlu0 8
        %3256 = vperm.xlu0 %3255, %v2895
        %v3257 = vpop.permute.xlu0 %3256
        %3258 = vset.pattern.permute.xlu0 8
        %3259 = vperm.xlu0 %3258, %v2897
        %v3260 = vpop.permute.xlu0 %3259
        %3261 = vset.pattern.permute.xlu0 8
        %3262 = vperm.xlu0 %3261, %v2899
        %v3263 = vpop.permute.xlu0 %3262
        %3264 = vset.pattern.permute.xlu0 8
        %3265 = vperm.xlu0 %3264, %v2901
        %v3266 = vpop.permute.xlu0 %3265
        %3267 = vset.pattern.permute.xlu0 8
        %3268 = vperm.xlu0 %3267, %v2903
        %v3269 = vpop.permute.xlu0 %3268
        %3270 = vset.pattern.permute.xlu0 8
        %3271 = vperm.xlu0 %3270, %v2905
        %v3272 = vpop.permute.xlu0 %3271
        %3273 = vset.pattern.permute.xlu0 8
        %3274 = vperm.xlu0 %3273, %v2907
        %v3275 = vpop.permute.xlu0 %3274
        %3276 = vset.pattern.permute.xlu0 8
        %3277 = vperm.xlu0 %3276, %v2909
        %v3278 = vpop.permute.xlu0 %3277
        %3279 = vset.pattern.permute.xlu0 8
        %3280 = vperm.xlu0 %3279, %v2911
        %v3281 = vpop.permute.xlu0 %3280
        %3282 = vset.pattern.permute.xlu0 8
        %3283 = vperm.xlu0 %3282, %v2913
        %v3284 = vpop.permute.xlu0 %3283
        %3285 = vset.pattern.permute.xlu0 8
        %3286 = vperm.xlu0 %3285, %v2915
        %v3287 = vpop.permute.xlu0 %3286
        %3288 = vset.pattern.permute.xlu0 8
        %3289 = vperm.xlu0 %3288, %v2917
        %v3290 = vpop.permute.xlu0 %3289
        %3291 = vset.pattern.permute.xlu0 8
        %3292 = vperm.xlu0 %3291, %v2919
        %v3293 = vpop.permute.xlu0 %3292
        %3294 = vset.pattern.permute.xlu0 8
        %3295 = vperm.xlu0 %3294, %v2921
        %v3296 = vpop.permute.xlu0 %3295
        %3297 = vset.pattern.permute.xlu0 8
        %3298 = vperm.xlu0 %3297, %v2923
        %v3299 = vpop.permute.xlu0 %3298
        %3300 = vset.pattern.permute.xlu0 8
        %3301 = vperm.xlu0 %3300, %v2925
        %v3302 = vpop.permute.xlu0 %3301
        %3303 = vset.pattern.permute.xlu0 8
        %3304 = vperm.xlu0 %3303, %v2927
        %v3305 = vpop.permute.xlu0 %3304
        %3306 = vset.pattern.permute.xlu0 8
        %3307 = vperm.xlu0 %3306, %v2929
        %v3308 = vpop.permute.xlu0 %3307
        %3309 = vset.pattern.permute.xlu0 8
        %3310 = vperm.xlu0 %3309, %v2931
        %v3311 = vpop.permute.xlu0 %3310
        %3312 = vset.pattern.permute.xlu0 8
        %3313 = vperm.xlu0 %3312, %v2933
        %v3314 = vpop.permute.xlu0 %3313
        %3315 = vset.pattern.permute.xlu0 8
        %3316 = vperm.xlu0 %3315, %v2935
        %v3317 = vpop.permute.xlu0 %3316
        %3318 = vset.pattern.permute.xlu0 8
        %3319 = vperm.xlu0 %3318, %v2937
        %v3320 = vpop.permute.xlu0 %3319
        %3321 = vset.pattern.permute.xlu0 8
        %3322 = vperm.xlu0 %3321, %v2939
        %v3323 = vpop.permute.xlu0 %3322
        %vm3324 = vcmp.eq.s32.totalorder %v2942, %v356
        %vm3325 = vcmp.eq.s32.totalorder %v2945, %v356
        %vm3326 = vcmp.eq.s32.totalorder %v2948, %v356
        %vm3327 = vcmp.eq.s32.totalorder %v2951, %v356
        %vm3328 = vcmp.eq.s32.totalorder %v2954, %v356
        %vm3329 = vcmp.eq.s32.totalorder %v2957, %v356
        %vm3330 = vcmp.eq.s32.totalorder %v2960, %v356
        %vm3331 = vcmp.eq.s32.totalorder %v2963, %v356
        %vm3332 = vcmp.eq.s32.totalorder %v2966, %v356
        %vm3333 = vcmp.eq.s32.totalorder %v2969, %v356
        %vm3334 = vcmp.eq.s32.totalorder %v2972, %v356
        %vm3335 = vcmp.eq.s32.totalorder %v2975, %v356
        %vm3336 = vcmp.eq.s32.totalorder %v2978, %v356
        %vm3337 = vcmp.eq.s32.totalorder %v2981, %v356
        %vm3338 = vcmp.eq.s32.totalorder %v2984, %v356
        %vm3339 = vcmp.eq.s32.totalorder %v2987, %v356
        %vm3340 = vcmp.eq.s32.totalorder %v2990, %v356
        %vm3341 = vcmp.eq.s32.totalorder %v2993, %v356
        %vm3342 = vcmp.eq.s32.totalorder %v2996, %v356
        %vm3343 = vcmp.eq.s32.totalorder %v2999, %v356
        %vm3344 = vcmp.eq.s32.totalorder %v3002, %v356
        %vm3345 = vcmp.eq.s32.totalorder %v3005, %v356
        %vm3346 = vcmp.eq.s32.totalorder %v3008, %v356
        %vm3347 = vcmp.eq.s32.totalorder %v3011, %v356
        %vm3348 = vcmp.eq.s32.totalorder %v3014, %v356
        %vm3349 = vcmp.eq.s32.totalorder %v3017, %v356
        %vm3350 = vcmp.eq.s32.totalorder %v3020, %v356
        %vm3351 = vcmp.eq.s32.totalorder %v3023, %v356
        %vm3352 = vcmp.eq.s32.totalorder %v3026, %v356
        %vm3353 = vcmp.eq.s32.totalorder %v3029, %v356
        %vm3354 = vcmp.eq.s32.totalorder %v3032, %v356
        %vm3355 = vcmp.eq.s32.totalorder %v3035, %v356
        %vm3356 = vcmp.eq.s32.totalorder %v3038, %v356
        %vm3357 = vcmp.eq.s32.totalorder %v3041, %v356
        %vm3358 = vcmp.eq.s32.totalorder %v3044, %v356
        %vm3359 = vcmp.eq.s32.totalorder %v3047, %v356
        %vm3360 = vcmp.eq.s32.totalorder %v3050, %v356
        %vm3361 = vcmp.eq.s32.totalorder %v3053, %v356
        %vm3362 = vcmp.eq.s32.totalorder %v3056, %v356
        %vm3363 = vcmp.eq.s32.totalorder %v3059, %v356
        %vm3364 = vcmp.eq.s32.totalorder %v3062, %v356
        %vm3365 = vcmp.eq.s32.totalorder %v3065, %v356
        %vm3366 = vcmp.eq.s32.totalorder %v3068, %v356
        %vm3367 = vcmp.eq.s32.totalorder %v3071, %v356
        %vm3368 = vcmp.eq.s32.totalorder %v3074, %v356
        %vm3369 = vcmp.eq.s32.totalorder %v3077, %v356
        %vm3370 = vcmp.eq.s32.totalorder %v3080, %v356
        %vm3371 = vcmp.eq.s32.totalorder %v3083, %v356
        %vm3372 = vcmp.eq.s32.totalorder %v3086, %v356
        %vm3373 = vcmp.eq.s32.totalorder %v3089, %v356
        %vm3374 = vcmp.eq.s32.totalorder %v3092, %v356
        %vm3375 = vcmp.eq.s32.totalorder %v3095, %v356
        %vm3376 = vcmp.eq.s32.totalorder %v3098, %v356
        %vm3377 = vcmp.eq.s32.totalorder %v3101, %v356
        %vm3378 = vcmp.eq.s32.totalorder %v3104, %v356
        %vm3379 = vcmp.eq.s32.totalorder %v3107, %v356
        %vm3380 = vcmp.eq.s32.totalorder %v3110, %v356
        %vm3381 = vcmp.eq.s32.totalorder %v3113, %v356
        %vm3382 = vcmp.eq.s32.totalorder %v3116, %v356
        %vm3383 = vcmp.eq.s32.totalorder %v3119, %v356
        %vm3384 = vcmp.eq.s32.totalorder %v3122, %v356
        %vm3385 = vcmp.eq.s32.totalorder %v3125, %v356
        %vm3386 = vcmp.eq.s32.totalorder %v3128, %v356
        %vm3387 = vcmp.eq.s32.totalorder %v3131, %v356
        %vm3388 = vcmp.eq.s32.totalorder %v3134, %v356
        %vm3389 = vcmp.eq.s32.totalorder %v3137, %v356
        %vm3390 = vcmp.eq.s32.totalorder %v3140, %v356
        %vm3391 = vcmp.eq.s32.totalorder %v3143, %v356
        %vm3392 = vcmp.eq.s32.totalorder %v3146, %v356
        %vm3393 = vcmp.eq.s32.totalorder %v3149, %v356
        %vm3394 = vcmp.eq.s32.totalorder %v3152, %v356
        %vm3395 = vcmp.eq.s32.totalorder %v3155, %v356
        %vm3396 = vcmp.eq.s32.totalorder %v3158, %v356
        %vm3397 = vcmp.eq.s32.totalorder %v3161, %v356
        %vm3398 = vcmp.eq.s32.totalorder %v3164, %v356
        %vm3399 = vcmp.eq.s32.totalorder %v3167, %v356
        %vm3400 = vcmp.eq.s32.totalorder %v3170, %v356
        %vm3401 = vcmp.eq.s32.totalorder %v3173, %v356
        %vm3402 = vcmp.eq.s32.totalorder %v3176, %v356
        %vm3403 = vcmp.eq.s32.totalorder %v3179, %v356
        %vm3404 = vcmp.eq.s32.totalorder %v3182, %v356
        %vm3405 = vcmp.eq.s32.totalorder %v3185, %v356
        %vm3406 = vcmp.eq.s32.totalorder %v3188, %v356
        %vm3407 = vcmp.eq.s32.totalorder %v3191, %v356
        %vm3408 = vcmp.eq.s32.totalorder %v3194, %v356
        %vm3409 = vcmp.eq.s32.totalorder %v3197, %v356
        %vm3410 = vcmp.eq.s32.totalorder %v3200, %v356
        %vm3411 = vcmp.eq.s32.totalorder %v3203, %v356
        %vm3412 = vcmp.eq.s32.totalorder %v3206, %v356
        %vm3413 = vcmp.eq.s32.totalorder %v3209, %v356
        %vm3414 = vcmp.eq.s32.totalorder %v3212, %v356
        %vm3415 = vcmp.eq.s32.totalorder %v3215, %v356
        %vm3416 = vcmp.eq.s32.totalorder %v3218, %v356
        %vm3417 = vcmp.eq.s32.totalorder %v3221, %v356
        %vm3418 = vcmp.eq.s32.totalorder %v3224, %v356
        %vm3419 = vcmp.eq.s32.totalorder %v3227, %v356
        %vm3420 = vcmp.eq.s32.totalorder %v3230, %v356
        %vm3421 = vcmp.eq.s32.totalorder %v3233, %v356
        %vm3422 = vcmp.eq.s32.totalorder %v3236, %v356
        %vm3423 = vcmp.eq.s32.totalorder %v3239, %v356
        %vm3424 = vcmp.eq.s32.totalorder %v3242, %v356
        %vm3425 = vcmp.eq.s32.totalorder %v3245, %v356
        %vm3426 = vcmp.eq.s32.totalorder %v3248, %v356
        %vm3427 = vcmp.eq.s32.totalorder %v3251, %v356
        %vm3428 = vcmp.eq.s32.totalorder %v3254, %v356
        %vm3429 = vcmp.eq.s32.totalorder %v3257, %v356
        %vm3430 = vcmp.eq.s32.totalorder %v3260, %v356
        %vm3431 = vcmp.eq.s32.totalorder %v3263, %v356
        %vm3432 = vcmp.eq.s32.totalorder %v3266, %v356
        %vm3433 = vcmp.eq.s32.totalorder %v3269, %v356
        %vm3434 = vcmp.eq.s32.totalorder %v3272, %v356
        %vm3435 = vcmp.eq.s32.totalorder %v3275, %v356
        %vm3436 = vcmp.eq.s32.totalorder %v3278, %v356
        %vm3437 = vcmp.eq.s32.totalorder %v3281, %v356
        %vm3438 = vcmp.eq.s32.totalorder %v3284, %v356
        %vm3439 = vcmp.eq.s32.totalorder %v3287, %v356
        %vm3440 = vcmp.eq.s32.totalorder %v3290, %v356
        %vm3441 = vcmp.eq.s32.totalorder %v3293, %v356
        %vm3442 = vcmp.eq.s32.totalorder %v3296, %v356
        %vm3443 = vcmp.eq.s32.totalorder %v3299, %v356
        %vm3444 = vcmp.eq.s32.totalorder %v3302, %v356
        %vm3445 = vcmp.eq.s32.totalorder %v3305, %v356
        %vm3446 = vcmp.eq.s32.totalorder %v3308, %v356
        %vm3447 = vcmp.eq.s32.totalorder %v3311, %v356
        %vm3448 = vcmp.eq.s32.totalorder %v3314, %v356
        %vm3449 = vcmp.eq.s32.totalorder %v3317, %v356
        %vm3450 = vcmp.eq.s32.totalorder %v3320, %v356
        %vm3451 = vcmp.eq.s32.totalorder %v3323, %v356
        %v3452 = vsel %vm3324, 1, 0
        %v3453 = vsel %vm3325, 1, 0
        %v3454 = vsel %vm3326, 1, 0
        %v3455 = vsel %vm3327, 1, 0
        %v3456 = vsel %vm3328, 1, 0
        %v3457 = vsel %vm3329, 1, 0
        %v3458 = vsel %vm3330, 1, 0
        %v3459 = vsel %vm3331, 1, 0
        %v3460 = vsel %vm3332, 1, 0
        %v3461 = vsel %vm3333, 1, 0
        %v3462 = vsel %vm3334, 1, 0
        %v3463 = vsel %vm3335, 1, 0
        %v3464 = vsel %vm3336, 1, 0
        %v3465 = vsel %vm3337, 1, 0
        %v3466 = vsel %vm3338, 1, 0
        %v3467 = vsel %vm3339, 1, 0
        %v3468 = vsel %vm3340, 1, 0
        %v3469 = vsel %vm3341, 1, 0
        %v3470 = vsel %vm3342, 1, 0
        %v3471 = vsel %vm3343, 1, 0
        %v3472 = vsel %vm3344, 1, 0
        %v3473 = vsel %vm3345, 1, 0
        %v3474 = vsel %vm3346, 1, 0
        %v3475 = vsel %vm3347, 1, 0
        %v3476 = vsel %vm3348, 1, 0
        %v3477 = vsel %vm3349, 1, 0
        %v3478 = vsel %vm3350, 1, 0
        %v3479 = vsel %vm3351, 1, 0
        %v3480 = vsel %vm3352, 1, 0
        %v3481 = vsel %vm3353, 1, 0
        %v3482 = vsel %vm3354, 1, 0
        %v3483 = vsel %vm3355, 1, 0
        %v3484 = vsel %vm3356, 1, 0
        %v3485 = vsel %vm3357, 1, 0
        %v3486 = vsel %vm3358, 1, 0
        %v3487 = vsel %vm3359, 1, 0
        %v3488 = vsel %vm3360, 1, 0
        %v3489 = vsel %vm3361, 1, 0
        %v3490 = vsel %vm3362, 1, 0
        %v3491 = vsel %vm3363, 1, 0
        %v3492 = vsel %vm3364, 1, 0
        %v3493 = vsel %vm3365, 1, 0
        %v3494 = vsel %vm3366, 1, 0
        %v3495 = vsel %vm3367, 1, 0
        %v3496 = vsel %vm3368, 1, 0
        %v3497 = vsel %vm3369, 1, 0
        %v3498 = vsel %vm3370, 1, 0
        %v3499 = vsel %vm3371, 1, 0
        %v3500 = vsel %vm3372, 1, 0
        %v3501 = vsel %vm3373, 1, 0
        %v3502 = vsel %vm3374, 1, 0
        %v3503 = vsel %vm3375, 1, 0
        %v3504 = vsel %vm3376, 1, 0
        %v3505 = vsel %vm3377, 1, 0
        %v3506 = vsel %vm3378, 1, 0
        %v3507 = vsel %vm3379, 1, 0
        %v3508 = vsel %vm3380, 1, 0
        %v3509 = vsel %vm3381, 1, 0
        %v3510 = vsel %vm3382, 1, 0
        %v3511 = vsel %vm3383, 1, 0
        %v3512 = vsel %vm3384, 1, 0
        %v3513 = vsel %vm3385, 1, 0
        %v3514 = vsel %vm3386, 1, 0
        %v3515 = vsel %vm3387, 1, 0
        %v3516 = vsel %vm3388, 1, 0
        %v3517 = vsel %vm3389, 1, 0
        %v3518 = vsel %vm3390, 1, 0
        %v3519 = vsel %vm3391, 1, 0
        %v3520 = vsel %vm3392, 1, 0
        %v3521 = vsel %vm3393, 1, 0
        %v3522 = vsel %vm3394, 1, 0
        %v3523 = vsel %vm3395, 1, 0
        %v3524 = vsel %vm3396, 1, 0
        %v3525 = vsel %vm3397, 1, 0
        %v3526 = vsel %vm3398, 1, 0
        %v3527 = vsel %vm3399, 1, 0
        %v3528 = vsel %vm3400, 1, 0
        %v3529 = vsel %vm3401, 1, 0
        %v3530 = vsel %vm3402, 1, 0
        %v3531 = vsel %vm3403, 1, 0
        %v3532 = vsel %vm3404, 1, 0
        %v3533 = vsel %vm3405, 1, 0
        %v3534 = vsel %vm3406, 1, 0
        %v3535 = vsel %vm3407, 1, 0
        %v3536 = vsel %vm3408, 1, 0
        %v3537 = vsel %vm3409, 1, 0
        %v3538 = vsel %vm3410, 1, 0
        %v3539 = vsel %vm3411, 1, 0
        %v3540 = vsel %vm3412, 1, 0
        %v3541 = vsel %vm3413, 1, 0
        %v3542 = vsel %vm3414, 1, 0
        %v3543 = vsel %vm3415, 1, 0
        %v3544 = vsel %vm3416, 1, 0
        %v3545 = vsel %vm3417, 1, 0
        %v3546 = vsel %vm3418, 1, 0
        %v3547 = vsel %vm3419, 1, 0
        %v3548 = vsel %vm3420, 1, 0
        %v3549 = vsel %vm3421, 1, 0
        %v3550 = vsel %vm3422, 1, 0
        %v3551 = vsel %vm3423, 1, 0
        %v3552 = vsel %vm3424, 1, 0
        %v3553 = vsel %vm3425, 1, 0
        %v3554 = vsel %vm3426, 1, 0
        %v3555 = vsel %vm3427, 1, 0
        %v3556 = vsel %vm3428, 1, 0
        %v3557 = vsel %vm3429, 1, 0
        %v3558 = vsel %vm3430, 1, 0
        %v3559 = vsel %vm3431, 1, 0
        %v3560 = vsel %vm3432, 1, 0
        %v3561 = vsel %vm3433, 1, 0
        %v3562 = vsel %vm3434, 1, 0
        %v3563 = vsel %vm3435, 1, 0
        %v3564 = vsel %vm3436, 1, 0
        %v3565 = vsel %vm3437, 1, 0
        %v3566 = vsel %vm3438, 1, 0
        %v3567 = vsel %vm3439, 1, 0
        %v3568 = vsel %vm3440, 1, 0
        %v3569 = vsel %vm3441, 1, 0
        %v3570 = vsel %vm3442, 1, 0
        %v3571 = vsel %vm3443, 1, 0
        %v3572 = vsel %vm3444, 1, 0
        %v3573 = vsel %vm3445, 1, 0
        %v3574 = vsel %vm3446, 1, 0
        %v3575 = vsel %vm3447, 1, 0
        %v3576 = vsel %vm3448, 1, 0
        %v3577 = vsel %vm3449, 1, 0
        %v3578 = vsel %vm3450, 1, 0
        %v3579 = vsel %vm3451, 1, 0
        %v3580 = vcvt.s32.f32 %v3452
        %v3581 = vcvt.s32.f32 %v3453
        %v3582 = vcvt.s32.f32 %v3454
        %v3583 = vcvt.s32.f32 %v3455
        %v3584 = vcvt.s32.f32 %v3456
        %v3585 = vcvt.s32.f32 %v3457
        %v3586 = vcvt.s32.f32 %v3458
        %v3587 = vcvt.s32.f32 %v3459
        %v3588 = vcvt.s32.f32 %v3460
        %v3589 = vcvt.s32.f32 %v3461
        %v3590 = vcvt.s32.f32 %v3462
        %v3591 = vcvt.s32.f32 %v3463
        %v3592 = vcvt.s32.f32 %v3464
        %v3593 = vcvt.s32.f32 %v3465
        %v3594 = vcvt.s32.f32 %v3466
        %v3595 = vcvt.s32.f32 %v3467
        %v3596 = vcvt.s32.f32 %v3468
        %v3597 = vcvt.s32.f32 %v3469
        %v3598 = vcvt.s32.f32 %v3470
        %v3599 = vcvt.s32.f32 %v3471
        %v3600 = vcvt.s32.f32 %v3472
        %v3601 = vcvt.s32.f32 %v3473
        %v3602 = vcvt.s32.f32 %v3474
        %v3603 = vcvt.s32.f32 %v3475
        %v3604 = vcvt.s32.f32 %v3476
        %v3605 = vcvt.s32.f32 %v3477
        %v3606 = vcvt.s32.f32 %v3478
        %v3607 = vcvt.s32.f32 %v3479
        %v3608 = vcvt.s32.f32 %v3480
        %v3609 = vcvt.s32.f32 %v3481
        %v3610 = vcvt.s32.f32 %v3482
        %v3611 = vcvt.s32.f32 %v3483
        %v3612 = vcvt.s32.f32 %v3484
        %v3613 = vcvt.s32.f32 %v3485
        %v3614 = vcvt.s32.f32 %v3486
        %v3615 = vcvt.s32.f32 %v3487
        %v3616 = vcvt.s32.f32 %v3488
        %v3617 = vcvt.s32.f32 %v3489
        %v3618 = vcvt.s32.f32 %v3490
        %v3619 = vcvt.s32.f32 %v3491
        %v3620 = vcvt.s32.f32 %v3492
        %v3621 = vcvt.s32.f32 %v3493
        %v3622 = vcvt.s32.f32 %v3494
        %v3623 = vcvt.s32.f32 %v3495
        %v3624 = vcvt.s32.f32 %v3496
        %v3625 = vcvt.s32.f32 %v3497
        %v3626 = vcvt.s32.f32 %v3498
        %v3627 = vcvt.s32.f32 %v3499
        %v3628 = vcvt.s32.f32 %v3500
        %v3629 = vcvt.s32.f32 %v3501
        %v3630 = vcvt.s32.f32 %v3502
        %v3631 = vcvt.s32.f32 %v3503
        %v3632 = vcvt.s32.f32 %v3504
        %v3633 = vcvt.s32.f32 %v3505
        %v3634 = vcvt.s32.f32 %v3506
        %v3635 = vcvt.s32.f32 %v3507
        %v3636 = vcvt.s32.f32 %v3508
        %v3637 = vcvt.s32.f32 %v3509
        %v3638 = vcvt.s32.f32 %v3510
        %v3639 = vcvt.s32.f32 %v3511
        %v3640 = vcvt.s32.f32 %v3512
        %v3641 = vcvt.s32.f32 %v3513
        %v3642 = vcvt.s32.f32 %v3514
        %v3643 = vcvt.s32.f32 %v3515
        %v3644 = vcvt.s32.f32 %v3516
        %v3645 = vcvt.s32.f32 %v3517
        %v3646 = vcvt.s32.f32 %v3518
        %v3647 = vcvt.s32.f32 %v3519
        %v3648 = vcvt.s32.f32 %v3520
        %v3649 = vcvt.s32.f32 %v3521
        %v3650 = vcvt.s32.f32 %v3522
        %v3651 = vcvt.s32.f32 %v3523
        %v3652 = vcvt.s32.f32 %v3524
        %v3653 = vcvt.s32.f32 %v3525
        %v3654 = vcvt.s32.f32 %v3526
        %v3655 = vcvt.s32.f32 %v3527
        %v3656 = vcvt.s32.f32 %v3528
        %v3657 = vcvt.s32.f32 %v3529
        %v3658 = vcvt.s32.f32 %v3530
        %v3659 = vcvt.s32.f32 %v3531
        %v3660 = vcvt.s32.f32 %v3532
        %v3661 = vcvt.s32.f32 %v3533
        %v3662 = vcvt.s32.f32 %v3534
        %v3663 = vcvt.s32.f32 %v3535
        %v3664 = vcvt.s32.f32 %v3536
        %v3665 = vcvt.s32.f32 %v3537
        %v3666 = vcvt.s32.f32 %v3538
        %v3667 = vcvt.s32.f32 %v3539
        %v3668 = vcvt.s32.f32 %v3540
        %v3669 = vcvt.s32.f32 %v3541
        %v3670 = vcvt.s32.f32 %v3542
        %v3671 = vcvt.s32.f32 %v3543
        %v3672 = vcvt.s32.f32 %v3544
        %v3673 = vcvt.s32.f32 %v3545
        %v3674 = vcvt.s32.f32 %v3546
        %v3675 = vcvt.s32.f32 %v3547
        %v3676 = vcvt.s32.f32 %v3548
        %v3677 = vcvt.s32.f32 %v3549
        %v3678 = vcvt.s32.f32 %v3550
        %v3679 = vcvt.s32.f32 %v3551
        %v3680 = vcvt.s32.f32 %v3552
        %v3681 = vcvt.s32.f32 %v3553
        %v3682 = vcvt.s32.f32 %v3554
        %v3683 = vcvt.s32.f32 %v3555
        %v3684 = vcvt.s32.f32 %v3556
        %v3685 = vcvt.s32.f32 %v3557
        %v3686 = vcvt.s32.f32 %v3558
        %v3687 = vcvt.s32.f32 %v3559
        %v3688 = vcvt.s32.f32 %v3560
        %v3689 = vcvt.s32.f32 %v3561
        %v3690 = vcvt.s32.f32 %v3562
        %v3691 = vcvt.s32.f32 %v3563
        %v3692 = vcvt.s32.f32 %v3564
        %v3693 = vcvt.s32.f32 %v3565
        %v3694 = vcvt.s32.f32 %v3566
        %v3695 = vcvt.s32.f32 %v3567
        %v3696 = vcvt.s32.f32 %v3568
        %v3697 = vcvt.s32.f32 %v3569
        %v3698 = vcvt.s32.f32 %v3570
        %v3699 = vcvt.s32.f32 %v3571
        %v3700 = vcvt.s32.f32 %v3572
        %v3701 = vcvt.s32.f32 %v3573
        %v3702 = vcvt.s32.f32 %v3574
        %v3703 = vcvt.s32.f32 %v3575
        %v3704 = vcvt.s32.f32 %v3576
        %v3705 = vcvt.s32.f32 %v3577
        %v3706 = vcvt.s32.f32 %v3578
        %v3707 = vcvt.s32.f32 %v3579
        %v3708 = vld [vmem:[%s4] sm:$0x1]
        %v3709 = vld [vmem:[%s2] sm:$0xff]
        %v3710 = vld [vmem:[%s2 + $0x8] sm:$0xff]
        %v3711 = vld [vmem:[%s2 + $0x10] sm:$0xff]
        %v3713 = vlaneseq
        %v3714 = vshrl.u32 %v3713, 7
        %v3715 = vsub.s32 0, %v3714
        %v3716 = vrot.slane %v3708, %v3715
        %vm3718 = vcmask 195584
        %v3720 = vsel %vm3718, %v3580, 0
        %v3723 = vsel %vm3718, %v3581, 0
        %v3726 = vsel %vm3718, %v3582, 0
        %v3729 = vsel %vm3718, %v3583, 0
        %v3732 = vsel %vm3718, %v3584, 0
        %v3735 = vsel %vm3718, %v3585, 0
        %v3738 = vsel %vm3718, %v3586, 0
        %v3741 = vsel %vm3718, %v3587, 0
        %v3744 = vsel %vm3718, %v3588, 0
        %v3747 = vsel %vm3718, %v3589, 0
        %v3750 = vsel %vm3718, %v3590, 0
        %v3753 = vsel %vm3718, %v3591, 0
        %v3756 = vsel %vm3718, %v3592, 0
        %v3759 = vsel %vm3718, %v3593, 0
        %v3762 = vsel %vm3718, %v3594, 0
        %v3765 = vsel %vm3718, %v3595, 0
        %v3768 = vsel %vm3718, %v3596, 0
        %v3771 = vsel %vm3718, %v3597, 0
        %v3774 = vsel %vm3718, %v3598, 0
        %v3777 = vsel %vm3718, %v3599, 0
        %v3780 = vsel %vm3718, %v3600, 0
        %v3783 = vsel %vm3718, %v3601, 0
        %v3786 = vsel %vm3718, %v3602, 0
        %v3789 = vsel %vm3718, %v3603, 0
        %v3792 = vsel %vm3718, %v3604, 0
        %v3795 = vsel %vm3718, %v3605, 0
        %v3798 = vsel %vm3718, %v3606, 0
        %v3801 = vsel %vm3718, %v3607, 0
        %v3804 = vsel %vm3718, %v3608, 0
        %v3807 = vsel %vm3718, %v3609, 0
        %v3810 = vsel %vm3718, %v3610, 0
        %v3813 = vsel %vm3718, %v3611, 0
        %v3816 = vsel %vm3718, %v3612, 0
        %v3819 = vsel %vm3718, %v3613, 0
        %v3822 = vsel %vm3718, %v3614, 0
        %v3825 = vsel %vm3718, %v3615, 0
        %v3828 = vsel %vm3718, %v3616, 0
        %v3831 = vsel %vm3718, %v3617, 0
        %v3834 = vsel %vm3718, %v3618, 0
        %v3837 = vsel %vm3718, %v3619, 0
        %v3840 = vsel %vm3718, %v3620, 0
        %v3843 = vsel %vm3718, %v3621, 0
        %v3846 = vsel %vm3718, %v3622, 0
        %v3849 = vsel %vm3718, %v3623, 0
        %v3852 = vsel %vm3718, %v3624, 0
        %v3855 = vsel %vm3718, %v3625, 0
        %v3858 = vsel %vm3718, %v3626, 0
        %v3861 = vsel %vm3718, %v3627, 0
        %v3864 = vsel %vm3718, %v3628, 0
        %v3867 = vsel %vm3718, %v3629, 0
        %v3870 = vsel %vm3718, %v3630, 0
        %v3873 = vsel %vm3718, %v3631, 0
        %v3876 = vsel %vm3718, %v3632, 0
        %v3879 = vsel %vm3718, %v3633, 0
        %v3882 = vsel %vm3718, %v3634, 0
        %v3885 = vsel %vm3718, %v3635, 0
        %v3888 = vsel %vm3718, %v3636, 0
        %v3891 = vsel %vm3718, %v3637, 0
        %v3894 = vsel %vm3718, %v3638, 0
        %v3897 = vsel %vm3718, %v3639, 0
        %v3900 = vsel %vm3718, %v3640, 0
        %v3903 = vsel %vm3718, %v3641, 0
        %v3906 = vsel %vm3718, %v3642, 0
        %v3909 = vsel %vm3718, %v3643, 0
        %v3912 = vsel %vm3718, %v3644, 0
        %v3915 = vsel %vm3718, %v3645, 0
        %v3918 = vsel %vm3718, %v3646, 0
        %v3921 = vsel %vm3718, %v3647, 0
        %v3924 = vsel %vm3718, %v3648, 0
        %v3927 = vsel %vm3718, %v3649, 0
        %v3930 = vsel %vm3718, %v3650, 0
        %v3933 = vsel %vm3718, %v3651, 0
        %v3936 = vsel %vm3718, %v3652, 0
        %v3939 = vsel %vm3718, %v3653, 0
        %v3942 = vsel %vm3718, %v3654, 0
        %v3945 = vsel %vm3718, %v3655, 0
        %v3948 = vsel %vm3718, %v3656, 0
        %v3951 = vsel %vm3718, %v3657, 0
        %v3954 = vsel %vm3718, %v3658, 0
        %v3957 = vsel %vm3718, %v3659, 0
        %v3960 = vsel %vm3718, %v3660, 0
        %v3963 = vsel %vm3718, %v3661, 0
        %v3966 = vsel %vm3718, %v3662, 0
        %v3969 = vsel %vm3718, %v3663, 0
        %v3972 = vsel %vm3718, %v3664, 0
        %v3975 = vsel %vm3718, %v3665, 0
        %v3978 = vsel %vm3718, %v3666, 0
        %v3981 = vsel %vm3718, %v3667, 0
        %v3984 = vsel %vm3718, %v3668, 0
        %v3987 = vsel %vm3718, %v3669, 0
        %v3990 = vsel %vm3718, %v3670, 0
        %v3993 = vsel %vm3718, %v3671, 0
        %v3996 = vsel %vm3718, %v3672, 0
        %v3999 = vsel %vm3718, %v3673, 0
        %v4002 = vsel %vm3718, %v3674, 0
        %v4005 = vsel %vm3718, %v3675, 0
        %v4008 = vsel %vm3718, %v3676, 0
        %v4011 = vsel %vm3718, %v3677, 0
        %v4014 = vsel %vm3718, %v3678, 0
        %v4017 = vsel %vm3718, %v3679, 0
        %v4020 = vsel %vm3718, %v3680, 0
        %v4023 = vsel %vm3718, %v3681, 0
        %v4026 = vsel %vm3718, %v3682, 0
        %v4029 = vsel %vm3718, %v3683, 0
        %v4032 = vsel %vm3718, %v3684, 0
        %v4035 = vsel %vm3718, %v3685, 0
        %v4038 = vsel %vm3718, %v3686, 0
        %v4041 = vsel %vm3718, %v3687, 0
        %v4044 = vsel %vm3718, %v3688, 0
        %v4047 = vsel %vm3718, %v3689, 0
        %v4050 = vsel %vm3718, %v3690, 0
        %v4053 = vsel %vm3718, %v3691, 0
        %v4056 = vsel %vm3718, %v3692, 0
        %v4059 = vsel %vm3718, %v3693, 0
        %v4062 = vsel %vm3718, %v3694, 0
        %v4065 = vsel %vm3718, %v3695, 0
        %v4068 = vsel %vm3718, %v3696, 0
        %v4071 = vsel %vm3718, %v3697, 0
        %v4074 = vsel %vm3718, %v3698, 0
        %v4077 = vsel %vm3718, %v3699, 0
        %v4080 = vsel %vm3718, %v3700, 0
        %v4083 = vsel %vm3718, %v3701, 0
        %v4086 = vsel %vm3718, %v3702, 0
        %v4089 = vsel %vm3718, %v3703, 0
        %v4092 = vsel %vm3718, %v3704, 0
        %v4095 = vsel %vm3718, %v3705, 0
        %v4098 = vsel %vm3718, %v3706, 0
        %v4101 = vsel %vm3718, %v3707, 0
        %4103 = vmatprep.subr.mxu0 0.0
        %4104 = vmatpush1.msra.mxu0 0.0
        %4105 = vmatprep.subr.mxu0 0.0
        %4106 = vmatpush1.msra.mxu0 0.0
        %4107 = vmatprep.subr.mxu0 0.0
        %4108 = vmatpush1.msra.mxu0 0.0
        %4109 = vmatprep.subr.mxu0 0.0
        %4110 = vmatpush1.msra.mxu0 0.0
        %4111 = vmatprep.subr.mxu0 0.0
        %4112 = vmatpush1.msra.mxu0 0.0
        %4113 = vmatprep.subr.mxu0 0.0
        %4114 = vmatpush1.msra.mxu0 0.0
        %4115 = vmatprep.subr.mxu0 0.0
        %4116 = vmatpush1.msra.mxu0 0.0
        %4117 = vmatprep.subr.mxu0 0.0
        %4118 = vmatpush1.msra.mxu0 0.0
        %4119 = vmatprep.subr.mxu0 0.0
        %4120 = vmatpush1.msra.mxu0 0.0
        %4121 = vmatprep.subr.mxu0 0.0
        %4122 = vmatpush1.msra.mxu0 0.0
        %4123 = vmatprep.subr.mxu0 0.0
        %4124 = vmatpush1.msra.mxu0 0.0
        %4125 = vmatprep.subr.mxu0 0.0
        %4126 = vmatpush1.msra.mxu0 0.0
        %4127 = vmatprep.subr.mxu0 0.0
        %4128 = vmatpush1.msra.mxu0 0.0
        %4129 = vmatprep.subr.mxu0 0.0
        %4130 = vmatpush1.msra.mxu0 %v3711
        %4131 = vmatprep.subr.mxu0 0.0
        %4132 = vmatpush1.msra.mxu0 %v3710
        %4133 = vmatprep.subr.mxu0 0.0
        %4134 = vmatpush1.msra.mxu0 %v3709
        %4135 = vmatprep.subr.mxu0 0.0
        %4136 = vmatpush2.msra.mxu0 0.0
        %4137 = vmatprep.subr.mxu0 0.0
        %4138 = vmatpush2.msra.mxu0 0.0
        %4139 = vmatprep.subr.mxu0 0.0
        %4140 = vmatpush2.msra.mxu0 0.0
        %4141 = vmatprep.subr.mxu0 0.0
        %4142 = vmatpush2.msra.mxu0 0.0
        %4143 = vmatprep.subr.mxu0 0.0
        %4144 = vmatpush2.msra.mxu0 0.0
        %4145 = vmatprep.subr.mxu0 0.0
        %4146 = vmatpush2.msra.mxu0 0.0
        %4147 = vmatprep.subr.mxu0 0.0
        %4148 = vmatpush2.msra.mxu0 0.0
        %4149 = vmatprep.subr.mxu0 0.0
        %4150 = vmatpush2.msra.mxu0 0.0
        %4151 = vmatprep.subr.mxu0 0.0
        %4152 = vmatpush2.msra.mxu0 0.0
        %4153 = vmatprep.subr.mxu0 0.0
        %4154 = vmatpush2.msra.mxu0 0.0
        %4155 = vmatprep.subr.mxu0 0.0
        %4156 = vmatpush2.msra.mxu0 0.0
        %4157 = vmatprep.subr.mxu0 0.0
        %4158 = vmatpush2.msra.mxu0 0.0
        %4159 = vmatprep.subr.mxu0 0.0
        %4160 = vmatpush2.msra.mxu0 0.0
        %4161 = vmatprep.subr.mxu0 0.0
        %4162 = vmatpush2.msra.mxu0 0.0
        %4163 = vmatprep.subr.mxu0 0.0
        %4164 = vmatpush2.msra.mxu0 0.0
        %4165 = vmatprep.subr.mxu0 0.0
        %4166 = vmatpush2.msra.mxu0 0.0
        %4167 = vmatprep.mubr.f32.mxu0 0.0
        %4168 = vmatmul.mubr.f32.gmra.mxu0 %v3720
        %v4169 = vpop.f32.mrf.mxu0
        %v4170 = vadd.f32 %v3716, %v4169
        %v4171 = vpop.f32.mrf.mxu0
        %4172 = vmatprep.mubr.f32.mxu0 0.0
        %4173 = vmatmul.mubr.f32.gmra.mxu0 %v3723
        %v4174 = vpop.f32.mrf.mxu0
        %v4175 = vadd.f32 %v3716, %v4174
        %v4176 = vpop.f32.mrf.mxu0
        %4177 = vmatprep.mubr.f32.mxu0 0.0
        %4178 = vmatmul.mubr.f32.gmra.mxu0 %v3726
        %v4179 = vpop.f32.mrf.mxu0
        %v4180 = vadd.f32 %v3716, %v4179
        %v4181 = vpop.f32.mrf.mxu0
        %4182 = vmatprep.mubr.f32.mxu0 0.0
        %4183 = vmatmul.mubr.f32.gmra.mxu0 %v3729
        %v4184 = vpop.f32.mrf.mxu0
        %v4185 = vadd.f32 %v3716, %v4184
        %v4186 = vpop.f32.mrf.mxu0
        %4187 = vmatprep.mubr.f32.mxu0 0.0
        %4188 = vmatmul.mubr.f32.gmra.mxu0 %v3732
        %v4189 = vpop.f32.mrf.mxu0
        %v4190 = vadd.f32 %v3716, %v4189
        %v4191 = vpop.f32.mrf.mxu0
        %4192 = vmatprep.mubr.f32.mxu0 0.0
        %4193 = vmatmul.mubr.f32.gmra.mxu0 %v3735
        %v4194 = vpop.f32.mrf.mxu0
        %v4195 = vadd.f32 %v3716, %v4194
        %v4196 = vpop.f32.mrf.mxu0
        %4197 = vmatprep.mubr.f32.mxu0 0.0
        %4198 = vmatmul.mubr.f32.gmra.mxu0 %v3738
        %v4199 = vpop.f32.mrf.mxu0
        %v4200 = vadd.f32 %v3716, %v4199
        %v4201 = vpop.f32.mrf.mxu0
        %4202 = vmatprep.mubr.f32.mxu0 0.0
        %4203 = vmatmul.mubr.f32.gmra.mxu0 %v3741
        %v4204 = vpop.f32.mrf.mxu0
        %v4205 = vadd.f32 %v3716, %v4204
        %v4206 = vpop.f32.mrf.mxu0
        %4207 = vmatprep.mubr.f32.mxu0 0.0
        %4208 = vmatmul.mubr.f32.gmra.mxu0 %v3744
        %v4209 = vpop.f32.mrf.mxu0
        %v4210 = vadd.f32 %v3716, %v4209
        %v4211 = vpop.f32.mrf.mxu0
        %4212 = vmatprep.mubr.f32.mxu0 0.0
        %4213 = vmatmul.mubr.f32.gmra.mxu0 %v3747
        %v4214 = vpop.f32.mrf.mxu0
        %v4215 = vadd.f32 %v3716, %v4214
        %v4216 = vpop.f32.mrf.mxu0
        %4217 = vmatprep.mubr.f32.mxu0 0.0
        %4218 = vmatmul.mubr.f32.gmra.mxu0 %v3750
        %v4219 = vpop.f32.mrf.mxu0
        %v4220 = vadd.f32 %v3716, %v4219
        %v4221 = vpop.f32.mrf.mxu0
        %4222 = vmatprep.mubr.f32.mxu0 0.0
        %4223 = vmatmul.mubr.f32.gmra.mxu0 %v3753
        %v4224 = vpop.f32.mrf.mxu0
        %v4225 = vadd.f32 %v3716, %v4224
        %v4226 = vpop.f32.mrf.mxu0
        %4227 = vmatprep.mubr.f32.mxu0 0.0
        %4228 = vmatmul.mubr.f32.gmra.mxu0 %v3756
        %v4229 = vpop.f32.mrf.mxu0
        %v4230 = vadd.f32 %v3716, %v4229
        %v4231 = vpop.f32.mrf.mxu0
        %4232 = vmatprep.mubr.f32.mxu0 0.0
        %4233 = vmatmul.mubr.f32.gmra.mxu0 %v3759
        %v4234 = vpop.f32.mrf.mxu0
        %v4235 = vadd.f32 %v3716, %v4234
        %v4236 = vpop.f32.mrf.mxu0
        %4237 = vmatprep.mubr.f32.mxu0 0.0
        %4238 = vmatmul.mubr.f32.gmra.mxu0 %v3762
        %v4239 = vpop.f32.mrf.mxu0
        %v4240 = vadd.f32 %v3716, %v4239
        %v4241 = vpop.f32.mrf.mxu0
        %4242 = vmatprep.mubr.f32.mxu0 0.0
        %4243 = vmatmul.mubr.f32.gmra.mxu0 %v3765
        %v4244 = vpop.f32.mrf.mxu0
        %v4245 = vadd.f32 %v3716, %v4244
        %v4246 = vpop.f32.mrf.mxu0
        %4247 = vmatprep.mubr.f32.mxu0 0.0
        %4248 = vmatmul.mubr.f32.gmra.mxu0 %v3768
        %v4249 = vpop.f32.mrf.mxu0
        %v4250 = vadd.f32 %v3716, %v4249
        %v4251 = vpop.f32.mrf.mxu0
        %4252 = vmatprep.mubr.f32.mxu0 0.0
        %4253 = vmatmul.mubr.f32.gmra.mxu0 %v3771
        %v4254 = vpop.f32.mrf.mxu0
        %v4255 = vadd.f32 %v3716, %v4254
        %v4256 = vpop.f32.mrf.mxu0
        %4257 = vmatprep.mubr.f32.mxu0 0.0
        %4258 = vmatmul.mubr.f32.gmra.mxu0 %v3774
        %v4259 = vpop.f32.mrf.mxu0
        %v4260 = vadd.f32 %v3716, %v4259
        %v4261 = vpop.f32.mrf.mxu0
        %4262 = vmatprep.mubr.f32.mxu0 0.0
        %4263 = vmatmul.mubr.f32.gmra.mxu0 %v3777
        %v4264 = vpop.f32.mrf.mxu0
        %v4265 = vadd.f32 %v3716, %v4264
        %v4266 = vpop.f32.mrf.mxu0
        %4267 = vmatprep.mubr.f32.mxu0 0.0
        %4268 = vmatmul.mubr.f32.gmra.mxu0 %v3780
        %v4269 = vpop.f32.mrf.mxu0
        %v4270 = vadd.f32 %v3716, %v4269
        %v4271 = vpop.f32.mrf.mxu0
        %4272 = vmatprep.mubr.f32.mxu0 0.0
        %4273 = vmatmul.mubr.f32.gmra.mxu0 %v3783
        %v4274 = vpop.f32.mrf.mxu0
        %v4275 = vadd.f32 %v3716, %v4274
        %v4276 = vpop.f32.mrf.mxu0
        %4277 = vmatprep.mubr.f32.mxu0 0.0
        %4278 = vmatmul.mubr.f32.gmra.mxu0 %v3786
        %v4279 = vpop.f32.mrf.mxu0
        %v4280 = vadd.f32 %v3716, %v4279
        %v4281 = vpop.f32.mrf.mxu0
        %4282 = vmatprep.mubr.f32.mxu0 0.0
        %4283 = vmatmul.mubr.f32.gmra.mxu0 %v3789
        %v4284 = vpop.f32.mrf.mxu0
        %v4285 = vadd.f32 %v3716, %v4284
        %v4286 = vpop.f32.mrf.mxu0
        %4287 = vmatprep.mubr.f32.mxu0 0.0
        %4288 = vmatmul.mubr.f32.gmra.mxu0 %v3792
        %v4289 = vpop.f32.mrf.mxu0
        %v4290 = vadd.f32 %v3716, %v4289
        %v4291 = vpop.f32.mrf.mxu0
        %4292 = vmatprep.mubr.f32.mxu0 0.0
        %4293 = vmatmul.mubr.f32.gmra.mxu0 %v3795
        %v4294 = vpop.f32.mrf.mxu0
        %v4295 = vadd.f32 %v3716, %v4294
        %v4296 = vpop.f32.mrf.mxu0
        %4297 = vmatprep.mubr.f32.mxu0 0.0
        %4298 = vmatmul.mubr.f32.gmra.mxu0 %v3798
        %v4299 = vpop.f32.mrf.mxu0
        %v4300 = vadd.f32 %v3716, %v4299
        %v4301 = vpop.f32.mrf.mxu0
        %4302 = vmatprep.mubr.f32.mxu0 0.0
        %4303 = vmatmul.mubr.f32.gmra.mxu0 %v3801
        %v4304 = vpop.f32.mrf.mxu0
        %v4305 = vadd.f32 %v3716, %v4304
        %v4306 = vpop.f32.mrf.mxu0
        %4307 = vmatprep.mubr.f32.mxu0 0.0
        %4308 = vmatmul.mubr.f32.gmra.mxu0 %v3804
        %v4309 = vpop.f32.mrf.mxu0
        %v4310 = vadd.f32 %v3716, %v4309
        %v4311 = vpop.f32.mrf.mxu0
        %4312 = vmatprep.mubr.f32.mxu0 0.0
        %4313 = vmatmul.mubr.f32.gmra.mxu0 %v3807
        %v4314 = vpop.f32.mrf.mxu0
        %v4315 = vadd.f32 %v3716, %v4314
        %v4316 = vpop.f32.mrf.mxu0
        %4317 = vmatprep.mubr.f32.mxu0 0.0
        %4318 = vmatmul.mubr.f32.gmra.mxu0 %v3810
        %v4319 = vpop.f32.mrf.mxu0
        %v4320 = vadd.f32 %v3716, %v4319
        %v4321 = vpop.f32.mrf.mxu0
        %4322 = vmatprep.mubr.f32.mxu0 0.0
        %4323 = vmatmul.mubr.f32.gmra.mxu0 %v3813
        %v4324 = vpop.f32.mrf.mxu0
        %v4325 = vadd.f32 %v3716, %v4324
        %v4326 = vpop.f32.mrf.mxu0
        %4327 = vmatprep.mubr.f32.mxu0 0.0
        %4328 = vmatmul.mubr.f32.gmra.mxu0 %v3816
        %v4329 = vpop.f32.mrf.mxu0
        %v4330 = vadd.f32 %v3716, %v4329
        %v4331 = vpop.f32.mrf.mxu0
        %4332 = vmatprep.mubr.f32.mxu0 0.0
        %4333 = vmatmul.mubr.f32.gmra.mxu0 %v3819
        %v4334 = vpop.f32.mrf.mxu0
        %v4335 = vadd.f32 %v3716, %v4334
        %v4336 = vpop.f32.mrf.mxu0
        %4337 = vmatprep.mubr.f32.mxu0 0.0
        %4338 = vmatmul.mubr.f32.gmra.mxu0 %v3822
        %v4339 = vpop.f32.mrf.mxu0
        %v4340 = vadd.f32 %v3716, %v4339
        %v4341 = vpop.f32.mrf.mxu0
        %4342 = vmatprep.mubr.f32.mxu0 0.0
        %4343 = vmatmul.mubr.f32.gmra.mxu0 %v3825
        %v4344 = vpop.f32.mrf.mxu0
        %v4345 = vadd.f32 %v3716, %v4344
        %v4346 = vpop.f32.mrf.mxu0
        %4347 = vmatprep.mubr.f32.mxu0 0.0
        %4348 = vmatmul.mubr.f32.gmra.mxu0 %v3828
        %v4349 = vpop.f32.mrf.mxu0
        %v4350 = vadd.f32 %v3716, %v4349
        %v4351 = vpop.f32.mrf.mxu0
        %4352 = vmatprep.mubr.f32.mxu0 0.0
        %4353 = vmatmul.mubr.f32.gmra.mxu0 %v3831
        %v4354 = vpop.f32.mrf.mxu0
        %v4355 = vadd.f32 %v3716, %v4354
        %v4356 = vpop.f32.mrf.mxu0
        %4357 = vmatprep.mubr.f32.mxu0 0.0
        %4358 = vmatmul.mubr.f32.gmra.mxu0 %v3834
        %v4359 = vpop.f32.mrf.mxu0
        %v4360 = vadd.f32 %v3716, %v4359
        %v4361 = vpop.f32.mrf.mxu0
        %4362 = vmatprep.mubr.f32.mxu0 0.0
        %4363 = vmatmul.mubr.f32.gmra.mxu0 %v3837
        %v4364 = vpop.f32.mrf.mxu0
        %v4365 = vadd.f32 %v3716, %v4364
        %v4366 = vpop.f32.mrf.mxu0
        %4367 = vmatprep.mubr.f32.mxu0 0.0
        %4368 = vmatmul.mubr.f32.gmra.mxu0 %v3840
        %v4369 = vpop.f32.mrf.mxu0
        %v4370 = vadd.f32 %v3716, %v4369
        %v4371 = vpop.f32.mrf.mxu0
        %4372 = vmatprep.mubr.f32.mxu0 0.0
        %4373 = vmatmul.mubr.f32.gmra.mxu0 %v3843
        %v4374 = vpop.f32.mrf.mxu0
        %v4375 = vadd.f32 %v3716, %v4374
        %v4376 = vpop.f32.mrf.mxu0
        %4377 = vmatprep.mubr.f32.mxu0 0.0
        %4378 = vmatmul.mubr.f32.gmra.mxu0 %v3846
        %v4379 = vpop.f32.mrf.mxu0
        %v4380 = vadd.f32 %v3716, %v4379
        %v4381 = vpop.f32.mrf.mxu0
        %4382 = vmatprep.mubr.f32.mxu0 0.0
        %4383 = vmatmul.mubr.f32.gmra.mxu0 %v3849
        %v4384 = vpop.f32.mrf.mxu0
        %v4385 = vadd.f32 %v3716, %v4384
        %v4386 = vpop.f32.mrf.mxu0
        %4387 = vmatprep.mubr.f32.mxu0 0.0
        %4388 = vmatmul.mubr.f32.gmra.mxu0 %v3852
        %v4389 = vpop.f32.mrf.mxu0
        %v4390 = vadd.f32 %v3716, %v4389
        %v4391 = vpop.f32.mrf.mxu0
        %4392 = vmatprep.mubr.f32.mxu0 0.0
        %4393 = vmatmul.mubr.f32.gmra.mxu0 %v3855
        %v4394 = vpop.f32.mrf.mxu0
        %v4395 = vadd.f32 %v3716, %v4394
        %v4396 = vpop.f32.mrf.mxu0
        %4397 = vmatprep.mubr.f32.mxu0 0.0
        %4398 = vmatmul.mubr.f32.gmra.mxu0 %v3858
        %v4399 = vpop.f32.mrf.mxu0
        %v4400 = vadd.f32 %v3716, %v4399
        %v4401 = vpop.f32.mrf.mxu0
        %4402 = vmatprep.mubr.f32.mxu0 0.0
        %4403 = vmatmul.mubr.f32.gmra.mxu0 %v3861
        %v4404 = vpop.f32.mrf.mxu0
        %v4405 = vadd.f32 %v3716, %v4404
        %v4406 = vpop.f32.mrf.mxu0
        %4407 = vmatprep.mubr.f32.mxu0 0.0
        %4408 = vmatmul.mubr.f32.gmra.mxu0 %v3864
        %v4409 = vpop.f32.mrf.mxu0
        %v4410 = vadd.f32 %v3716, %v4409
        %v4411 = vpop.f32.mrf.mxu0
        %4412 = vmatprep.mubr.f32.mxu0 0.0
        %4413 = vmatmul.mubr.f32.gmra.mxu0 %v3867
        %v4414 = vpop.f32.mrf.mxu0
        %v4415 = vadd.f32 %v3716, %v4414
        %v4416 = vpop.f32.mrf.mxu0
        %4417 = vmatprep.mubr.f32.mxu0 0.0
        %4418 = vmatmul.mubr.f32.gmra.mxu0 %v3870
        %v4419 = vpop.f32.mrf.mxu0
        %v4420 = vadd.f32 %v3716, %v4419
        %v4421 = vpop.f32.mrf.mxu0
        %4422 = vmatprep.mubr.f32.mxu0 0.0
        %4423 = vmatmul.mubr.f32.gmra.mxu0 %v3873
        %v4424 = vpop.f32.mrf.mxu0
        %v4425 = vadd.f32 %v3716, %v4424
        %v4426 = vpop.f32.mrf.mxu0
        %4427 = vmatprep.mubr.f32.mxu0 0.0
        %4428 = vmatmul.mubr.f32.gmra.mxu0 %v3876
        %v4429 = vpop.f32.mrf.mxu0
        %v4430 = vadd.f32 %v3716, %v4429
        %v4431 = vpop.f32.mrf.mxu0
        %4432 = vmatprep.mubr.f32.mxu0 0.0
        %4433 = vmatmul.mubr.f32.gmra.mxu0 %v3879
        %v4434 = vpop.f32.mrf.mxu0
        %v4435 = vadd.f32 %v3716, %v4434
        %v4436 = vpop.f32.mrf.mxu0
        %4437 = vmatprep.mubr.f32.mxu0 0.0
        %4438 = vmatmul.mubr.f32.gmra.mxu0 %v3882
        %v4439 = vpop.f32.mrf.mxu0
        %v4440 = vadd.f32 %v3716, %v4439
        %v4441 = vpop.f32.mrf.mxu0
        %4442 = vmatprep.mubr.f32.mxu0 0.0
        %4443 = vmatmul.mubr.f32.gmra.mxu0 %v3885
        %v4444 = vpop.f32.mrf.mxu0
        %v4445 = vadd.f32 %v3716, %v4444
        %v4446 = vpop.f32.mrf.mxu0
        %4447 = vmatprep.mubr.f32.mxu0 0.0
        %4448 = vmatmul.mubr.f32.gmra.mxu0 %v3888
        %v4449 = vpop.f32.mrf.mxu0
        %v4450 = vadd.f32 %v3716, %v4449
        %v4451 = vpop.f32.mrf.mxu0
        %4452 = vmatprep.mubr.f32.mxu0 0.0
        %4453 = vmatmul.mubr.f32.gmra.mxu0 %v3891
        %v4454 = vpop.f32.mrf.mxu0
        %v4455 = vadd.f32 %v3716, %v4454
        %v4456 = vpop.f32.mrf.mxu0
        %4457 = vmatprep.mubr.f32.mxu0 0.0
        %4458 = vmatmul.mubr.f32.gmra.mxu0 %v3894
        %v4459 = vpop.f32.mrf.mxu0
        %v4460 = vadd.f32 %v3716, %v4459
        %v4461 = vpop.f32.mrf.mxu0
        %4462 = vmatprep.mubr.f32.mxu0 0.0
        %4463 = vmatmul.mubr.f32.gmra.mxu0 %v3897
        %v4464 = vpop.f32.mrf.mxu0
        %v4465 = vadd.f32 %v3716, %v4464
        %v4466 = vpop.f32.mrf.mxu0
        %4467 = vmatprep.mubr.f32.mxu0 0.0
        %4468 = vmatmul.mubr.f32.gmra.mxu0 %v3900
        %v4469 = vpop.f32.mrf.mxu0
        %v4470 = vadd.f32 %v3716, %v4469
        %v4471 = vpop.f32.mrf.mxu0
        %4472 = vmatprep.mubr.f32.mxu0 0.0
        %4473 = vmatmul.mubr.f32.gmra.mxu0 %v3903
        %v4474 = vpop.f32.mrf.mxu0
        %v4475 = vadd.f32 %v3716, %v4474
        %v4476 = vpop.f32.mrf.mxu0
        %4477 = vmatprep.mubr.f32.mxu0 0.0
        %4478 = vmatmul.mubr.f32.gmra.mxu0 %v3906
        %v4479 = vpop.f32.mrf.mxu0
        %v4480 = vadd.f32 %v3716, %v4479
        %v4481 = vpop.f32.mrf.mxu0
        %4482 = vmatprep.mubr.f32.mxu0 0.0
        %4483 = vmatmul.mubr.f32.gmra.mxu0 %v3909
        %v4484 = vpop.f32.mrf.mxu0
        %v4485 = vadd.f32 %v3716, %v4484
        %v4486 = vpop.f32.mrf.mxu0
        %4487 = vmatprep.mubr.f32.mxu0 0.0
        %4488 = vmatmul.mubr.f32.gmra.mxu0 %v3912
        %v4489 = vpop.f32.mrf.mxu0
        %v4490 = vadd.f32 %v3716, %v4489
        %v4491 = vpop.f32.mrf.mxu0
        %4492 = vmatprep.mubr.f32.mxu0 0.0
        %4493 = vmatmul.mubr.f32.gmra.mxu0 %v3915
        %v4494 = vpop.f32.mrf.mxu0
        %v4495 = vadd.f32 %v3716, %v4494
        %v4496 = vpop.f32.mrf.mxu0
        %4497 = vmatprep.mubr.f32.mxu0 0.0
        %4498 = vmatmul.mubr.f32.gmra.mxu0 %v3918
        %v4499 = vpop.f32.mrf.mxu0
        %v4500 = vadd.f32 %v3716, %v4499
        %v4501 = vpop.f32.mrf.mxu0
        %4502 = vmatprep.mubr.f32.mxu0 0.0
        %4503 = vmatmul.mubr.f32.gmra.mxu0 %v3921
        %v4504 = vpop.f32.mrf.mxu0
        %v4505 = vadd.f32 %v3716, %v4504
        %v4506 = vpop.f32.mrf.mxu0
        %4507 = vmatprep.mubr.f32.mxu0 0.0
        %4508 = vmatmul.mubr.f32.gmra.mxu0 %v3924
        %v4509 = vpop.f32.mrf.mxu0
        %v4510 = vadd.f32 %v3716, %v4509
        %v4511 = vpop.f32.mrf.mxu0
        %4512 = vmatprep.mubr.f32.mxu0 0.0
        %4513 = vmatmul.mubr.f32.gmra.mxu0 %v3927
        %v4514 = vpop.f32.mrf.mxu0
        %v4515 = vadd.f32 %v3716, %v4514
        %v4516 = vpop.f32.mrf.mxu0
        %4517 = vmatprep.mubr.f32.mxu0 0.0
        %4518 = vmatmul.mubr.f32.gmra.mxu0 %v3930
        %v4519 = vpop.f32.mrf.mxu0
        %v4520 = vadd.f32 %v3716, %v4519
        %v4521 = vpop.f32.mrf.mxu0
        %4522 = vmatprep.mubr.f32.mxu0 0.0
        %4523 = vmatmul.mubr.f32.gmra.mxu0 %v3933
        %v4524 = vpop.f32.mrf.mxu0
        %v4525 = vadd.f32 %v3716, %v4524
        %v4526 = vpop.f32.mrf.mxu0
        %4527 = vmatprep.mubr.f32.mxu0 0.0
        %4528 = vmatmul.mubr.f32.gmra.mxu0 %v3936
        %v4529 = vpop.f32.mrf.mxu0
        %v4530 = vadd.f32 %v3716, %v4529
        %v4531 = vpop.f32.mrf.mxu0
        %4532 = vmatprep.mubr.f32.mxu0 0.0
        %4533 = vmatmul.mubr.f32.gmra.mxu0 %v3939
        %v4534 = vpop.f32.mrf.mxu0
        %v4535 = vadd.f32 %v3716, %v4534
        %v4536 = vpop.f32.mrf.mxu0
        %4537 = vmatprep.mubr.f32.mxu0 0.0
        %4538 = vmatmul.mubr.f32.gmra.mxu0 %v3942
        %v4539 = vpop.f32.mrf.mxu0
        %v4540 = vadd.f32 %v3716, %v4539
        %v4541 = vpop.f32.mrf.mxu0
        %4542 = vmatprep.mubr.f32.mxu0 0.0
        %4543 = vmatmul.mubr.f32.gmra.mxu0 %v3945
        %v4544 = vpop.f32.mrf.mxu0
        %v4545 = vadd.f32 %v3716, %v4544
        %v4546 = vpop.f32.mrf.mxu0
        %4547 = vmatprep.mubr.f32.mxu0 0.0
        %4548 = vmatmul.mubr.f32.gmra.mxu0 %v3948
        %v4549 = vpop.f32.mrf.mxu0
        %v4550 = vadd.f32 %v3716, %v4549
        %v4551 = vpop.f32.mrf.mxu0
        %4552 = vmatprep.mubr.f32.mxu0 0.0
        %4553 = vmatmul.mubr.f32.gmra.mxu0 %v3951
        %v4554 = vpop.f32.mrf.mxu0
        %v4555 = vadd.f32 %v3716, %v4554
        %v4556 = vpop.f32.mrf.mxu0
        %4557 = vmatprep.mubr.f32.mxu0 0.0
        %4558 = vmatmul.mubr.f32.gmra.mxu0 %v3954
        %v4559 = vpop.f32.mrf.mxu0
        %v4560 = vadd.f32 %v3716, %v4559
        %v4561 = vpop.f32.mrf.mxu0
        %4562 = vmatprep.mubr.f32.mxu0 0.0
        %4563 = vmatmul.mubr.f32.gmra.mxu0 %v3957
        %v4564 = vpop.f32.mrf.mxu0
        %v4565 = vadd.f32 %v3716, %v4564
        %v4566 = vpop.f32.mrf.mxu0
        %4567 = vmatprep.mubr.f32.mxu0 0.0
        %4568 = vmatmul.mubr.f32.gmra.mxu0 %v3960
        %v4569 = vpop.f32.mrf.mxu0
        %v4570 = vadd.f32 %v3716, %v4569
        %v4571 = vpop.f32.mrf.mxu0
        %4572 = vmatprep.mubr.f32.mxu0 0.0
        %4573 = vmatmul.mubr.f32.gmra.mxu0 %v3963
        %v4574 = vpop.f32.mrf.mxu0
        %v4575 = vadd.f32 %v3716, %v4574
        %v4576 = vpop.f32.mrf.mxu0
        %4577 = vmatprep.mubr.f32.mxu0 0.0
        %4578 = vmatmul.mubr.f32.gmra.mxu0 %v3966
        %v4579 = vpop.f32.mrf.mxu0
        %v4580 = vadd.f32 %v3716, %v4579
        %v4581 = vpop.f32.mrf.mxu0
        %4582 = vmatprep.mubr.f32.mxu0 0.0
        %4583 = vmatmul.mubr.f32.gmra.mxu0 %v3969
        %v4584 = vpop.f32.mrf.mxu0
        %v4585 = vadd.f32 %v3716, %v4584
        %v4586 = vpop.f32.mrf.mxu0
        %4587 = vmatprep.mubr.f32.mxu0 0.0
        %4588 = vmatmul.mubr.f32.gmra.mxu0 %v3972
        %v4589 = vpop.f32.mrf.mxu0
        %v4590 = vadd.f32 %v3716, %v4589
        %v4591 = vpop.f32.mrf.mxu0
        %4592 = vmatprep.mubr.f32.mxu0 0.0
        %4593 = vmatmul.mubr.f32.gmra.mxu0 %v3975
        %v4594 = vpop.f32.mrf.mxu0
        %v4595 = vadd.f32 %v3716, %v4594
        %v4596 = vpop.f32.mrf.mxu0
        %4597 = vmatprep.mubr.f32.mxu0 0.0
        %4598 = vmatmul.mubr.f32.gmra.mxu0 %v3978
        %v4599 = vpop.f32.mrf.mxu0
        %v4600 = vadd.f32 %v3716, %v4599
        %v4601 = vpop.f32.mrf.mxu0
        %4602 = vmatprep.mubr.f32.mxu0 0.0
        %4603 = vmatmul.mubr.f32.gmra.mxu0 %v3981
        %v4604 = vpop.f32.mrf.mxu0
        %v4605 = vadd.f32 %v3716, %v4604
        %v4606 = vpop.f32.mrf.mxu0
        %4607 = vmatprep.mubr.f32.mxu0 0.0
        %4608 = vmatmul.mubr.f32.gmra.mxu0 %v3984
        %v4609 = vpop.f32.mrf.mxu0
        %v4610 = vadd.f32 %v3716, %v4609
        %v4611 = vpop.f32.mrf.mxu0
        %4612 = vmatprep.mubr.f32.mxu0 0.0
        %4613 = vmatmul.mubr.f32.gmra.mxu0 %v3987
        %v4614 = vpop.f32.mrf.mxu0
        %v4615 = vadd.f32 %v3716, %v4614
        %v4616 = vpop.f32.mrf.mxu0
        %4617 = vmatprep.mubr.f32.mxu0 0.0
        %4618 = vmatmul.mubr.f32.gmra.mxu0 %v3990
        %v4619 = vpop.f32.mrf.mxu0
        %v4620 = vadd.f32 %v3716, %v4619
        %v4621 = vpop.f32.mrf.mxu0
        %4622 = vmatprep.mubr.f32.mxu0 0.0
        %4623 = vmatmul.mubr.f32.gmra.mxu0 %v3993
        %v4624 = vpop.f32.mrf.mxu0
        %v4625 = vadd.f32 %v3716, %v4624
        %v4626 = vpop.f32.mrf.mxu0
        %4627 = vmatprep.mubr.f32.mxu0 0.0
        %4628 = vmatmul.mubr.f32.gmra.mxu0 %v3996
        %v4629 = vpop.f32.mrf.mxu0
        %v4630 = vadd.f32 %v3716, %v4629
        %v4631 = vpop.f32.mrf.mxu0
        %4632 = vmatprep.mubr.f32.mxu0 0.0
        %4633 = vmatmul.mubr.f32.gmra.mxu0 %v3999
        %v4634 = vpop.f32.mrf.mxu0
        %v4635 = vadd.f32 %v3716, %v4634
        %v4636 = vpop.f32.mrf.mxu0
        %4637 = vmatprep.mubr.f32.mxu0 0.0
        %4638 = vmatmul.mubr.f32.gmra.mxu0 %v4002
        %v4639 = vpop.f32.mrf.mxu0
        %v4640 = vadd.f32 %v3716, %v4639
        %v4641 = vpop.f32.mrf.mxu0
        %4642 = vmatprep.mubr.f32.mxu0 0.0
        %4643 = vmatmul.mubr.f32.gmra.mxu0 %v4005
        %v4644 = vpop.f32.mrf.mxu0
        %v4645 = vadd.f32 %v3716, %v4644
        %v4646 = vpop.f32.mrf.mxu0
        %4647 = vmatprep.mubr.f32.mxu0 0.0
        %4648 = vmatmul.mubr.f32.gmra.mxu0 %v4008
        %v4649 = vpop.f32.mrf.mxu0
        %v4650 = vadd.f32 %v3716, %v4649
        %v4651 = vpop.f32.mrf.mxu0
        %4652 = vmatprep.mubr.f32.mxu0 0.0
        %4653 = vmatmul.mubr.f32.gmra.mxu0 %v4011
        %v4654 = vpop.f32.mrf.mxu0
        %v4655 = vadd.f32 %v3716, %v4654
        %v4656 = vpop.f32.mrf.mxu0
        %4657 = vmatprep.mubr.f32.mxu0 0.0
        %4658 = vmatmul.mubr.f32.gmra.mxu0 %v4014
        %v4659 = vpop.f32.mrf.mxu0
        %v4660 = vadd.f32 %v3716, %v4659
        %v4661 = vpop.f32.mrf.mxu0
        %4662 = vmatprep.mubr.f32.mxu0 0.0
        %4663 = vmatmul.mubr.f32.gmra.mxu0 %v4017
        %v4664 = vpop.f32.mrf.mxu0
        %v4665 = vadd.f32 %v3716, %v4664
        %v4666 = vpop.f32.mrf.mxu0
        %4667 = vmatprep.mubr.f32.mxu0 0.0
        %4668 = vmatmul.mubr.f32.gmra.mxu0 %v4020
        %v4669 = vpop.f32.mrf.mxu0
        %v4670 = vadd.f32 %v3716, %v4669
        %v4671 = vpop.f32.mrf.mxu0
        %4672 = vmatprep.mubr.f32.mxu0 0.0
        %4673 = vmatmul.mubr.f32.gmra.mxu0 %v4023
        %v4674 = vpop.f32.mrf.mxu0
        %v4675 = vadd.f32 %v3716, %v4674
        %v4676 = vpop.f32.mrf.mxu0
        %4677 = vmatprep.mubr.f32.mxu0 0.0
        %4678 = vmatmul.mubr.f32.gmra.mxu0 %v4026
        %v4679 = vpop.f32.mrf.mxu0
        %v4680 = vadd.f32 %v3716, %v4679
        %v4681 = vpop.f32.mrf.mxu0
        %4682 = vmatprep.mubr.f32.mxu0 0.0
        %4683 = vmatmul.mubr.f32.gmra.mxu0 %v4029
        %v4684 = vpop.f32.mrf.mxu0
        %v4685 = vadd.f32 %v3716, %v4684
        %v4686 = vpop.f32.mrf.mxu0
        %4687 = vmatprep.mubr.f32.mxu0 0.0
        %4688 = vmatmul.mubr.f32.gmra.mxu0 %v4032
        %v4689 = vpop.f32.mrf.mxu0
        %v4690 = vadd.f32 %v3716, %v4689
        %v4691 = vpop.f32.mrf.mxu0
        %4692 = vmatprep.mubr.f32.mxu0 0.0
        %4693 = vmatmul.mubr.f32.gmra.mxu0 %v4035
        %v4694 = vpop.f32.mrf.mxu0
        %v4695 = vadd.f32 %v3716, %v4694
        %v4696 = vpop.f32.mrf.mxu0
        %4697 = vmatprep.mubr.f32.mxu0 0.0
        %4698 = vmatmul.mubr.f32.gmra.mxu0 %v4038
        %v4699 = vpop.f32.mrf.mxu0
        %v4700 = vadd.f32 %v3716, %v4699
        %v4701 = vpop.f32.mrf.mxu0
        %4702 = vmatprep.mubr.f32.mxu0 0.0
        %4703 = vmatmul.mubr.f32.gmra.mxu0 %v4041
        %v4704 = vpop.f32.mrf.mxu0
        %v4705 = vadd.f32 %v3716, %v4704
        %v4706 = vpop.f32.mrf.mxu0
        %4707 = vmatprep.mubr.f32.mxu0 0.0
        %4708 = vmatmul.mubr.f32.gmra.mxu0 %v4044
        %v4709 = vpop.f32.mrf.mxu0
        %v4710 = vadd.f32 %v3716, %v4709
        %v4711 = vpop.f32.mrf.mxu0
        %4712 = vmatprep.mubr.f32.mxu0 0.0
        %4713 = vmatmul.mubr.f32.gmra.mxu0 %v4047
        %v4714 = vpop.f32.mrf.mxu0
        %v4715 = vadd.f32 %v3716, %v4714
        %v4716 = vpop.f32.mrf.mxu0
        %4717 = vmatprep.mubr.f32.mxu0 0.0
        %4718 = vmatmul.mubr.f32.gmra.mxu0 %v4050
        %v4719 = vpop.f32.mrf.mxu0
        %v4720 = vadd.f32 %v3716, %v4719
        %v4721 = vpop.f32.mrf.mxu0
        %4722 = vmatprep.mubr.f32.mxu0 0.0
        %4723 = vmatmul.mubr.f32.gmra.mxu0 %v4053
        %v4724 = vpop.f32.mrf.mxu0
        %v4725 = vadd.f32 %v3716, %v4724
        %v4726 = vpop.f32.mrf.mxu0
        %4727 = vmatprep.mubr.f32.mxu0 0.0
        %4728 = vmatmul.mubr.f32.gmra.mxu0 %v4056
        %v4729 = vpop.f32.mrf.mxu0
        %v4730 = vadd.f32 %v3716, %v4729
        %v4731 = vpop.f32.mrf.mxu0
        %4732 = vmatprep.mubr.f32.mxu0 0.0
        %4733 = vmatmul.mubr.f32.gmra.mxu0 %v4059
        %v4734 = vpop.f32.mrf.mxu0
        %v4735 = vadd.f32 %v3716, %v4734
        %v4736 = vpop.f32.mrf.mxu0
        %4737 = vmatprep.mubr.f32.mxu0 0.0
        %4738 = vmatmul.mubr.f32.gmra.mxu0 %v4062
        %v4739 = vpop.f32.mrf.mxu0
        %v4740 = vadd.f32 %v3716, %v4739
        %v4741 = vpop.f32.mrf.mxu0
        %4742 = vmatprep.mubr.f32.mxu0 0.0
        %4743 = vmatmul.mubr.f32.gmra.mxu0 %v4065
        %v4744 = vpop.f32.mrf.mxu0
        %v4745 = vadd.f32 %v3716, %v4744
        %v4746 = vpop.f32.mrf.mxu0
        %4747 = vmatprep.mubr.f32.mxu0 0.0
        %4748 = vmatmul.mubr.f32.gmra.mxu0 %v4068
        %v4749 = vpop.f32.mrf.mxu0
        %v4750 = vadd.f32 %v3716, %v4749
        %v4751 = vpop.f32.mrf.mxu0
        %4752 = vmatprep.mubr.f32.mxu0 0.0
        %4753 = vmatmul.mubr.f32.gmra.mxu0 %v4071
        %v4754 = vpop.f32.mrf.mxu0
        %v4755 = vadd.f32 %v3716, %v4754
        %v4756 = vpop.f32.mrf.mxu0
        %4757 = vmatprep.mubr.f32.mxu0 0.0
        %4758 = vmatmul.mubr.f32.gmra.mxu0 %v4074
        %v4759 = vpop.f32.mrf.mxu0
        %v4760 = vadd.f32 %v3716, %v4759
        %v4761 = vpop.f32.mrf.mxu0
        %4762 = vmatprep.mubr.f32.mxu0 0.0
        %4763 = vmatmul.mubr.f32.gmra.mxu0 %v4077
        %v4764 = vpop.f32.mrf.mxu0
        %v4765 = vadd.f32 %v3716, %v4764
        %v4766 = vpop.f32.mrf.mxu0
        %4767 = vmatprep.mubr.f32.mxu0 0.0
        %4768 = vmatmul.mubr.f32.gmra.mxu0 %v4080
        %v4769 = vpop.f32.mrf.mxu0
        %v4770 = vadd.f32 %v3716, %v4769
        %v4771 = vpop.f32.mrf.mxu0
        %4772 = vmatprep.mubr.f32.mxu0 0.0
        %4773 = vmatmul.mubr.f32.gmra.mxu0 %v4083
        %v4774 = vpop.f32.mrf.mxu0
        %v4775 = vadd.f32 %v3716, %v4774
        %v4776 = vpop.f32.mrf.mxu0
        %4777 = vmatprep.mubr.f32.mxu0 0.0
        %4778 = vmatmul.mubr.f32.gmra.mxu0 %v4086
        %v4779 = vpop.f32.mrf.mxu0
        %v4780 = vadd.f32 %v3716, %v4779
        %v4781 = vpop.f32.mrf.mxu0
        %4782 = vmatprep.mubr.f32.mxu0 0.0
        %4783 = vmatmul.mubr.f32.gmra.mxu0 %v4089
        %v4784 = vpop.f32.mrf.mxu0
        %v4785 = vadd.f32 %v3716, %v4784
        %v4786 = vpop.f32.mrf.mxu0
        %4787 = vmatprep.mubr.f32.mxu0 0.0
        %4788 = vmatmul.mubr.f32.gmra.mxu0 %v4092
        %v4789 = vpop.f32.mrf.mxu0
        %v4790 = vadd.f32 %v3716, %v4789
        %v4791 = vpop.f32.mrf.mxu0
        %4792 = vmatprep.mubr.f32.mxu0 0.0
        %4793 = vmatmul.mubr.f32.gmra.mxu0 %v4095
        %v4794 = vpop.f32.mrf.mxu0
        %v4795 = vadd.f32 %v3716, %v4794
        %v4796 = vpop.f32.mrf.mxu0
        %4797 = vmatprep.mubr.f32.mxu0 0.0
        %4798 = vmatmul.mubr.f32.gmra.mxu0 %v4098
        %v4799 = vpop.f32.mrf.mxu0
        %v4800 = vadd.f32 %v3716, %v4799
        %v4801 = vpop.f32.mrf.mxu0
        %4802 = vmatprep.mubr.f32.mxu0 0.0
        %4803 = vmatmul.mubr.f32.gmra.mxu0 %v4101
        %v4804 = vpop.f32.mrf.mxu0
        %v4805 = vadd.f32 %v3716, %v4804
        %v4806 = vpop.f32.mrf.mxu0
        %4807 = vdwg.mxu0
        %v4808 = vld [vmem:[%s3] sm:$0xff]
        %v4809 = vld [vmem:[%s3 + $0x8] sm:$0xff]
        %v4810 = vld [vmem:[%s3 + $0x10] sm:$0xff]
        %v4811 = vld [vmem:[%s3 + $0x18] sm:$0xff]
        %v4813 = vsel %vm2153, 0.0, 0
        %4815 = vmatprep.subr.mxu0 0.0
        %4816 = vmatpush1.msra.mxu0 0.0
        %4817 = vmatprep.subr.mxu0 0.0
        %4818 = vmatpush1.msra.mxu0 0.0
        %4819 = vmatprep.subr.mxu0 0.0
        %4820 = vmatpush1.msra.mxu0 0.0
        %4821 = vmatprep.subr.mxu0 0.0
        %4822 = vmatpush1.msra.mxu0 0.0
        %4823 = vmatprep.subr.mxu0 0.0
        %4824 = vmatpush1.msra.mxu0 0.0
        %4825 = vmatprep.subr.mxu0 0.0
        %4826 = vmatpush1.msra.mxu0 0.0
        %4827 = vmatprep.subr.mxu0 0.0
        %4828 = vmatpush1.msra.mxu0 0.0
        %4829 = vmatprep.subr.mxu0 0.0
        %4830 = vmatpush1.msra.mxu0 0.0
        %4831 = vmatprep.subr.mxu0 0.0
        %4832 = vmatpush1.msra.mxu0 0.0
        %4833 = vmatprep.subr.mxu0 0.0
        %4834 = vmatpush1.msra.mxu0 0.0
        %4835 = vmatprep.subr.mxu0 0.0
        %4836 = vmatpush1.msra.mxu0 0.0
        %4837 = vmatprep.subr.mxu0 0.0
        %4838 = vmatpush1.msra.mxu0 0.0
        %4839 = vmatprep.subr.mxu0 0.0
        %4840 = vmatpush1.msra.mxu0 %v4811
        %4841 = vmatprep.subr.mxu0 0.0
        %4842 = vmatpush1.msra.mxu0 %v4810
        %4843 = vmatprep.subr.mxu0 0.0
        %4844 = vmatpush1.msra.mxu0 %v4809
        %4845 = vmatprep.subr.mxu0 0.0
        %4846 = vmatpush1.msra.mxu0 %v4808
        %4847 = vmatprep.subr.mxu0 0.0
        %4848 = vmatpush2.msra.mxu0 0.0
        %4849 = vmatprep.subr.mxu0 0.0
        %4850 = vmatpush2.msra.mxu0 0.0
        %4851 = vmatprep.subr.mxu0 0.0
        %4852 = vmatpush2.msra.mxu0 0.0
        %4853 = vmatprep.subr.mxu0 0.0
        %4854 = vmatpush2.msra.mxu0 0.0
        %4855 = vmatprep.subr.mxu0 0.0
        %4856 = vmatpush2.msra.mxu0 0.0
        %4857 = vmatprep.subr.mxu0 0.0
        %4858 = vmatpush2.msra.mxu0 0.0
        %4859 = vmatprep.subr.mxu0 0.0
        %4860 = vmatpush2.msra.mxu0 0.0
        %4861 = vmatprep.subr.mxu0 0.0
        %4862 = vmatpush2.msra.mxu0 0.0
        %4863 = vmatprep.subr.mxu0 0.0
        %4864 = vmatpush2.msra.mxu0 0.0
        %4865 = vmatprep.subr.mxu0 0.0
        %4866 = vmatpush2.msra.mxu0 0.0
        %4867 = vmatprep.subr.mxu0 0.0
        %4868 = vmatpush2.msra.mxu0 0.0
        %4869 = vmatprep.subr.mxu0 0.0
        %4870 = vmatpush2.msra.mxu0 0.0
        %4871 = vmatprep.subr.mxu0 0.0
        %4872 = vmatpush2.msra.mxu0 0.0
        %4873 = vmatprep.subr.mxu0 0.0
        %4874 = vmatpush2.msra.mxu0 0.0
        %4875 = vmatprep.subr.mxu0 0.0
        %4876 = vmatpush2.msra.mxu0 0.0
        %4877 = vmatprep.subr.mxu0 0.0
        %4878 = vmatpush2.msra.mxu0 0.0
        %4879 = vmatprep.mubr.f32.mxu0 0.0
        %4880 = vmatmul.mubr.f32.gmra.mxu0 %v4813
        %v4881 = vpop.f32.mrf.mxu0
        %v4882 = vadd.f32 0.0, %v4881
        %v4883 = vpop.f32.mrf.mxu0
        %4884 = vmatprep.mubr.f32.mxu0 0.0
        %4885 = vmatmul.mubr.f32.gmra.mxu0 %v4813
        %v4886 = vpop.f32.mrf.mxu0
        %v4887 = vadd.f32 0.0, %v4886
        %v4888 = vpop.f32.mrf.mxu0
        %4889 = vmatprep.mubr.f32.mxu0 0.0
        %4890 = vmatmul.mubr.f32.gmra.mxu0 %v4813
        %v4891 = vpop.f32.mrf.mxu0
        %v4892 = vadd.f32 0.0, %v4891
        %v4893 = vpop.f32.mrf.mxu0
        %4894 = vmatprep.mubr.f32.mxu0 0.0
        %4895 = vmatmul.mubr.f32.gmra.mxu0 %v4813
        %v4896 = vpop.f32.mrf.mxu0
        %v4897 = vadd.f32 0.0, %v4896
        %v4898 = vpop.f32.mrf.mxu0
        %4899 = vmatprep.mubr.f32.mxu0 0.0
        %4900 = vmatmul.mubr.f32.gmra.mxu0 %v4813
        %v4901 = vpop.f32.mrf.mxu0
        %v4902 = vadd.f32 0.0, %v4901
        %v4903 = vpop.f32.mrf.mxu0
        %4904 = vmatprep.mubr.f32.mxu0 0.0
        %4905 = vmatmul.mubr.f32.gmra.mxu0 %v4813
        %v4906 = vpop.f32.mrf.mxu0
        %v4907 = vadd.f32 0.0, %v4906
        %v4908 = vpop.f32.mrf.mxu0
        %4909 = vmatprep.mubr.f32.mxu0 0.0
        %4910 = vmatmul.mubr.f32.gmra.mxu0 %v4813
        %v4911 = vpop.f32.mrf.mxu0
        %v4912 = vadd.f32 0.0, %v4911
        %v4913 = vpop.f32.mrf.mxu0
        %4914 = vmatprep.mubr.f32.mxu0 0.0
        %4915 = vmatmul.mubr.f32.gmra.mxu0 %v4813
        %v4916 = vpop.f32.mrf.mxu0
        %v4917 = vadd.f32 0.0, %v4916
        %v4918 = vpop.f32.mrf.mxu0
        %4919 = vmatprep.mubr.f32.mxu0 0.0
        %4920 = vmatmul.mubr.f32.gmra.mxu0 %v4813
        %v4921 = vpop.f32.mrf.mxu0
        %v4922 = vadd.f32 0.0, %v4921
        %v4923 = vpop.f32.mrf.mxu0
        %4924 = vmatprep.mubr.f32.mxu0 0.0
        %4925 = vmatmul.mubr.f32.gmra.mxu0 %v4813
        %v4926 = vpop.f32.mrf.mxu0
        %v4927 = vadd.f32 0.0, %v4926
        %v4928 = vpop.f32.mrf.mxu0
        %4929 = vmatprep.mubr.f32.mxu0 0.0
        %4930 = vmatmul.mubr.f32.gmra.mxu0 %v4813
        %v4931 = vpop.f32.mrf.mxu0
        %v4932 = vadd.f32 0.0, %v4931
        %v4933 = vpop.f32.mrf.mxu0
        %4934 = vmatprep.mubr.f32.mxu0 0.0
        %4935 = vmatmul.mubr.f32.gmra.mxu0 %v4813
        %v4936 = vpop.f32.mrf.mxu0
        %v4937 = vadd.f32 0.0, %v4936
        %v4938 = vpop.f32.mrf.mxu0
        %4939 = vmatprep.mubr.f32.mxu0 0.0
        %4940 = vmatmul.mubr.f32.gmra.mxu0 %v4813
        %v4941 = vpop.f32.mrf.mxu0
        %v4942 = vadd.f32 0.0, %v4941
        %v4943 = vpop.f32.mrf.mxu0
        %4944 = vmatprep.mubr.f32.mxu0 0.0
        %4945 = vmatmul.mubr.f32.gmra.mxu0 %v4813
        %v4946 = vpop.f32.mrf.mxu0
        %v4947 = vadd.f32 0.0, %v4946
        %v4948 = vpop.f32.mrf.mxu0
        %4949 = vmatprep.mubr.f32.mxu0 0.0
        %4950 = vmatmul.mubr.f32.gmra.mxu0 %v4813
        %v4951 = vpop.f32.mrf.mxu0
        %v4952 = vadd.f32 0.0, %v4951
        %v4953 = vpop.f32.mrf.mxu0
        %4954 = vmatprep.mubr.f32.mxu0 0.0
        %4955 = vmatmul.mubr.f32.gmra.mxu0 %v4813
        %v4956 = vpop.f32.mrf.mxu0
        %v4957 = vadd.f32 0.0, %v4956
        %v4958 = vpop.f32.mrf.mxu0
        %4959 = vdwg.mxu0
        %v4960 = vadd.f32 %v4170, %v4882
        %v4961 = vadd.f32 %v4175, %v4887
        %v4962 = vadd.f32 %v4180, %v4892
        %v4963 = vadd.f32 %v4185, %v4897
        %v4964 = vadd.f32 %v4190, %v4902
        %v4965 = vadd.f32 %v4195, %v4907
        %v4966 = vadd.f32 %v4200, %v4912
        %v4967 = vadd.f32 %v4205, %v4917
        %v4968 = vadd.f32 %v4210, %v4922
        %v4969 = vadd.f32 %v4215, %v4927
        %v4970 = vadd.f32 %v4220, %v4932
        %v4971 = vadd.f32 %v4225, %v4937
        %v4972 = vadd.f32 %v4230, %v4942
        %v4973 = vadd.f32 %v4235, %v4947
        %v4974 = vadd.f32 %v4240, %v4952
        %v4975 = vadd.f32 %v4245, %v4957
        %v4976 = vxor.u32 %v4960, 2147483648
        %v4977 = vxor.u32 %v4961, 2147483648
        %v4978 = vxor.u32 %v4962, 2147483648
        %v4979 = vxor.u32 %v4963, 2147483648
        %v4980 = vxor.u32 %v4964, 2147483648
        %v4981 = vxor.u32 %v4965, 2147483648
        %v4982 = vxor.u32 %v4966, 2147483648
        %v4983 = vxor.u32 %v4967, 2147483648
        %v4984 = vxor.u32 %v4968, 2147483648
        %v4985 = vxor.u32 %v4969, 2147483648
        %v4986 = vxor.u32 %v4970, 2147483648
        %v4987 = vxor.u32 %v4971, 2147483648
        %v4988 = vxor.u32 %v4972, 2147483648
        %v4989 = vxor.u32 %v4973, 2147483648
        %v4990 = vxor.u32 %v4974, 2147483648
        %v4991 = vxor.u32 %v4975, 2147483648
        %v4992 = vmul.f32 %v4976, 1.442695
        %v4993 = vpow.pop %v4992
        %v4994 = vmul.f32 %v4977, 1.442695
        %v4995 = vpow.pop %v4994
        %v4996 = vmul.f32 %v4978, 1.442695
        %v4997 = vpow.pop %v4996
        %v4998 = vmul.f32 %v4979, 1.442695
        %v4999 = vpow.pop %v4998
        %v5000 = vmul.f32 %v4980, 1.442695
        %v5001 = vpow.pop %v5000
        %v5002 = vmul.f32 %v4981, 1.442695
        %v5003 = vpow.pop %v5002
        %v5004 = vmul.f32 %v4982, 1.442695
        %v5005 = vpow.pop %v5004
        %v5006 = vmul.f32 %v4983, 1.442695
        %v5007 = vpow.pop %v5006
        %v5008 = vmul.f32 %v4984, 1.442695
        %v5009 = vpow.pop %v5008
        %v5010 = vmul.f32 %v4985, 1.442695
        %v5011 = vpow.pop %v5010
        %v5012 = vmul.f32 %v4986, 1.442695
        %v5013 = vpow.pop %v5012
        %v5014 = vmul.f32 %v4987, 1.442695
        %v5015 = vpow.pop %v5014
        %v5016 = vmul.f32 %v4988, 1.442695
        %v5017 = vpow.pop %v5016
        %v5018 = vmul.f32 %v4989, 1.442695
        %v5019 = vpow.pop %v5018
        %v5020 = vmul.f32 %v4990, 1.442695
        %v5021 = vpow.pop %v5020
        %v5022 = vmul.f32 %v4991, 1.442695
        %v5023 = vpow.pop %v5022
        %v5024 = vadd.f32 %v4993, 1.0
        %v5025 = vadd.f32 %v4995, 1.0
        %v5026 = vadd.f32 %v4997, 1.0
        %v5027 = vadd.f32 %v4999, 1.0
        %v5028 = vadd.f32 %v5001, 1.0
        %v5029 = vadd.f32 %v5003, 1.0
        %v5030 = vadd.f32 %v5005, 1.0
        %v5031 = vadd.f32 %v5007, 1.0
        %v5032 = vadd.f32 %v5009, 1.0
        %v5033 = vadd.f32 %v5011, 1.0
        %v5034 = vadd.f32 %v5013, 1.0
        %v5035 = vadd.f32 %v5015, 1.0
        %v5036 = vadd.f32 %v5017, 1.0
        %v5037 = vadd.f32 %v5019, 1.0
        %v5038 = vadd.f32 %v5021, 1.0
        %v5039 = vadd.f32 %v5023, 1.0
        %v5040 = vrcp.pop %v5024
        %v5041 = vmul.f32 1.0, %v5040
        %v5042 = vrcp.pop %v5025
        %v5043 = vmul.f32 1.0, %v5042
        %v5044 = vrcp.pop %v5026
        %v5045 = vmul.f32 1.0, %v5044
        %v5046 = vrcp.pop %v5027
        %v5047 = vmul.f32 1.0, %v5046
        %v5048 = vrcp.pop %v5028
        %v5049 = vmul.f32 1.0, %v5048
        %v5050 = vrcp.pop %v5029
        %v5051 = vmul.f32 1.0, %v5050
        %v5052 = vrcp.pop %v5030
        %v5053 = vmul.f32 1.0, %v5052
        %v5054 = vrcp.pop %v5031
        %v5055 = vmul.f32 1.0, %v5054
        %v5056 = vrcp.pop %v5032
        %v5057 = vmul.f32 1.0, %v5056
        %v5058 = vrcp.pop %v5033
        %v5059 = vmul.f32 1.0, %v5058
        %v5060 = vrcp.pop %v5034
        %v5061 = vmul.f32 1.0, %v5060
        %v5062 = vrcp.pop %v5035
        %v5063 = vmul.f32 1.0, %v5062
        %v5064 = vrcp.pop %v5036
        %v5065 = vmul.f32 1.0, %v5064
        %v5066 = vrcp.pop %v5037
        %v5067 = vmul.f32 1.0, %v5066
        %v5068 = vrcp.pop %v5038
        %v5069 = vmul.f32 1.0, %v5068
        %v5070 = vrcp.pop %v5039
        %v5071 = vmul.f32 1.0, %v5070
        %v5072 = vtanh.pop %v4960
        %v5073 = vtanh.pop %v4961
        %v5074 = vtanh.pop %v4962
        %v5075 = vtanh.pop %v4963
        %v5076 = vtanh.pop %v4964
        %v5077 = vtanh.pop %v4965
        %v5078 = vtanh.pop %v4966
        %v5079 = vtanh.pop %v4967
        %v5080 = vtanh.pop %v4968
        %v5081 = vtanh.pop %v4969
        %v5082 = vtanh.pop %v4970
        %v5083 = vtanh.pop %v4971
        %v5084 = vtanh.pop %v4972
        %v5085 = vtanh.pop %v4973
        %v5086 = vtanh.pop %v4974
        %v5087 = vtanh.pop %v4975
        %v5088 = vmul.f32 %v5041, 0.0
        %v5089 = vmul.f32 %v5043, 0.0
        %v5090 = vmul.f32 %v5045, 0.0
        %v5091 = vmul.f32 %v5047, 0.0
        %v5092 = vmul.f32 %v5049, 0.0
        %v5093 = vmul.f32 %v5051, 0.0
        %v5094 = vmul.f32 %v5053, 0.0
        %v5095 = vmul.f32 %v5055, 0.0
        %v5096 = vmul.f32 %v5057, 0.0
        %v5097 = vmul.f32 %v5059, 0.0
        %v5098 = vmul.f32 %v5061, 0.0
        %v5099 = vmul.f32 %v5063, 0.0
        %v5100 = vmul.f32 %v5065, 0.0
        %v5101 = vmul.f32 %v5067, 0.0
        %v5102 = vmul.f32 %v5069, 0.0
        %v5103 = vmul.f32 %v5071, 0.0
        %5120 = vrot.lane.b32.xlu0 %v5072, 64
        %v5121 = vpop.permute.xlu0 %5120
        %5122 = vrot.lane.b32.xlu0 %v5073, 64
        %v5123 = vpop.permute.xlu0 %5122
        %5124 = vrot.lane.b32.xlu0 %v5074, 64
        %v5125 = vpop.permute.xlu0 %5124
        %5126 = vrot.lane.b32.xlu0 %v5075, 64
        %v5127 = vpop.permute.xlu0 %5126
        %5128 = vrot.lane.b32.xlu0 %v5076, 64
        %v5129 = vpop.permute.xlu0 %5128
        %5130 = vrot.lane.b32.xlu0 %v5077, 64
        %v5131 = vpop.permute.xlu0 %5130
        %5132 = vrot.lane.b32.xlu0 %v5078, 64
        %v5133 = vpop.permute.xlu0 %5132
        %5134 = vrot.lane.b32.xlu0 %v5079, 64
        %v5135 = vpop.permute.xlu0 %5134
        %5136 = vrot.lane.b32.xlu0 %v5080, 64
        %v5137 = vpop.permute.xlu0 %5136
        %5138 = vrot.lane.b32.xlu0 %v5081, 64
        %v5139 = vpop.permute.xlu0 %5138
        %5140 = vrot.lane.b32.xlu0 %v5082, 64
        %v5141 = vpop.permute.xlu0 %5140
        %5142 = vrot.lane.b32.xlu0 %v5083, 64
        %v5143 = vpop.permute.xlu0 %5142
        %5144 = vrot.lane.b32.xlu0 %v5084, 64
        %v5145 = vpop.permute.xlu0 %5144
        %5146 = vrot.lane.b32.xlu0 %v5085, 64
        %v5147 = vpop.permute.xlu0 %5146
        %5148 = vrot.lane.b32.xlu0 %v5086, 64
        %v5149 = vpop.permute.xlu0 %5148
        %5150 = vrot.lane.b32.xlu0 %v5087, 64
        %v5151 = vpop.permute.xlu0 %5150
        %v5168 = vmul.f32 %v5041, %v5121
        %v5169 = vmul.f32 %v5043, %v5123
        %v5170 = vmul.f32 %v5045, %v5125
        %v5171 = vmul.f32 %v5047, %v5127
        %v5172 = vmul.f32 %v5049, %v5129
        %v5173 = vmul.f32 %v5051, %v5131
        %v5174 = vmul.f32 %v5053, %v5133
        %v5175 = vmul.f32 %v5055, %v5135
        %v5176 = vmul.f32 %v5057, %v5137
        %v5177 = vmul.f32 %v5059, %v5139
        %v5178 = vmul.f32 %v5061, %v5141
        %v5179 = vmul.f32 %v5063, %v5143
        %v5180 = vmul.f32 %v5065, %v5145
        %v5181 = vmul.f32 %v5067, %v5147
        %v5182 = vmul.f32 %v5069, %v5149
        %v5183 = vmul.f32 %v5071, %v5151
        %5200 = vrot.lane.b32.xlu0 %v5168, 32
        %v5201 = vpop.permute.xlu0 %5200
        %5202 = vrot.lane.b32.xlu0 %v5169, 32
        %v5203 = vpop.permute.xlu0 %5202
        %5204 = vrot.lane.b32.xlu0 %v5170, 32
        %v5205 = vpop.permute.xlu0 %5204
        %5206 = vrot.lane.b32.xlu0 %v5171, 32
        %v5207 = vpop.permute.xlu0 %5206
        %5208 = vrot.lane.b32.xlu0 %v5172, 32
        %v5209 = vpop.permute.xlu0 %5208
        %5210 = vrot.lane.b32.xlu0 %v5173, 32
        %v5211 = vpop.permute.xlu0 %5210
        %5212 = vrot.lane.b32.xlu0 %v5174, 32
        %v5213 = vpop.permute.xlu0 %5212
        %5214 = vrot.lane.b32.xlu0 %v5175, 32
        %v5215 = vpop.permute.xlu0 %5214
        %5216 = vrot.lane.b32.xlu0 %v5176, 32
        %v5217 = vpop.permute.xlu0 %5216
        %5218 = vrot.lane.b32.xlu0 %v5177, 32
        %v5219 = vpop.permute.xlu0 %5218
        %5220 = vrot.lane.b32.xlu0 %v5178, 32
        %v5221 = vpop.permute.xlu0 %5220
        %5222 = vrot.lane.b32.xlu0 %v5179, 32
        %v5223 = vpop.permute.xlu0 %5222
        %5224 = vrot.lane.b32.xlu0 %v5180, 32
        %v5225 = vpop.permute.xlu0 %5224
        %5226 = vrot.lane.b32.xlu0 %v5181, 32
        %v5227 = vpop.permute.xlu0 %5226
        %5228 = vrot.lane.b32.xlu0 %v5182, 32
        %v5229 = vpop.permute.xlu0 %5228
        %5230 = vrot.lane.b32.xlu0 %v5183, 32
        %v5231 = vpop.permute.xlu0 %5230
        %v5248 = vadd.f32 %v5088, %v5201
        %v5249 = vadd.f32 %v5089, %v5203
        %v5250 = vadd.f32 %v5090, %v5205
        %v5251 = vadd.f32 %v5091, %v5207
        %v5252 = vadd.f32 %v5092, %v5209
        %v5253 = vadd.f32 %v5093, %v5211
        %v5254 = vadd.f32 %v5094, %v5213
        %v5255 = vadd.f32 %v5095, %v5215
        %v5256 = vadd.f32 %v5096, %v5217
        %v5257 = vadd.f32 %v5097, %v5219
        %v5258 = vadd.f32 %v5098, %v5221
        %v5259 = vadd.f32 %v5099, %v5223
        %v5260 = vadd.f32 %v5100, %v5225
        %v5261 = vadd.f32 %v5101, %v5227
        %v5262 = vadd.f32 %v5102, %v5229
        %v5263 = vadd.f32 %v5103, %v5231
        %v5264 = vtanh.pop %v5248
        %v5265 = vtanh.pop %v5249
        %v5266 = vtanh.pop %v5250
        %v5267 = vtanh.pop %v5251
        %v5268 = vtanh.pop %v5252
        %v5269 = vtanh.pop %v5253
        %v5270 = vtanh.pop %v5254
        %v5271 = vtanh.pop %v5255
        %v5272 = vtanh.pop %v5256
        %v5273 = vtanh.pop %v5257
        %v5274 = vtanh.pop %v5258
        %v5275 = vtanh.pop %v5259
        %v5276 = vtanh.pop %v5260
        %v5277 = vtanh.pop %v5261
        %v5278 = vtanh.pop %v5262
        %v5279 = vtanh.pop %v5263
        %5296 = vrot.lane.b32.xlu0 %v5264, 64
        %v5297 = vpop.permute.xlu0 %5296
        %5298 = vrot.lane.b32.xlu0 %v5265, 64
        %v5299 = vpop.permute.xlu0 %5298
        %5300 = vrot.lane.b32.xlu0 %v5266, 64
        %v5301 = vpop.permute.xlu0 %5300
        %5302 = vrot.lane.b32.xlu0 %v5267, 64
        %v5303 = vpop.permute.xlu0 %5302
        %5304 = vrot.lane.b32.xlu0 %v5268, 64
        %v5305 = vpop.permute.xlu0 %5304
        %5306 = vrot.lane.b32.xlu0 %v5269, 64
        %v5307 = vpop.permute.xlu0 %5306
        %5308 = vrot.lane.b32.xlu0 %v5270, 64
        %v5309 = vpop.permute.xlu0 %5308
        %5310 = vrot.lane.b32.xlu0 %v5271, 64
        %v5311 = vpop.permute.xlu0 %5310
        %5312 = vrot.lane.b32.xlu0 %v5272, 64
        %v5313 = vpop.permute.xlu0 %5312
        %5314 = vrot.lane.b32.xlu0 %v5273, 64
        %v5315 = vpop.permute.xlu0 %5314
        %5316 = vrot.lane.b32.xlu0 %v5274, 64
        %v5317 = vpop.permute.xlu0 %5316
        %5318 = vrot.lane.b32.xlu0 %v5275, 64
        %v5319 = vpop.permute.xlu0 %5318
        %5320 = vrot.lane.b32.xlu0 %v5276, 64
        %v5321 = vpop.permute.xlu0 %5320
        %5322 = vrot.lane.b32.xlu0 %v5277, 64
        %v5323 = vpop.permute.xlu0 %5322
        %5324 = vrot.lane.b32.xlu0 %v5278, 64
        %v5325 = vpop.permute.xlu0 %5324
        %5326 = vrot.lane.b32.xlu0 %v5279, 64
        %v5327 = vpop.permute.xlu0 %5326
        %v5344 = vmul.f32 %v5041, %v5297
        %v5345 = vmul.f32 %v5043, %v5299
        %v5346 = vmul.f32 %v5045, %v5301
        %v5347 = vmul.f32 %v5047, %v5303
        %v5348 = vmul.f32 %v5049, %v5305
        %v5349 = vmul.f32 %v5051, %v5307
        %v5350 = vmul.f32 %v5053, %v5309
        %v5351 = vmul.f32 %v5055, %v5311
        %v5352 = vmul.f32 %v5057, %v5313
        %v5353 = vmul.f32 %v5059, %v5315
        %v5354 = vmul.f32 %v5061, %v5317
        %v5355 = vmul.f32 %v5063, %v5319
        %v5356 = vmul.f32 %v5065, %v5321
        %v5357 = vmul.f32 %v5067, %v5323
        %v5358 = vmul.f32 %v5069, %v5325
        %v5359 = vmul.f32 %v5071, %v5327
        %vm5360 = vcmp.gt.s32.totalorder %v2520, 0
        %vm5361 = vcmp.gt.s32.totalorder %v2533, 0
        %vm5362 = vcmp.gt.s32.totalorder %v2546, 0
        %vm5363 = vcmp.gt.s32.totalorder %v2559, 0
        %vm5364 = vcmp.gt.s32.totalorder %v2572, 0
        %vm5365 = vcmp.gt.s32.totalorder %v2585, 0
        %vm5366 = vcmp.gt.s32.totalorder %v2598, 0
        %vm5367 = vcmp.gt.s32.totalorder %v2611, 0
        %vm5368 = vcmp.gt.s32.totalorder %v2624, 0
        %vm5369 = vcmp.gt.s32.totalorder %v2637, 0
        %vm5370 = vcmp.gt.s32.totalorder %v2650, 0
        %vm5371 = vcmp.gt.s32.totalorder %v2663, 0
        %vm5372 = vcmp.gt.s32.totalorder %v2676, 0
        %vm5373 = vcmp.gt.s32.totalorder %v2689, 0
        %vm5374 = vcmp.gt.s32.totalorder %v2702, 0
        %vm5375 = vcmp.gt.s32.totalorder %v2715, 0
        %v5376 = vsel %vm5360, 1, 0
        %v5377 = vsel %vm5361, 1, 0
        %v5378 = vsel %vm5362, 1, 0
        %v5379 = vsel %vm5363, 1, 0
        %v5380 = vsel %vm5364, 1, 0
        %v5381 = vsel %vm5365, 1, 0
        %v5382 = vsel %vm5366, 1, 0
        %v5383 = vsel %vm5367, 1, 0
        %v5384 = vsel %vm5368, 1, 0
        %v5385 = vsel %vm5369, 1, 0
        %v5386 = vsel %vm5370, 1, 0
        %v5387 = vsel %vm5371, 1, 0
        %v5388 = vsel %vm5372, 1, 0
        %v5389 = vsel %vm5373, 1, 0
        %v5390 = vsel %vm5374, 1, 0
        %v5391 = vsel %vm5375, 1, 0
        %vm5392 = vcmp.eq.s32.totalorder %v5376, 1
        %vm5393 = vcmp.eq.s32.totalorder %v5377, 1
        %vm5394 = vcmp.eq.s32.totalorder %v5378, 1
        %vm5395 = vcmp.eq.s32.totalorder %v5379, 1
        %vm5396 = vcmp.eq.s32.totalorder %v5380, 1
        %vm5397 = vcmp.eq.s32.totalorder %v5381, 1
        %vm5398 = vcmp.eq.s32.totalorder %v5382, 1
        %vm5399 = vcmp.eq.s32.totalorder %v5383, 1
        %vm5400 = vcmp.eq.s32.totalorder %v5384, 1
        %vm5401 = vcmp.eq.s32.totalorder %v5385, 1
        %vm5402 = vcmp.eq.s32.totalorder %v5386, 1
        %vm5403 = vcmp.eq.s32.totalorder %v5387, 1
        %vm5404 = vcmp.eq.s32.totalorder %v5388, 1
        %vm5405 = vcmp.eq.s32.totalorder %v5389, 1
        %vm5406 = vcmp.eq.s32.totalorder %v5390, 1
        %vm5407 = vcmp.eq.s32.totalorder %v5391, 1
        %v5408 = vsel %vm5392, %v5344, 0.0
        %v5409 = vsel %vm5393, %v5345, 0.0
        %v5410 = vsel %vm5394, %v5346, 0.0
        %v5411 = vsel %vm5395, %v5347, 0.0
        %v5412 = vsel %vm5396, %v5348, 0.0
        %v5413 = vsel %vm5397, %v5349, 0.0
        %v5414 = vsel %vm5398, %v5350, 0.0
        %v5415 = vsel %vm5399, %v5351, 0.0
        %v5416 = vsel %vm5400, %v5352, 0.0
        %v5417 = vsel %vm5401, %v5353, 0.0
        %v5418 = vsel %vm5402, %v5354, 0.0
        %v5419 = vsel %vm5403, %v5355, 0.0
        %v5420 = vsel %vm5404, %v5356, 0.0
        %v5421 = vsel %vm5405, %v5357, 0.0
        %v5422 = vsel %vm5406, %v5358, 0.0
        %v5423 = vsel %vm5407, %v5359, 0.0
        %v5424 = vsel %vm5392, %v5248, 0.0
        %v5425 = vsel %vm5393, %v5249, 0.0
        %v5426 = vsel %vm5394, %v5250, 0.0
        %v5427 = vsel %vm5395, %v5251, 0.0
        %v5428 = vsel %vm5396, %v5252, 0.0
        %v5429 = vsel %vm5397, %v5253, 0.0
        %v5430 = vsel %vm5398, %v5254, 0.0
        %v5431 = vsel %vm5399, %v5255, 0.0
        %v5432 = vsel %vm5400, %v5256, 0.0
        %v5433 = vsel %vm5401, %v5257, 0.0
        %v5434 = vsel %vm5402, %v5258, 0.0
        %v5435 = vsel %vm5403, %v5259, 0.0
        %v5436 = vsel %vm5404, %v5260, 0.0
        %v5437 = vsel %vm5405, %v5261, 0.0
        %v5438 = vsel %vm5406, %v5262, 0.0
        %v5439 = vsel %vm5407, %v5263, 0.0
        %5456 = vrot.lane.b32.xlu0 %v5408, 32
        %v5457 = vpop.permute.xlu0 %5456
        %5458 = vrot.lane.b32.xlu0 %v5409, 32
        %v5459 = vpop.permute.xlu0 %5458
        %5460 = vrot.lane.b32.xlu0 %v5410, 32
        %v5461 = vpop.permute.xlu0 %5460
        %5462 = vrot.lane.b32.xlu0 %v5411, 32
        %v5463 = vpop.permute.xlu0 %5462
        %5464 = vrot.lane.b32.xlu0 %v5412, 32
        %v5465 = vpop.permute.xlu0 %5464
        %5466 = vrot.lane.b32.xlu0 %v5413, 32
        %v5467 = vpop.permute.xlu0 %5466
        %5468 = vrot.lane.b32.xlu0 %v5414, 32
        %v5469 = vpop.permute.xlu0 %5468
        %5470 = vrot.lane.b32.xlu0 %v5415, 32
        %v5471 = vpop.permute.xlu0 %5470
        %5472 = vrot.lane.b32.xlu0 %v5416, 32
        %v5473 = vpop.permute.xlu0 %5472
        %5474 = vrot.lane.b32.xlu0 %v5417, 32
        %v5475 = vpop.permute.xlu0 %5474
        %5476 = vrot.lane.b32.xlu0 %v5418, 32
        %v5477 = vpop.permute.xlu0 %5476
        %5478 = vrot.lane.b32.xlu0 %v5419, 32
        %v5479 = vpop.permute.xlu0 %5478
        %5480 = vrot.lane.b32.xlu0 %v5420, 32
        %v5481 = vpop.permute.xlu0 %5480
        %5482 = vrot.lane.b32.xlu0 %v5421, 32
        %v5483 = vpop.permute.xlu0 %5482
        %5484 = vrot.lane.b32.xlu0 %v5422, 32
        %v5485 = vpop.permute.xlu0 %5484
        %5486 = vrot.lane.b32.xlu0 %v5423, 32
        %v5487 = vpop.permute.xlu0 %5486
        %v5488 = vsel %vm2153, %v5457, 0
        %v5490 = vsel %vm2153, %v5459, 0
        %v5492 = vsel %vm2153, %v5461, 0
        %v5494 = vsel %vm2153, %v5463, 0
        %v5496 = vsel %vm2153, %v5465, 0
        %v5498 = vsel %vm2153, %v5467, 0
        %v5500 = vsel %vm2153, %v5469, 0
        %v5502 = vsel %vm2153, %v5471, 0
        %v5504 = vsel %vm2153, %v5473, 0
        %v5506 = vsel %vm2153, %v5475, 0
        %v5508 = vsel %vm2153, %v5477, 0
        %v5510 = vsel %vm2153, %v5479, 0
        %v5512 = vsel %vm2153, %v5481, 0
        %v5514 = vsel %vm2153, %v5483, 0
        %v5516 = vsel %vm2153, %v5485, 0
        %v5518 = vsel %vm2153, %v5487, 0
        %5520 = vmatprep.subr.mxu0 0.0
        %5521 = vmatpush1.msra.mxu0 0.0
        %5522 = vmatprep.subr.mxu0 0.0
        %5523 = vmatpush1.msra.mxu0 0.0
        %5524 = vmatprep.subr.mxu0 0.0
        %5525 = vmatpush1.msra.mxu0 0.0
        %5526 = vmatprep.subr.mxu0 0.0
        %5527 = vmatpush1.msra.mxu0 0.0
        %5528 = vmatprep.subr.mxu0 0.0
        %5529 = vmatpush1.msra.mxu0 0.0
        %5530 = vmatprep.subr.mxu0 0.0
        %5531 = vmatpush1.msra.mxu0 0.0
        %5532 = vmatprep.subr.mxu0 0.0
        %5533 = vmatpush1.msra.mxu0 0.0
        %5534 = vmatprep.subr.mxu0 0.0
        %5535 = vmatpush1.msra.mxu0 0.0
        %5536 = vmatprep.subr.mxu0 0.0
        %5537 = vmatpush1.msra.mxu0 0.0
        %5538 = vmatprep.subr.mxu0 0.0
        %5539 = vmatpush1.msra.mxu0 0.0
        %5540 = vmatprep.subr.mxu0 0.0
        %5541 = vmatpush1.msra.mxu0 0.0
        %5542 = vmatprep.subr.mxu0 0.0
        %5543 = vmatpush1.msra.mxu0 0.0
        %5544 = vmatprep.subr.mxu0 0.0
        %5545 = vmatpush1.msra.mxu0 %v4811
        %5546 = vmatprep.subr.mxu0 0.0
        %5547 = vmatpush1.msra.mxu0 %v4810
        %5548 = vmatprep.subr.mxu0 0.0
        %5549 = vmatpush1.msra.mxu0 %v4809
        %5550 = vmatprep.subr.mxu0 0.0
        %5551 = vmatpush1.msra.mxu0 %v4808
        %5552 = vmatprep.subr.mxu0 0.0
        %5553 = vmatpush2.msra.mxu0 0.0
        %5554 = vmatprep.subr.mxu0 0.0
        %5555 = vmatpush2.msra.mxu0 0.0
        %5556 = vmatprep.subr.mxu0 0.0
        %5557 = vmatpush2.msra.mxu0 0.0
        %5558 = vmatprep.subr.mxu0 0.0
        %5559 = vmatpush2.msra.mxu0 0.0
        %5560 = vmatprep.subr.mxu0 0.0
        %5561 = vmatpush2.msra.mxu0 0.0
        %5562 = vmatprep.subr.mxu0 0.0
        %5563 = vmatpush2.msra.mxu0 0.0
        %5564 = vmatprep.subr.mxu0 0.0
        %5565 = vmatpush2.msra.mxu0 0.0
        %5566 = vmatprep.subr.mxu0 0.0
        %5567 = vmatpush2.msra.mxu0 0.0
        %5568 = vmatprep.subr.mxu0 0.0
        %5569 = vmatpush2.msra.mxu0 0.0
        %5570 = vmatprep.subr.mxu0 0.0
        %5571 = vmatpush2.msra.mxu0 0.0
        %5572 = vmatprep.subr.mxu0 0.0
        %5573 = vmatpush2.msra.mxu0 0.0
        %5574 = vmatprep.subr.mxu0 0.0
        %5575 = vmatpush2.msra.mxu0 0.0
        %5576 = vmatprep.subr.mxu0 0.0
        %5577 = vmatpush2.msra.mxu0 0.0
        %5578 = vmatprep.subr.mxu0 0.0
        %5579 = vmatpush2.msra.mxu0 0.0
        %5580 = vmatprep.subr.mxu0 0.0
        %5581 = vmatpush2.msra.mxu0 0.0
        %5582 = vmatprep.subr.mxu0 0.0
        %5583 = vmatpush2.msra.mxu0 0.0
        %5584 = vmatprep.mubr.f32.mxu0 0.0
        %5585 = vmatmul.mubr.f32.gmra.mxu0 %v5488
        %v5586 = vpop.f32.mrf.mxu0
        %v5587 = vadd.f32 0.0, %v5586
        %v5588 = vpop.f32.mrf.mxu0
        %5589 = vmatprep.mubr.f32.mxu0 0.0
        %5590 = vmatmul.mubr.f32.gmra.mxu0 %v5490
        %v5591 = vpop.f32.mrf.mxu0
        %v5592 = vadd.f32 0.0, %v5591
        %v5593 = vpop.f32.mrf.mxu0
        %5594 = vmatprep.mubr.f32.mxu0 0.0
        %5595 = vmatmul.mubr.f32.gmra.mxu0 %v5492
        %v5596 = vpop.f32.mrf.mxu0
        %v5597 = vadd.f32 0.0, %v5596
        %v5598 = vpop.f32.mrf.mxu0
        %5599 = vmatprep.mubr.f32.mxu0 0.0
        %5600 = vmatmul.mubr.f32.gmra.mxu0 %v5494
        %v5601 = vpop.f32.mrf.mxu0
        %v5602 = vadd.f32 0.0, %v5601
        %v5603 = vpop.f32.mrf.mxu0
        %5604 = vmatprep.mubr.f32.mxu0 0.0
        %5605 = vmatmul.mubr.f32.gmra.mxu0 %v5496
        %v5606 = vpop.f32.mrf.mxu0
        %v5607 = vadd.f32 0.0, %v5606
        %v5608 = vpop.f32.mrf.mxu0
        %5609 = vmatprep.mubr.f32.mxu0 0.0
        %5610 = vmatmul.mubr.f32.gmra.mxu0 %v5498
        %v5611 = vpop.f32.mrf.mxu0
        %v5612 = vadd.f32 0.0, %v5611
        %v5613 = vpop.f32.mrf.mxu0
        %5614 = vmatprep.mubr.f32.mxu0 0.0
        %5615 = vmatmul.mubr.f32.gmra.mxu0 %v5500
        %v5616 = vpop.f32.mrf.mxu0
        %v5617 = vadd.f32 0.0, %v5616
        %v5618 = vpop.f32.mrf.mxu0
        %5619 = vmatprep.mubr.f32.mxu0 0.0
        %5620 = vmatmul.mubr.f32.gmra.mxu0 %v5502
        %v5621 = vpop.f32.mrf.mxu0
        %v5622 = vadd.f32 0.0, %v5621
        %v5623 = vpop.f32.mrf.mxu0
        %5624 = vmatprep.mubr.f32.mxu0 0.0
        %5625 = vmatmul.mubr.f32.gmra.mxu0 %v5504
        %v5626 = vpop.f32.mrf.mxu0
        %v5627 = vadd.f32 0.0, %v5626
        %v5628 = vpop.f32.mrf.mxu0
        %5629 = vmatprep.mubr.f32.mxu0 0.0
        %5630 = vmatmul.mubr.f32.gmra.mxu0 %v5506
        %v5631 = vpop.f32.mrf.mxu0
        %v5632 = vadd.f32 0.0, %v5631
        %v5633 = vpop.f32.mrf.mxu0
        %5634 = vmatprep.mubr.f32.mxu0 0.0
        %5635 = vmatmul.mubr.f32.gmra.mxu0 %v5508
        %v5636 = vpop.f32.mrf.mxu0
        %v5637 = vadd.f32 0.0, %v5636
        %v5638 = vpop.f32.mrf.mxu0
        %5639 = vmatprep.mubr.f32.mxu0 0.0
        %5640 = vmatmul.mubr.f32.gmra.mxu0 %v5510
        %v5641 = vpop.f32.mrf.mxu0
        %v5642 = vadd.f32 0.0, %v5641
        %v5643 = vpop.f32.mrf.mxu0
        %5644 = vmatprep.mubr.f32.mxu0 0.0
        %5645 = vmatmul.mubr.f32.gmra.mxu0 %v5512
        %v5646 = vpop.f32.mrf.mxu0
        %v5647 = vadd.f32 0.0, %v5646
        %v5648 = vpop.f32.mrf.mxu0
        %5649 = vmatprep.mubr.f32.mxu0 0.0
        %5650 = vmatmul.mubr.f32.gmra.mxu0 %v5514
        %v5651 = vpop.f32.mrf.mxu0
        %v5652 = vadd.f32 0.0, %v5651
        %v5653 = vpop.f32.mrf.mxu0
        %5654 = vmatprep.mubr.f32.mxu0 0.0
        %5655 = vmatmul.mubr.f32.gmra.mxu0 %v5516
        %v5656 = vpop.f32.mrf.mxu0
        %v5657 = vadd.f32 0.0, %v5656
        %v5658 = vpop.f32.mrf.mxu0
        %5659 = vmatprep.mubr.f32.mxu0 0.0
        %5660 = vmatmul.mubr.f32.gmra.mxu0 %v5518
        %v5661 = vpop.f32.mrf.mxu0
        %v5662 = vadd.f32 0.0, %v5661
        %v5663 = vpop.f32.mrf.mxu0
        %5664 = vdwg.mxu0
        %v5665 = vadd.f32 %v4250, %v5587
        %v5666 = vadd.f32 %v4255, %v5592
        %v5667 = vadd.f32 %v4260, %v5597
        %v5668 = vadd.f32 %v4265, %v5602
        %v5669 = vadd.f32 %v4270, %v5607
        %v5670 = vadd.f32 %v4275, %v5612
        %v5671 = vadd.f32 %v4280, %v5617
        %v5672 = vadd.f32 %v4285, %v5622
        %v5673 = vadd.f32 %v4290, %v5627
        %v5674 = vadd.f32 %v4295, %v5632
        %v5675 = vadd.f32 %v4300, %v5637
        %v5676 = vadd.f32 %v4305, %v5642
        %v5677 = vadd.f32 %v4310, %v5647
        %v5678 = vadd.f32 %v4315, %v5652
        %v5679 = vadd.f32 %v4320, %v5657
        %v5680 = vadd.f32 %v4325, %v5662
        %v5681 = vxor.u32 %v5665, 2147483648
        %v5682 = vxor.u32 %v5666, 2147483648
        %v5683 = vxor.u32 %v5667, 2147483648
        %v5684 = vxor.u32 %v5668, 2147483648
        %v5685 = vxor.u32 %v5669, 2147483648
        %v5686 = vxor.u32 %v5670, 2147483648
        %v5687 = vxor.u32 %v5671, 2147483648
        %v5688 = vxor.u32 %v5672, 2147483648
        %v5689 = vxor.u32 %v5673, 2147483648
        %v5690 = vxor.u32 %v5674, 2147483648
        %v5691 = vxor.u32 %v5675, 2147483648
        %v5692 = vxor.u32 %v5676, 2147483648
        %v5693 = vxor.u32 %v5677, 2147483648
        %v5694 = vxor.u32 %v5678, 2147483648
        %v5695 = vxor.u32 %v5679, 2147483648
        %v5696 = vxor.u32 %v5680, 2147483648
        %v5697 = vmul.f32 %v5681, 1.442695
        %v5698 = vpow.pop %v5697
        %v5699 = vmul.f32 %v5682, 1.442695
        %v5700 = vpow.pop %v5699
        %v5701 = vmul.f32 %v5683, 1.442695
        %v5702 = vpow.pop %v5701
        %v5703 = vmul.f32 %v5684, 1.442695
        %v5704 = vpow.pop %v5703
        %v5705 = vmul.f32 %v5685, 1.442695
        %v5706 = vpow.pop %v5705
        %v5707 = vmul.f32 %v5686, 1.442695
        %v5708 = vpow.pop %v5707
        %v5709 = vmul.f32 %v5687, 1.442695
        %v5710 = vpow.pop %v5709
        %v5711 = vmul.f32 %v5688, 1.442695
        %v5712 = vpow.pop %v5711
        %v5713 = vmul.f32 %v5689, 1.442695
        %v5714 = vpow.pop %v5713
        %v5715 = vmul.f32 %v5690, 1.442695
        %v5716 = vpow.pop %v5715
        %v5717 = vmul.f32 %v5691, 1.442695
        %v5718 = vpow.pop %v5717
        %v5719 = vmul.f32 %v5692, 1.442695
        %v5720 = vpow.pop %v5719
        %v5721 = vmul.f32 %v5693, 1.442695
        %v5722 = vpow.pop %v5721
        %v5723 = vmul.f32 %v5694, 1.442695
        %v5724 = vpow.pop %v5723
        %v5725 = vmul.f32 %v5695, 1.442695
        %v5726 = vpow.pop %v5725
        %v5727 = vmul.f32 %v5696, 1.442695
        %v5728 = vpow.pop %v5727
        %v5729 = vadd.f32 %v5698, 1.0
        %v5730 = vadd.f32 %v5700, 1.0
        %v5731 = vadd.f32 %v5702, 1.0
        %v5732 = vadd.f32 %v5704, 1.0
        %v5733 = vadd.f32 %v5706, 1.0
        %v5734 = vadd.f32 %v5708, 1.0
        %v5735 = vadd.f32 %v5710, 1.0
        %v5736 = vadd.f32 %v5712, 1.0
        %v5737 = vadd.f32 %v5714, 1.0
        %v5738 = vadd.f32 %v5716, 1.0
        %v5739 = vadd.f32 %v5718, 1.0
        %v5740 = vadd.f32 %v5720, 1.0
        %v5741 = vadd.f32 %v5722, 1.0
        %v5742 = vadd.f32 %v5724, 1.0
        %v5743 = vadd.f32 %v5726, 1.0
        %v5744 = vadd.f32 %v5728, 1.0
        %v5745 = vrcp.pop %v5729
        %v5746 = vmul.f32 1.0, %v5745
        %v5747 = vrcp.pop %v5730
        %v5748 = vmul.f32 1.0, %v5747
        %v5749 = vrcp.pop %v5731
        %v5750 = vmul.f32 1.0, %v5749
        %v5751 = vrcp.pop %v5732
        %v5752 = vmul.f32 1.0, %v5751
        %v5753 = vrcp.pop %v5733
        %v5754 = vmul.f32 1.0, %v5753
        %v5755 = vrcp.pop %v5734
        %v5756 = vmul.f32 1.0, %v5755
        %v5757 = vrcp.pop %v5735
        %v5758 = vmul.f32 1.0, %v5757
        %v5759 = vrcp.pop %v5736
        %v5760 = vmul.f32 1.0, %v5759
        %v5761 = vrcp.pop %v5737
        %v5762 = vmul.f32 1.0, %v5761
        %v5763 = vrcp.pop %v5738
        %v5764 = vmul.f32 1.0, %v5763
        %v5765 = vrcp.pop %v5739
        %v5766 = vmul.f32 1.0, %v5765
        %v5767 = vrcp.pop %v5740
        %v5768 = vmul.f32 1.0, %v5767
        %v5769 = vrcp.pop %v5741
        %v5770 = vmul.f32 1.0, %v5769
        %v5771 = vrcp.pop %v5742
        %v5772 = vmul.f32 1.0, %v5771
        %v5773 = vrcp.pop %v5743
        %v5774 = vmul.f32 1.0, %v5773
        %v5775 = vrcp.pop %v5744
        %v5776 = vmul.f32 1.0, %v5775
        %v5777 = vtanh.pop %v5665
        %v5778 = vtanh.pop %v5666
        %v5779 = vtanh.pop %v5667
        %v5780 = vtanh.pop %v5668
        %v5781 = vtanh.pop %v5669
        %v5782 = vtanh.pop %v5670
        %v5783 = vtanh.pop %v5671
        %v5784 = vtanh.pop %v5672
        %v5785 = vtanh.pop %v5673
        %v5786 = vtanh.pop %v5674
        %v5787 = vtanh.pop %v5675
        %v5788 = vtanh.pop %v5676
        %v5789 = vtanh.pop %v5677
        %v5790 = vtanh.pop %v5678
        %v5791 = vtanh.pop %v5679
        %v5792 = vtanh.pop %v5680
        %v5793 = vmul.f32 %v5746, %v5424
        %v5794 = vmul.f32 %v5748, %v5425
        %v5795 = vmul.f32 %v5750, %v5426
        %v5796 = vmul.f32 %v5752, %v5427
        %v5797 = vmul.f32 %v5754, %v5428
        %v5798 = vmul.f32 %v5756, %v5429
        %v5799 = vmul.f32 %v5758, %v5430
        %v5800 = vmul.f32 %v5760, %v5431
        %v5801 = vmul.f32 %v5762, %v5432
        %v5802 = vmul.f32 %v5764, %v5433
        %v5803 = vmul.f32 %v5766, %v5434
        %v5804 = vmul.f32 %v5768, %v5435
        %v5805 = vmul.f32 %v5770, %v5436
        %v5806 = vmul.f32 %v5772, %v5437
        %v5807 = vmul.f32 %v5774, %v5438
        %v5808 = vmul.f32 %v5776, %v5439
        %5825 = vrot.lane.b32.xlu0 %v5777, 64
        %v5826 = vpop.permute.xlu0 %5825
        %5827 = vrot.lane.b32.xlu0 %v5778, 64
        %v5828 = vpop.permute.xlu0 %5827
        %5829 = vrot.lane.b32.xlu0 %v5779, 64
        %v5830 = vpop.permute.xlu0 %5829
        %5831 = vrot.lane.b32.xlu0 %v5780, 64
        %v5832 = vpop.permute.xlu0 %5831
        %5833 = vrot.lane.b32.xlu0 %v5781, 64
        %v5834 = vpop.permute.xlu0 %5833
        %5835 = vrot.lane.b32.xlu0 %v5782, 64
        %v5836 = vpop.permute.xlu0 %5835
        %5837 = vrot.lane.b32.xlu0 %v5783, 64
        %v5838 = vpop.permute.xlu0 %5837
        %5839 = vrot.lane.b32.xlu0 %v5784, 64
        %v5840 = vpop.permute.xlu0 %5839
        %5841 = vrot.lane.b32.xlu0 %v5785, 64
        %v5842 = vpop.permute.xlu0 %5841
        %5843 = vrot.lane.b32.xlu0 %v5786, 64
        %v5844 = vpop.permute.xlu0 %5843
        %5845 = vrot.lane.b32.xlu0 %v5787, 64
        %v5846 = vpop.permute.xlu0 %5845
        %5847 = vrot.lane.b32.xlu0 %v5788, 64
        %v5848 = vpop.permute.xlu0 %5847
        %5849 = vrot.lane.b32.xlu0 %v5789, 64
        %v5850 = vpop.permute.xlu0 %5849
        %5851 = vrot.lane.b32.xlu0 %v5790, 64
        %v5852 = vpop.permute.xlu0 %5851
        %5853 = vrot.lane.b32.xlu0 %v5791, 64
        %v5854 = vpop.permute.xlu0 %5853
        %5855 = vrot.lane.b32.xlu0 %v5792, 64
        %v5856 = vpop.permute.xlu0 %5855
        %v5873 = vmul.f32 %v5746, %v5826
        %v5874 = vmul.f32 %v5748, %v5828
        %v5875 = vmul.f32 %v5750, %v5830
        %v5876 = vmul.f32 %v5752, %v5832
        %v5877 = vmul.f32 %v5754, %v5834
        %v5878 = vmul.f32 %v5756, %v5836
        %v5879 = vmul.f32 %v5758, %v5838
        %v5880 = vmul.f32 %v5760, %v5840
        %v5881 = vmul.f32 %v5762, %v5842
        %v5882 = vmul.f32 %v5764, %v5844
        %v5883 = vmul.f32 %v5766, %v5846
        %v5884 = vmul.f32 %v5768, %v5848
        %v5885 = vmul.f32 %v5770, %v5850
        %v5886 = vmul.f32 %v5772, %v5852
        %v5887 = vmul.f32 %v5774, %v5854
        %v5888 = vmul.f32 %v5776, %v5856
        %5905 = vrot.lane.b32.xlu0 %v5873, 32
        %v5906 = vpop.permute.xlu0 %5905
        %5907 = vrot.lane.b32.xlu0 %v5874, 32
        %v5908 = vpop.permute.xlu0 %5907
        %5909 = vrot.lane.b32.xlu0 %v5875, 32
        %v5910 = vpop.permute.xlu0 %5909
        %5911 = vrot.lane.b32.xlu0 %v5876, 32
        %v5912 = vpop.permute.xlu0 %5911
        %5913 = vrot.lane.b32.xlu0 %v5877, 32
        %v5914 = vpop.permute.xlu0 %5913
        %5915 = vrot.lane.b32.xlu0 %v5878, 32
        %v5916 = vpop.permute.xlu0 %5915
        %5917 = vrot.lane.b32.xlu0 %v5879, 32
        %v5918 = vpop.permute.xlu0 %5917
        %5919 = vrot.lane.b32.xlu0 %v5880, 32
        %v5920 = vpop.permute.xlu0 %5919
        %5921 = vrot.lane.b32.xlu0 %v5881, 32
        %v5922 = vpop.permute.xlu0 %5921
        %5923 = vrot.lane.b32.xlu0 %v5882, 32
        %v5924 = vpop.permute.xlu0 %5923
        %5925 = vrot.lane.b32.xlu0 %v5883, 32
        %v5926 = vpop.permute.xlu0 %5925
        %5927 = vrot.lane.b32.xlu0 %v5884, 32
        %v5928 = vpop.permute.xlu0 %5927
        %5929 = vrot.lane.b32.xlu0 %v5885, 32
        %v5930 = vpop.permute.xlu0 %5929
        %5931 = vrot.lane.b32.xlu0 %v5886, 32
        %v5932 = vpop.permute.xlu0 %5931
        %5933 = vrot.lane.b32.xlu0 %v5887, 32
        %v5934 = vpop.permute.xlu0 %5933
        %5935 = vrot.lane.b32.xlu0 %v5888, 32
        %v5936 = vpop.permute.xlu0 %5935
        %v5953 = vadd.f32 %v5793, %v5906
        %v5954 = vadd.f32 %v5794, %v5908
        %v5955 = vadd.f32 %v5795, %v5910
        %v5956 = vadd.f32 %v5796, %v5912
        %v5957 = vadd.f32 %v5797, %v5914
        %v5958 = vadd.f32 %v5798, %v5916
        %v5959 = vadd.f32 %v5799, %v5918
        %v5960 = vadd.f32 %v5800, %v5920
        %v5961 = vadd.f32 %v5801, %v5922
        %v5962 = vadd.f32 %v5802, %v5924
        %v5963 = vadd.f32 %v5803, %v5926
        %v5964 = vadd.f32 %v5804, %v5928
        %v5965 = vadd.f32 %v5805, %v5930
        %v5966 = vadd.f32 %v5806, %v5932
        %v5967 = vadd.f32 %v5807, %v5934
        %v5968 = vadd.f32 %v5808, %v5936
        %v5969 = vtanh.pop %v5953
        %v5970 = vtanh.pop %v5954
        %v5971 = vtanh.pop %v5955
        %v5972 = vtanh.pop %v5956
        %v5973 = vtanh.pop %v5957
        %v5974 = vtanh.pop %v5958
        %v5975 = vtanh.pop %v5959
        %v5976 = vtanh.pop %v5960
        %v5977 = vtanh.pop %v5961
        %v5978 = vtanh.pop %v5962
        %v5979 = vtanh.pop %v5963
        %v5980 = vtanh.pop %v5964
        %v5981 = vtanh.pop %v5965
        %v5982 = vtanh.pop %v5966
        %v5983 = vtanh.pop %v5967
        %v5984 = vtanh.pop %v5968
        %6001 = vrot.lane.b32.xlu0 %v5969, 64
        %v6002 = vpop.permute.xlu0 %6001
        %6003 = vrot.lane.b32.xlu0 %v5970, 64
        %v6004 = vpop.permute.xlu0 %6003
        %6005 = vrot.lane.b32.xlu0 %v5971, 64
        %v6006 = vpop.permute.xlu0 %6005
        %6007 = vrot.lane.b32.xlu0 %v5972, 64
        %v6008 = vpop.permute.xlu0 %6007
        %6009 = vrot.lane.b32.xlu0 %v5973, 64
        %v6010 = vpop.permute.xlu0 %6009
        %6011 = vrot.lane.b32.xlu0 %v5974, 64
        %v6012 = vpop.permute.xlu0 %6011
        %6013 = vrot.lane.b32.xlu0 %v5975, 64
        %v6014 = vpop.permute.xlu0 %6013
        %6015 = vrot.lane.b32.xlu0 %v5976, 64
        %v6016 = vpop.permute.xlu0 %6015
        %6017 = vrot.lane.b32.xlu0 %v5977, 64
        %v6018 = vpop.permute.xlu0 %6017
        %6019 = vrot.lane.b32.xlu0 %v5978, 64
        %v6020 = vpop.permute.xlu0 %6019
        %6021 = vrot.lane.b32.xlu0 %v5979, 64
        %v6022 = vpop.permute.xlu0 %6021
        %6023 = vrot.lane.b32.xlu0 %v5980, 64
        %v6024 = vpop.permute.xlu0 %6023
        %6025 = vrot.lane.b32.xlu0 %v5981, 64
        %v6026 = vpop.permute.xlu0 %6025
        %6027 = vrot.lane.b32.xlu0 %v5982, 64
        %v6028 = vpop.permute.xlu0 %6027
        %6029 = vrot.lane.b32.xlu0 %v5983, 64
        %v6030 = vpop.permute.xlu0 %6029
        %6031 = vrot.lane.b32.xlu0 %v5984, 64
        %v6032 = vpop.permute.xlu0 %6031
        %v6049 = vmul.f32 %v5746, %v6002
        %v6050 = vmul.f32 %v5748, %v6004
        %v6051 = vmul.f32 %v5750, %v6006
        %v6052 = vmul.f32 %v5752, %v6008
        %v6053 = vmul.f32 %v5754, %v6010
        %v6054 = vmul.f32 %v5756, %v6012
        %v6055 = vmul.f32 %v5758, %v6014
        %v6056 = vmul.f32 %v5760, %v6016
        %v6057 = vmul.f32 %v5762, %v6018
        %v6058 = vmul.f32 %v5764, %v6020
        %v6059 = vmul.f32 %v5766, %v6022
        %v6060 = vmul.f32 %v5768, %v6024
        %v6061 = vmul.f32 %v5770, %v6026
        %v6062 = vmul.f32 %v5772, %v6028
        %v6063 = vmul.f32 %v5774, %v6030
        %v6064 = vmul.f32 %v5776, %v6032
        %vm6065 = vcmp.gt.s32.totalorder %v2520, 1
        %vm6066 = vcmp.gt.s32.totalorder %v2533, 1
        %vm6067 = vcmp.gt.s32.totalorder %v2546, 1
        %vm6068 = vcmp.gt.s32.totalorder %v2559, 1
        %vm6069 = vcmp.gt.s32.totalorder %v2572, 1
        %vm6070 = vcmp.gt.s32.totalorder %v2585, 1
        %vm6071 = vcmp.gt.s32.totalorder %v2598, 1
        %vm6072 = vcmp.gt.s32.totalorder %v2611, 1
        %vm6073 = vcmp.gt.s32.totalorder %v2624, 1
        %vm6074 = vcmp.gt.s32.totalorder %v2637, 1
        %vm6075 = vcmp.gt.s32.totalorder %v2650, 1
        %vm6076 = vcmp.gt.s32.totalorder %v2663, 1
        %vm6077 = vcmp.gt.s32.totalorder %v2676, 1
        %vm6078 = vcmp.gt.s32.totalorder %v2689, 1
        %vm6079 = vcmp.gt.s32.totalorder %v2702, 1
        %vm6080 = vcmp.gt.s32.totalorder %v2715, 1
        %v6081 = vsel %vm6065, 1, 0
        %v6082 = vsel %vm6066, 1, 0
        %v6083 = vsel %vm6067, 1, 0
        %v6084 = vsel %vm6068, 1, 0
        %v6085 = vsel %vm6069, 1, 0
        %v6086 = vsel %vm6070, 1, 0
        %v6087 = vsel %vm6071, 1, 0
        %v6088 = vsel %vm6072, 1, 0
        %v6089 = vsel %vm6073, 1, 0
        %v6090 = vsel %vm6074, 1, 0
        %v6091 = vsel %vm6075, 1, 0
        %v6092 = vsel %vm6076, 1, 0
        %v6093 = vsel %vm6077, 1, 0
        %v6094 = vsel %vm6078, 1, 0
        %v6095 = vsel %vm6079, 1, 0
        %v6096 = vsel %vm6080, 1, 0
        %vm6097 = vcmp.eq.s32.totalorder %v6081, 1
        %vm6098 = vcmp.eq.s32.totalorder %v6082, 1
        %vm6099 = vcmp.eq.s32.totalorder %v6083, 1
        %vm6100 = vcmp.eq.s32.totalorder %v6084, 1
        %vm6101 = vcmp.eq.s32.totalorder %v6085, 1
        %vm6102 = vcmp.eq.s32.totalorder %v6086, 1
        %vm6103 = vcmp.eq.s32.totalorder %v6087, 1
        %vm6104 = vcmp.eq.s32.totalorder %v6088, 1
        %vm6105 = vcmp.eq.s32.totalorder %v6089, 1
        %vm6106 = vcmp.eq.s32.totalorder %v6090, 1
        %vm6107 = vcmp.eq.s32.totalorder %v6091, 1
        %vm6108 = vcmp.eq.s32.totalorder %v6092, 1
        %vm6109 = vcmp.eq.s32.totalorder %v6093, 1
        %vm6110 = vcmp.eq.s32.totalorder %v6094, 1
        %vm6111 = vcmp.eq.s32.totalorder %v6095, 1
        %vm6112 = vcmp.eq.s32.totalorder %v6096, 1
        %v6113 = vsel %vm6097, %v6049, %v5408
        %v6114 = vsel %vm6098, %v6050, %v5409
        %v6115 = vsel %vm6099, %v6051, %v5410
        %v6116 = vsel %vm6100, %v6052, %v5411
        %v6117 = vsel %vm6101, %v6053, %v5412
        %v6118 = vsel %vm6102, %v6054, %v5413
        %v6119 = vsel %vm6103, %v6055, %v5414
        %v6120 = vsel %vm6104, %v6056, %v5415
        %v6121 = vsel %vm6105, %v6057, %v5416
        %v6122 = vsel %vm6106, %v6058, %v5417
        %v6123 = vsel %vm6107, %v6059, %v5418
        %v6124 = vsel %vm6108, %v6060, %v5419
        %v6125 = vsel %vm6109, %v6061, %v5420
        %v6126 = vsel %vm6110, %v6062, %v5421
        %v6127 = vsel %vm6111, %v6063, %v5422
        %v6128 = vsel %vm6112, %v6064, %v5423
        %v6129 = vsel %vm6097, %v5953, %v5424
        %v6130 = vsel %vm6098, %v5954, %v5425
        %v6131 = vsel %vm6099, %v5955, %v5426
        %v6132 = vsel %vm6100, %v5956, %v5427
        %v6133 = vsel %vm6101, %v5957, %v5428
        %v6134 = vsel %vm6102, %v5958, %v5429
        %v6135 = vsel %vm6103, %v5959, %v5430
        %v6136 = vsel %vm6104, %v5960, %v5431
        %v6137 = vsel %vm6105, %v5961, %v5432
        %v6138 = vsel %vm6106, %v5962, %v5433
        %v6139 = vsel %vm6107, %v5963, %v5434
        %v6140 = vsel %vm6108, %v5964, %v5435
        %v6141 = vsel %vm6109, %v5965, %v5436
        %v6142 = vsel %vm6110, %v5966, %v5437
        %v6143 = vsel %vm6111, %v5967, %v5438
        %v6144 = vsel %vm6112, %v5968, %v5439
        %6161 = vrot.lane.b32.xlu0 %v6113, 32
        %v6162 = vpop.permute.xlu0 %6161
        %6163 = vrot.lane.b32.xlu0 %v6114, 32
        %v6164 = vpop.permute.xlu0 %6163
        %6165 = vrot.lane.b32.xlu0 %v6115, 32
        %v6166 = vpop.permute.xlu0 %6165
        %6167 = vrot.lane.b32.xlu0 %v6116, 32
        %v6168 = vpop.permute.xlu0 %6167
        %6169 = vrot.lane.b32.xlu0 %v6117, 32
        %v6170 = vpop.permute.xlu0 %6169
        %6171 = vrot.lane.b32.xlu0 %v6118, 32
        %v6172 = vpop.permute.xlu0 %6171
        %6173 = vrot.lane.b32.xlu0 %v6119, 32
        %v6174 = vpop.permute.xlu0 %6173
        %6175 = vrot.lane.b32.xlu0 %v6120, 32
        %v6176 = vpop.permute.xlu0 %6175
        %6177 = vrot.lane.b32.xlu0 %v6121, 32
        %v6178 = vpop.permute.xlu0 %6177
        %6179 = vrot.lane.b32.xlu0 %v6122, 32
        %v6180 = vpop.permute.xlu0 %6179
        %6181 = vrot.lane.b32.xlu0 %v6123, 32
        %v6182 = vpop.permute.xlu0 %6181
        %6183 = vrot.lane.b32.xlu0 %v6124, 32
        %v6184 = vpop.permute.xlu0 %6183
        %6185 = vrot.lane.b32.xlu0 %v6125, 32
        %v6186 = vpop.permute.xlu0 %6185
        %6187 = vrot.lane.b32.xlu0 %v6126, 32
        %v6188 = vpop.permute.xlu0 %6187
        %6189 = vrot.lane.b32.xlu0 %v6127, 32
        %v6190 = vpop.permute.xlu0 %6189
        %6191 = vrot.lane.b32.xlu0 %v6128, 32
        %v6192 = vpop.permute.xlu0 %6191
        %v6193 = vsel %vm2153, %v6162, 0
        %v6195 = vsel %vm2153, %v6164, 0
        %v6197 = vsel %vm2153, %v6166, 0
        %v6199 = vsel %vm2153, %v6168, 0
        %v6201 = vsel %vm2153, %v6170, 0
        %v6203 = vsel %vm2153, %v6172, 0
        %v6205 = vsel %vm2153, %v6174, 0
        %v6207 = vsel %vm2153, %v6176, 0
        %v6209 = vsel %vm2153, %v6178, 0
        %v6211 = vsel %vm2153, %v6180, 0
        %v6213 = vsel %vm2153, %v6182, 0
        %v6215 = vsel %vm2153, %v6184, 0
        %v6217 = vsel %vm2153, %v6186, 0
        %v6219 = vsel %vm2153, %v6188, 0
        %v6221 = vsel %vm2153, %v6190, 0
        %v6223 = vsel %vm2153, %v6192, 0
        %6225 = vmatprep.subr.mxu0 0.0
        %6226 = vmatpush1.msra.mxu0 0.0
        %6227 = vmatprep.subr.mxu0 0.0
        %6228 = vmatpush1.msra.mxu0 0.0
        %6229 = vmatprep.subr.mxu0 0.0
        %6230 = vmatpush1.msra.mxu0 0.0
        %6231 = vmatprep.subr.mxu0 0.0
        %6232 = vmatpush1.msra.mxu0 0.0
        %6233 = vmatprep.subr.mxu0 0.0
        %6234 = vmatpush1.msra.mxu0 0.0
        %6235 = vmatprep.subr.mxu0 0.0
        %6236 = vmatpush1.msra.mxu0 0.0
        %6237 = vmatprep.subr.mxu0 0.0
        %6238 = vmatpush1.msra.mxu0 0.0
        %6239 = vmatprep.subr.mxu0 0.0
        %6240 = vmatpush1.msra.mxu0 0.0
        %6241 = vmatprep.subr.mxu0 0.0
        %6242 = vmatpush1.msra.mxu0 0.0
        %6243 = vmatprep.subr.mxu0 0.0
        %6244 = vmatpush1.msra.mxu0 0.0
        %6245 = vmatprep.subr.mxu0 0.0
        %6246 = vmatpush1.msra.mxu0 0.0
        %6247 = vmatprep.subr.mxu0 0.0
        %6248 = vmatpush1.msra.mxu0 0.0
        %6249 = vmatprep.subr.mxu0 0.0
        %6250 = vmatpush1.msra.mxu0 %v4811
        %6251 = vmatprep.subr.mxu0 0.0
        %6252 = vmatpush1.msra.mxu0 %v4810
        %6253 = vmatprep.subr.mxu0 0.0
        %6254 = vmatpush1.msra.mxu0 %v4809
        %6255 = vmatprep.subr.mxu0 0.0
        %6256 = vmatpush1.msra.mxu0 %v4808
        %6257 = vmatprep.subr.mxu0 0.0
        %6258 = vmatpush2.msra.mxu0 0.0
        %6259 = vmatprep.subr.mxu0 0.0
        %6260 = vmatpush2.msra.mxu0 0.0
        %6261 = vmatprep.subr.mxu0 0.0
        %6262 = vmatpush2.msra.mxu0 0.0
        %6263 = vmatprep.subr.mxu0 0.0
        %6264 = vmatpush2.msra.mxu0 0.0
        %6265 = vmatprep.subr.mxu0 0.0
        %6266 = vmatpush2.msra.mxu0 0.0
        %6267 = vmatprep.subr.mxu0 0.0
        %6268 = vmatpush2.msra.mxu0 0.0
        %6269 = vmatprep.subr.mxu0 0.0
        %6270 = vmatpush2.msra.mxu0 0.0
        %6271 = vmatprep.subr.mxu0 0.0
        %6272 = vmatpush2.msra.mxu0 0.0
        %6273 = vmatprep.subr.mxu0 0.0
        %6274 = vmatpush2.msra.mxu0 0.0
        %6275 = vmatprep.subr.mxu0 0.0
        %6276 = vmatpush2.msra.mxu0 0.0
        %6277 = vmatprep.subr.mxu0 0.0
        %6278 = vmatpush2.msra.mxu0 0.0
        %6279 = vmatprep.subr.mxu0 0.0
        %6280 = vmatpush2.msra.mxu0 0.0
        %6281 = vmatprep.subr.mxu0 0.0
        %6282 = vmatpush2.msra.mxu0 0.0
        %6283 = vmatprep.subr.mxu0 0.0
        %6284 = vmatpush2.msra.mxu0 0.0
        %6285 = vmatprep.subr.mxu0 0.0
        %6286 = vmatpush2.msra.mxu0 0.0
        %6287 = vmatprep.subr.mxu0 0.0
        %6288 = vmatpush2.msra.mxu0 0.0
        %6289 = vmatprep.mubr.f32.mxu0 0.0
        %6290 = vmatmul.mubr.f32.gmra.mxu0 %v6193
        %v6291 = vpop.f32.mrf.mxu0
        %v6292 = vadd.f32 0.0, %v6291
        %v6293 = vpop.f32.mrf.mxu0
        %6294 = vmatprep.mubr.f32.mxu0 0.0
        %6295 = vmatmul.mubr.f32.gmra.mxu0 %v6195
        %v6296 = vpop.f32.mrf.mxu0
        %v6297 = vadd.f32 0.0, %v6296
        %v6298 = vpop.f32.mrf.mxu0
        %6299 = vmatprep.mubr.f32.mxu0 0.0
        %6300 = vmatmul.mubr.f32.gmra.mxu0 %v6197
        %v6301 = vpop.f32.mrf.mxu0
        %v6302 = vadd.f32 0.0, %v6301
        %v6303 = vpop.f32.mrf.mxu0
        %6304 = vmatprep.mubr.f32.mxu0 0.0
        %6305 = vmatmul.mubr.f32.gmra.mxu0 %v6199
        %v6306 = vpop.f32.mrf.mxu0
        %v6307 = vadd.f32 0.0, %v6306
        %v6308 = vpop.f32.mrf.mxu0
        %6309 = vmatprep.mubr.f32.mxu0 0.0
        %6310 = vmatmul.mubr.f32.gmra.mxu0 %v6201
        %v6311 = vpop.f32.mrf.mxu0
        %v6312 = vadd.f32 0.0, %v6311
        %v6313 = vpop.f32.mrf.mxu0
        %6314 = vmatprep.mubr.f32.mxu0 0.0
        %6315 = vmatmul.mubr.f32.gmra.mxu0 %v6203
        %v6316 = vpop.f32.mrf.mxu0
        %v6317 = vadd.f32 0.0, %v6316
        %v6318 = vpop.f32.mrf.mxu0
        %6319 = vmatprep.mubr.f32.mxu0 0.0
        %6320 = vmatmul.mubr.f32.gmra.mxu0 %v6205
        %v6321 = vpop.f32.mrf.mxu0
        %v6322 = vadd.f32 0.0, %v6321
        %v6323 = vpop.f32.mrf.mxu0
        %6324 = vmatprep.mubr.f32.mxu0 0.0
        %6325 = vmatmul.mubr.f32.gmra.mxu0 %v6207
        %v6326 = vpop.f32.mrf.mxu0
        %v6327 = vadd.f32 0.0, %v6326
        %v6328 = vpop.f32.mrf.mxu0
        %6329 = vmatprep.mubr.f32.mxu0 0.0
        %6330 = vmatmul.mubr.f32.gmra.mxu0 %v6209
        %v6331 = vpop.f32.mrf.mxu0
        %v6332 = vadd.f32 0.0, %v6331
        %v6333 = vpop.f32.mrf.mxu0
        %6334 = vmatprep.mubr.f32.mxu0 0.0
        %6335 = vmatmul.mubr.f32.gmra.mxu0 %v6211
        %v6336 = vpop.f32.mrf.mxu0
        %v6337 = vadd.f32 0.0, %v6336
        %v6338 = vpop.f32.mrf.mxu0
        %6339 = vmatprep.mubr.f32.mxu0 0.0
        %6340 = vmatmul.mubr.f32.gmra.mxu0 %v6213
        %v6341 = vpop.f32.mrf.mxu0
        %v6342 = vadd.f32 0.0, %v6341
        %v6343 = vpop.f32.mrf.mxu0
        %6344 = vmatprep.mubr.f32.mxu0 0.0
        %6345 = vmatmul.mubr.f32.gmra.mxu0 %v6215
        %v6346 = vpop.f32.mrf.mxu0
        %v6347 = vadd.f32 0.0, %v6346
        %v6348 = vpop.f32.mrf.mxu0
        %6349 = vmatprep.mubr.f32.mxu0 0.0
        %6350 = vmatmul.mubr.f32.gmra.mxu0 %v6217
        %v6351 = vpop.f32.mrf.mxu0
        %v6352 = vadd.f32 0.0, %v6351
        %v6353 = vpop.f32.mrf.mxu0
        %6354 = vmatprep.mubr.f32.mxu0 0.0
        %6355 = vmatmul.mubr.f32.gmra.mxu0 %v6219
        %v6356 = vpop.f32.mrf.mxu0
        %v6357 = vadd.f32 0.0, %v6356
        %v6358 = vpop.f32.mrf.mxu0
        %6359 = vmatprep.mubr.f32.mxu0 0.0
        %6360 = vmatmul.mubr.f32.gmra.mxu0 %v6221
        %v6361 = vpop.f32.mrf.mxu0
        %v6362 = vadd.f32 0.0, %v6361
        %v6363 = vpop.f32.mrf.mxu0
        %6364 = vmatprep.mubr.f32.mxu0 0.0
        %6365 = vmatmul.mubr.f32.gmra.mxu0 %v6223
        %v6366 = vpop.f32.mrf.mxu0
        %v6367 = vadd.f32 0.0, %v6366
        %v6368 = vpop.f32.mrf.mxu0
        %6369 = vdwg.mxu0
        %v6370 = vadd.f32 %v4330, %v6292
        %v6371 = vadd.f32 %v4335, %v6297
        %v6372 = vadd.f32 %v4340, %v6302
        %v6373 = vadd.f32 %v4345, %v6307
        %v6374 = vadd.f32 %v4350, %v6312
        %v6375 = vadd.f32 %v4355, %v6317
        %v6376 = vadd.f32 %v4360, %v6322
        %v6377 = vadd.f32 %v4365, %v6327
        %v6378 = vadd.f32 %v4370, %v6332
        %v6379 = vadd.f32 %v4375, %v6337
        %v6380 = vadd.f32 %v4380, %v6342
        %v6381 = vadd.f32 %v4385, %v6347
        %v6382 = vadd.f32 %v4390, %v6352
        %v6383 = vadd.f32 %v4395, %v6357
        %v6384 = vadd.f32 %v4400, %v6362
        %v6385 = vadd.f32 %v4405, %v6367
        %v6386 = vxor.u32 %v6370, 2147483648
        %v6387 = vxor.u32 %v6371, 2147483648
        %v6388 = vxor.u32 %v6372, 2147483648
        %v6389 = vxor.u32 %v6373, 2147483648
        %v6390 = vxor.u32 %v6374, 2147483648
        %v6391 = vxor.u32 %v6375, 2147483648
        %v6392 = vxor.u32 %v6376, 2147483648
        %v6393 = vxor.u32 %v6377, 2147483648
        %v6394 = vxor.u32 %v6378, 2147483648
        %v6395 = vxor.u32 %v6379, 2147483648
        %v6396 = vxor.u32 %v6380, 2147483648
        %v6397 = vxor.u32 %v6381, 2147483648
        %v6398 = vxor.u32 %v6382, 2147483648
        %v6399 = vxor.u32 %v6383, 2147483648
        %v6400 = vxor.u32 %v6384, 2147483648
        %v6401 = vxor.u32 %v6385, 2147483648
        %v6402 = vmul.f32 %v6386, 1.442695
        %v6403 = vpow.pop %v6402
        %v6404 = vmul.f32 %v6387, 1.442695
        %v6405 = vpow.pop %v6404
        %v6406 = vmul.f32 %v6388, 1.442695
        %v6407 = vpow.pop %v6406
        %v6408 = vmul.f32 %v6389, 1.442695
        %v6409 = vpow.pop %v6408
        %v6410 = vmul.f32 %v6390, 1.442695
        %v6411 = vpow.pop %v6410
        %v6412 = vmul.f32 %v6391, 1.442695
        %v6413 = vpow.pop %v6412
        %v6414 = vmul.f32 %v6392, 1.442695
        %v6415 = vpow.pop %v6414
        %v6416 = vmul.f32 %v6393, 1.442695
        %v6417 = vpow.pop %v6416
        %v6418 = vmul.f32 %v6394, 1.442695
        %v6419 = vpow.pop %v6418
        %v6420 = vmul.f32 %v6395, 1.442695
        %v6421 = vpow.pop %v6420
        %v6422 = vmul.f32 %v6396, 1.442695
        %v6423 = vpow.pop %v6422
        %v6424 = vmul.f32 %v6397, 1.442695
        %v6425 = vpow.pop %v6424
        %v6426 = vmul.f32 %v6398, 1.442695
        %v6427 = vpow.pop %v6426
        %v6428 = vmul.f32 %v6399, 1.442695
        %v6429 = vpow.pop %v6428
        %v6430 = vmul.f32 %v6400, 1.442695
        %v6431 = vpow.pop %v6430
        %v6432 = vmul.f32 %v6401, 1.442695
        %v6433 = vpow.pop %v6432
        %v6434 = vadd.f32 %v6403, 1.0
        %v6435 = vadd.f32 %v6405, 1.0
        %v6436 = vadd.f32 %v6407, 1.0
        %v6437 = vadd.f32 %v6409, 1.0
        %v6438 = vadd.f32 %v6411, 1.0
        %v6439 = vadd.f32 %v6413, 1.0
        %v6440 = vadd.f32 %v6415, 1.0
        %v6441 = vadd.f32 %v6417, 1.0
        %v6442 = vadd.f32 %v6419, 1.0
        %v6443 = vadd.f32 %v6421, 1.0
        %v6444 = vadd.f32 %v6423, 1.0
        %v6445 = vadd.f32 %v6425, 1.0
        %v6446 = vadd.f32 %v6427, 1.0
        %v6447 = vadd.f32 %v6429, 1.0
        %v6448 = vadd.f32 %v6431, 1.0
        %v6449 = vadd.f32 %v6433, 1.0
        %v6450 = vrcp.pop %v6434
        %v6451 = vmul.f32 1.0, %v6450
        %v6452 = vrcp.pop %v6435
        %v6453 = vmul.f32 1.0, %v6452
        %v6454 = vrcp.pop %v6436
        %v6455 = vmul.f32 1.0, %v6454
        %v6456 = vrcp.pop %v6437
        %v6457 = vmul.f32 1.0, %v6456
        %v6458 = vrcp.pop %v6438
        %v6459 = vmul.f32 1.0, %v6458
        %v6460 = vrcp.pop %v6439
        %v6461 = vmul.f32 1.0, %v6460
        %v6462 = vrcp.pop %v6440
        %v6463 = vmul.f32 1.0, %v6462
        %v6464 = vrcp.pop %v6441
        %v6465 = vmul.f32 1.0, %v6464
        %v6466 = vrcp.pop %v6442
        %v6467 = vmul.f32 1.0, %v6466
        %v6468 = vrcp.pop %v6443
        %v6469 = vmul.f32 1.0, %v6468
        %v6470 = vrcp.pop %v6444
        %v6471 = vmul.f32 1.0, %v6470
        %v6472 = vrcp.pop %v6445
        %v6473 = vmul.f32 1.0, %v6472
        %v6474 = vrcp.pop %v6446
        %v6475 = vmul.f32 1.0, %v6474
        %v6476 = vrcp.pop %v6447
        %v6477 = vmul.f32 1.0, %v6476
        %v6478 = vrcp.pop %v6448
        %v6479 = vmul.f32 1.0, %v6478
        %v6480 = vrcp.pop %v6449
        %v6481 = vmul.f32 1.0, %v6480
        %v6482 = vtanh.pop %v6370
        %v6483 = vtanh.pop %v6371
        %v6484 = vtanh.pop %v6372
        %v6485 = vtanh.pop %v6373
        %v6486 = vtanh.pop %v6374
        %v6487 = vtanh.pop %v6375
        %v6488 = vtanh.pop %v6376
        %v6489 = vtanh.pop %v6377
        %v6490 = vtanh.pop %v6378
        %v6491 = vtanh.pop %v6379
        %v6492 = vtanh.pop %v6380
        %v6493 = vtanh.pop %v6381
        %v6494 = vtanh.pop %v6382
        %v6495 = vtanh.pop %v6383
        %v6496 = vtanh.pop %v6384
        %v6497 = vtanh.pop %v6385
        %v6498 = vmul.f32 %v6451, %v6129
        %v6499 = vmul.f32 %v6453, %v6130
        %v6500 = vmul.f32 %v6455, %v6131
        %v6501 = vmul.f32 %v6457, %v6132
        %v6502 = vmul.f32 %v6459, %v6133
        %v6503 = vmul.f32 %v6461, %v6134
        %v6504 = vmul.f32 %v6463, %v6135
        %v6505 = vmul.f32 %v6465, %v6136
        %v6506 = vmul.f32 %v6467, %v6137
        %v6507 = vmul.f32 %v6469, %v6138
        %v6508 = vmul.f32 %v6471, %v6139
        %v6509 = vmul.f32 %v6473, %v6140
        %v6510 = vmul.f32 %v6475, %v6141
        %v6511 = vmul.f32 %v6477, %v6142
        %v6512 = vmul.f32 %v6479, %v6143
        %v6513 = vmul.f32 %v6481, %v6144
        %6530 = vrot.lane.b32.xlu0 %v6482, 64
        %v6531 = vpop.permute.xlu0 %6530
        %6532 = vrot.lane.b32.xlu0 %v6483, 64
        %v6533 = vpop.permute.xlu0 %6532
        %6534 = vrot.lane.b32.xlu0 %v6484, 64
        %v6535 = vpop.permute.xlu0 %6534
        %6536 = vrot.lane.b32.xlu0 %v6485, 64
        %v6537 = vpop.permute.xlu0 %6536
        %6538 = vrot.lane.b32.xlu0 %v6486, 64
        %v6539 = vpop.permute.xlu0 %6538
        %6540 = vrot.lane.b32.xlu0 %v6487, 64
        %v6541 = vpop.permute.xlu0 %6540
        %6542 = vrot.lane.b32.xlu0 %v6488, 64
        %v6543 = vpop.permute.xlu0 %6542
        %6544 = vrot.lane.b32.xlu0 %v6489, 64
        %v6545 = vpop.permute.xlu0 %6544
        %6546 = vrot.lane.b32.xlu0 %v6490, 64
        %v6547 = vpop.permute.xlu0 %6546
        %6548 = vrot.lane.b32.xlu0 %v6491, 64
        %v6549 = vpop.permute.xlu0 %6548
        %6550 = vrot.lane.b32.xlu0 %v6492, 64
        %v6551 = vpop.permute.xlu0 %6550
        %6552 = vrot.lane.b32.xlu0 %v6493, 64
        %v6553 = vpop.permute.xlu0 %6552
        %6554 = vrot.lane.b32.xlu0 %v6494, 64
        %v6555 = vpop.permute.xlu0 %6554
        %6556 = vrot.lane.b32.xlu0 %v6495, 64
        %v6557 = vpop.permute.xlu0 %6556
        %6558 = vrot.lane.b32.xlu0 %v6496, 64
        %v6559 = vpop.permute.xlu0 %6558
        %6560 = vrot.lane.b32.xlu0 %v6497, 64
        %v6561 = vpop.permute.xlu0 %6560
        %v6578 = vmul.f32 %v6451, %v6531
        %v6579 = vmul.f32 %v6453, %v6533
        %v6580 = vmul.f32 %v6455, %v6535
        %v6581 = vmul.f32 %v6457, %v6537
        %v6582 = vmul.f32 %v6459, %v6539
        %v6583 = vmul.f32 %v6461, %v6541
        %v6584 = vmul.f32 %v6463, %v6543
        %v6585 = vmul.f32 %v6465, %v6545
        %v6586 = vmul.f32 %v6467, %v6547
        %v6587 = vmul.f32 %v6469, %v6549
        %v6588 = vmul.f32 %v6471, %v6551
        %v6589 = vmul.f32 %v6473, %v6553
        %v6590 = vmul.f32 %v6475, %v6555
        %v6591 = vmul.f32 %v6477, %v6557
        %v6592 = vmul.f32 %v6479, %v6559
        %v6593 = vmul.f32 %v6481, %v6561
        %6610 = vrot.lane.b32.xlu0 %v6578, 32
        %v6611 = vpop.permute.xlu0 %6610
        %6612 = vrot.lane.b32.xlu0 %v6579, 32
        %v6613 = vpop.permute.xlu0 %6612
        %6614 = vrot.lane.b32.xlu0 %v6580, 32
        %v6615 = vpop.permute.xlu0 %6614
        %6616 = vrot.lane.b32.xlu0 %v6581, 32
        %v6617 = vpop.permute.xlu0 %6616
        %6618 = vrot.lane.b32.xlu0 %v6582, 32
        %v6619 = vpop.permute.xlu0 %6618
        %6620 = vrot.lane.b32.xlu0 %v6583, 32
        %v6621 = vpop.permute.xlu0 %6620
        %6622 = vrot.lane.b32.xlu0 %v6584, 32
        %v6623 = vpop.permute.xlu0 %6622
        %6624 = vrot.lane.b32.xlu0 %v6585, 32
        %v6625 = vpop.permute.xlu0 %6624
        %6626 = vrot.lane.b32.xlu0 %v6586, 32
        %v6627 = vpop.permute.xlu0 %6626
        %6628 = vrot.lane.b32.xlu0 %v6587, 32
        %v6629 = vpop.permute.xlu0 %6628
        %6630 = vrot.lane.b32.xlu0 %v6588, 32
        %v6631 = vpop.permute.xlu0 %6630
        %6632 = vrot.lane.b32.xlu0 %v6589, 32
        %v6633 = vpop.permute.xlu0 %6632
        %6634 = vrot.lane.b32.xlu0 %v6590, 32
        %v6635 = vpop.permute.xlu0 %6634
        %6636 = vrot.lane.b32.xlu0 %v6591, 32
        %v6637 = vpop.permute.xlu0 %6636
        %6638 = vrot.lane.b32.xlu0 %v6592, 32
        %v6639 = vpop.permute.xlu0 %6638
        %6640 = vrot.lane.b32.xlu0 %v6593, 32
        %v6641 = vpop.permute.xlu0 %6640
        %v6658 = vadd.f32 %v6498, %v6611
        %v6659 = vadd.f32 %v6499, %v6613
        %v6660 = vadd.f32 %v6500, %v6615
        %v6661 = vadd.f32 %v6501, %v6617
        %v6662 = vadd.f32 %v6502, %v6619
        %v6663 = vadd.f32 %v6503, %v6621
        %v6664 = vadd.f32 %v6504, %v6623
        %v6665 = vadd.f32 %v6505, %v6625
        %v6666 = vadd.f32 %v6506, %v6627
        %v6667 = vadd.f32 %v6507, %v6629
        %v6668 = vadd.f32 %v6508, %v6631
        %v6669 = vadd.f32 %v6509, %v6633
        %v6670 = vadd.f32 %v6510, %v6635
        %v6671 = vadd.f32 %v6511, %v6637
        %v6672 = vadd.f32 %v6512, %v6639
        %v6673 = vadd.f32 %v6513, %v6641
        %v6674 = vtanh.pop %v6658
        %v6675 = vtanh.pop %v6659
        %v6676 = vtanh.pop %v6660
        %v6677 = vtanh.pop %v6661
        %v6678 = vtanh.pop %v6662
        %v6679 = vtanh.pop %v6663
        %v6680 = vtanh.pop %v6664
        %v6681 = vtanh.pop %v6665
        %v6682 = vtanh.pop %v6666
        %v6683 = vtanh.pop %v6667
        %v6684 = vtanh.pop %v6668
        %v6685 = vtanh.pop %v6669
        %v6686 = vtanh.pop %v6670
        %v6687 = vtanh.pop %v6671
        %v6688 = vtanh.pop %v6672
        %v6689 = vtanh.pop %v6673
        %6706 = vrot.lane.b32.xlu0 %v6674, 64
        %v6707 = vpop.permute.xlu0 %6706
        %6708 = vrot.lane.b32.xlu0 %v6675, 64
        %v6709 = vpop.permute.xlu0 %6708
        %6710 = vrot.lane.b32.xlu0 %v6676, 64
        %v6711 = vpop.permute.xlu0 %6710
        %6712 = vrot.lane.b32.xlu0 %v6677, 64
        %v6713 = vpop.permute.xlu0 %6712
        %6714 = vrot.lane.b32.xlu0 %v6678, 64
        %v6715 = vpop.permute.xlu0 %6714
        %6716 = vrot.lane.b32.xlu0 %v6679, 64
        %v6717 = vpop.permute.xlu0 %6716
        %6718 = vrot.lane.b32.xlu0 %v6680, 64
        %v6719 = vpop.permute.xlu0 %6718
        %6720 = vrot.lane.b32.xlu0 %v6681, 64
        %v6721 = vpop.permute.xlu0 %6720
        %6722 = vrot.lane.b32.xlu0 %v6682, 64
        %v6723 = vpop.permute.xlu0 %6722
        %6724 = vrot.lane.b32.xlu0 %v6683, 64
        %v6725 = vpop.permute.xlu0 %6724
        %6726 = vrot.lane.b32.xlu0 %v6684, 64
        %v6727 = vpop.permute.xlu0 %6726
        %6728 = vrot.lane.b32.xlu0 %v6685, 64
        %v6729 = vpop.permute.xlu0 %6728
        %6730 = vrot.lane.b32.xlu0 %v6686, 64
        %v6731 = vpop.permute.xlu0 %6730
        %6732 = vrot.lane.b32.xlu0 %v6687, 64
        %v6733 = vpop.permute.xlu0 %6732
        %6734 = vrot.lane.b32.xlu0 %v6688, 64
        %v6735 = vpop.permute.xlu0 %6734
        %6736 = vrot.lane.b32.xlu0 %v6689, 64
        %v6737 = vpop.permute.xlu0 %6736
        %v6754 = vmul.f32 %v6451, %v6707
        %v6755 = vmul.f32 %v6453, %v6709
        %v6756 = vmul.f32 %v6455, %v6711
        %v6757 = vmul.f32 %v6457, %v6713
        %v6758 = vmul.f32 %v6459, %v6715
        %v6759 = vmul.f32 %v6461, %v6717
        %v6760 = vmul.f32 %v6463, %v6719
        %v6761 = vmul.f32 %v6465, %v6721
        %v6762 = vmul.f32 %v6467, %v6723
        %v6763 = vmul.f32 %v6469, %v6725
        %v6764 = vmul.f32 %v6471, %v6727
        %v6765 = vmul.f32 %v6473, %v6729
        %v6766 = vmul.f32 %v6475, %v6731
        %v6767 = vmul.f32 %v6477, %v6733
        %v6768 = vmul.f32 %v6479, %v6735
        %v6769 = vmul.f32 %v6481, %v6737
        %vm6770 = vcmp.gt.s32.totalorder %v2520, 2
        %vm6771 = vcmp.gt.s32.totalorder %v2533, 2
        %vm6772 = vcmp.gt.s32.totalorder %v2546, 2
        %vm6773 = vcmp.gt.s32.totalorder %v2559, 2
        %vm6774 = vcmp.gt.s32.totalorder %v2572, 2
        %vm6775 = vcmp.gt.s32.totalorder %v2585, 2
        %vm6776 = vcmp.gt.s32.totalorder %v2598, 2
        %vm6777 = vcmp.gt.s32.totalorder %v2611, 2
        %vm6778 = vcmp.gt.s32.totalorder %v2624, 2
        %vm6779 = vcmp.gt.s32.totalorder %v2637, 2
        %vm6780 = vcmp.gt.s32.totalorder %v2650, 2
        %vm6781 = vcmp.gt.s32.totalorder %v2663, 2
        %vm6782 = vcmp.gt.s32.totalorder %v2676, 2
        %vm6783 = vcmp.gt.s32.totalorder %v2689, 2
        %vm6784 = vcmp.gt.s32.totalorder %v2702, 2
        %vm6785 = vcmp.gt.s32.totalorder %v2715, 2
        %v6786 = vsel %vm6770, 1, 0
        %v6787 = vsel %vm6771, 1, 0
        %v6788 = vsel %vm6772, 1, 0
        %v6789 = vsel %vm6773, 1, 0
        %v6790 = vsel %vm6774, 1, 0
        %v6791 = vsel %vm6775, 1, 0
        %v6792 = vsel %vm6776, 1, 0
        %v6793 = vsel %vm6777, 1, 0
        %v6794 = vsel %vm6778, 1, 0
        %v6795 = vsel %vm6779, 1, 0
        %v6796 = vsel %vm6780, 1, 0
        %v6797 = vsel %vm6781, 1, 0
        %v6798 = vsel %vm6782, 1, 0
        %v6799 = vsel %vm6783, 1, 0
        %v6800 = vsel %vm6784, 1, 0
        %v6801 = vsel %vm6785, 1, 0
        %vm6802 = vcmp.eq.s32.totalorder %v6786, 1
        %vm6803 = vcmp.eq.s32.totalorder %v6787, 1
        %vm6804 = vcmp.eq.s32.totalorder %v6788, 1
        %vm6805 = vcmp.eq.s32.totalorder %v6789, 1
        %vm6806 = vcmp.eq.s32.totalorder %v6790, 1
        %vm6807 = vcmp.eq.s32.totalorder %v6791, 1
        %vm6808 = vcmp.eq.s32.totalorder %v6792, 1
        %vm6809 = vcmp.eq.s32.totalorder %v6793, 1
        %vm6810 = vcmp.eq.s32.totalorder %v6794, 1
        %vm6811 = vcmp.eq.s32.totalorder %v6795, 1
        %vm6812 = vcmp.eq.s32.totalorder %v6796, 1
        %vm6813 = vcmp.eq.s32.totalorder %v6797, 1
        %vm6814 = vcmp.eq.s32.totalorder %v6798, 1
        %vm6815 = vcmp.eq.s32.totalorder %v6799, 1
        %vm6816 = vcmp.eq.s32.totalorder %v6800, 1
        %vm6817 = vcmp.eq.s32.totalorder %v6801, 1
        %v6818 = vsel %vm6802, %v6754, %v6113
        %v6819 = vsel %vm6803, %v6755, %v6114
        %v6820 = vsel %vm6804, %v6756, %v6115
        %v6821 = vsel %vm6805, %v6757, %v6116
        %v6822 = vsel %vm6806, %v6758, %v6117
        %v6823 = vsel %vm6807, %v6759, %v6118
        %v6824 = vsel %vm6808, %v6760, %v6119
        %v6825 = vsel %vm6809, %v6761, %v6120
        %v6826 = vsel %vm6810, %v6762, %v6121
        %v6827 = vsel %vm6811, %v6763, %v6122
        %v6828 = vsel %vm6812, %v6764, %v6123
        %v6829 = vsel %vm6813, %v6765, %v6124
        %v6830 = vsel %vm6814, %v6766, %v6125
        %v6831 = vsel %vm6815, %v6767, %v6126
        %v6832 = vsel %vm6816, %v6768, %v6127
        %v6833 = vsel %vm6817, %v6769, %v6128
        %v6834 = vsel %vm6802, %v6658, %v6129
        %v6835 = vsel %vm6803, %v6659, %v6130
        %v6836 = vsel %vm6804, %v6660, %v6131
        %v6837 = vsel %vm6805, %v6661, %v6132
        %v6838 = vsel %vm6806, %v6662, %v6133
        %v6839 = vsel %vm6807, %v6663, %v6134
        %v6840 = vsel %vm6808, %v6664, %v6135
        %v6841 = vsel %vm6809, %v6665, %v6136
        %v6842 = vsel %vm6810, %v6666, %v6137
        %v6843 = vsel %vm6811, %v6667, %v6138
        %v6844 = vsel %vm6812, %v6668, %v6139
        %v6845 = vsel %vm6813, %v6669, %v6140
        %v6846 = vsel %vm6814, %v6670, %v6141
        %v6847 = vsel %vm6815, %v6671, %v6142
        %v6848 = vsel %vm6816, %v6672, %v6143
        %v6849 = vsel %vm6817, %v6673, %v6144
        %6866 = vrot.lane.b32.xlu0 %v6818, 32
        %v6867 = vpop.permute.xlu0 %6866
        %6868 = vrot.lane.b32.xlu0 %v6819, 32
        %v6869 = vpop.permute.xlu0 %6868
        %6870 = vrot.lane.b32.xlu0 %v6820, 32
        %v6871 = vpop.permute.xlu0 %6870
        %6872 = vrot.lane.b32.xlu0 %v6821, 32
        %v6873 = vpop.permute.xlu0 %6872
        %6874 = vrot.lane.b32.xlu0 %v6822, 32
        %v6875 = vpop.permute.xlu0 %6874
        %6876 = vrot.lane.b32.xlu0 %v6823, 32
        %v6877 = vpop.permute.xlu0 %6876
        %6878 = vrot.lane.b32.xlu0 %v6824, 32
        %v6879 = vpop.permute.xlu0 %6878
        %6880 = vrot.lane.b32.xlu0 %v6825, 32
        %v6881 = vpop.permute.xlu0 %6880
        %6882 = vrot.lane.b32.xlu0 %v6826, 32
        %v6883 = vpop.permute.xlu0 %6882
        %6884 = vrot.lane.b32.xlu0 %v6827, 32
        %v6885 = vpop.permute.xlu0 %6884
        %6886 = vrot.lane.b32.xlu0 %v6828, 32
        %v6887 = vpop.permute.xlu0 %6886
        %6888 = vrot.lane.b32.xlu0 %v6829, 32
        %v6889 = vpop.permute.xlu0 %6888
        %6890 = vrot.lane.b32.xlu0 %v6830, 32
        %v6891 = vpop.permute.xlu0 %6890
        %6892 = vrot.lane.b32.xlu0 %v6831, 32
        %v6893 = vpop.permute.xlu0 %6892
        %6894 = vrot.lane.b32.xlu0 %v6832, 32
        %v6895 = vpop.permute.xlu0 %6894
        %6896 = vrot.lane.b32.xlu0 %v6833, 32
        %v6897 = vpop.permute.xlu0 %6896
        %v6898 = vsel %vm2153, %v6867, 0
        %v6900 = vsel %vm2153, %v6869, 0
        %v6902 = vsel %vm2153, %v6871, 0
        %v6904 = vsel %vm2153, %v6873, 0
        %v6906 = vsel %vm2153, %v6875, 0
        %v6908 = vsel %vm2153, %v6877, 0
        %v6910 = vsel %vm2153, %v6879, 0
        %v6912 = vsel %vm2153, %v6881, 0
        %v6914 = vsel %vm2153, %v6883, 0
        %v6916 = vsel %vm2153, %v6885, 0
        %v6918 = vsel %vm2153, %v6887, 0
        %v6920 = vsel %vm2153, %v6889, 0
        %v6922 = vsel %vm2153, %v6891, 0
        %v6924 = vsel %vm2153, %v6893, 0
        %v6926 = vsel %vm2153, %v6895, 0
        %v6928 = vsel %vm2153, %v6897, 0
        %6930 = vmatprep.subr.mxu0 0.0
        %6931 = vmatpush1.msra.mxu0 0.0
        %6932 = vmatprep.subr.mxu0 0.0
        %6933 = vmatpush1.msra.mxu0 0.0
        %6934 = vmatprep.subr.mxu0 0.0
        %6935 = vmatpush1.msra.mxu0 0.0
        %6936 = vmatprep.subr.mxu0 0.0
        %6937 = vmatpush1.msra.mxu0 0.0
        %6938 = vmatprep.subr.mxu0 0.0
        %6939 = vmatpush1.msra.mxu0 0.0
        %6940 = vmatprep.subr.mxu0 0.0
        %6941 = vmatpush1.msra.mxu0 0.0
        %6942 = vmatprep.subr.mxu0 0.0
        %6943 = vmatpush1.msra.mxu0 0.0
        %6944 = vmatprep.subr.mxu0 0.0
        %6945 = vmatpush1.msra.mxu0 0.0
        %6946 = vmatprep.subr.mxu0 0.0
        %6947 = vmatpush1.msra.mxu0 0.0
        %6948 = vmatprep.subr.mxu0 0.0
        %6949 = vmatpush1.msra.mxu0 0.0
        %6950 = vmatprep.subr.mxu0 0.0
        %6951 = vmatpush1.msra.mxu0 0.0
        %6952 = vmatprep.subr.mxu0 0.0
        %6953 = vmatpush1.msra.mxu0 0.0
        %6954 = vmatprep.subr.mxu0 0.0
        %6955 = vmatpush1.msra.mxu0 %v4811
        %6956 = vmatprep.subr.mxu0 0.0
        %6957 = vmatpush1.msra.mxu0 %v4810
        %6958 = vmatprep.subr.mxu0 0.0
        %6959 = vmatpush1.msra.mxu0 %v4809
        %6960 = vmatprep.subr.mxu0 0.0
        %6961 = vmatpush1.msra.mxu0 %v4808
        %6962 = vmatprep.subr.mxu0 0.0
        %6963 = vmatpush2.msra.mxu0 0.0
        %6964 = vmatprep.subr.mxu0 0.0
        %6965 = vmatpush2.msra.mxu0 0.0
        %6966 = vmatprep.subr.mxu0 0.0
        %6967 = vmatpush2.msra.mxu0 0.0
        %6968 = vmatprep.subr.mxu0 0.0
        %6969 = vmatpush2.msra.mxu0 0.0
        %6970 = vmatprep.subr.mxu0 0.0
        %6971 = vmatpush2.msra.mxu0 0.0
        %6972 = vmatprep.subr.mxu0 0.0
        %6973 = vmatpush2.msra.mxu0 0.0
        %6974 = vmatprep.subr.mxu0 0.0
        %6975 = vmatpush2.msra.mxu0 0.0
        %6976 = vmatprep.subr.mxu0 0.0
        %6977 = vmatpush2.msra.mxu0 0.0
        %6978 = vmatprep.subr.mxu0 0.0
        %6979 = vmatpush2.msra.mxu0 0.0
        %6980 = vmatprep.subr.mxu0 0.0
        %6981 = vmatpush2.msra.mxu0 0.0
        %6982 = vmatprep.subr.mxu0 0.0
        %6983 = vmatpush2.msra.mxu0 0.0
        %6984 = vmatprep.subr.mxu0 0.0
        %6985 = vmatpush2.msra.mxu0 0.0
        %6986 = vmatprep.subr.mxu0 0.0
        %6987 = vmatpush2.msra.mxu0 0.0
        %6988 = vmatprep.subr.mxu0 0.0
        %6989 = vmatpush2.msra.mxu0 0.0
        %6990 = vmatprep.subr.mxu0 0.0
        %6991 = vmatpush2.msra.mxu0 0.0
        %6992 = vmatprep.subr.mxu0 0.0
        %6993 = vmatpush2.msra.mxu0 0.0
        %6994 = vmatprep.mubr.f32.mxu0 0.0
        %6995 = vmatmul.mubr.f32.gmra.mxu0 %v6898
        %v6996 = vpop.f32.mrf.mxu0
        %v6997 = vadd.f32 0.0, %v6996
        %v6998 = vpop.f32.mrf.mxu0
        %6999 = vmatprep.mubr.f32.mxu0 0.0
        %7000 = vmatmul.mubr.f32.gmra.mxu0 %v6900
        %v7001 = vpop.f32.mrf.mxu0
        %v7002 = vadd.f32 0.0, %v7001
        %v7003 = vpop.f32.mrf.mxu0
        %7004 = vmatprep.mubr.f32.mxu0 0.0
        %7005 = vmatmul.mubr.f32.gmra.mxu0 %v6902
        %v7006 = vpop.f32.mrf.mxu0
        %v7007 = vadd.f32 0.0, %v7006
        %v7008 = vpop.f32.mrf.mxu0
        %7009 = vmatprep.mubr.f32.mxu0 0.0
        %7010 = vmatmul.mubr.f32.gmra.mxu0 %v6904
        %v7011 = vpop.f32.mrf.mxu0
        %v7012 = vadd.f32 0.0, %v7011
        %v7013 = vpop.f32.mrf.mxu0
        %7014 = vmatprep.mubr.f32.mxu0 0.0
        %7015 = vmatmul.mubr.f32.gmra.mxu0 %v6906
        %v7016 = vpop.f32.mrf.mxu0
        %v7017 = vadd.f32 0.0, %v7016
        %v7018 = vpop.f32.mrf.mxu0
        %7019 = vmatprep.mubr.f32.mxu0 0.0
        %7020 = vmatmul.mubr.f32.gmra.mxu0 %v6908
        %v7021 = vpop.f32.mrf.mxu0
        %v7022 = vadd.f32 0.0, %v7021
        %v7023 = vpop.f32.mrf.mxu0
        %7024 = vmatprep.mubr.f32.mxu0 0.0
        %7025 = vmatmul.mubr.f32.gmra.mxu0 %v6910
        %v7026 = vpop.f32.mrf.mxu0
        %v7027 = vadd.f32 0.0, %v7026
        %v7028 = vpop.f32.mrf.mxu0
        %7029 = vmatprep.mubr.f32.mxu0 0.0
        %7030 = vmatmul.mubr.f32.gmra.mxu0 %v6912
        %v7031 = vpop.f32.mrf.mxu0
        %v7032 = vadd.f32 0.0, %v7031
        %v7033 = vpop.f32.mrf.mxu0
        %7034 = vmatprep.mubr.f32.mxu0 0.0
        %7035 = vmatmul.mubr.f32.gmra.mxu0 %v6914
        %v7036 = vpop.f32.mrf.mxu0
        %v7037 = vadd.f32 0.0, %v7036
        %v7038 = vpop.f32.mrf.mxu0
        %7039 = vmatprep.mubr.f32.mxu0 0.0
        %7040 = vmatmul.mubr.f32.gmra.mxu0 %v6916
        %v7041 = vpop.f32.mrf.mxu0
        %v7042 = vadd.f32 0.0, %v7041
        %v7043 = vpop.f32.mrf.mxu0
        %7044 = vmatprep.mubr.f32.mxu0 0.0
        %7045 = vmatmul.mubr.f32.gmra.mxu0 %v6918
        %v7046 = vpop.f32.mrf.mxu0
        %v7047 = vadd.f32 0.0, %v7046
        %v7048 = vpop.f32.mrf.mxu0
        %7049 = vmatprep.mubr.f32.mxu0 0.0
        %7050 = vmatmul.mubr.f32.gmra.mxu0 %v6920
        %v7051 = vpop.f32.mrf.mxu0
        %v7052 = vadd.f32 0.0, %v7051
        %v7053 = vpop.f32.mrf.mxu0
        %7054 = vmatprep.mubr.f32.mxu0 0.0
        %7055 = vmatmul.mubr.f32.gmra.mxu0 %v6922
        %v7056 = vpop.f32.mrf.mxu0
        %v7057 = vadd.f32 0.0, %v7056
        %v7058 = vpop.f32.mrf.mxu0
        %7059 = vmatprep.mubr.f32.mxu0 0.0
        %7060 = vmatmul.mubr.f32.gmra.mxu0 %v6924
        %v7061 = vpop.f32.mrf.mxu0
        %v7062 = vadd.f32 0.0, %v7061
        %v7063 = vpop.f32.mrf.mxu0
        %7064 = vmatprep.mubr.f32.mxu0 0.0
        %7065 = vmatmul.mubr.f32.gmra.mxu0 %v6926
        %v7066 = vpop.f32.mrf.mxu0
        %v7067 = vadd.f32 0.0, %v7066
        %v7068 = vpop.f32.mrf.mxu0
        %7069 = vmatprep.mubr.f32.mxu0 0.0
        %7070 = vmatmul.mubr.f32.gmra.mxu0 %v6928
        %v7071 = vpop.f32.mrf.mxu0
        %v7072 = vadd.f32 0.0, %v7071
        %v7073 = vpop.f32.mrf.mxu0
        %7074 = vdwg.mxu0
        %v7075 = vadd.f32 %v4410, %v6997
        %v7076 = vadd.f32 %v4415, %v7002
        %v7077 = vadd.f32 %v4420, %v7007
        %v7078 = vadd.f32 %v4425, %v7012
        %v7079 = vadd.f32 %v4430, %v7017
        %v7080 = vadd.f32 %v4435, %v7022
        %v7081 = vadd.f32 %v4440, %v7027
        %v7082 = vadd.f32 %v4445, %v7032
        %v7083 = vadd.f32 %v4450, %v7037
        %v7084 = vadd.f32 %v4455, %v7042
        %v7085 = vadd.f32 %v4460, %v7047
        %v7086 = vadd.f32 %v4465, %v7052
        %v7087 = vadd.f32 %v4470, %v7057
        %v7088 = vadd.f32 %v4475, %v7062
        %v7089 = vadd.f32 %v4480, %v7067
        %v7090 = vadd.f32 %v4485, %v7072
        %v7091 = vxor.u32 %v7075, 2147483648
        %v7092 = vxor.u32 %v7076, 2147483648
        %v7093 = vxor.u32 %v7077, 2147483648
        %v7094 = vxor.u32 %v7078, 2147483648
        %v7095 = vxor.u32 %v7079, 2147483648
        %v7096 = vxor.u32 %v7080, 2147483648
        %v7097 = vxor.u32 %v7081, 2147483648
        %v7098 = vxor.u32 %v7082, 2147483648
        %v7099 = vxor.u32 %v7083, 2147483648
        %v7100 = vxor.u32 %v7084, 2147483648
        %v7101 = vxor.u32 %v7085, 2147483648
        %v7102 = vxor.u32 %v7086, 2147483648
        %v7103 = vxor.u32 %v7087, 2147483648
        %v7104 = vxor.u32 %v7088, 2147483648
        %v7105 = vxor.u32 %v7089, 2147483648
        %v7106 = vxor.u32 %v7090, 2147483648
        %v7107 = vmul.f32 %v7091, 1.442695
        %v7108 = vpow.pop %v7107
        %v7109 = vmul.f32 %v7092, 1.442695
        %v7110 = vpow.pop %v7109
        %v7111 = vmul.f32 %v7093, 1.442695
        %v7112 = vpow.pop %v7111
        %v7113 = vmul.f32 %v7094, 1.442695
        %v7114 = vpow.pop %v7113
        %v7115 = vmul.f32 %v7095, 1.442695
        %v7116 = vpow.pop %v7115
        %v7117 = vmul.f32 %v7096, 1.442695
        %v7118 = vpow.pop %v7117
        %v7119 = vmul.f32 %v7097, 1.442695
        %v7120 = vpow.pop %v7119
        %v7121 = vmul.f32 %v7098, 1.442695
        %v7122 = vpow.pop %v7121
        %v7123 = vmul.f32 %v7099, 1.442695
        %v7124 = vpow.pop %v7123
        %v7125 = vmul.f32 %v7100, 1.442695
        %v7126 = vpow.pop %v7125
        %v7127 = vmul.f32 %v7101, 1.442695
        %v7128 = vpow.pop %v7127
        %v7129 = vmul.f32 %v7102, 1.442695
        %v7130 = vpow.pop %v7129
        %v7131 = vmul.f32 %v7103, 1.442695
        %v7132 = vpow.pop %v7131
        %v7133 = vmul.f32 %v7104, 1.442695
        %v7134 = vpow.pop %v7133
        %v7135 = vmul.f32 %v7105, 1.442695
        %v7136 = vpow.pop %v7135
        %v7137 = vmul.f32 %v7106, 1.442695
        %v7138 = vpow.pop %v7137
        %v7139 = vadd.f32 %v7108, 1.0
        %v7140 = vadd.f32 %v7110, 1.0
        %v7141 = vadd.f32 %v7112, 1.0
        %v7142 = vadd.f32 %v7114, 1.0
        %v7143 = vadd.f32 %v7116, 1.0
        %v7144 = vadd.f32 %v7118, 1.0
        %v7145 = vadd.f32 %v7120, 1.0
        %v7146 = vadd.f32 %v7122, 1.0
        %v7147 = vadd.f32 %v7124, 1.0
        %v7148 = vadd.f32 %v7126, 1.0
        %v7149 = vadd.f32 %v7128, 1.0
        %v7150 = vadd.f32 %v7130, 1.0
        %v7151 = vadd.f32 %v7132, 1.0
        %v7152 = vadd.f32 %v7134, 1.0
        %v7153 = vadd.f32 %v7136, 1.0
        %v7154 = vadd.f32 %v7138, 1.0
        %v7155 = vrcp.pop %v7139
        %v7156 = vmul.f32 1.0, %v7155
        %v7157 = vrcp.pop %v7140
        %v7158 = vmul.f32 1.0, %v7157
        %v7159 = vrcp.pop %v7141
        %v7160 = vmul.f32 1.0, %v7159
        %v7161 = vrcp.pop %v7142
        %v7162 = vmul.f32 1.0, %v7161
        %v7163 = vrcp.pop %v7143
        %v7164 = vmul.f32 1.0, %v7163
        %v7165 = vrcp.pop %v7144
        %v7166 = vmul.f32 1.0, %v7165
        %v7167 = vrcp.pop %v7145
        %v7168 = vmul.f32 1.0, %v7167
        %v7169 = vrcp.pop %v7146
        %v7170 = vmul.f32 1.0, %v7169
        %v7171 = vrcp.pop %v7147
        %v7172 = vmul.f32 1.0, %v7171
        %v7173 = vrcp.pop %v7148
        %v7174 = vmul.f32 1.0, %v7173
        %v7175 = vrcp.pop %v7149
        %v7176 = vmul.f32 1.0, %v7175
        %v7177 = vrcp.pop %v7150
        %v7178 = vmul.f32 1.0, %v7177
        %v7179 = vrcp.pop %v7151
        %v7180 = vmul.f32 1.0, %v7179
        %v7181 = vrcp.pop %v7152
        %v7182 = vmul.f32 1.0, %v7181
        %v7183 = vrcp.pop %v7153
        %v7184 = vmul.f32 1.0, %v7183
        %v7185 = vrcp.pop %v7154
        %v7186 = vmul.f32 1.0, %v7185
        %v7187 = vtanh.pop %v7075
        %v7188 = vtanh.pop %v7076
        %v7189 = vtanh.pop %v7077
        %v7190 = vtanh.pop %v7078
        %v7191 = vtanh.pop %v7079
        %v7192 = vtanh.pop %v7080
        %v7193 = vtanh.pop %v7081
        %v7194 = vtanh.pop %v7082
        %v7195 = vtanh.pop %v7083
        %v7196 = vtanh.pop %v7084
        %v7197 = vtanh.pop %v7085
        %v7198 = vtanh.pop %v7086
        %v7199 = vtanh.pop %v7087
        %v7200 = vtanh.pop %v7088
        %v7201 = vtanh.pop %v7089
        %v7202 = vtanh.pop %v7090
        %v7203 = vmul.f32 %v7156, %v6834
        %v7204 = vmul.f32 %v7158, %v6835
        %v7205 = vmul.f32 %v7160, %v6836
        %v7206 = vmul.f32 %v7162, %v6837
        %v7207 = vmul.f32 %v7164, %v6838
        %v7208 = vmul.f32 %v7166, %v6839
        %v7209 = vmul.f32 %v7168, %v6840
        %v7210 = vmul.f32 %v7170, %v6841
        %v7211 = vmul.f32 %v7172, %v6842
        %v7212 = vmul.f32 %v7174, %v6843
        %v7213 = vmul.f32 %v7176, %v6844
        %v7214 = vmul.f32 %v7178, %v6845
        %v7215 = vmul.f32 %v7180, %v6846
        %v7216 = vmul.f32 %v7182, %v6847
        %v7217 = vmul.f32 %v7184, %v6848
        %v7218 = vmul.f32 %v7186, %v6849
        %7235 = vrot.lane.b32.xlu0 %v7187, 64
        %v7236 = vpop.permute.xlu0 %7235
        %7237 = vrot.lane.b32.xlu0 %v7188, 64
        %v7238 = vpop.permute.xlu0 %7237
        %7239 = vrot.lane.b32.xlu0 %v7189, 64
        %v7240 = vpop.permute.xlu0 %7239
        %7241 = vrot.lane.b32.xlu0 %v7190, 64
        %v7242 = vpop.permute.xlu0 %7241
        %7243 = vrot.lane.b32.xlu0 %v7191, 64
        %v7244 = vpop.permute.xlu0 %7243
        %7245 = vrot.lane.b32.xlu0 %v7192, 64
        %v7246 = vpop.permute.xlu0 %7245
        %7247 = vrot.lane.b32.xlu0 %v7193, 64
        %v7248 = vpop.permute.xlu0 %7247
        %7249 = vrot.lane.b32.xlu0 %v7194, 64
        %v7250 = vpop.permute.xlu0 %7249
        %7251 = vrot.lane.b32.xlu0 %v7195, 64
        %v7252 = vpop.permute.xlu0 %7251
        %7253 = vrot.lane.b32.xlu0 %v7196, 64
        %v7254 = vpop.permute.xlu0 %7253
        %7255 = vrot.lane.b32.xlu0 %v7197, 64
        %v7256 = vpop.permute.xlu0 %7255
        %7257 = vrot.lane.b32.xlu0 %v7198, 64
        %v7258 = vpop.permute.xlu0 %7257
        %7259 = vrot.lane.b32.xlu0 %v7199, 64
        %v7260 = vpop.permute.xlu0 %7259
        %7261 = vrot.lane.b32.xlu0 %v7200, 64
        %v7262 = vpop.permute.xlu0 %7261
        %7263 = vrot.lane.b32.xlu0 %v7201, 64
        %v7264 = vpop.permute.xlu0 %7263
        %7265 = vrot.lane.b32.xlu0 %v7202, 64
        %v7266 = vpop.permute.xlu0 %7265
        %v7283 = vmul.f32 %v7156, %v7236
        %v7284 = vmul.f32 %v7158, %v7238
        %v7285 = vmul.f32 %v7160, %v7240
        %v7286 = vmul.f32 %v7162, %v7242
        %v7287 = vmul.f32 %v7164, %v7244
        %v7288 = vmul.f32 %v7166, %v7246
        %v7289 = vmul.f32 %v7168, %v7248
        %v7290 = vmul.f32 %v7170, %v7250
        %v7291 = vmul.f32 %v7172, %v7252
        %v7292 = vmul.f32 %v7174, %v7254
        %v7293 = vmul.f32 %v7176, %v7256
        %v7294 = vmul.f32 %v7178, %v7258
        %v7295 = vmul.f32 %v7180, %v7260
        %v7296 = vmul.f32 %v7182, %v7262
        %v7297 = vmul.f32 %v7184, %v7264
        %v7298 = vmul.f32 %v7186, %v7266
        %7315 = vrot.lane.b32.xlu0 %v7283, 32
        %v7316 = vpop.permute.xlu0 %7315
        %7317 = vrot.lane.b32.xlu0 %v7284, 32
        %v7318 = vpop.permute.xlu0 %7317
        %7319 = vrot.lane.b32.xlu0 %v7285, 32
        %v7320 = vpop.permute.xlu0 %7319
        %7321 = vrot.lane.b32.xlu0 %v7286, 32
        %v7322 = vpop.permute.xlu0 %7321
        %7323 = vrot.lane.b32.xlu0 %v7287, 32
        %v7324 = vpop.permute.xlu0 %7323
        %7325 = vrot.lane.b32.xlu0 %v7288, 32
        %v7326 = vpop.permute.xlu0 %7325
        %7327 = vrot.lane.b32.xlu0 %v7289, 32
        %v7328 = vpop.permute.xlu0 %7327
        %7329 = vrot.lane.b32.xlu0 %v7290, 32
        %v7330 = vpop.permute.xlu0 %7329
        %7331 = vrot.lane.b32.xlu0 %v7291, 32
        %v7332 = vpop.permute.xlu0 %7331
        %7333 = vrot.lane.b32.xlu0 %v7292, 32
        %v7334 = vpop.permute.xlu0 %7333
        %7335 = vrot.lane.b32.xlu0 %v7293, 32
        %v7336 = vpop.permute.xlu0 %7335
        %7337 = vrot.lane.b32.xlu0 %v7294, 32
        %v7338 = vpop.permute.xlu0 %7337
        %7339 = vrot.lane.b32.xlu0 %v7295, 32
        %v7340 = vpop.permute.xlu0 %7339
        %7341 = vrot.lane.b32.xlu0 %v7296, 32
        %v7342 = vpop.permute.xlu0 %7341
        %7343 = vrot.lane.b32.xlu0 %v7297, 32
        %v7344 = vpop.permute.xlu0 %7343
        %7345 = vrot.lane.b32.xlu0 %v7298, 32
        %v7346 = vpop.permute.xlu0 %7345
        %v7363 = vadd.f32 %v7203, %v7316
        %v7364 = vadd.f32 %v7204, %v7318
        %v7365 = vadd.f32 %v7205, %v7320
        %v7366 = vadd.f32 %v7206, %v7322
        %v7367 = vadd.f32 %v7207, %v7324
        %v7368 = vadd.f32 %v7208, %v7326
        %v7369 = vadd.f32 %v7209, %v7328
        %v7370 = vadd.f32 %v7210, %v7330
        %v7371 = vadd.f32 %v7211, %v7332
        %v7372 = vadd.f32 %v7212, %v7334
        %v7373 = vadd.f32 %v7213, %v7336
        %v7374 = vadd.f32 %v7214, %v7338
        %v7375 = vadd.f32 %v7215, %v7340
        %v7376 = vadd.f32 %v7216, %v7342
        %v7377 = vadd.f32 %v7217, %v7344
        %v7378 = vadd.f32 %v7218, %v7346
        %v7379 = vtanh.pop %v7363
        %v7380 = vtanh.pop %v7364
        %v7381 = vtanh.pop %v7365
        %v7382 = vtanh.pop %v7366
        %v7383 = vtanh.pop %v7367
        %v7384 = vtanh.pop %v7368
        %v7385 = vtanh.pop %v7369
        %v7386 = vtanh.pop %v7370
        %v7387 = vtanh.pop %v7371
        %v7388 = vtanh.pop %v7372
        %v7389 = vtanh.pop %v7373
        %v7390 = vtanh.pop %v7374
        %v7391 = vtanh.pop %v7375
        %v7392 = vtanh.pop %v7376
        %v7393 = vtanh.pop %v7377
        %v7394 = vtanh.pop %v7378
        %7411 = vrot.lane.b32.xlu0 %v7379, 64
        %v7412 = vpop.permute.xlu0 %7411
        %7413 = vrot.lane.b32.xlu0 %v7380, 64
        %v7414 = vpop.permute.xlu0 %7413
        %7415 = vrot.lane.b32.xlu0 %v7381, 64
        %v7416 = vpop.permute.xlu0 %7415
        %7417 = vrot.lane.b32.xlu0 %v7382, 64
        %v7418 = vpop.permute.xlu0 %7417
        %7419 = vrot.lane.b32.xlu0 %v7383, 64
        %v7420 = vpop.permute.xlu0 %7419
        %7421 = vrot.lane.b32.xlu0 %v7384, 64
        %v7422 = vpop.permute.xlu0 %7421
        %7423 = vrot.lane.b32.xlu0 %v7385, 64
        %v7424 = vpop.permute.xlu0 %7423
        %7425 = vrot.lane.b32.xlu0 %v7386, 64
        %v7426 = vpop.permute.xlu0 %7425
        %7427 = vrot.lane.b32.xlu0 %v7387, 64
        %v7428 = vpop.permute.xlu0 %7427
        %7429 = vrot.lane.b32.xlu0 %v7388, 64
        %v7430 = vpop.permute.xlu0 %7429
        %7431 = vrot.lane.b32.xlu0 %v7389, 64
        %v7432 = vpop.permute.xlu0 %7431
        %7433 = vrot.lane.b32.xlu0 %v7390, 64
        %v7434 = vpop.permute.xlu0 %7433
        %7435 = vrot.lane.b32.xlu0 %v7391, 64
        %v7436 = vpop.permute.xlu0 %7435
        %7437 = vrot.lane.b32.xlu0 %v7392, 64
        %v7438 = vpop.permute.xlu0 %7437
        %7439 = vrot.lane.b32.xlu0 %v7393, 64
        %v7440 = vpop.permute.xlu0 %7439
        %7441 = vrot.lane.b32.xlu0 %v7394, 64
        %v7442 = vpop.permute.xlu0 %7441
        %v7459 = vmul.f32 %v7156, %v7412
        %v7460 = vmul.f32 %v7158, %v7414
        %v7461 = vmul.f32 %v7160, %v7416
        %v7462 = vmul.f32 %v7162, %v7418
        %v7463 = vmul.f32 %v7164, %v7420
        %v7464 = vmul.f32 %v7166, %v7422
        %v7465 = vmul.f32 %v7168, %v7424
        %v7466 = vmul.f32 %v7170, %v7426
        %v7467 = vmul.f32 %v7172, %v7428
        %v7468 = vmul.f32 %v7174, %v7430
        %v7469 = vmul.f32 %v7176, %v7432
        %v7470 = vmul.f32 %v7178, %v7434
        %v7471 = vmul.f32 %v7180, %v7436
        %v7472 = vmul.f32 %v7182, %v7438
        %v7473 = vmul.f32 %v7184, %v7440
        %v7474 = vmul.f32 %v7186, %v7442
        %vm7475 = vcmp.gt.s32.totalorder %v2520, 3
        %vm7476 = vcmp.gt.s32.totalorder %v2533, 3
        %vm7477 = vcmp.gt.s32.totalorder %v2546, 3
        %vm7478 = vcmp.gt.s32.totalorder %v2559, 3
        %vm7479 = vcmp.gt.s32.totalorder %v2572, 3
        %vm7480 = vcmp.gt.s32.totalorder %v2585, 3
        %vm7481 = vcmp.gt.s32.totalorder %v2598, 3
        %vm7482 = vcmp.gt.s32.totalorder %v2611, 3
        %vm7483 = vcmp.gt.s32.totalorder %v2624, 3
        %vm7484 = vcmp.gt.s32.totalorder %v2637, 3
        %vm7485 = vcmp.gt.s32.totalorder %v2650, 3
        %vm7486 = vcmp.gt.s32.totalorder %v2663, 3
        %vm7487 = vcmp.gt.s32.totalorder %v2676, 3
        %vm7488 = vcmp.gt.s32.totalorder %v2689, 3
        %vm7489 = vcmp.gt.s32.totalorder %v2702, 3
        %vm7490 = vcmp.gt.s32.totalorder %v2715, 3
        %v7491 = vsel %vm7475, 1, 0
        %v7492 = vsel %vm7476, 1, 0
        %v7493 = vsel %vm7477, 1, 0
        %v7494 = vsel %vm7478, 1, 0
        %v7495 = vsel %vm7479, 1, 0
        %v7496 = vsel %vm7480, 1, 0
        %v7497 = vsel %vm7481, 1, 0
        %v7498 = vsel %vm7482, 1, 0
        %v7499 = vsel %vm7483, 1, 0
        %v7500 = vsel %vm7484, 1, 0
        %v7501 = vsel %vm7485, 1, 0
        %v7502 = vsel %vm7486, 1, 0
        %v7503 = vsel %vm7487, 1, 0
        %v7504 = vsel %vm7488, 1, 0
        %v7505 = vsel %vm7489, 1, 0
        %v7506 = vsel %vm7490, 1, 0
        %vm7507 = vcmp.eq.s32.totalorder %v7491, 1
        %vm7508 = vcmp.eq.s32.totalorder %v7492, 1
        %vm7509 = vcmp.eq.s32.totalorder %v7493, 1
        %vm7510 = vcmp.eq.s32.totalorder %v7494, 1
        %vm7511 = vcmp.eq.s32.totalorder %v7495, 1
        %vm7512 = vcmp.eq.s32.totalorder %v7496, 1
        %vm7513 = vcmp.eq.s32.totalorder %v7497, 1
        %vm7514 = vcmp.eq.s32.totalorder %v7498, 1
        %vm7515 = vcmp.eq.s32.totalorder %v7499, 1
        %vm7516 = vcmp.eq.s32.totalorder %v7500, 1
        %vm7517 = vcmp.eq.s32.totalorder %v7501, 1
        %vm7518 = vcmp.eq.s32.totalorder %v7502, 1
        %vm7519 = vcmp.eq.s32.totalorder %v7503, 1
        %vm7520 = vcmp.eq.s32.totalorder %v7504, 1
        %vm7521 = vcmp.eq.s32.totalorder %v7505, 1
        %vm7522 = vcmp.eq.s32.totalorder %v7506, 1
        %v7523 = vsel %vm7507, %v7459, %v6818
        %v7524 = vsel %vm7508, %v7460, %v6819
        %v7525 = vsel %vm7509, %v7461, %v6820
        %v7526 = vsel %vm7510, %v7462, %v6821
        %v7527 = vsel %vm7511, %v7463, %v6822
        %v7528 = vsel %vm7512, %v7464, %v6823
        %v7529 = vsel %vm7513, %v7465, %v6824
        %v7530 = vsel %vm7514, %v7466, %v6825
        %v7531 = vsel %vm7515, %v7467, %v6826
        %v7532 = vsel %vm7516, %v7468, %v6827
        %v7533 = vsel %vm7517, %v7469, %v6828
        %v7534 = vsel %vm7518, %v7470, %v6829
        %v7535 = vsel %vm7519, %v7471, %v6830
        %v7536 = vsel %vm7520, %v7472, %v6831
        %v7537 = vsel %vm7521, %v7473, %v6832
        %v7538 = vsel %vm7522, %v7474, %v6833
        %v7539 = vsel %vm7507, %v7363, %v6834
        %v7540 = vsel %vm7508, %v7364, %v6835
        %v7541 = vsel %vm7509, %v7365, %v6836
        %v7542 = vsel %vm7510, %v7366, %v6837
        %v7543 = vsel %vm7511, %v7367, %v6838
        %v7544 = vsel %vm7512, %v7368, %v6839
        %v7545 = vsel %vm7513, %v7369, %v6840
        %v7546 = vsel %vm7514, %v7370, %v6841
        %v7547 = vsel %vm7515, %v7371, %v6842
        %v7548 = vsel %vm7516, %v7372, %v6843
        %v7549 = vsel %vm7517, %v7373, %v6844
        %v7550 = vsel %vm7518, %v7374, %v6845
        %v7551 = vsel %vm7519, %v7375, %v6846
        %v7552 = vsel %vm7520, %v7376, %v6847
        %v7553 = vsel %vm7521, %v7377, %v6848
        %v7554 = vsel %vm7522, %v7378, %v6849
        %7571 = vrot.lane.b32.xlu0 %v7523, 32
        %v7572 = vpop.permute.xlu0 %7571
        %7573 = vrot.lane.b32.xlu0 %v7524, 32
        %v7574 = vpop.permute.xlu0 %7573
        %7575 = vrot.lane.b32.xlu0 %v7525, 32
        %v7576 = vpop.permute.xlu0 %7575
        %7577 = vrot.lane.b32.xlu0 %v7526, 32
        %v7578 = vpop.permute.xlu0 %7577
        %7579 = vrot.lane.b32.xlu0 %v7527, 32
        %v7580 = vpop.permute.xlu0 %7579
        %7581 = vrot.lane.b32.xlu0 %v7528, 32
        %v7582 = vpop.permute.xlu0 %7581
        %7583 = vrot.lane.b32.xlu0 %v7529, 32
        %v7584 = vpop.permute.xlu0 %7583
        %7585 = vrot.lane.b32.xlu0 %v7530, 32
        %v7586 = vpop.permute.xlu0 %7585
        %7587 = vrot.lane.b32.xlu0 %v7531, 32
        %v7588 = vpop.permute.xlu0 %7587
        %7589 = vrot.lane.b32.xlu0 %v7532, 32
        %v7590 = vpop.permute.xlu0 %7589
        %7591 = vrot.lane.b32.xlu0 %v7533, 32
        %v7592 = vpop.permute.xlu0 %7591
        %7593 = vrot.lane.b32.xlu0 %v7534, 32
        %v7594 = vpop.permute.xlu0 %7593
        %7595 = vrot.lane.b32.xlu0 %v7535, 32
        %v7596 = vpop.permute.xlu0 %7595
        %7597 = vrot.lane.b32.xlu0 %v7536, 32
        %v7598 = vpop.permute.xlu0 %7597
        %7599 = vrot.lane.b32.xlu0 %v7537, 32
        %v7600 = vpop.permute.xlu0 %7599
        %7601 = vrot.lane.b32.xlu0 %v7538, 32
        %v7602 = vpop.permute.xlu0 %7601
        %v7603 = vsel %vm2153, %v7572, 0
        %v7605 = vsel %vm2153, %v7574, 0
        %v7607 = vsel %vm2153, %v7576, 0
        %v7609 = vsel %vm2153, %v7578, 0
        %v7611 = vsel %vm2153, %v7580, 0
        %v7613 = vsel %vm2153, %v7582, 0
        %v7615 = vsel %vm2153, %v7584, 0
        %v7617 = vsel %vm2153, %v7586, 0
        %v7619 = vsel %vm2153, %v7588, 0
        %v7621 = vsel %vm2153, %v7590, 0
        %v7623 = vsel %vm2153, %v7592, 0
        %v7625 = vsel %vm2153, %v7594, 0
        %v7627 = vsel %vm2153, %v7596, 0
        %v7629 = vsel %vm2153, %v7598, 0
        %v7631 = vsel %vm2153, %v7600, 0
        %v7633 = vsel %vm2153, %v7602, 0
        %7635 = vmatprep.subr.mxu0 0.0
        %7636 = vmatpush1.msra.mxu0 0.0
        %7637 = vmatprep.subr.mxu0 0.0
        %7638 = vmatpush1.msra.mxu0 0.0
        %7639 = vmatprep.subr.mxu0 0.0
        %7640 = vmatpush1.msra.mxu0 0.0
        %7641 = vmatprep.subr.mxu0 0.0
        %7642 = vmatpush1.msra.mxu0 0.0
        %7643 = vmatprep.subr.mxu0 0.0
        %7644 = vmatpush1.msra.mxu0 0.0
        %7645 = vmatprep.subr.mxu0 0.0
        %7646 = vmatpush1.msra.mxu0 0.0
        %7647 = vmatprep.subr.mxu0 0.0
        %7648 = vmatpush1.msra.mxu0 0.0
        %7649 = vmatprep.subr.mxu0 0.0
        %7650 = vmatpush1.msra.mxu0 0.0
        %7651 = vmatprep.subr.mxu0 0.0
        %7652 = vmatpush1.msra.mxu0 0.0
        %7653 = vmatprep.subr.mxu0 0.0
        %7654 = vmatpush1.msra.mxu0 0.0
        %7655 = vmatprep.subr.mxu0 0.0
        %7656 = vmatpush1.msra.mxu0 0.0
        %7657 = vmatprep.subr.mxu0 0.0
        %7658 = vmatpush1.msra.mxu0 0.0
        %7659 = vmatprep.subr.mxu0 0.0
        %7660 = vmatpush1.msra.mxu0 %v4811
        %7661 = vmatprep.subr.mxu0 0.0
        %7662 = vmatpush1.msra.mxu0 %v4810
        %7663 = vmatprep.subr.mxu0 0.0
        %7664 = vmatpush1.msra.mxu0 %v4809
        %7665 = vmatprep.subr.mxu0 0.0
        %7666 = vmatpush1.msra.mxu0 %v4808
        %7667 = vmatprep.subr.mxu0 0.0
        %7668 = vmatpush2.msra.mxu0 0.0
        %7669 = vmatprep.subr.mxu0 0.0
        %7670 = vmatpush2.msra.mxu0 0.0
        %7671 = vmatprep.subr.mxu0 0.0
        %7672 = vmatpush2.msra.mxu0 0.0
        %7673 = vmatprep.subr.mxu0 0.0
        %7674 = vmatpush2.msra.mxu0 0.0
        %7675 = vmatprep.subr.mxu0 0.0
        %7676 = vmatpush2.msra.mxu0 0.0
        %7677 = vmatprep.subr.mxu0 0.0
        %7678 = vmatpush2.msra.mxu0 0.0
        %7679 = vmatprep.subr.mxu0 0.0
        %7680 = vmatpush2.msra.mxu0 0.0
        %7681 = vmatprep.subr.mxu0 0.0
        %7682 = vmatpush2.msra.mxu0 0.0
        %7683 = vmatprep.subr.mxu0 0.0
        %7684 = vmatpush2.msra.mxu0 0.0
        %7685 = vmatprep.subr.mxu0 0.0
        %7686 = vmatpush2.msra.mxu0 0.0
        %7687 = vmatprep.subr.mxu0 0.0
        %7688 = vmatpush2.msra.mxu0 0.0
        %7689 = vmatprep.subr.mxu0 0.0
        %7690 = vmatpush2.msra.mxu0 0.0
        %7691 = vmatprep.subr.mxu0 0.0
        %7692 = vmatpush2.msra.mxu0 0.0
        %7693 = vmatprep.subr.mxu0 0.0
        %7694 = vmatpush2.msra.mxu0 0.0
        %7695 = vmatprep.subr.mxu0 0.0
        %7696 = vmatpush2.msra.mxu0 0.0
        %7697 = vmatprep.subr.mxu0 0.0
        %7698 = vmatpush2.msra.mxu0 0.0
        %7699 = vmatprep.mubr.f32.mxu0 0.0
        %7700 = vmatmul.mubr.f32.gmra.mxu0 %v7603
        %v7701 = vpop.f32.mrf.mxu0
        %v7702 = vadd.f32 0.0, %v7701
        %v7703 = vpop.f32.mrf.mxu0
        %7704 = vmatprep.mubr.f32.mxu0 0.0
        %7705 = vmatmul.mubr.f32.gmra.mxu0 %v7605
        %v7706 = vpop.f32.mrf.mxu0
        %v7707 = vadd.f32 0.0, %v7706
        %v7708 = vpop.f32.mrf.mxu0
        %7709 = vmatprep.mubr.f32.mxu0 0.0
        %7710 = vmatmul.mubr.f32.gmra.mxu0 %v7607
        %v7711 = vpop.f32.mrf.mxu0
        %v7712 = vadd.f32 0.0, %v7711
        %v7713 = vpop.f32.mrf.mxu0
        %7714 = vmatprep.mubr.f32.mxu0 0.0
        %7715 = vmatmul.mubr.f32.gmra.mxu0 %v7609
        %v7716 = vpop.f32.mrf.mxu0
        %v7717 = vadd.f32 0.0, %v7716
        %v7718 = vpop.f32.mrf.mxu0
        %7719 = vmatprep.mubr.f32.mxu0 0.0
        %7720 = vmatmul.mubr.f32.gmra.mxu0 %v7611
        %v7721 = vpop.f32.mrf.mxu0
        %v7722 = vadd.f32 0.0, %v7721
        %v7723 = vpop.f32.mrf.mxu0
        %7724 = vmatprep.mubr.f32.mxu0 0.0
        %7725 = vmatmul.mubr.f32.gmra.mxu0 %v7613
        %v7726 = vpop.f32.mrf.mxu0
        %v7727 = vadd.f32 0.0, %v7726
        %v7728 = vpop.f32.mrf.mxu0
        %7729 = vmatprep.mubr.f32.mxu0 0.0
        %7730 = vmatmul.mubr.f32.gmra.mxu0 %v7615
        %v7731 = vpop.f32.mrf.mxu0
        %v7732 = vadd.f32 0.0, %v7731
        %v7733 = vpop.f32.mrf.mxu0
        %7734 = vmatprep.mubr.f32.mxu0 0.0
        %7735 = vmatmul.mubr.f32.gmra.mxu0 %v7617
        %v7736 = vpop.f32.mrf.mxu0
        %v7737 = vadd.f32 0.0, %v7736
        %v7738 = vpop.f32.mrf.mxu0
        %7739 = vmatprep.mubr.f32.mxu0 0.0
        %7740 = vmatmul.mubr.f32.gmra.mxu0 %v7619
        %v7741 = vpop.f32.mrf.mxu0
        %v7742 = vadd.f32 0.0, %v7741
        %v7743 = vpop.f32.mrf.mxu0
        %7744 = vmatprep.mubr.f32.mxu0 0.0
        %7745 = vmatmul.mubr.f32.gmra.mxu0 %v7621
        %v7746 = vpop.f32.mrf.mxu0
        %v7747 = vadd.f32 0.0, %v7746
        %v7748 = vpop.f32.mrf.mxu0
        %7749 = vmatprep.mubr.f32.mxu0 0.0
        %7750 = vmatmul.mubr.f32.gmra.mxu0 %v7623
        %v7751 = vpop.f32.mrf.mxu0
        %v7752 = vadd.f32 0.0, %v7751
        %v7753 = vpop.f32.mrf.mxu0
        %7754 = vmatprep.mubr.f32.mxu0 0.0
        %7755 = vmatmul.mubr.f32.gmra.mxu0 %v7625
        %v7756 = vpop.f32.mrf.mxu0
        %v7757 = vadd.f32 0.0, %v7756
        %v7758 = vpop.f32.mrf.mxu0
        %7759 = vmatprep.mubr.f32.mxu0 0.0
        %7760 = vmatmul.mubr.f32.gmra.mxu0 %v7627
        %v7761 = vpop.f32.mrf.mxu0
        %v7762 = vadd.f32 0.0, %v7761
        %v7763 = vpop.f32.mrf.mxu0
        %7764 = vmatprep.mubr.f32.mxu0 0.0
        %7765 = vmatmul.mubr.f32.gmra.mxu0 %v7629
        %v7766 = vpop.f32.mrf.mxu0
        %v7767 = vadd.f32 0.0, %v7766
        %v7768 = vpop.f32.mrf.mxu0
        %7769 = vmatprep.mubr.f32.mxu0 0.0
        %7770 = vmatmul.mubr.f32.gmra.mxu0 %v7631
        %v7771 = vpop.f32.mrf.mxu0
        %v7772 = vadd.f32 0.0, %v7771
        %v7773 = vpop.f32.mrf.mxu0
        %7774 = vmatprep.mubr.f32.mxu0 0.0
        %7775 = vmatmul.mubr.f32.gmra.mxu0 %v7633
        %v7776 = vpop.f32.mrf.mxu0
        %v7777 = vadd.f32 0.0, %v7776
        %v7778 = vpop.f32.mrf.mxu0
        %7779 = vdwg.mxu0
        %v7780 = vadd.f32 %v4490, %v7702
        %v7781 = vadd.f32 %v4495, %v7707
        %v7782 = vadd.f32 %v4500, %v7712
        %v7783 = vadd.f32 %v4505, %v7717
        %v7784 = vadd.f32 %v4510, %v7722
        %v7785 = vadd.f32 %v4515, %v7727
        %v7786 = vadd.f32 %v4520, %v7732
        %v7787 = vadd.f32 %v4525, %v7737
        %v7788 = vadd.f32 %v4530, %v7742
        %v7789 = vadd.f32 %v4535, %v7747
        %v7790 = vadd.f32 %v4540, %v7752
        %v7791 = vadd.f32 %v4545, %v7757
        %v7792 = vadd.f32 %v4550, %v7762
        %v7793 = vadd.f32 %v4555, %v7767
        %v7794 = vadd.f32 %v4560, %v7772
        %v7795 = vadd.f32 %v4565, %v7777
        %v7796 = vxor.u32 %v7780, 2147483648
        %v7797 = vxor.u32 %v7781, 2147483648
        %v7798 = vxor.u32 %v7782, 2147483648
        %v7799 = vxor.u32 %v7783, 2147483648
        %v7800 = vxor.u32 %v7784, 2147483648
        %v7801 = vxor.u32 %v7785, 2147483648
        %v7802 = vxor.u32 %v7786, 2147483648
        %v7803 = vxor.u32 %v7787, 2147483648
        %v7804 = vxor.u32 %v7788, 2147483648
        %v7805 = vxor.u32 %v7789, 2147483648
        %v7806 = vxor.u32 %v7790, 2147483648
        %v7807 = vxor.u32 %v7791, 2147483648
        %v7808 = vxor.u32 %v7792, 2147483648
        %v7809 = vxor.u32 %v7793, 2147483648
        %v7810 = vxor.u32 %v7794, 2147483648
        %v7811 = vxor.u32 %v7795, 2147483648
        %v7812 = vmul.f32 %v7796, 1.442695
        %v7813 = vpow.pop %v7812
        %v7814 = vmul.f32 %v7797, 1.442695
        %v7815 = vpow.pop %v7814
        %v7816 = vmul.f32 %v7798, 1.442695
        %v7817 = vpow.pop %v7816
        %v7818 = vmul.f32 %v7799, 1.442695
        %v7819 = vpow.pop %v7818
        %v7820 = vmul.f32 %v7800, 1.442695
        %v7821 = vpow.pop %v7820
        %v7822 = vmul.f32 %v7801, 1.442695
        %v7823 = vpow.pop %v7822
        %v7824 = vmul.f32 %v7802, 1.442695
        %v7825 = vpow.pop %v7824
        %v7826 = vmul.f32 %v7803, 1.442695
        %v7827 = vpow.pop %v7826
        %v7828 = vmul.f32 %v7804, 1.442695
        %v7829 = vpow.pop %v7828
        %v7830 = vmul.f32 %v7805, 1.442695
        %v7831 = vpow.pop %v7830
        %v7832 = vmul.f32 %v7806, 1.442695
        %v7833 = vpow.pop %v7832
        %v7834 = vmul.f32 %v7807, 1.442695
        %v7835 = vpow.pop %v7834
        %v7836 = vmul.f32 %v7808, 1.442695
        %v7837 = vpow.pop %v7836
        %v7838 = vmul.f32 %v7809, 1.442695
        %v7839 = vpow.pop %v7838
        %v7840 = vmul.f32 %v7810, 1.442695
        %v7841 = vpow.pop %v7840
        %v7842 = vmul.f32 %v7811, 1.442695
        %v7843 = vpow.pop %v7842
        %v7844 = vadd.f32 %v7813, 1.0
        %v7845 = vadd.f32 %v7815, 1.0
        %v7846 = vadd.f32 %v7817, 1.0
        %v7847 = vadd.f32 %v7819, 1.0
        %v7848 = vadd.f32 %v7821, 1.0
        %v7849 = vadd.f32 %v7823, 1.0
        %v7850 = vadd.f32 %v7825, 1.0
        %v7851 = vadd.f32 %v7827, 1.0
        %v7852 = vadd.f32 %v7829, 1.0
        %v7853 = vadd.f32 %v7831, 1.0
        %v7854 = vadd.f32 %v7833, 1.0
        %v7855 = vadd.f32 %v7835, 1.0
        %v7856 = vadd.f32 %v7837, 1.0
        %v7857 = vadd.f32 %v7839, 1.0
        %v7858 = vadd.f32 %v7841, 1.0
        %v7859 = vadd.f32 %v7843, 1.0
        %v7860 = vrcp.pop %v7844
        %v7861 = vmul.f32 1.0, %v7860
        %v7862 = vrcp.pop %v7845
        %v7863 = vmul.f32 1.0, %v7862
        %v7864 = vrcp.pop %v7846
        %v7865 = vmul.f32 1.0, %v7864
        %v7866 = vrcp.pop %v7847
        %v7867 = vmul.f32 1.0, %v7866
        %v7868 = vrcp.pop %v7848
        %v7869 = vmul.f32 1.0, %v7868
        %v7870 = vrcp.pop %v7849
        %v7871 = vmul.f32 1.0, %v7870
        %v7872 = vrcp.pop %v7850
        %v7873 = vmul.f32 1.0, %v7872
        %v7874 = vrcp.pop %v7851
        %v7875 = vmul.f32 1.0, %v7874
        %v7876 = vrcp.pop %v7852
        %v7877 = vmul.f32 1.0, %v7876
        %v7878 = vrcp.pop %v7853
        %v7879 = vmul.f32 1.0, %v7878
        %v7880 = vrcp.pop %v7854
        %v7881 = vmul.f32 1.0, %v7880
        %v7882 = vrcp.pop %v7855
        %v7883 = vmul.f32 1.0, %v7882
        %v7884 = vrcp.pop %v7856
        %v7885 = vmul.f32 1.0, %v7884
        %v7886 = vrcp.pop %v7857
        %v7887 = vmul.f32 1.0, %v7886
        %v7888 = vrcp.pop %v7858
        %v7889 = vmul.f32 1.0, %v7888
        %v7890 = vrcp.pop %v7859
        %v7891 = vmul.f32 1.0, %v7890
        %v7892 = vtanh.pop %v7780
        %v7893 = vtanh.pop %v7781
        %v7894 = vtanh.pop %v7782
        %v7895 = vtanh.pop %v7783
        %v7896 = vtanh.pop %v7784
        %v7897 = vtanh.pop %v7785
        %v7898 = vtanh.pop %v7786
        %v7899 = vtanh.pop %v7787
        %v7900 = vtanh.pop %v7788
        %v7901 = vtanh.pop %v7789
        %v7902 = vtanh.pop %v7790
        %v7903 = vtanh.pop %v7791
        %v7904 = vtanh.pop %v7792
        %v7905 = vtanh.pop %v7793
        %v7906 = vtanh.pop %v7794
        %v7907 = vtanh.pop %v7795
        %v7908 = vmul.f32 %v7861, %v7539
        %v7909 = vmul.f32 %v7863, %v7540
        %v7910 = vmul.f32 %v7865, %v7541
        %v7911 = vmul.f32 %v7867, %v7542
        %v7912 = vmul.f32 %v7869, %v7543
        %v7913 = vmul.f32 %v7871, %v7544
        %v7914 = vmul.f32 %v7873, %v7545
        %v7915 = vmul.f32 %v7875, %v7546
        %v7916 = vmul.f32 %v7877, %v7547
        %v7917 = vmul.f32 %v7879, %v7548
        %v7918 = vmul.f32 %v7881, %v7549
        %v7919 = vmul.f32 %v7883, %v7550
        %v7920 = vmul.f32 %v7885, %v7551
        %v7921 = vmul.f32 %v7887, %v7552
        %v7922 = vmul.f32 %v7889, %v7553
        %v7923 = vmul.f32 %v7891, %v7554
        %7940 = vrot.lane.b32.xlu0 %v7892, 64
        %v7941 = vpop.permute.xlu0 %7940
        %7942 = vrot.lane.b32.xlu0 %v7893, 64
        %v7943 = vpop.permute.xlu0 %7942
        %7944 = vrot.lane.b32.xlu0 %v7894, 64
        %v7945 = vpop.permute.xlu0 %7944
        %7946 = vrot.lane.b32.xlu0 %v7895, 64
        %v7947 = vpop.permute.xlu0 %7946
        %7948 = vrot.lane.b32.xlu0 %v7896, 64
        %v7949 = vpop.permute.xlu0 %7948
        %7950 = vrot.lane.b32.xlu0 %v7897, 64
        %v7951 = vpop.permute.xlu0 %7950
        %7952 = vrot.lane.b32.xlu0 %v7898, 64
        %v7953 = vpop.permute.xlu0 %7952
        %7954 = vrot.lane.b32.xlu0 %v7899, 64
        %v7955 = vpop.permute.xlu0 %7954
        %7956 = vrot.lane.b32.xlu0 %v7900, 64
        %v7957 = vpop.permute.xlu0 %7956
        %7958 = vrot.lane.b32.xlu0 %v7901, 64
        %v7959 = vpop.permute.xlu0 %7958
        %7960 = vrot.lane.b32.xlu0 %v7902, 64
        %v7961 = vpop.permute.xlu0 %7960
        %7962 = vrot.lane.b32.xlu0 %v7903, 64
        %v7963 = vpop.permute.xlu0 %7962
        %7964 = vrot.lane.b32.xlu0 %v7904, 64
        %v7965 = vpop.permute.xlu0 %7964
        %7966 = vrot.lane.b32.xlu0 %v7905, 64
        %v7967 = vpop.permute.xlu0 %7966
        %7968 = vrot.lane.b32.xlu0 %v7906, 64
        %v7969 = vpop.permute.xlu0 %7968
        %7970 = vrot.lane.b32.xlu0 %v7907, 64
        %v7971 = vpop.permute.xlu0 %7970
        %v7988 = vmul.f32 %v7861, %v7941
        %v7989 = vmul.f32 %v7863, %v7943
        %v7990 = vmul.f32 %v7865, %v7945
        %v7991 = vmul.f32 %v7867, %v7947
        %v7992 = vmul.f32 %v7869, %v7949
        %v7993 = vmul.f32 %v7871, %v7951
        %v7994 = vmul.f32 %v7873, %v7953
        %v7995 = vmul.f32 %v7875, %v7955
        %v7996 = vmul.f32 %v7877, %v7957
        %v7997 = vmul.f32 %v7879, %v7959
        %v7998 = vmul.f32 %v7881, %v7961
        %v7999 = vmul.f32 %v7883, %v7963
        %v8000 = vmul.f32 %v7885, %v7965
        %v8001 = vmul.f32 %v7887, %v7967
        %v8002 = vmul.f32 %v7889, %v7969
        %v8003 = vmul.f32 %v7891, %v7971
        %8020 = vrot.lane.b32.xlu0 %v7988, 32
        %v8021 = vpop.permute.xlu0 %8020
        %8022 = vrot.lane.b32.xlu0 %v7989, 32
        %v8023 = vpop.permute.xlu0 %8022
        %8024 = vrot.lane.b32.xlu0 %v7990, 32
        %v8025 = vpop.permute.xlu0 %8024
        %8026 = vrot.lane.b32.xlu0 %v7991, 32
        %v8027 = vpop.permute.xlu0 %8026
        %8028 = vrot.lane.b32.xlu0 %v7992, 32
        %v8029 = vpop.permute.xlu0 %8028
        %8030 = vrot.lane.b32.xlu0 %v7993, 32
        %v8031 = vpop.permute.xlu0 %8030
        %8032 = vrot.lane.b32.xlu0 %v7994, 32
        %v8033 = vpop.permute.xlu0 %8032
        %8034 = vrot.lane.b32.xlu0 %v7995, 32
        %v8035 = vpop.permute.xlu0 %8034
        %8036 = vrot.lane.b32.xlu0 %v7996, 32
        %v8037 = vpop.permute.xlu0 %8036
        %8038 = vrot.lane.b32.xlu0 %v7997, 32
        %v8039 = vpop.permute.xlu0 %8038
        %8040 = vrot.lane.b32.xlu0 %v7998, 32
        %v8041 = vpop.permute.xlu0 %8040
        %8042 = vrot.lane.b32.xlu0 %v7999, 32
        %v8043 = vpop.permute.xlu0 %8042
        %8044 = vrot.lane.b32.xlu0 %v8000, 32
        %v8045 = vpop.permute.xlu0 %8044
        %8046 = vrot.lane.b32.xlu0 %v8001, 32
        %v8047 = vpop.permute.xlu0 %8046
        %8048 = vrot.lane.b32.xlu0 %v8002, 32
        %v8049 = vpop.permute.xlu0 %8048
        %8050 = vrot.lane.b32.xlu0 %v8003, 32
        %v8051 = vpop.permute.xlu0 %8050
        %v8068 = vadd.f32 %v7908, %v8021
        %v8069 = vadd.f32 %v7909, %v8023
        %v8070 = vadd.f32 %v7910, %v8025
        %v8071 = vadd.f32 %v7911, %v8027
        %v8072 = vadd.f32 %v7912, %v8029
        %v8073 = vadd.f32 %v7913, %v8031
        %v8074 = vadd.f32 %v7914, %v8033
        %v8075 = vadd.f32 %v7915, %v8035
        %v8076 = vadd.f32 %v7916, %v8037
        %v8077 = vadd.f32 %v7917, %v8039
        %v8078 = vadd.f32 %v7918, %v8041
        %v8079 = vadd.f32 %v7919, %v8043
        %v8080 = vadd.f32 %v7920, %v8045
        %v8081 = vadd.f32 %v7921, %v8047
        %v8082 = vadd.f32 %v7922, %v8049
        %v8083 = vadd.f32 %v7923, %v8051
        %v8084 = vtanh.pop %v8068
        %v8085 = vtanh.pop %v8069
        %v8086 = vtanh.pop %v8070
        %v8087 = vtanh.pop %v8071
        %v8088 = vtanh.pop %v8072
        %v8089 = vtanh.pop %v8073
        %v8090 = vtanh.pop %v8074
        %v8091 = vtanh.pop %v8075
        %v8092 = vtanh.pop %v8076
        %v8093 = vtanh.pop %v8077
        %v8094 = vtanh.pop %v8078
        %v8095 = vtanh.pop %v8079
        %v8096 = vtanh.pop %v8080
        %v8097 = vtanh.pop %v8081
        %v8098 = vtanh.pop %v8082
        %v8099 = vtanh.pop %v8083
        %8116 = vrot.lane.b32.xlu0 %v8084, 64
        %v8117 = vpop.permute.xlu0 %8116
        %8118 = vrot.lane.b32.xlu0 %v8085, 64
        %v8119 = vpop.permute.xlu0 %8118
        %8120 = vrot.lane.b32.xlu0 %v8086, 64
        %v8121 = vpop.permute.xlu0 %8120
        %8122 = vrot.lane.b32.xlu0 %v8087, 64
        %v8123 = vpop.permute.xlu0 %8122
        %8124 = vrot.lane.b32.xlu0 %v8088, 64
        %v8125 = vpop.permute.xlu0 %8124
        %8126 = vrot.lane.b32.xlu0 %v8089, 64
        %v8127 = vpop.permute.xlu0 %8126
        %8128 = vrot.lane.b32.xlu0 %v8090, 64
        %v8129 = vpop.permute.xlu0 %8128
        %8130 = vrot.lane.b32.xlu0 %v8091, 64
        %v8131 = vpop.permute.xlu0 %8130
        %8132 = vrot.lane.b32.xlu0 %v8092, 64
        %v8133 = vpop.permute.xlu0 %8132
        %8134 = vrot.lane.b32.xlu0 %v8093, 64
        %v8135 = vpop.permute.xlu0 %8134
        %8136 = vrot.lane.b32.xlu0 %v8094, 64
        %v8137 = vpop.permute.xlu0 %8136
        %8138 = vrot.lane.b32.xlu0 %v8095, 64
        %v8139 = vpop.permute.xlu0 %8138
        %8140 = vrot.lane.b32.xlu0 %v8096, 64
        %v8141 = vpop.permute.xlu0 %8140
        %8142 = vrot.lane.b32.xlu0 %v8097, 64
        %v8143 = vpop.permute.xlu0 %8142
        %8144 = vrot.lane.b32.xlu0 %v8098, 64
        %v8145 = vpop.permute.xlu0 %8144
        %8146 = vrot.lane.b32.xlu0 %v8099, 64
        %v8147 = vpop.permute.xlu0 %8146
        %v8164 = vmul.f32 %v7861, %v8117
        %v8165 = vmul.f32 %v7863, %v8119
        %v8166 = vmul.f32 %v7865, %v8121
        %v8167 = vmul.f32 %v7867, %v8123
        %v8168 = vmul.f32 %v7869, %v8125
        %v8169 = vmul.f32 %v7871, %v8127
        %v8170 = vmul.f32 %v7873, %v8129
        %v8171 = vmul.f32 %v7875, %v8131
        %v8172 = vmul.f32 %v7877, %v8133
        %v8173 = vmul.f32 %v7879, %v8135
        %v8174 = vmul.f32 %v7881, %v8137
        %v8175 = vmul.f32 %v7883, %v8139
        %v8176 = vmul.f32 %v7885, %v8141
        %v8177 = vmul.f32 %v7887, %v8143
        %v8178 = vmul.f32 %v7889, %v8145
        %v8179 = vmul.f32 %v7891, %v8147
        %vm8180 = vcmp.gt.s32.totalorder %v2520, 4
        %vm8181 = vcmp.gt.s32.totalorder %v2533, 4
        %vm8182 = vcmp.gt.s32.totalorder %v2546, 4
        %vm8183 = vcmp.gt.s32.totalorder %v2559, 4
        %vm8184 = vcmp.gt.s32.totalorder %v2572, 4
        %vm8185 = vcmp.gt.s32.totalorder %v2585, 4
        %vm8186 = vcmp.gt.s32.totalorder %v2598, 4
        %vm8187 = vcmp.gt.s32.totalorder %v2611, 4
        %vm8188 = vcmp.gt.s32.totalorder %v2624, 4
        %vm8189 = vcmp.gt.s32.totalorder %v2637, 4
        %vm8190 = vcmp.gt.s32.totalorder %v2650, 4
        %vm8191 = vcmp.gt.s32.totalorder %v2663, 4
        %vm8192 = vcmp.gt.s32.totalorder %v2676, 4
        %vm8193 = vcmp.gt.s32.totalorder %v2689, 4
        %vm8194 = vcmp.gt.s32.totalorder %v2702, 4
        %vm8195 = vcmp.gt.s32.totalorder %v2715, 4
        %v8196 = vsel %vm8180, 1, 0
        %v8197 = vsel %vm8181, 1, 0
        %v8198 = vsel %vm8182, 1, 0
        %v8199 = vsel %vm8183, 1, 0
        %v8200 = vsel %vm8184, 1, 0
        %v8201 = vsel %vm8185, 1, 0
        %v8202 = vsel %vm8186, 1, 0
        %v8203 = vsel %vm8187, 1, 0
        %v8204 = vsel %vm8188, 1, 0
        %v8205 = vsel %vm8189, 1, 0
        %v8206 = vsel %vm8190, 1, 0
        %v8207 = vsel %vm8191, 1, 0
        %v8208 = vsel %vm8192, 1, 0
        %v8209 = vsel %vm8193, 1, 0
        %v8210 = vsel %vm8194, 1, 0
        %v8211 = vsel %vm8195, 1, 0
        %vm8212 = vcmp.eq.s32.totalorder %v8196, 1
        %vm8213 = vcmp.eq.s32.totalorder %v8197, 1
        %vm8214 = vcmp.eq.s32.totalorder %v8198, 1
        %vm8215 = vcmp.eq.s32.totalorder %v8199, 1
        %vm8216 = vcmp.eq.s32.totalorder %v8200, 1
        %vm8217 = vcmp.eq.s32.totalorder %v8201, 1
        %vm8218 = vcmp.eq.s32.totalorder %v8202, 1
        %vm8219 = vcmp.eq.s32.totalorder %v8203, 1
        %vm8220 = vcmp.eq.s32.totalorder %v8204, 1
        %vm8221 = vcmp.eq.s32.totalorder %v8205, 1
        %vm8222 = vcmp.eq.s32.totalorder %v8206, 1
        %vm8223 = vcmp.eq.s32.totalorder %v8207, 1
        %vm8224 = vcmp.eq.s32.totalorder %v8208, 1
        %vm8225 = vcmp.eq.s32.totalorder %v8209, 1
        %vm8226 = vcmp.eq.s32.totalorder %v8210, 1
        %vm8227 = vcmp.eq.s32.totalorder %v8211, 1
        %v8228 = vsel %vm8212, %v8164, %v7523
        %v8229 = vsel %vm8213, %v8165, %v7524
        %v8230 = vsel %vm8214, %v8166, %v7525
        %v8231 = vsel %vm8215, %v8167, %v7526
        %v8232 = vsel %vm8216, %v8168, %v7527
        %v8233 = vsel %vm8217, %v8169, %v7528
        %v8234 = vsel %vm8218, %v8170, %v7529
        %v8235 = vsel %vm8219, %v8171, %v7530
        %v8236 = vsel %vm8220, %v8172, %v7531
        %v8237 = vsel %vm8221, %v8173, %v7532
        %v8238 = vsel %vm8222, %v8174, %v7533
        %v8239 = vsel %vm8223, %v8175, %v7534
        %v8240 = vsel %vm8224, %v8176, %v7535
        %v8241 = vsel %vm8225, %v8177, %v7536
        %v8242 = vsel %vm8226, %v8178, %v7537
        %v8243 = vsel %vm8227, %v8179, %v7538
        %v8244 = vsel %vm8212, %v8068, %v7539
        %v8245 = vsel %vm8213, %v8069, %v7540
        %v8246 = vsel %vm8214, %v8070, %v7541
        %v8247 = vsel %vm8215, %v8071, %v7542
        %v8248 = vsel %vm8216, %v8072, %v7543
        %v8249 = vsel %vm8217, %v8073, %v7544
        %v8250 = vsel %vm8218, %v8074, %v7545
        %v8251 = vsel %vm8219, %v8075, %v7546
        %v8252 = vsel %vm8220, %v8076, %v7547
        %v8253 = vsel %vm8221, %v8077, %v7548
        %v8254 = vsel %vm8222, %v8078, %v7549
        %v8255 = vsel %vm8223, %v8079, %v7550
        %v8256 = vsel %vm8224, %v8080, %v7551
        %v8257 = vsel %vm8225, %v8081, %v7552
        %v8258 = vsel %vm8226, %v8082, %v7553
        %v8259 = vsel %vm8227, %v8083, %v7554
        %8276 = vrot.lane.b32.xlu0 %v8228, 32
        %v8277 = vpop.permute.xlu0 %8276
        %8278 = vrot.lane.b32.xlu0 %v8229, 32
        %v8279 = vpop.permute.xlu0 %8278
        %8280 = vrot.lane.b32.xlu0 %v8230, 32
        %v8281 = vpop.permute.xlu0 %8280
        %8282 = vrot.lane.b32.xlu0 %v8231, 32
        %v8283 = vpop.permute.xlu0 %8282
        %8284 = vrot.lane.b32.xlu0 %v8232, 32
        %v8285 = vpop.permute.xlu0 %8284
        %8286 = vrot.lane.b32.xlu0 %v8233, 32
        %v8287 = vpop.permute.xlu0 %8286
        %8288 = vrot.lane.b32.xlu0 %v8234, 32
        %v8289 = vpop.permute.xlu0 %8288
        %8290 = vrot.lane.b32.xlu0 %v8235, 32
        %v8291 = vpop.permute.xlu0 %8290
        %8292 = vrot.lane.b32.xlu0 %v8236, 32
        %v8293 = vpop.permute.xlu0 %8292
        %8294 = vrot.lane.b32.xlu0 %v8237, 32
        %v8295 = vpop.permute.xlu0 %8294
        %8296 = vrot.lane.b32.xlu0 %v8238, 32
        %v8297 = vpop.permute.xlu0 %8296
        %8298 = vrot.lane.b32.xlu0 %v8239, 32
        %v8299 = vpop.permute.xlu0 %8298
        %8300 = vrot.lane.b32.xlu0 %v8240, 32
        %v8301 = vpop.permute.xlu0 %8300
        %8302 = vrot.lane.b32.xlu0 %v8241, 32
        %v8303 = vpop.permute.xlu0 %8302
        %8304 = vrot.lane.b32.xlu0 %v8242, 32
        %v8305 = vpop.permute.xlu0 %8304
        %8306 = vrot.lane.b32.xlu0 %v8243, 32
        %v8307 = vpop.permute.xlu0 %8306
        %v8308 = vsel %vm2153, %v8277, 0
        %v8310 = vsel %vm2153, %v8279, 0
        %v8312 = vsel %vm2153, %v8281, 0
        %v8314 = vsel %vm2153, %v8283, 0
        %v8316 = vsel %vm2153, %v8285, 0
        %v8318 = vsel %vm2153, %v8287, 0
        %v8320 = vsel %vm2153, %v8289, 0
        %v8322 = vsel %vm2153, %v8291, 0
        %v8324 = vsel %vm2153, %v8293, 0
        %v8326 = vsel %vm2153, %v8295, 0
        %v8328 = vsel %vm2153, %v8297, 0
        %v8330 = vsel %vm2153, %v8299, 0
        %v8332 = vsel %vm2153, %v8301, 0
        %v8334 = vsel %vm2153, %v8303, 0
        %v8336 = vsel %vm2153, %v8305, 0
        %v8338 = vsel %vm2153, %v8307, 0
        %8340 = vmatprep.subr.mxu0 0.0
        %8341 = vmatpush1.msra.mxu0 0.0
        %8342 = vmatprep.subr.mxu0 0.0
        %8343 = vmatpush1.msra.mxu0 0.0
        %8344 = vmatprep.subr.mxu0 0.0
        %8345 = vmatpush1.msra.mxu0 0.0
        %8346 = vmatprep.subr.mxu0 0.0
        %8347 = vmatpush1.msra.mxu0 0.0
        %8348 = vmatprep.subr.mxu0 0.0
        %8349 = vmatpush1.msra.mxu0 0.0
        %8350 = vmatprep.subr.mxu0 0.0
        %8351 = vmatpush1.msra.mxu0 0.0
        %8352 = vmatprep.subr.mxu0 0.0
        %8353 = vmatpush1.msra.mxu0 0.0
        %8354 = vmatprep.subr.mxu0 0.0
        %8355 = vmatpush1.msra.mxu0 0.0
        %8356 = vmatprep.subr.mxu0 0.0
        %8357 = vmatpush1.msra.mxu0 0.0
        %8358 = vmatprep.subr.mxu0 0.0
        %8359 = vmatpush1.msra.mxu0 0.0
        %8360 = vmatprep.subr.mxu0 0.0
        %8361 = vmatpush1.msra.mxu0 0.0
        %8362 = vmatprep.subr.mxu0 0.0
        %8363 = vmatpush1.msra.mxu0 0.0
        %8364 = vmatprep.subr.mxu0 0.0
        %8365 = vmatpush1.msra.mxu0 %v4811
        %8366 = vmatprep.subr.mxu0 0.0
        %8367 = vmatpush1.msra.mxu0 %v4810
        %8368 = vmatprep.subr.mxu0 0.0
        %8369 = vmatpush1.msra.mxu0 %v4809
        %8370 = vmatprep.subr.mxu0 0.0
        %8371 = vmatpush1.msra.mxu0 %v4808
        %8372 = vmatprep.subr.mxu0 0.0
        %8373 = vmatpush2.msra.mxu0 0.0
        %8374 = vmatprep.subr.mxu0 0.0
        %8375 = vmatpush2.msra.mxu0 0.0
        %8376 = vmatprep.subr.mxu0 0.0
        %8377 = vmatpush2.msra.mxu0 0.0
        %8378 = vmatprep.subr.mxu0 0.0
        %8379 = vmatpush2.msra.mxu0 0.0
        %8380 = vmatprep.subr.mxu0 0.0
        %8381 = vmatpush2.msra.mxu0 0.0
        %8382 = vmatprep.subr.mxu0 0.0
        %8383 = vmatpush2.msra.mxu0 0.0
        %8384 = vmatprep.subr.mxu0 0.0
        %8385 = vmatpush2.msra.mxu0 0.0
        %8386 = vmatprep.subr.mxu0 0.0
        %8387 = vmatpush2.msra.mxu0 0.0
        %8388 = vmatprep.subr.mxu0 0.0
        %8389 = vmatpush2.msra.mxu0 0.0
        %8390 = vmatprep.subr.mxu0 0.0
        %8391 = vmatpush2.msra.mxu0 0.0
        %8392 = vmatprep.subr.mxu0 0.0
        %8393 = vmatpush2.msra.mxu0 0.0
        %8394 = vmatprep.subr.mxu0 0.0
        %8395 = vmatpush2.msra.mxu0 0.0
        %8396 = vmatprep.subr.mxu0 0.0
        %8397 = vmatpush2.msra.mxu0 0.0
        %8398 = vmatprep.subr.mxu0 0.0
        %8399 = vmatpush2.msra.mxu0 0.0
        %8400 = vmatprep.subr.mxu0 0.0
        %8401 = vmatpush2.msra.mxu0 0.0
        %8402 = vmatprep.subr.mxu0 0.0
        %8403 = vmatpush2.msra.mxu0 0.0
        %8404 = vmatprep.mubr.f32.mxu0 0.0
        %8405 = vmatmul.mubr.f32.gmra.mxu0 %v8308
        %v8406 = vpop.f32.mrf.mxu0
        %v8407 = vadd.f32 0.0, %v8406
        %v8408 = vpop.f32.mrf.mxu0
        %8409 = vmatprep.mubr.f32.mxu0 0.0
        %8410 = vmatmul.mubr.f32.gmra.mxu0 %v8310
        %v8411 = vpop.f32.mrf.mxu0
        %v8412 = vadd.f32 0.0, %v8411
        %v8413 = vpop.f32.mrf.mxu0
        %8414 = vmatprep.mubr.f32.mxu0 0.0
        %8415 = vmatmul.mubr.f32.gmra.mxu0 %v8312
        %v8416 = vpop.f32.mrf.mxu0
        %v8417 = vadd.f32 0.0, %v8416
        %v8418 = vpop.f32.mrf.mxu0
        %8419 = vmatprep.mubr.f32.mxu0 0.0
        %8420 = vmatmul.mubr.f32.gmra.mxu0 %v8314
        %v8421 = vpop.f32.mrf.mxu0
        %v8422 = vadd.f32 0.0, %v8421
        %v8423 = vpop.f32.mrf.mxu0
        %8424 = vmatprep.mubr.f32.mxu0 0.0
        %8425 = vmatmul.mubr.f32.gmra.mxu0 %v8316
        %v8426 = vpop.f32.mrf.mxu0
        %v8427 = vadd.f32 0.0, %v8426
        %v8428 = vpop.f32.mrf.mxu0
        %8429 = vmatprep.mubr.f32.mxu0 0.0
        %8430 = vmatmul.mubr.f32.gmra.mxu0 %v8318
        %v8431 = vpop.f32.mrf.mxu0
        %v8432 = vadd.f32 0.0, %v8431
        %v8433 = vpop.f32.mrf.mxu0
        %8434 = vmatprep.mubr.f32.mxu0 0.0
        %8435 = vmatmul.mubr.f32.gmra.mxu0 %v8320
        %v8436 = vpop.f32.mrf.mxu0
        %v8437 = vadd.f32 0.0, %v8436
        %v8438 = vpop.f32.mrf.mxu0
        %8439 = vmatprep.mubr.f32.mxu0 0.0
        %8440 = vmatmul.mubr.f32.gmra.mxu0 %v8322
        %v8441 = vpop.f32.mrf.mxu0
        %v8442 = vadd.f32 0.0, %v8441
        %v8443 = vpop.f32.mrf.mxu0
        %8444 = vmatprep.mubr.f32.mxu0 0.0
        %8445 = vmatmul.mubr.f32.gmra.mxu0 %v8324
        %v8446 = vpop.f32.mrf.mxu0
        %v8447 = vadd.f32 0.0, %v8446
        %v8448 = vpop.f32.mrf.mxu0
        %8449 = vmatprep.mubr.f32.mxu0 0.0
        %8450 = vmatmul.mubr.f32.gmra.mxu0 %v8326
        %v8451 = vpop.f32.mrf.mxu0
        %v8452 = vadd.f32 0.0, %v8451
        %v8453 = vpop.f32.mrf.mxu0
        %8454 = vmatprep.mubr.f32.mxu0 0.0
        %8455 = vmatmul.mubr.f32.gmra.mxu0 %v8328
        %v8456 = vpop.f32.mrf.mxu0
        %v8457 = vadd.f32 0.0, %v8456
        %v8458 = vpop.f32.mrf.mxu0
        %8459 = vmatprep.mubr.f32.mxu0 0.0
        %8460 = vmatmul.mubr.f32.gmra.mxu0 %v8330
        %v8461 = vpop.f32.mrf.mxu0
        %v8462 = vadd.f32 0.0, %v8461
        %v8463 = vpop.f32.mrf.mxu0
        %8464 = vmatprep.mubr.f32.mxu0 0.0
        %8465 = vmatmul.mubr.f32.gmra.mxu0 %v8332
        %v8466 = vpop.f32.mrf.mxu0
        %v8467 = vadd.f32 0.0, %v8466
        %v8468 = vpop.f32.mrf.mxu0
        %8469 = vmatprep.mubr.f32.mxu0 0.0
        %8470 = vmatmul.mubr.f32.gmra.mxu0 %v8334
        %v8471 = vpop.f32.mrf.mxu0
        %v8472 = vadd.f32 0.0, %v8471
        %v8473 = vpop.f32.mrf.mxu0
        %8474 = vmatprep.mubr.f32.mxu0 0.0
        %8475 = vmatmul.mubr.f32.gmra.mxu0 %v8336
        %v8476 = vpop.f32.mrf.mxu0
        %v8477 = vadd.f32 0.0, %v8476
        %v8478 = vpop.f32.mrf.mxu0
        %8479 = vmatprep.mubr.f32.mxu0 0.0
        %8480 = vmatmul.mubr.f32.gmra.mxu0 %v8338
        %v8481 = vpop.f32.mrf.mxu0
        %v8482 = vadd.f32 0.0, %v8481
        %v8483 = vpop.f32.mrf.mxu0
        %8484 = vdwg.mxu0
        %v8485 = vadd.f32 %v4570, %v8407
        %v8486 = vadd.f32 %v4575, %v8412
        %v8487 = vadd.f32 %v4580, %v8417
        %v8488 = vadd.f32 %v4585, %v8422
        %v8489 = vadd.f32 %v4590, %v8427
        %v8490 = vadd.f32 %v4595, %v8432
        %v8491 = vadd.f32 %v4600, %v8437
        %v8492 = vadd.f32 %v4605, %v8442
        %v8493 = vadd.f32 %v4610, %v8447
        %v8494 = vadd.f32 %v4615, %v8452
        %v8495 = vadd.f32 %v4620, %v8457
        %v8496 = vadd.f32 %v4625, %v8462
        %v8497 = vadd.f32 %v4630, %v8467
        %v8498 = vadd.f32 %v4635, %v8472
        %v8499 = vadd.f32 %v4640, %v8477
        %v8500 = vadd.f32 %v4645, %v8482
        %v8501 = vxor.u32 %v8485, 2147483648
        %v8502 = vxor.u32 %v8486, 2147483648
        %v8503 = vxor.u32 %v8487, 2147483648
        %v8504 = vxor.u32 %v8488, 2147483648
        %v8505 = vxor.u32 %v8489, 2147483648
        %v8506 = vxor.u32 %v8490, 2147483648
        %v8507 = vxor.u32 %v8491, 2147483648
        %v8508 = vxor.u32 %v8492, 2147483648
        %v8509 = vxor.u32 %v8493, 2147483648
        %v8510 = vxor.u32 %v8494, 2147483648
        %v8511 = vxor.u32 %v8495, 2147483648
        %v8512 = vxor.u32 %v8496, 2147483648
        %v8513 = vxor.u32 %v8497, 2147483648
        %v8514 = vxor.u32 %v8498, 2147483648
        %v8515 = vxor.u32 %v8499, 2147483648
        %v8516 = vxor.u32 %v8500, 2147483648
        %v8517 = vmul.f32 %v8501, 1.442695
        %v8518 = vpow.pop %v8517
        %v8519 = vmul.f32 %v8502, 1.442695
        %v8520 = vpow.pop %v8519
        %v8521 = vmul.f32 %v8503, 1.442695
        %v8522 = vpow.pop %v8521
        %v8523 = vmul.f32 %v8504, 1.442695
        %v8524 = vpow.pop %v8523
        %v8525 = vmul.f32 %v8505, 1.442695
        %v8526 = vpow.pop %v8525
        %v8527 = vmul.f32 %v8506, 1.442695
        %v8528 = vpow.pop %v8527
        %v8529 = vmul.f32 %v8507, 1.442695
        %v8530 = vpow.pop %v8529
        %v8531 = vmul.f32 %v8508, 1.442695
        %v8532 = vpow.pop %v8531
        %v8533 = vmul.f32 %v8509, 1.442695
        %v8534 = vpow.pop %v8533
        %v8535 = vmul.f32 %v8510, 1.442695
        %v8536 = vpow.pop %v8535
        %v8537 = vmul.f32 %v8511, 1.442695
        %v8538 = vpow.pop %v8537
        %v8539 = vmul.f32 %v8512, 1.442695
        %v8540 = vpow.pop %v8539
        %v8541 = vmul.f32 %v8513, 1.442695
        %v8542 = vpow.pop %v8541
        %v8543 = vmul.f32 %v8514, 1.442695
        %v8544 = vpow.pop %v8543
        %v8545 = vmul.f32 %v8515, 1.442695
        %v8546 = vpow.pop %v8545
        %v8547 = vmul.f32 %v8516, 1.442695
        %v8548 = vpow.pop %v8547
        %v8549 = vadd.f32 %v8518, 1.0
        %v8550 = vadd.f32 %v8520, 1.0
        %v8551 = vadd.f32 %v8522, 1.0
        %v8552 = vadd.f32 %v8524, 1.0
        %v8553 = vadd.f32 %v8526, 1.0
        %v8554 = vadd.f32 %v8528, 1.0
        %v8555 = vadd.f32 %v8530, 1.0
        %v8556 = vadd.f32 %v8532, 1.0
        %v8557 = vadd.f32 %v8534, 1.0
        %v8558 = vadd.f32 %v8536, 1.0
        %v8559 = vadd.f32 %v8538, 1.0
        %v8560 = vadd.f32 %v8540, 1.0
        %v8561 = vadd.f32 %v8542, 1.0
        %v8562 = vadd.f32 %v8544, 1.0
        %v8563 = vadd.f32 %v8546, 1.0
        %v8564 = vadd.f32 %v8548, 1.0
        %v8565 = vrcp.pop %v8549
        %v8566 = vmul.f32 1.0, %v8565
        %v8567 = vrcp.pop %v8550
        %v8568 = vmul.f32 1.0, %v8567
        %v8569 = vrcp.pop %v8551
        %v8570 = vmul.f32 1.0, %v8569
        %v8571 = vrcp.pop %v8552
        %v8572 = vmul.f32 1.0, %v8571
        %v8573 = vrcp.pop %v8553
        %v8574 = vmul.f32 1.0, %v8573
        %v8575 = vrcp.pop %v8554
        %v8576 = vmul.f32 1.0, %v8575
        %v8577 = vrcp.pop %v8555
        %v8578 = vmul.f32 1.0, %v8577
        %v8579 = vrcp.pop %v8556
        %v8580 = vmul.f32 1.0, %v8579
        %v8581 = vrcp.pop %v8557
        %v8582 = vmul.f32 1.0, %v8581
        %v8583 = vrcp.pop %v8558
        %v8584 = vmul.f32 1.0, %v8583
        %v8585 = vrcp.pop %v8559
        %v8586 = vmul.f32 1.0, %v8585
        %v8587 = vrcp.pop %v8560
        %v8588 = vmul.f32 1.0, %v8587
        %v8589 = vrcp.pop %v8561
        %v8590 = vmul.f32 1.0, %v8589
        %v8591 = vrcp.pop %v8562
        %v8592 = vmul.f32 1.0, %v8591
        %v8593 = vrcp.pop %v8563
        %v8594 = vmul.f32 1.0, %v8593
        %v8595 = vrcp.pop %v8564
        %v8596 = vmul.f32 1.0, %v8595
        %v8597 = vtanh.pop %v8485
        %v8598 = vtanh.pop %v8486
        %v8599 = vtanh.pop %v8487
        %v8600 = vtanh.pop %v8488
        %v8601 = vtanh.pop %v8489
        %v8602 = vtanh.pop %v8490
        %v8603 = vtanh.pop %v8491
        %v8604 = vtanh.pop %v8492
        %v8605 = vtanh.pop %v8493
        %v8606 = vtanh.pop %v8494
        %v8607 = vtanh.pop %v8495
        %v8608 = vtanh.pop %v8496
        %v8609 = vtanh.pop %v8497
        %v8610 = vtanh.pop %v8498
        %v8611 = vtanh.pop %v8499
        %v8612 = vtanh.pop %v8500
        %v8613 = vmul.f32 %v8566, %v8244
        %v8614 = vmul.f32 %v8568, %v8245
        %v8615 = vmul.f32 %v8570, %v8246
        %v8616 = vmul.f32 %v8572, %v8247
        %v8617 = vmul.f32 %v8574, %v8248
        %v8618 = vmul.f32 %v8576, %v8249
        %v8619 = vmul.f32 %v8578, %v8250
        %v8620 = vmul.f32 %v8580, %v8251
        %v8621 = vmul.f32 %v8582, %v8252
        %v8622 = vmul.f32 %v8584, %v8253
        %v8623 = vmul.f32 %v8586, %v8254
        %v8624 = vmul.f32 %v8588, %v8255
        %v8625 = vmul.f32 %v8590, %v8256
        %v8626 = vmul.f32 %v8592, %v8257
        %v8627 = vmul.f32 %v8594, %v8258
        %v8628 = vmul.f32 %v8596, %v8259
        %8645 = vrot.lane.b32.xlu0 %v8597, 64
        %v8646 = vpop.permute.xlu0 %8645
        %8647 = vrot.lane.b32.xlu0 %v8598, 64
        %v8648 = vpop.permute.xlu0 %8647
        %8649 = vrot.lane.b32.xlu0 %v8599, 64
        %v8650 = vpop.permute.xlu0 %8649
        %8651 = vrot.lane.b32.xlu0 %v8600, 64
        %v8652 = vpop.permute.xlu0 %8651
        %8653 = vrot.lane.b32.xlu0 %v8601, 64
        %v8654 = vpop.permute.xlu0 %8653
        %8655 = vrot.lane.b32.xlu0 %v8602, 64
        %v8656 = vpop.permute.xlu0 %8655
        %8657 = vrot.lane.b32.xlu0 %v8603, 64
        %v8658 = vpop.permute.xlu0 %8657
        %8659 = vrot.lane.b32.xlu0 %v8604, 64
        %v8660 = vpop.permute.xlu0 %8659
        %8661 = vrot.lane.b32.xlu0 %v8605, 64
        %v8662 = vpop.permute.xlu0 %8661
        %8663 = vrot.lane.b32.xlu0 %v8606, 64
        %v8664 = vpop.permute.xlu0 %8663
        %8665 = vrot.lane.b32.xlu0 %v8607, 64
        %v8666 = vpop.permute.xlu0 %8665
        %8667 = vrot.lane.b32.xlu0 %v8608, 64
        %v8668 = vpop.permute.xlu0 %8667
        %8669 = vrot.lane.b32.xlu0 %v8609, 64
        %v8670 = vpop.permute.xlu0 %8669
        %8671 = vrot.lane.b32.xlu0 %v8610, 64
        %v8672 = vpop.permute.xlu0 %8671
        %8673 = vrot.lane.b32.xlu0 %v8611, 64
        %v8674 = vpop.permute.xlu0 %8673
        %8675 = vrot.lane.b32.xlu0 %v8612, 64
        %v8676 = vpop.permute.xlu0 %8675
        %v8693 = vmul.f32 %v8566, %v8646
        %v8694 = vmul.f32 %v8568, %v8648
        %v8695 = vmul.f32 %v8570, %v8650
        %v8696 = vmul.f32 %v8572, %v8652
        %v8697 = vmul.f32 %v8574, %v8654
        %v8698 = vmul.f32 %v8576, %v8656
        %v8699 = vmul.f32 %v8578, %v8658
        %v8700 = vmul.f32 %v8580, %v8660
        %v8701 = vmul.f32 %v8582, %v8662
        %v8702 = vmul.f32 %v8584, %v8664
        %v8703 = vmul.f32 %v8586, %v8666
        %v8704 = vmul.f32 %v8588, %v8668
        %v8705 = vmul.f32 %v8590, %v8670
        %v8706 = vmul.f32 %v8592, %v8672
        %v8707 = vmul.f32 %v8594, %v8674
        %v8708 = vmul.f32 %v8596, %v8676
        %8725 = vrot.lane.b32.xlu0 %v8693, 32
        %v8726 = vpop.permute.xlu0 %8725
        %8727 = vrot.lane.b32.xlu0 %v8694, 32
        %v8728 = vpop.permute.xlu0 %8727
        %8729 = vrot.lane.b32.xlu0 %v8695, 32
        %v8730 = vpop.permute.xlu0 %8729
        %8731 = vrot.lane.b32.xlu0 %v8696, 32
        %v8732 = vpop.permute.xlu0 %8731
        %8733 = vrot.lane.b32.xlu0 %v8697, 32
        %v8734 = vpop.permute.xlu0 %8733
        %8735 = vrot.lane.b32.xlu0 %v8698, 32
        %v8736 = vpop.permute.xlu0 %8735
        %8737 = vrot.lane.b32.xlu0 %v8699, 32
        %v8738 = vpop.permute.xlu0 %8737
        %8739 = vrot.lane.b32.xlu0 %v8700, 32
        %v8740 = vpop.permute.xlu0 %8739
        %8741 = vrot.lane.b32.xlu0 %v8701, 32
        %v8742 = vpop.permute.xlu0 %8741
        %8743 = vrot.lane.b32.xlu0 %v8702, 32
        %v8744 = vpop.permute.xlu0 %8743
        %8745 = vrot.lane.b32.xlu0 %v8703, 32
        %v8746 = vpop.permute.xlu0 %8745
        %8747 = vrot.lane.b32.xlu0 %v8704, 32
        %v8748 = vpop.permute.xlu0 %8747
        %8749 = vrot.lane.b32.xlu0 %v8705, 32
        %v8750 = vpop.permute.xlu0 %8749
        %8751 = vrot.lane.b32.xlu0 %v8706, 32
        %v8752 = vpop.permute.xlu0 %8751
        %8753 = vrot.lane.b32.xlu0 %v8707, 32
        %v8754 = vpop.permute.xlu0 %8753
        %8755 = vrot.lane.b32.xlu0 %v8708, 32
        %v8756 = vpop.permute.xlu0 %8755
        %v8773 = vadd.f32 %v8613, %v8726
        %v8774 = vadd.f32 %v8614, %v8728
        %v8775 = vadd.f32 %v8615, %v8730
        %v8776 = vadd.f32 %v8616, %v8732
        %v8777 = vadd.f32 %v8617, %v8734
        %v8778 = vadd.f32 %v8618, %v8736
        %v8779 = vadd.f32 %v8619, %v8738
        %v8780 = vadd.f32 %v8620, %v8740
        %v8781 = vadd.f32 %v8621, %v8742
        %v8782 = vadd.f32 %v8622, %v8744
        %v8783 = vadd.f32 %v8623, %v8746
        %v8784 = vadd.f32 %v8624, %v8748
        %v8785 = vadd.f32 %v8625, %v8750
        %v8786 = vadd.f32 %v8626, %v8752
        %v8787 = vadd.f32 %v8627, %v8754
        %v8788 = vadd.f32 %v8628, %v8756
        %v8789 = vtanh.pop %v8773
        %v8790 = vtanh.pop %v8774
        %v8791 = vtanh.pop %v8775
        %v8792 = vtanh.pop %v8776
        %v8793 = vtanh.pop %v8777
        %v8794 = vtanh.pop %v8778
        %v8795 = vtanh.pop %v8779
        %v8796 = vtanh.pop %v8780
        %v8797 = vtanh.pop %v8781
        %v8798 = vtanh.pop %v8782
        %v8799 = vtanh.pop %v8783
        %v8800 = vtanh.pop %v8784
        %v8801 = vtanh.pop %v8785
        %v8802 = vtanh.pop %v8786
        %v8803 = vtanh.pop %v8787
        %v8804 = vtanh.pop %v8788
        %8821 = vrot.lane.b32.xlu0 %v8789, 64
        %v8822 = vpop.permute.xlu0 %8821
        %8823 = vrot.lane.b32.xlu0 %v8790, 64
        %v8824 = vpop.permute.xlu0 %8823
        %8825 = vrot.lane.b32.xlu0 %v8791, 64
        %v8826 = vpop.permute.xlu0 %8825
        %8827 = vrot.lane.b32.xlu0 %v8792, 64
        %v8828 = vpop.permute.xlu0 %8827
        %8829 = vrot.lane.b32.xlu0 %v8793, 64
        %v8830 = vpop.permute.xlu0 %8829
        %8831 = vrot.lane.b32.xlu0 %v8794, 64
        %v8832 = vpop.permute.xlu0 %8831
        %8833 = vrot.lane.b32.xlu0 %v8795, 64
        %v8834 = vpop.permute.xlu0 %8833
        %8835 = vrot.lane.b32.xlu0 %v8796, 64
        %v8836 = vpop.permute.xlu0 %8835
        %8837 = vrot.lane.b32.xlu0 %v8797, 64
        %v8838 = vpop.permute.xlu0 %8837
        %8839 = vrot.lane.b32.xlu0 %v8798, 64
        %v8840 = vpop.permute.xlu0 %8839
        %8841 = vrot.lane.b32.xlu0 %v8799, 64
        %v8842 = vpop.permute.xlu0 %8841
        %8843 = vrot.lane.b32.xlu0 %v8800, 64
        %v8844 = vpop.permute.xlu0 %8843
        %8845 = vrot.lane.b32.xlu0 %v8801, 64
        %v8846 = vpop.permute.xlu0 %8845
        %8847 = vrot.lane.b32.xlu0 %v8802, 64
        %v8848 = vpop.permute.xlu0 %8847
        %8849 = vrot.lane.b32.xlu0 %v8803, 64
        %v8850 = vpop.permute.xlu0 %8849
        %8851 = vrot.lane.b32.xlu0 %v8804, 64
        %v8852 = vpop.permute.xlu0 %8851
        %v8869 = vmul.f32 %v8566, %v8822
        %v8870 = vmul.f32 %v8568, %v8824
        %v8871 = vmul.f32 %v8570, %v8826
        %v8872 = vmul.f32 %v8572, %v8828
        %v8873 = vmul.f32 %v8574, %v8830
        %v8874 = vmul.f32 %v8576, %v8832
        %v8875 = vmul.f32 %v8578, %v8834
        %v8876 = vmul.f32 %v8580, %v8836
        %v8877 = vmul.f32 %v8582, %v8838
        %v8878 = vmul.f32 %v8584, %v8840
        %v8879 = vmul.f32 %v8586, %v8842
        %v8880 = vmul.f32 %v8588, %v8844
        %v8881 = vmul.f32 %v8590, %v8846
        %v8882 = vmul.f32 %v8592, %v8848
        %v8883 = vmul.f32 %v8594, %v8850
        %v8884 = vmul.f32 %v8596, %v8852
        %vm8885 = vcmp.gt.s32.totalorder %v2520, 5
        %vm8886 = vcmp.gt.s32.totalorder %v2533, 5
        %vm8887 = vcmp.gt.s32.totalorder %v2546, 5
        %vm8888 = vcmp.gt.s32.totalorder %v2559, 5
        %vm8889 = vcmp.gt.s32.totalorder %v2572, 5
        %vm8890 = vcmp.gt.s32.totalorder %v2585, 5
        %vm8891 = vcmp.gt.s32.totalorder %v2598, 5
        %vm8892 = vcmp.gt.s32.totalorder %v2611, 5
        %vm8893 = vcmp.gt.s32.totalorder %v2624, 5
        %vm8894 = vcmp.gt.s32.totalorder %v2637, 5
        %vm8895 = vcmp.gt.s32.totalorder %v2650, 5
        %vm8896 = vcmp.gt.s32.totalorder %v2663, 5
        %vm8897 = vcmp.gt.s32.totalorder %v2676, 5
        %vm8898 = vcmp.gt.s32.totalorder %v2689, 5
        %vm8899 = vcmp.gt.s32.totalorder %v2702, 5
        %vm8900 = vcmp.gt.s32.totalorder %v2715, 5
        %v8901 = vsel %vm8885, 1, 0
        %v8902 = vsel %vm8886, 1, 0
        %v8903 = vsel %vm8887, 1, 0
        %v8904 = vsel %vm8888, 1, 0
        %v8905 = vsel %vm8889, 1, 0
        %v8906 = vsel %vm8890, 1, 0
        %v8907 = vsel %vm8891, 1, 0
        %v8908 = vsel %vm8892, 1, 0
        %v8909 = vsel %vm8893, 1, 0
        %v8910 = vsel %vm8894, 1, 0
        %v8911 = vsel %vm8895, 1, 0
        %v8912 = vsel %vm8896, 1, 0
        %v8913 = vsel %vm8897, 1, 0
        %v8914 = vsel %vm8898, 1, 0
        %v8915 = vsel %vm8899, 1, 0
        %v8916 = vsel %vm8900, 1, 0
        %vm8917 = vcmp.eq.s32.totalorder %v8901, 1
        %vm8918 = vcmp.eq.s32.totalorder %v8902, 1
        %vm8919 = vcmp.eq.s32.totalorder %v8903, 1
        %vm8920 = vcmp.eq.s32.totalorder %v8904, 1
        %vm8921 = vcmp.eq.s32.totalorder %v8905, 1
        %vm8922 = vcmp.eq.s32.totalorder %v8906, 1
        %vm8923 = vcmp.eq.s32.totalorder %v8907, 1
        %vm8924 = vcmp.eq.s32.totalorder %v8908, 1
        %vm8925 = vcmp.eq.s32.totalorder %v8909, 1
        %vm8926 = vcmp.eq.s32.totalorder %v8910, 1
        %vm8927 = vcmp.eq.s32.totalorder %v8911, 1
        %vm8928 = vcmp.eq.s32.totalorder %v8912, 1
        %vm8929 = vcmp.eq.s32.totalorder %v8913, 1
        %vm8930 = vcmp.eq.s32.totalorder %v8914, 1
        %vm8931 = vcmp.eq.s32.totalorder %v8915, 1
        %vm8932 = vcmp.eq.s32.totalorder %v8916, 1
        %v8933 = vsel %vm8917, %v8869, %v8228
        %v8934 = vsel %vm8918, %v8870, %v8229
        %v8935 = vsel %vm8919, %v8871, %v8230
        %v8936 = vsel %vm8920, %v8872, %v8231
        %v8937 = vsel %vm8921, %v8873, %v8232
        %v8938 = vsel %vm8922, %v8874, %v8233
        %v8939 = vsel %vm8923, %v8875, %v8234
        %v8940 = vsel %vm8924, %v8876, %v8235
        %v8941 = vsel %vm8925, %v8877, %v8236
        %v8942 = vsel %vm8926, %v8878, %v8237
        %v8943 = vsel %vm8927, %v8879, %v8238
        %v8944 = vsel %vm8928, %v8880, %v8239
        %v8945 = vsel %vm8929, %v8881, %v8240
        %v8946 = vsel %vm8930, %v8882, %v8241
        %v8947 = vsel %vm8931, %v8883, %v8242
        %v8948 = vsel %vm8932, %v8884, %v8243
        %v8949 = vsel %vm8917, %v8773, %v8244
        %v8950 = vsel %vm8918, %v8774, %v8245
        %v8951 = vsel %vm8919, %v8775, %v8246
        %v8952 = vsel %vm8920, %v8776, %v8247
        %v8953 = vsel %vm8921, %v8777, %v8248
        %v8954 = vsel %vm8922, %v8778, %v8249
        %v8955 = vsel %vm8923, %v8779, %v8250
        %v8956 = vsel %vm8924, %v8780, %v8251
        %v8957 = vsel %vm8925, %v8781, %v8252
        %v8958 = vsel %vm8926, %v8782, %v8253
        %v8959 = vsel %vm8927, %v8783, %v8254
        %v8960 = vsel %vm8928, %v8784, %v8255
        %v8961 = vsel %vm8929, %v8785, %v8256
        %v8962 = vsel %vm8930, %v8786, %v8257
        %v8963 = vsel %vm8931, %v8787, %v8258
        %v8964 = vsel %vm8932, %v8788, %v8259
        %8981 = vrot.lane.b32.xlu0 %v8933, 32
        %v8982 = vpop.permute.xlu0 %8981
        %8983 = vrot.lane.b32.xlu0 %v8934, 32
        %v8984 = vpop.permute.xlu0 %8983
        %8985 = vrot.lane.b32.xlu0 %v8935, 32
        %v8986 = vpop.permute.xlu0 %8985
        %8987 = vrot.lane.b32.xlu0 %v8936, 32
        %v8988 = vpop.permute.xlu0 %8987
        %8989 = vrot.lane.b32.xlu0 %v8937, 32
        %v8990 = vpop.permute.xlu0 %8989
        %8991 = vrot.lane.b32.xlu0 %v8938, 32
        %v8992 = vpop.permute.xlu0 %8991
        %8993 = vrot.lane.b32.xlu0 %v8939, 32
        %v8994 = vpop.permute.xlu0 %8993
        %8995 = vrot.lane.b32.xlu0 %v8940, 32
        %v8996 = vpop.permute.xlu0 %8995
        %8997 = vrot.lane.b32.xlu0 %v8941, 32
        %v8998 = vpop.permute.xlu0 %8997
        %8999 = vrot.lane.b32.xlu0 %v8942, 32
        %v9000 = vpop.permute.xlu0 %8999
        %9001 = vrot.lane.b32.xlu0 %v8943, 32
        %v9002 = vpop.permute.xlu0 %9001
        %9003 = vrot.lane.b32.xlu0 %v8944, 32
        %v9004 = vpop.permute.xlu0 %9003
        %9005 = vrot.lane.b32.xlu0 %v8945, 32
        %v9006 = vpop.permute.xlu0 %9005
        %9007 = vrot.lane.b32.xlu0 %v8946, 32
        %v9008 = vpop.permute.xlu0 %9007
        %9009 = vrot.lane.b32.xlu0 %v8947, 32
        %v9010 = vpop.permute.xlu0 %9009
        %9011 = vrot.lane.b32.xlu0 %v8948, 32
        %v9012 = vpop.permute.xlu0 %9011
        %v9013 = vsel %vm2153, %v8982, 0
        %v9015 = vsel %vm2153, %v8984, 0
        %v9017 = vsel %vm2153, %v8986, 0
        %v9019 = vsel %vm2153, %v8988, 0
        %v9021 = vsel %vm2153, %v8990, 0
        %v9023 = vsel %vm2153, %v8992, 0
        %v9025 = vsel %vm2153, %v8994, 0
        %v9027 = vsel %vm2153, %v8996, 0
        %v9029 = vsel %vm2153, %v8998, 0
        %v9031 = vsel %vm2153, %v9000, 0
        %v9033 = vsel %vm2153, %v9002, 0
        %v9035 = vsel %vm2153, %v9004, 0
        %v9037 = vsel %vm2153, %v9006, 0
        %v9039 = vsel %vm2153, %v9008, 0
        %v9041 = vsel %vm2153, %v9010, 0
        %v9043 = vsel %vm2153, %v9012, 0
        %9045 = vmatprep.subr.mxu0 0.0
        %9046 = vmatpush1.msra.mxu0 0.0
        %9047 = vmatprep.subr.mxu0 0.0
        %9048 = vmatpush1.msra.mxu0 0.0
        %9049 = vmatprep.subr.mxu0 0.0
        %9050 = vmatpush1.msra.mxu0 0.0
        %9051 = vmatprep.subr.mxu0 0.0
        %9052 = vmatpush1.msra.mxu0 0.0
        %9053 = vmatprep.subr.mxu0 0.0
        %9054 = vmatpush1.msra.mxu0 0.0
        %9055 = vmatprep.subr.mxu0 0.0
        %9056 = vmatpush1.msra.mxu0 0.0
        %9057 = vmatprep.subr.mxu0 0.0
        %9058 = vmatpush1.msra.mxu0 0.0
        %9059 = vmatprep.subr.mxu0 0.0
        %9060 = vmatpush1.msra.mxu0 0.0
        %9061 = vmatprep.subr.mxu0 0.0
        %9062 = vmatpush1.msra.mxu0 0.0
        %9063 = vmatprep.subr.mxu0 0.0
        %9064 = vmatpush1.msra.mxu0 0.0
        %9065 = vmatprep.subr.mxu0 0.0
        %9066 = vmatpush1.msra.mxu0 0.0
        %9067 = vmatprep.subr.mxu0 0.0
        %9068 = vmatpush1.msra.mxu0 0.0
        %9069 = vmatprep.subr.mxu0 0.0
        %9070 = vmatpush1.msra.mxu0 %v4811
        %9071 = vmatprep.subr.mxu0 0.0
        %9072 = vmatpush1.msra.mxu0 %v4810
        %9073 = vmatprep.subr.mxu0 0.0
        %9074 = vmatpush1.msra.mxu0 %v4809
        %9075 = vmatprep.subr.mxu0 0.0
        %9076 = vmatpush1.msra.mxu0 %v4808
        %9077 = vmatprep.subr.mxu0 0.0
        %9078 = vmatpush2.msra.mxu0 0.0
        %9079 = vmatprep.subr.mxu0 0.0
        %9080 = vmatpush2.msra.mxu0 0.0
        %9081 = vmatprep.subr.mxu0 0.0
        %9082 = vmatpush2.msra.mxu0 0.0
        %9083 = vmatprep.subr.mxu0 0.0
        %9084 = vmatpush2.msra.mxu0 0.0
        %9085 = vmatprep.subr.mxu0 0.0
        %9086 = vmatpush2.msra.mxu0 0.0
        %9087 = vmatprep.subr.mxu0 0.0
        %9088 = vmatpush2.msra.mxu0 0.0
        %9089 = vmatprep.subr.mxu0 0.0
        %9090 = vmatpush2.msra.mxu0 0.0
        %9091 = vmatprep.subr.mxu0 0.0
        %9092 = vmatpush2.msra.mxu0 0.0
        %9093 = vmatprep.subr.mxu0 0.0
        %9094 = vmatpush2.msra.mxu0 0.0
        %9095 = vmatprep.subr.mxu0 0.0
        %9096 = vmatpush2.msra.mxu0 0.0
        %9097 = vmatprep.subr.mxu0 0.0
        %9098 = vmatpush2.msra.mxu0 0.0
        %9099 = vmatprep.subr.mxu0 0.0
        %9100 = vmatpush2.msra.mxu0 0.0
        %9101 = vmatprep.subr.mxu0 0.0
        %9102 = vmatpush2.msra.mxu0 0.0
        %9103 = vmatprep.subr.mxu0 0.0
        %9104 = vmatpush2.msra.mxu0 0.0
        %9105 = vmatprep.subr.mxu0 0.0
        %9106 = vmatpush2.msra.mxu0 0.0
        %9107 = vmatprep.subr.mxu0 0.0
        %9108 = vmatpush2.msra.mxu0 0.0
        %9109 = vmatprep.mubr.f32.mxu0 0.0
        %9110 = vmatmul.mubr.f32.gmra.mxu0 %v9013
        %v9111 = vpop.f32.mrf.mxu0
        %v9112 = vadd.f32 0.0, %v9111
        %v9113 = vpop.f32.mrf.mxu0
        %9114 = vmatprep.mubr.f32.mxu0 0.0
        %9115 = vmatmul.mubr.f32.gmra.mxu0 %v9015
        %v9116 = vpop.f32.mrf.mxu0
        %v9117 = vadd.f32 0.0, %v9116
        %v9118 = vpop.f32.mrf.mxu0
        %9119 = vmatprep.mubr.f32.mxu0 0.0
        %9120 = vmatmul.mubr.f32.gmra.mxu0 %v9017
        %v9121 = vpop.f32.mrf.mxu0
        %v9122 = vadd.f32 0.0, %v9121
        %v9123 = vpop.f32.mrf.mxu0
        %9124 = vmatprep.mubr.f32.mxu0 0.0
        %9125 = vmatmul.mubr.f32.gmra.mxu0 %v9019
        %v9126 = vpop.f32.mrf.mxu0
        %v9127 = vadd.f32 0.0, %v9126
        %v9128 = vpop.f32.mrf.mxu0
        %9129 = vmatprep.mubr.f32.mxu0 0.0
        %9130 = vmatmul.mubr.f32.gmra.mxu0 %v9021
        %v9131 = vpop.f32.mrf.mxu0
        %v9132 = vadd.f32 0.0, %v9131
        %v9133 = vpop.f32.mrf.mxu0
        %9134 = vmatprep.mubr.f32.mxu0 0.0
        %9135 = vmatmul.mubr.f32.gmra.mxu0 %v9023
        %v9136 = vpop.f32.mrf.mxu0
        %v9137 = vadd.f32 0.0, %v9136
        %v9138 = vpop.f32.mrf.mxu0
        %9139 = vmatprep.mubr.f32.mxu0 0.0
        %9140 = vmatmul.mubr.f32.gmra.mxu0 %v9025
        %v9141 = vpop.f32.mrf.mxu0
        %v9142 = vadd.f32 0.0, %v9141
        %v9143 = vpop.f32.mrf.mxu0
        %9144 = vmatprep.mubr.f32.mxu0 0.0
        %9145 = vmatmul.mubr.f32.gmra.mxu0 %v9027
        %v9146 = vpop.f32.mrf.mxu0
        %v9147 = vadd.f32 0.0, %v9146
        %v9148 = vpop.f32.mrf.mxu0
        %9149 = vmatprep.mubr.f32.mxu0 0.0
        %9150 = vmatmul.mubr.f32.gmra.mxu0 %v9029
        %v9151 = vpop.f32.mrf.mxu0
        %v9152 = vadd.f32 0.0, %v9151
        %v9153 = vpop.f32.mrf.mxu0
        %9154 = vmatprep.mubr.f32.mxu0 0.0
        %9155 = vmatmul.mubr.f32.gmra.mxu0 %v9031
        %v9156 = vpop.f32.mrf.mxu0
        %v9157 = vadd.f32 0.0, %v9156
        %v9158 = vpop.f32.mrf.mxu0
        %9159 = vmatprep.mubr.f32.mxu0 0.0
        %9160 = vmatmul.mubr.f32.gmra.mxu0 %v9033
        %v9161 = vpop.f32.mrf.mxu0
        %v9162 = vadd.f32 0.0, %v9161
        %v9163 = vpop.f32.mrf.mxu0
        %9164 = vmatprep.mubr.f32.mxu0 0.0
        %9165 = vmatmul.mubr.f32.gmra.mxu0 %v9035
        %v9166 = vpop.f32.mrf.mxu0
        %v9167 = vadd.f32 0.0, %v9166
        %v9168 = vpop.f32.mrf.mxu0
        %9169 = vmatprep.mubr.f32.mxu0 0.0
        %9170 = vmatmul.mubr.f32.gmra.mxu0 %v9037
        %v9171 = vpop.f32.mrf.mxu0
        %v9172 = vadd.f32 0.0, %v9171
        %v9173 = vpop.f32.mrf.mxu0
        %9174 = vmatprep.mubr.f32.mxu0 0.0
        %9175 = vmatmul.mubr.f32.gmra.mxu0 %v9039
        %v9176 = vpop.f32.mrf.mxu0
        %v9177 = vadd.f32 0.0, %v9176
        %v9178 = vpop.f32.mrf.mxu0
        %9179 = vmatprep.mubr.f32.mxu0 0.0
        %9180 = vmatmul.mubr.f32.gmra.mxu0 %v9041
        %v9181 = vpop.f32.mrf.mxu0
        %v9182 = vadd.f32 0.0, %v9181
        %v9183 = vpop.f32.mrf.mxu0
        %9184 = vmatprep.mubr.f32.mxu0 0.0
        %9185 = vmatmul.mubr.f32.gmra.mxu0 %v9043
        %v9186 = vpop.f32.mrf.mxu0
        %v9187 = vadd.f32 0.0, %v9186
        %v9188 = vpop.f32.mrf.mxu0
        %9189 = vdwg.mxu0
        %v9190 = vadd.f32 %v4650, %v9112
        %v9191 = vadd.f32 %v4655, %v9117
        %v9192 = vadd.f32 %v4660, %v9122
        %v9193 = vadd.f32 %v4665, %v9127
        %v9194 = vadd.f32 %v4670, %v9132
        %v9195 = vadd.f32 %v4675, %v9137
        %v9196 = vadd.f32 %v4680, %v9142
        %v9197 = vadd.f32 %v4685, %v9147
        %v9198 = vadd.f32 %v4690, %v9152
        %v9199 = vadd.f32 %v4695, %v9157
        %v9200 = vadd.f32 %v4700, %v9162
        %v9201 = vadd.f32 %v4705, %v9167
        %v9202 = vadd.f32 %v4710, %v9172
        %v9203 = vadd.f32 %v4715, %v9177
        %v9204 = vadd.f32 %v4720, %v9182
        %v9205 = vadd.f32 %v4725, %v9187
        %v9206 = vxor.u32 %v9190, 2147483648
        %v9207 = vxor.u32 %v9191, 2147483648
        %v9208 = vxor.u32 %v9192, 2147483648
        %v9209 = vxor.u32 %v9193, 2147483648
        %v9210 = vxor.u32 %v9194, 2147483648
        %v9211 = vxor.u32 %v9195, 2147483648
        %v9212 = vxor.u32 %v9196, 2147483648
        %v9213 = vxor.u32 %v9197, 2147483648
        %v9214 = vxor.u32 %v9198, 2147483648
        %v9215 = vxor.u32 %v9199, 2147483648
        %v9216 = vxor.u32 %v9200, 2147483648
        %v9217 = vxor.u32 %v9201, 2147483648
        %v9218 = vxor.u32 %v9202, 2147483648
        %v9219 = vxor.u32 %v9203, 2147483648
        %v9220 = vxor.u32 %v9204, 2147483648
        %v9221 = vxor.u32 %v9205, 2147483648
        %v9222 = vmul.f32 %v9206, 1.442695
        %v9223 = vpow.pop %v9222
        %v9224 = vmul.f32 %v9207, 1.442695
        %v9225 = vpow.pop %v9224
        %v9226 = vmul.f32 %v9208, 1.442695
        %v9227 = vpow.pop %v9226
        %v9228 = vmul.f32 %v9209, 1.442695
        %v9229 = vpow.pop %v9228
        %v9230 = vmul.f32 %v9210, 1.442695
        %v9231 = vpow.pop %v9230
        %v9232 = vmul.f32 %v9211, 1.442695
        %v9233 = vpow.pop %v9232
        %v9234 = vmul.f32 %v9212, 1.442695
        %v9235 = vpow.pop %v9234
        %v9236 = vmul.f32 %v9213, 1.442695
        %v9237 = vpow.pop %v9236
        %v9238 = vmul.f32 %v9214, 1.442695
        %v9239 = vpow.pop %v9238
        %v9240 = vmul.f32 %v9215, 1.442695
        %v9241 = vpow.pop %v9240
        %v9242 = vmul.f32 %v9216, 1.442695
        %v9243 = vpow.pop %v9242
        %v9244 = vmul.f32 %v9217, 1.442695
        %v9245 = vpow.pop %v9244
        %v9246 = vmul.f32 %v9218, 1.442695
        %v9247 = vpow.pop %v9246
        %v9248 = vmul.f32 %v9219, 1.442695
        %v9249 = vpow.pop %v9248
        %v9250 = vmul.f32 %v9220, 1.442695
        %v9251 = vpow.pop %v9250
        %v9252 = vmul.f32 %v9221, 1.442695
        %v9253 = vpow.pop %v9252
        %v9254 = vadd.f32 %v9223, 1.0
        %v9255 = vadd.f32 %v9225, 1.0
        %v9256 = vadd.f32 %v9227, 1.0
        %v9257 = vadd.f32 %v9229, 1.0
        %v9258 = vadd.f32 %v9231, 1.0
        %v9259 = vadd.f32 %v9233, 1.0
        %v9260 = vadd.f32 %v9235, 1.0
        %v9261 = vadd.f32 %v9237, 1.0
        %v9262 = vadd.f32 %v9239, 1.0
        %v9263 = vadd.f32 %v9241, 1.0
        %v9264 = vadd.f32 %v9243, 1.0
        %v9265 = vadd.f32 %v9245, 1.0
        %v9266 = vadd.f32 %v9247, 1.0
        %v9267 = vadd.f32 %v9249, 1.0
        %v9268 = vadd.f32 %v9251, 1.0
        %v9269 = vadd.f32 %v9253, 1.0
        %v9270 = vrcp.pop %v9254
        %v9271 = vmul.f32 1.0, %v9270
        %v9272 = vrcp.pop %v9255
        %v9273 = vmul.f32 1.0, %v9272
        %v9274 = vrcp.pop %v9256
        %v9275 = vmul.f32 1.0, %v9274
        %v9276 = vrcp.pop %v9257
        %v9277 = vmul.f32 1.0, %v9276
        %v9278 = vrcp.pop %v9258
        %v9279 = vmul.f32 1.0, %v9278
        %v9280 = vrcp.pop %v9259
        %v9281 = vmul.f32 1.0, %v9280
        %v9282 = vrcp.pop %v9260
        %v9283 = vmul.f32 1.0, %v9282
        %v9284 = vrcp.pop %v9261
        %v9285 = vmul.f32 1.0, %v9284
        %v9286 = vrcp.pop %v9262
        %v9287 = vmul.f32 1.0, %v9286
        %v9288 = vrcp.pop %v9263
        %v9289 = vmul.f32 1.0, %v9288
        %v9290 = vrcp.pop %v9264
        %v9291 = vmul.f32 1.0, %v9290
        %v9292 = vrcp.pop %v9265
        %v9293 = vmul.f32 1.0, %v9292
        %v9294 = vrcp.pop %v9266
        %v9295 = vmul.f32 1.0, %v9294
        %v9296 = vrcp.pop %v9267
        %v9297 = vmul.f32 1.0, %v9296
        %v9298 = vrcp.pop %v9268
        %v9299 = vmul.f32 1.0, %v9298
        %v9300 = vrcp.pop %v9269
        %v9301 = vmul.f32 1.0, %v9300
        %v9302 = vtanh.pop %v9190
        %v9303 = vtanh.pop %v9191
        %v9304 = vtanh.pop %v9192
        %v9305 = vtanh.pop %v9193
        %v9306 = vtanh.pop %v9194
        %v9307 = vtanh.pop %v9195
        %v9308 = vtanh.pop %v9196
        %v9309 = vtanh.pop %v9197
        %v9310 = vtanh.pop %v9198
        %v9311 = vtanh.pop %v9199
        %v9312 = vtanh.pop %v9200
        %v9313 = vtanh.pop %v9201
        %v9314 = vtanh.pop %v9202
        %v9315 = vtanh.pop %v9203
        %v9316 = vtanh.pop %v9204
        %v9317 = vtanh.pop %v9205
        %v9318 = vmul.f32 %v9271, %v8949
        %v9319 = vmul.f32 %v9273, %v8950
        %v9320 = vmul.f32 %v9275, %v8951
        %v9321 = vmul.f32 %v9277, %v8952
        %v9322 = vmul.f32 %v9279, %v8953
        %v9323 = vmul.f32 %v9281, %v8954
        %v9324 = vmul.f32 %v9283, %v8955
        %v9325 = vmul.f32 %v9285, %v8956
        %v9326 = vmul.f32 %v9287, %v8957
        %v9327 = vmul.f32 %v9289, %v8958
        %v9328 = vmul.f32 %v9291, %v8959
        %v9329 = vmul.f32 %v9293, %v8960
        %v9330 = vmul.f32 %v9295, %v8961
        %v9331 = vmul.f32 %v9297, %v8962
        %v9332 = vmul.f32 %v9299, %v8963
        %v9333 = vmul.f32 %v9301, %v8964
        %9350 = vrot.lane.b32.xlu0 %v9302, 64
        %v9351 = vpop.permute.xlu0 %9350
        %9352 = vrot.lane.b32.xlu0 %v9303, 64
        %v9353 = vpop.permute.xlu0 %9352
        %9354 = vrot.lane.b32.xlu0 %v9304, 64
        %v9355 = vpop.permute.xlu0 %9354
        %9356 = vrot.lane.b32.xlu0 %v9305, 64
        %v9357 = vpop.permute.xlu0 %9356
        %9358 = vrot.lane.b32.xlu0 %v9306, 64
        %v9359 = vpop.permute.xlu0 %9358
        %9360 = vrot.lane.b32.xlu0 %v9307, 64
        %v9361 = vpop.permute.xlu0 %9360
        %9362 = vrot.lane.b32.xlu0 %v9308, 64
        %v9363 = vpop.permute.xlu0 %9362
        %9364 = vrot.lane.b32.xlu0 %v9309, 64
        %v9365 = vpop.permute.xlu0 %9364
        %9366 = vrot.lane.b32.xlu0 %v9310, 64
        %v9367 = vpop.permute.xlu0 %9366
        %9368 = vrot.lane.b32.xlu0 %v9311, 64
        %v9369 = vpop.permute.xlu0 %9368
        %9370 = vrot.lane.b32.xlu0 %v9312, 64
        %v9371 = vpop.permute.xlu0 %9370
        %9372 = vrot.lane.b32.xlu0 %v9313, 64
        %v9373 = vpop.permute.xlu0 %9372
        %9374 = vrot.lane.b32.xlu0 %v9314, 64
        %v9375 = vpop.permute.xlu0 %9374
        %9376 = vrot.lane.b32.xlu0 %v9315, 64
        %v9377 = vpop.permute.xlu0 %9376
        %9378 = vrot.lane.b32.xlu0 %v9316, 64
        %v9379 = vpop.permute.xlu0 %9378
        %9380 = vrot.lane.b32.xlu0 %v9317, 64
        %v9381 = vpop.permute.xlu0 %9380
        %v9398 = vmul.f32 %v9271, %v9351
        %v9399 = vmul.f32 %v9273, %v9353
        %v9400 = vmul.f32 %v9275, %v9355
        %v9401 = vmul.f32 %v9277, %v9357
        %v9402 = vmul.f32 %v9279, %v9359
        %v9403 = vmul.f32 %v9281, %v9361
        %v9404 = vmul.f32 %v9283, %v9363
        %v9405 = vmul.f32 %v9285, %v9365
        %v9406 = vmul.f32 %v9287, %v9367
        %v9407 = vmul.f32 %v9289, %v9369
        %v9408 = vmul.f32 %v9291, %v9371
        %v9409 = vmul.f32 %v9293, %v9373
        %v9410 = vmul.f32 %v9295, %v9375
        %v9411 = vmul.f32 %v9297, %v9377
        %v9412 = vmul.f32 %v9299, %v9379
        %v9413 = vmul.f32 %v9301, %v9381
        %9430 = vrot.lane.b32.xlu0 %v9398, 32
        %v9431 = vpop.permute.xlu0 %9430
        %9432 = vrot.lane.b32.xlu0 %v9399, 32
        %v9433 = vpop.permute.xlu0 %9432
        %9434 = vrot.lane.b32.xlu0 %v9400, 32
        %v9435 = vpop.permute.xlu0 %9434
        %9436 = vrot.lane.b32.xlu0 %v9401, 32
        %v9437 = vpop.permute.xlu0 %9436
        %9438 = vrot.lane.b32.xlu0 %v9402, 32
        %v9439 = vpop.permute.xlu0 %9438
        %9440 = vrot.lane.b32.xlu0 %v9403, 32
        %v9441 = vpop.permute.xlu0 %9440
        %9442 = vrot.lane.b32.xlu0 %v9404, 32
        %v9443 = vpop.permute.xlu0 %9442
        %9444 = vrot.lane.b32.xlu0 %v9405, 32
        %v9445 = vpop.permute.xlu0 %9444
        %9446 = vrot.lane.b32.xlu0 %v9406, 32
        %v9447 = vpop.permute.xlu0 %9446
        %9448 = vrot.lane.b32.xlu0 %v9407, 32
        %v9449 = vpop.permute.xlu0 %9448
        %9450 = vrot.lane.b32.xlu0 %v9408, 32
        %v9451 = vpop.permute.xlu0 %9450
        %9452 = vrot.lane.b32.xlu0 %v9409, 32
        %v9453 = vpop.permute.xlu0 %9452
        %9454 = vrot.lane.b32.xlu0 %v9410, 32
        %v9455 = vpop.permute.xlu0 %9454
        %9456 = vrot.lane.b32.xlu0 %v9411, 32
        %v9457 = vpop.permute.xlu0 %9456
        %9458 = vrot.lane.b32.xlu0 %v9412, 32
        %v9459 = vpop.permute.xlu0 %9458
        %9460 = vrot.lane.b32.xlu0 %v9413, 32
        %v9461 = vpop.permute.xlu0 %9460
        %v9478 = vadd.f32 %v9318, %v9431
        %v9479 = vadd.f32 %v9319, %v9433
        %v9480 = vadd.f32 %v9320, %v9435
        %v9481 = vadd.f32 %v9321, %v9437
        %v9482 = vadd.f32 %v9322, %v9439
        %v9483 = vadd.f32 %v9323, %v9441
        %v9484 = vadd.f32 %v9324, %v9443
        %v9485 = vadd.f32 %v9325, %v9445
        %v9486 = vadd.f32 %v9326, %v9447
        %v9487 = vadd.f32 %v9327, %v9449
        %v9488 = vadd.f32 %v9328, %v9451
        %v9489 = vadd.f32 %v9329, %v9453
        %v9490 = vadd.f32 %v9330, %v9455
        %v9491 = vadd.f32 %v9331, %v9457
        %v9492 = vadd.f32 %v9332, %v9459
        %v9493 = vadd.f32 %v9333, %v9461
        %v9494 = vtanh.pop %v9478
        %v9495 = vtanh.pop %v9479
        %v9496 = vtanh.pop %v9480
        %v9497 = vtanh.pop %v9481
        %v9498 = vtanh.pop %v9482
        %v9499 = vtanh.pop %v9483
        %v9500 = vtanh.pop %v9484
        %v9501 = vtanh.pop %v9485
        %v9502 = vtanh.pop %v9486
        %v9503 = vtanh.pop %v9487
        %v9504 = vtanh.pop %v9488
        %v9505 = vtanh.pop %v9489
        %v9506 = vtanh.pop %v9490
        %v9507 = vtanh.pop %v9491
        %v9508 = vtanh.pop %v9492
        %v9509 = vtanh.pop %v9493
        %9526 = vrot.lane.b32.xlu0 %v9494, 64
        %v9527 = vpop.permute.xlu0 %9526
        %9528 = vrot.lane.b32.xlu0 %v9495, 64
        %v9529 = vpop.permute.xlu0 %9528
        %9530 = vrot.lane.b32.xlu0 %v9496, 64
        %v9531 = vpop.permute.xlu0 %9530
        %9532 = vrot.lane.b32.xlu0 %v9497, 64
        %v9533 = vpop.permute.xlu0 %9532
        %9534 = vrot.lane.b32.xlu0 %v9498, 64
        %v9535 = vpop.permute.xlu0 %9534
        %9536 = vrot.lane.b32.xlu0 %v9499, 64
        %v9537 = vpop.permute.xlu0 %9536
        %9538 = vrot.lane.b32.xlu0 %v9500, 64
        %v9539 = vpop.permute.xlu0 %9538
        %9540 = vrot.lane.b32.xlu0 %v9501, 64
        %v9541 = vpop.permute.xlu0 %9540
        %9542 = vrot.lane.b32.xlu0 %v9502, 64
        %v9543 = vpop.permute.xlu0 %9542
        %9544 = vrot.lane.b32.xlu0 %v9503, 64
        %v9545 = vpop.permute.xlu0 %9544
        %9546 = vrot.lane.b32.xlu0 %v9504, 64
        %v9547 = vpop.permute.xlu0 %9546
        %9548 = vrot.lane.b32.xlu0 %v9505, 64
        %v9549 = vpop.permute.xlu0 %9548
        %9550 = vrot.lane.b32.xlu0 %v9506, 64
        %v9551 = vpop.permute.xlu0 %9550
        %9552 = vrot.lane.b32.xlu0 %v9507, 64
        %v9553 = vpop.permute.xlu0 %9552
        %9554 = vrot.lane.b32.xlu0 %v9508, 64
        %v9555 = vpop.permute.xlu0 %9554
        %9556 = vrot.lane.b32.xlu0 %v9509, 64
        %v9557 = vpop.permute.xlu0 %9556
        %v9574 = vmul.f32 %v9271, %v9527
        %v9575 = vmul.f32 %v9273, %v9529
        %v9576 = vmul.f32 %v9275, %v9531
        %v9577 = vmul.f32 %v9277, %v9533
        %v9578 = vmul.f32 %v9279, %v9535
        %v9579 = vmul.f32 %v9281, %v9537
        %v9580 = vmul.f32 %v9283, %v9539
        %v9581 = vmul.f32 %v9285, %v9541
        %v9582 = vmul.f32 %v9287, %v9543
        %v9583 = vmul.f32 %v9289, %v9545
        %v9584 = vmul.f32 %v9291, %v9547
        %v9585 = vmul.f32 %v9293, %v9549
        %v9586 = vmul.f32 %v9295, %v9551
        %v9587 = vmul.f32 %v9297, %v9553
        %v9588 = vmul.f32 %v9299, %v9555
        %v9589 = vmul.f32 %v9301, %v9557
        %vm9590 = vcmp.gt.s32.totalorder %v2520, 6
        %vm9591 = vcmp.gt.s32.totalorder %v2533, 6
        %vm9592 = vcmp.gt.s32.totalorder %v2546, 6
        %vm9593 = vcmp.gt.s32.totalorder %v2559, 6
        %vm9594 = vcmp.gt.s32.totalorder %v2572, 6
        %vm9595 = vcmp.gt.s32.totalorder %v2585, 6
        %vm9596 = vcmp.gt.s32.totalorder %v2598, 6
        %vm9597 = vcmp.gt.s32.totalorder %v2611, 6
        %vm9598 = vcmp.gt.s32.totalorder %v2624, 6
        %vm9599 = vcmp.gt.s32.totalorder %v2637, 6
        %vm9600 = vcmp.gt.s32.totalorder %v2650, 6
        %vm9601 = vcmp.gt.s32.totalorder %v2663, 6
        %vm9602 = vcmp.gt.s32.totalorder %v2676, 6
        %vm9603 = vcmp.gt.s32.totalorder %v2689, 6
        %vm9604 = vcmp.gt.s32.totalorder %v2702, 6
        %vm9605 = vcmp.gt.s32.totalorder %v2715, 6
        %v9606 = vsel %vm9590, 1, 0
        %v9607 = vsel %vm9591, 1, 0
        %v9608 = vsel %vm9592, 1, 0
        %v9609 = vsel %vm9593, 1, 0
        %v9610 = vsel %vm9594, 1, 0
        %v9611 = vsel %vm9595, 1, 0
        %v9612 = vsel %vm9596, 1, 0
        %v9613 = vsel %vm9597, 1, 0
        %v9614 = vsel %vm9598, 1, 0
        %v9615 = vsel %vm9599, 1, 0
        %v9616 = vsel %vm9600, 1, 0
        %v9617 = vsel %vm9601, 1, 0
        %v9618 = vsel %vm9602, 1, 0
        %v9619 = vsel %vm9603, 1, 0
        %v9620 = vsel %vm9604, 1, 0
        %v9621 = vsel %vm9605, 1, 0
        %vm9622 = vcmp.eq.s32.totalorder %v9606, 1
        %vm9623 = vcmp.eq.s32.totalorder %v9607, 1
        %vm9624 = vcmp.eq.s32.totalorder %v9608, 1
        %vm9625 = vcmp.eq.s32.totalorder %v9609, 1
        %vm9626 = vcmp.eq.s32.totalorder %v9610, 1
        %vm9627 = vcmp.eq.s32.totalorder %v9611, 1
        %vm9628 = vcmp.eq.s32.totalorder %v9612, 1
        %vm9629 = vcmp.eq.s32.totalorder %v9613, 1
        %vm9630 = vcmp.eq.s32.totalorder %v9614, 1
        %vm9631 = vcmp.eq.s32.totalorder %v9615, 1
        %vm9632 = vcmp.eq.s32.totalorder %v9616, 1
        %vm9633 = vcmp.eq.s32.totalorder %v9617, 1
        %vm9634 = vcmp.eq.s32.totalorder %v9618, 1
        %vm9635 = vcmp.eq.s32.totalorder %v9619, 1
        %vm9636 = vcmp.eq.s32.totalorder %v9620, 1
        %vm9637 = vcmp.eq.s32.totalorder %v9621, 1
        %v9638 = vsel %vm9622, %v9574, %v8933
        %v9639 = vsel %vm9623, %v9575, %v8934
        %v9640 = vsel %vm9624, %v9576, %v8935
        %v9641 = vsel %vm9625, %v9577, %v8936
        %v9642 = vsel %vm9626, %v9578, %v8937
        %v9643 = vsel %vm9627, %v9579, %v8938
        %v9644 = vsel %vm9628, %v9580, %v8939
        %v9645 = vsel %vm9629, %v9581, %v8940
        %v9646 = vsel %vm9630, %v9582, %v8941
        %v9647 = vsel %vm9631, %v9583, %v8942
        %v9648 = vsel %vm9632, %v9584, %v8943
        %v9649 = vsel %vm9633, %v9585, %v8944
        %v9650 = vsel %vm9634, %v9586, %v8945
        %v9651 = vsel %vm9635, %v9587, %v8946
        %v9652 = vsel %vm9636, %v9588, %v8947
        %v9653 = vsel %vm9637, %v9589, %v8948
        %v9654 = vsel %vm9622, %v9478, %v8949
        %v9655 = vsel %vm9623, %v9479, %v8950
        %v9656 = vsel %vm9624, %v9480, %v8951
        %v9657 = vsel %vm9625, %v9481, %v8952
        %v9658 = vsel %vm9626, %v9482, %v8953
        %v9659 = vsel %vm9627, %v9483, %v8954
        %v9660 = vsel %vm9628, %v9484, %v8955
        %v9661 = vsel %vm9629, %v9485, %v8956
        %v9662 = vsel %vm9630, %v9486, %v8957
        %v9663 = vsel %vm9631, %v9487, %v8958
        %v9664 = vsel %vm9632, %v9488, %v8959
        %v9665 = vsel %vm9633, %v9489, %v8960
        %v9666 = vsel %vm9634, %v9490, %v8961
        %v9667 = vsel %vm9635, %v9491, %v8962
        %v9668 = vsel %vm9636, %v9492, %v8963
        %v9669 = vsel %vm9637, %v9493, %v8964
        %9686 = vrot.lane.b32.xlu0 %v9638, 32
        %v9687 = vpop.permute.xlu0 %9686
        %9688 = vrot.lane.b32.xlu0 %v9639, 32
        %v9689 = vpop.permute.xlu0 %9688
        %9690 = vrot.lane.b32.xlu0 %v9640, 32
        %v9691 = vpop.permute.xlu0 %9690
        %9692 = vrot.lane.b32.xlu0 %v9641, 32
        %v9693 = vpop.permute.xlu0 %9692
        %9694 = vrot.lane.b32.xlu0 %v9642, 32
        %v9695 = vpop.permute.xlu0 %9694
        %9696 = vrot.lane.b32.xlu0 %v9643, 32
        %v9697 = vpop.permute.xlu0 %9696
        %9698 = vrot.lane.b32.xlu0 %v9644, 32
        %v9699 = vpop.permute.xlu0 %9698
        %9700 = vrot.lane.b32.xlu0 %v9645, 32
        %v9701 = vpop.permute.xlu0 %9700
        %9702 = vrot.lane.b32.xlu0 %v9646, 32
        %v9703 = vpop.permute.xlu0 %9702
        %9704 = vrot.lane.b32.xlu0 %v9647, 32
        %v9705 = vpop.permute.xlu0 %9704
        %9706 = vrot.lane.b32.xlu0 %v9648, 32
        %v9707 = vpop.permute.xlu0 %9706
        %9708 = vrot.lane.b32.xlu0 %v9649, 32
        %v9709 = vpop.permute.xlu0 %9708
        %9710 = vrot.lane.b32.xlu0 %v9650, 32
        %v9711 = vpop.permute.xlu0 %9710
        %9712 = vrot.lane.b32.xlu0 %v9651, 32
        %v9713 = vpop.permute.xlu0 %9712
        %9714 = vrot.lane.b32.xlu0 %v9652, 32
        %v9715 = vpop.permute.xlu0 %9714
        %9716 = vrot.lane.b32.xlu0 %v9653, 32
        %v9717 = vpop.permute.xlu0 %9716
        %v9718 = vsel %vm2153, %v9687, 0
        %v9720 = vsel %vm2153, %v9689, 0
        %v9722 = vsel %vm2153, %v9691, 0
        %v9724 = vsel %vm2153, %v9693, 0
        %v9726 = vsel %vm2153, %v9695, 0
        %v9728 = vsel %vm2153, %v9697, 0
        %v9730 = vsel %vm2153, %v9699, 0
        %v9732 = vsel %vm2153, %v9701, 0
        %v9734 = vsel %vm2153, %v9703, 0
        %v9736 = vsel %vm2153, %v9705, 0
        %v9738 = vsel %vm2153, %v9707, 0
        %v9740 = vsel %vm2153, %v9709, 0
        %v9742 = vsel %vm2153, %v9711, 0
        %v9744 = vsel %vm2153, %v9713, 0
        %v9746 = vsel %vm2153, %v9715, 0
        %v9748 = vsel %vm2153, %v9717, 0
        %9750 = vmatprep.subr.mxu0 0.0
        %9751 = vmatpush1.msra.mxu0 0.0
        %9752 = vmatprep.subr.mxu0 0.0
        %9753 = vmatpush1.msra.mxu0 0.0
        %9754 = vmatprep.subr.mxu0 0.0
        %9755 = vmatpush1.msra.mxu0 0.0
        %9756 = vmatprep.subr.mxu0 0.0
        %9757 = vmatpush1.msra.mxu0 0.0
        %9758 = vmatprep.subr.mxu0 0.0
        %9759 = vmatpush1.msra.mxu0 0.0
        %9760 = vmatprep.subr.mxu0 0.0
        %9761 = vmatpush1.msra.mxu0 0.0
        %9762 = vmatprep.subr.mxu0 0.0
        %9763 = vmatpush1.msra.mxu0 0.0
        %9764 = vmatprep.subr.mxu0 0.0
        %9765 = vmatpush1.msra.mxu0 0.0
        %9766 = vmatprep.subr.mxu0 0.0
        %9767 = vmatpush1.msra.mxu0 0.0
        %9768 = vmatprep.subr.mxu0 0.0
        %9769 = vmatpush1.msra.mxu0 0.0
        %9770 = vmatprep.subr.mxu0 0.0
        %9771 = vmatpush1.msra.mxu0 0.0
        %9772 = vmatprep.subr.mxu0 0.0
        %9773 = vmatpush1.msra.mxu0 0.0
        %9774 = vmatprep.subr.mxu0 0.0
        %9775 = vmatpush1.msra.mxu0 %v4811
        %9776 = vmatprep.subr.mxu0 0.0
        %9777 = vmatpush1.msra.mxu0 %v4810
        %9778 = vmatprep.subr.mxu0 0.0
        %9779 = vmatpush1.msra.mxu0 %v4809
        %9780 = vmatprep.subr.mxu0 0.0
        %9781 = vmatpush1.msra.mxu0 %v4808
        %9782 = vmatprep.subr.mxu0 0.0
        %9783 = vmatpush2.msra.mxu0 0.0
        %9784 = vmatprep.subr.mxu0 0.0
        %9785 = vmatpush2.msra.mxu0 0.0
        %9786 = vmatprep.subr.mxu0 0.0
        %9787 = vmatpush2.msra.mxu0 0.0
        %9788 = vmatprep.subr.mxu0 0.0
        %9789 = vmatpush2.msra.mxu0 0.0
        %9790 = vmatprep.subr.mxu0 0.0
        %9791 = vmatpush2.msra.mxu0 0.0
        %9792 = vmatprep.subr.mxu0 0.0
        %9793 = vmatpush2.msra.mxu0 0.0
        %9794 = vmatprep.subr.mxu0 0.0
        %9795 = vmatpush2.msra.mxu0 0.0
        %9796 = vmatprep.subr.mxu0 0.0
        %9797 = vmatpush2.msra.mxu0 0.0
        %9798 = vmatprep.subr.mxu0 0.0
        %9799 = vmatpush2.msra.mxu0 0.0
        %9800 = vmatprep.subr.mxu0 0.0
        %9801 = vmatpush2.msra.mxu0 0.0
        %9802 = vmatprep.subr.mxu0 0.0
        %9803 = vmatpush2.msra.mxu0 0.0
        %9804 = vmatprep.subr.mxu0 0.0
        %9805 = vmatpush2.msra.mxu0 0.0
        %9806 = vmatprep.subr.mxu0 0.0
        %9807 = vmatpush2.msra.mxu0 0.0
        %9808 = vmatprep.subr.mxu0 0.0
        %9809 = vmatpush2.msra.mxu0 0.0
        %9810 = vmatprep.subr.mxu0 0.0
        %9811 = vmatpush2.msra.mxu0 0.0
        %9812 = vmatprep.subr.mxu0 0.0
        %9813 = vmatpush2.msra.mxu0 0.0
        %9814 = vmatprep.mubr.f32.mxu0 0.0
        %9815 = vmatmul.mubr.f32.gmra.mxu0 %v9718
        %v9816 = vpop.f32.mrf.mxu0
        %v9817 = vadd.f32 0.0, %v9816
        %v9818 = vpop.f32.mrf.mxu0
        %9819 = vmatprep.mubr.f32.mxu0 0.0
        %9820 = vmatmul.mubr.f32.gmra.mxu0 %v9720
        %v9821 = vpop.f32.mrf.mxu0
        %v9822 = vadd.f32 0.0, %v9821
        %v9823 = vpop.f32.mrf.mxu0
        %9824 = vmatprep.mubr.f32.mxu0 0.0
        %9825 = vmatmul.mubr.f32.gmra.mxu0 %v9722
        %v9826 = vpop.f32.mrf.mxu0
        %v9827 = vadd.f32 0.0, %v9826
        %v9828 = vpop.f32.mrf.mxu0
        %9829 = vmatprep.mubr.f32.mxu0 0.0
        %9830 = vmatmul.mubr.f32.gmra.mxu0 %v9724
        %v9831 = vpop.f32.mrf.mxu0
        %v9832 = vadd.f32 0.0, %v9831
        %v9833 = vpop.f32.mrf.mxu0
        %9834 = vmatprep.mubr.f32.mxu0 0.0
        %9835 = vmatmul.mubr.f32.gmra.mxu0 %v9726
        %v9836 = vpop.f32.mrf.mxu0
        %v9837 = vadd.f32 0.0, %v9836
        %v9838 = vpop.f32.mrf.mxu0
        %9839 = vmatprep.mubr.f32.mxu0 0.0
        %9840 = vmatmul.mubr.f32.gmra.mxu0 %v9728
        %v9841 = vpop.f32.mrf.mxu0
        %v9842 = vadd.f32 0.0, %v9841
        %v9843 = vpop.f32.mrf.mxu0
        %9844 = vmatprep.mubr.f32.mxu0 0.0
        %9845 = vmatmul.mubr.f32.gmra.mxu0 %v9730
        %v9846 = vpop.f32.mrf.mxu0
        %v9847 = vadd.f32 0.0, %v9846
        %v9848 = vpop.f32.mrf.mxu0
        %9849 = vmatprep.mubr.f32.mxu0 0.0
        %9850 = vmatmul.mubr.f32.gmra.mxu0 %v9732
        %v9851 = vpop.f32.mrf.mxu0
        %v9852 = vadd.f32 0.0, %v9851
        %v9853 = vpop.f32.mrf.mxu0
        %9854 = vmatprep.mubr.f32.mxu0 0.0
        %9855 = vmatmul.mubr.f32.gmra.mxu0 %v9734
        %v9856 = vpop.f32.mrf.mxu0
        %v9857 = vadd.f32 0.0, %v9856
        %v9858 = vpop.f32.mrf.mxu0
        %9859 = vmatprep.mubr.f32.mxu0 0.0
        %9860 = vmatmul.mubr.f32.gmra.mxu0 %v9736
        %v9861 = vpop.f32.mrf.mxu0
        %v9862 = vadd.f32 0.0, %v9861
        %v9863 = vpop.f32.mrf.mxu0
        %9864 = vmatprep.mubr.f32.mxu0 0.0
        %9865 = vmatmul.mubr.f32.gmra.mxu0 %v9738
        %v9866 = vpop.f32.mrf.mxu0
        %v9867 = vadd.f32 0.0, %v9866
        %v9868 = vpop.f32.mrf.mxu0
        %9869 = vmatprep.mubr.f32.mxu0 0.0
        %9870 = vmatmul.mubr.f32.gmra.mxu0 %v9740
        %v9871 = vpop.f32.mrf.mxu0
        %v9872 = vadd.f32 0.0, %v9871
        %v9873 = vpop.f32.mrf.mxu0
        %9874 = vmatprep.mubr.f32.mxu0 0.0
        %9875 = vmatmul.mubr.f32.gmra.mxu0 %v9742
        %v9876 = vpop.f32.mrf.mxu0
        %v9877 = vadd.f32 0.0, %v9876
        %v9878 = vpop.f32.mrf.mxu0
        %9879 = vmatprep.mubr.f32.mxu0 0.0
        %9880 = vmatmul.mubr.f32.gmra.mxu0 %v9744
        %v9881 = vpop.f32.mrf.mxu0
        %v9882 = vadd.f32 0.0, %v9881
        %v9883 = vpop.f32.mrf.mxu0
        %9884 = vmatprep.mubr.f32.mxu0 0.0
        %9885 = vmatmul.mubr.f32.gmra.mxu0 %v9746
        %v9886 = vpop.f32.mrf.mxu0
        %v9887 = vadd.f32 0.0, %v9886
        %v9888 = vpop.f32.mrf.mxu0
        %9889 = vmatprep.mubr.f32.mxu0 0.0
        %9890 = vmatmul.mubr.f32.gmra.mxu0 %v9748
        %v9891 = vpop.f32.mrf.mxu0
        %v9892 = vadd.f32 0.0, %v9891
        %v9893 = vpop.f32.mrf.mxu0
        %9894 = vdwg.mxu0
        %v9895 = vadd.f32 %v4730, %v9817
        %v9896 = vadd.f32 %v4735, %v9822
        %v9897 = vadd.f32 %v4740, %v9827
        %v9898 = vadd.f32 %v4745, %v9832
        %v9899 = vadd.f32 %v4750, %v9837
        %v9900 = vadd.f32 %v4755, %v9842
        %v9901 = vadd.f32 %v4760, %v9847
        %v9902 = vadd.f32 %v4765, %v9852
        %v9903 = vadd.f32 %v4770, %v9857
        %v9904 = vadd.f32 %v4775, %v9862
        %v9905 = vadd.f32 %v4780, %v9867
        %v9906 = vadd.f32 %v4785, %v9872
        %v9907 = vadd.f32 %v4790, %v9877
        %v9908 = vadd.f32 %v4795, %v9882
        %v9909 = vadd.f32 %v4800, %v9887
        %v9910 = vadd.f32 %v4805, %v9892
        %v9911 = vxor.u32 %v9895, 2147483648
        %v9912 = vxor.u32 %v9896, 2147483648
        %v9913 = vxor.u32 %v9897, 2147483648
        %v9914 = vxor.u32 %v9898, 2147483648
        %v9915 = vxor.u32 %v9899, 2147483648
        %v9916 = vxor.u32 %v9900, 2147483648
        %v9917 = vxor.u32 %v9901, 2147483648
        %v9918 = vxor.u32 %v9902, 2147483648
        %v9919 = vxor.u32 %v9903, 2147483648
        %v9920 = vxor.u32 %v9904, 2147483648
        %v9921 = vxor.u32 %v9905, 2147483648
        %v9922 = vxor.u32 %v9906, 2147483648
        %v9923 = vxor.u32 %v9907, 2147483648
        %v9924 = vxor.u32 %v9908, 2147483648
        %v9925 = vxor.u32 %v9909, 2147483648
        %v9926 = vxor.u32 %v9910, 2147483648
        %v9927 = vmul.f32 %v9911, 1.442695
        %v9928 = vpow.pop %v9927
        %v9929 = vmul.f32 %v9912, 1.442695
        %v9930 = vpow.pop %v9929
        %v9931 = vmul.f32 %v9913, 1.442695
        %v9932 = vpow.pop %v9931
        %v9933 = vmul.f32 %v9914, 1.442695
        %v9934 = vpow.pop %v9933
        %v9935 = vmul.f32 %v9915, 1.442695
        %v9936 = vpow.pop %v9935
        %v9937 = vmul.f32 %v9916, 1.442695
        %v9938 = vpow.pop %v9937
        %v9939 = vmul.f32 %v9917, 1.442695
        %v9940 = vpow.pop %v9939
        %v9941 = vmul.f32 %v9918, 1.442695
        %v9942 = vpow.pop %v9941
        %v9943 = vmul.f32 %v9919, 1.442695
        %v9944 = vpow.pop %v9943
        %v9945 = vmul.f32 %v9920, 1.442695
        %v9946 = vpow.pop %v9945
        %v9947 = vmul.f32 %v9921, 1.442695
        %v9948 = vpow.pop %v9947
        %v9949 = vmul.f32 %v9922, 1.442695
        %v9950 = vpow.pop %v9949
        %v9951 = vmul.f32 %v9923, 1.442695
        %v9952 = vpow.pop %v9951
        %v9953 = vmul.f32 %v9924, 1.442695
        %v9954 = vpow.pop %v9953
        %v9955 = vmul.f32 %v9925, 1.442695
        %v9956 = vpow.pop %v9955
        %v9957 = vmul.f32 %v9926, 1.442695
        %v9958 = vpow.pop %v9957
        %v9959 = vadd.f32 %v9928, 1.0
        %v9960 = vadd.f32 %v9930, 1.0
        %v9961 = vadd.f32 %v9932, 1.0
        %v9962 = vadd.f32 %v9934, 1.0
        %v9963 = vadd.f32 %v9936, 1.0
        %v9964 = vadd.f32 %v9938, 1.0
        %v9965 = vadd.f32 %v9940, 1.0
        %v9966 = vadd.f32 %v9942, 1.0
        %v9967 = vadd.f32 %v9944, 1.0
        %v9968 = vadd.f32 %v9946, 1.0
        %v9969 = vadd.f32 %v9948, 1.0
        %v9970 = vadd.f32 %v9950, 1.0
        %v9971 = vadd.f32 %v9952, 1.0
        %v9972 = vadd.f32 %v9954, 1.0
        %v9973 = vadd.f32 %v9956, 1.0
        %v9974 = vadd.f32 %v9958, 1.0
        %v9975 = vrcp.pop %v9959
        %v9976 = vmul.f32 1.0, %v9975
        %v9977 = vrcp.pop %v9960
        %v9978 = vmul.f32 1.0, %v9977
        %v9979 = vrcp.pop %v9961
        %v9980 = vmul.f32 1.0, %v9979
        %v9981 = vrcp.pop %v9962
        %v9982 = vmul.f32 1.0, %v9981
        %v9983 = vrcp.pop %v9963
        %v9984 = vmul.f32 1.0, %v9983
        %v9985 = vrcp.pop %v9964
        %v9986 = vmul.f32 1.0, %v9985
        %v9987 = vrcp.pop %v9965
        %v9988 = vmul.f32 1.0, %v9987
        %v9989 = vrcp.pop %v9966
        %v9990 = vmul.f32 1.0, %v9989
        %v9991 = vrcp.pop %v9967
        %v9992 = vmul.f32 1.0, %v9991
        %v9993 = vrcp.pop %v9968
        %v9994 = vmul.f32 1.0, %v9993
        %v9995 = vrcp.pop %v9969
        %v9996 = vmul.f32 1.0, %v9995
        %v9997 = vrcp.pop %v9970
        %v9998 = vmul.f32 1.0, %v9997
        %v9999 = vrcp.pop %v9971
        %v10000 = vmul.f32 1.0, %v9999
        %v10001 = vrcp.pop %v9972
        %v10002 = vmul.f32 1.0, %v10001
        %v10003 = vrcp.pop %v9973
        %v10004 = vmul.f32 1.0, %v10003
        %v10005 = vrcp.pop %v9974
        %v10006 = vmul.f32 1.0, %v10005
        %v10007 = vtanh.pop %v9895
        %v10008 = vtanh.pop %v9896
        %v10009 = vtanh.pop %v9897
        %v10010 = vtanh.pop %v9898
        %v10011 = vtanh.pop %v9899
        %v10012 = vtanh.pop %v9900
        %v10013 = vtanh.pop %v9901
        %v10014 = vtanh.pop %v9902
        %v10015 = vtanh.pop %v9903
        %v10016 = vtanh.pop %v9904
        %v10017 = vtanh.pop %v9905
        %v10018 = vtanh.pop %v9906
        %v10019 = vtanh.pop %v9907
        %v10020 = vtanh.pop %v9908
        %v10021 = vtanh.pop %v9909
        %v10022 = vtanh.pop %v9910
        %v10023 = vmul.f32 %v9976, %v9654
        %v10024 = vmul.f32 %v9978, %v9655
        %v10025 = vmul.f32 %v9980, %v9656
        %v10026 = vmul.f32 %v9982, %v9657
        %v10027 = vmul.f32 %v9984, %v9658
        %v10028 = vmul.f32 %v9986, %v9659
        %v10029 = vmul.f32 %v9988, %v9660
        %v10030 = vmul.f32 %v9990, %v9661
        %v10031 = vmul.f32 %v9992, %v9662
        %v10032 = vmul.f32 %v9994, %v9663
        %v10033 = vmul.f32 %v9996, %v9664
        %v10034 = vmul.f32 %v9998, %v9665
        %v10035 = vmul.f32 %v10000, %v9666
        %v10036 = vmul.f32 %v10002, %v9667
        %v10037 = vmul.f32 %v10004, %v9668
        %v10038 = vmul.f32 %v10006, %v9669
        %10055 = vrot.lane.b32.xlu0 %v10007, 64
        %v10056 = vpop.permute.xlu0 %10055
        %10057 = vrot.lane.b32.xlu0 %v10008, 64
        %v10058 = vpop.permute.xlu0 %10057
        %10059 = vrot.lane.b32.xlu0 %v10009, 64
        %v10060 = vpop.permute.xlu0 %10059
        %10061 = vrot.lane.b32.xlu0 %v10010, 64
        %v10062 = vpop.permute.xlu0 %10061
        %10063 = vrot.lane.b32.xlu0 %v10011, 64
        %v10064 = vpop.permute.xlu0 %10063
        %10065 = vrot.lane.b32.xlu0 %v10012, 64
        %v10066 = vpop.permute.xlu0 %10065
        %10067 = vrot.lane.b32.xlu0 %v10013, 64
        %v10068 = vpop.permute.xlu0 %10067
        %10069 = vrot.lane.b32.xlu0 %v10014, 64
        %v10070 = vpop.permute.xlu0 %10069
        %10071 = vrot.lane.b32.xlu0 %v10015, 64
        %v10072 = vpop.permute.xlu0 %10071
        %10073 = vrot.lane.b32.xlu0 %v10016, 64
        %v10074 = vpop.permute.xlu0 %10073
        %10075 = vrot.lane.b32.xlu0 %v10017, 64
        %v10076 = vpop.permute.xlu0 %10075
        %10077 = vrot.lane.b32.xlu0 %v10018, 64
        %v10078 = vpop.permute.xlu0 %10077
        %10079 = vrot.lane.b32.xlu0 %v10019, 64
        %v10080 = vpop.permute.xlu0 %10079
        %10081 = vrot.lane.b32.xlu0 %v10020, 64
        %v10082 = vpop.permute.xlu0 %10081
        %10083 = vrot.lane.b32.xlu0 %v10021, 64
        %v10084 = vpop.permute.xlu0 %10083
        %10085 = vrot.lane.b32.xlu0 %v10022, 64
        %v10086 = vpop.permute.xlu0 %10085
        %v10103 = vmul.f32 %v9976, %v10056
        %v10104 = vmul.f32 %v9978, %v10058
        %v10105 = vmul.f32 %v9980, %v10060
        %v10106 = vmul.f32 %v9982, %v10062
        %v10107 = vmul.f32 %v9984, %v10064
        %v10108 = vmul.f32 %v9986, %v10066
        %v10109 = vmul.f32 %v9988, %v10068
        %v10110 = vmul.f32 %v9990, %v10070
        %v10111 = vmul.f32 %v9992, %v10072
        %v10112 = vmul.f32 %v9994, %v10074
        %v10113 = vmul.f32 %v9996, %v10076
        %v10114 = vmul.f32 %v9998, %v10078
        %v10115 = vmul.f32 %v10000, %v10080
        %v10116 = vmul.f32 %v10002, %v10082
        %v10117 = vmul.f32 %v10004, %v10084
        %v10118 = vmul.f32 %v10006, %v10086
        %10135 = vrot.lane.b32.xlu0 %v10103, 32
        %v10136 = vpop.permute.xlu0 %10135
        %10137 = vrot.lane.b32.xlu0 %v10104, 32
        %v10138 = vpop.permute.xlu0 %10137
        %10139 = vrot.lane.b32.xlu0 %v10105, 32
        %v10140 = vpop.permute.xlu0 %10139
        %10141 = vrot.lane.b32.xlu0 %v10106, 32
        %v10142 = vpop.permute.xlu0 %10141
        %10143 = vrot.lane.b32.xlu0 %v10107, 32
        %v10144 = vpop.permute.xlu0 %10143
        %10145 = vrot.lane.b32.xlu0 %v10108, 32
        %v10146 = vpop.permute.xlu0 %10145
        %10147 = vrot.lane.b32.xlu0 %v10109, 32
        %v10148 = vpop.permute.xlu0 %10147
        %10149 = vrot.lane.b32.xlu0 %v10110, 32
        %v10150 = vpop.permute.xlu0 %10149
        %10151 = vrot.lane.b32.xlu0 %v10111, 32
        %v10152 = vpop.permute.xlu0 %10151
        %10153 = vrot.lane.b32.xlu0 %v10112, 32
        %v10154 = vpop.permute.xlu0 %10153
        %10155 = vrot.lane.b32.xlu0 %v10113, 32
        %v10156 = vpop.permute.xlu0 %10155
        %10157 = vrot.lane.b32.xlu0 %v10114, 32
        %v10158 = vpop.permute.xlu0 %10157
        %10159 = vrot.lane.b32.xlu0 %v10115, 32
        %v10160 = vpop.permute.xlu0 %10159
        %10161 = vrot.lane.b32.xlu0 %v10116, 32
        %v10162 = vpop.permute.xlu0 %10161
        %10163 = vrot.lane.b32.xlu0 %v10117, 32
        %v10164 = vpop.permute.xlu0 %10163
        %10165 = vrot.lane.b32.xlu0 %v10118, 32
        %v10166 = vpop.permute.xlu0 %10165
        %v10183 = vadd.f32 %v10023, %v10136
        %v10184 = vadd.f32 %v10024, %v10138
        %v10185 = vadd.f32 %v10025, %v10140
        %v10186 = vadd.f32 %v10026, %v10142
        %v10187 = vadd.f32 %v10027, %v10144
        %v10188 = vadd.f32 %v10028, %v10146
        %v10189 = vadd.f32 %v10029, %v10148
        %v10190 = vadd.f32 %v10030, %v10150
        %v10191 = vadd.f32 %v10031, %v10152
        %v10192 = vadd.f32 %v10032, %v10154
        %v10193 = vadd.f32 %v10033, %v10156
        %v10194 = vadd.f32 %v10034, %v10158
        %v10195 = vadd.f32 %v10035, %v10160
        %v10196 = vadd.f32 %v10036, %v10162
        %v10197 = vadd.f32 %v10037, %v10164
        %v10198 = vadd.f32 %v10038, %v10166
        %v10199 = vtanh.pop %v10183
        %v10200 = vtanh.pop %v10184
        %v10201 = vtanh.pop %v10185
        %v10202 = vtanh.pop %v10186
        %v10203 = vtanh.pop %v10187
        %v10204 = vtanh.pop %v10188
        %v10205 = vtanh.pop %v10189
        %v10206 = vtanh.pop %v10190
        %v10207 = vtanh.pop %v10191
        %v10208 = vtanh.pop %v10192
        %v10209 = vtanh.pop %v10193
        %v10210 = vtanh.pop %v10194
        %v10211 = vtanh.pop %v10195
        %v10212 = vtanh.pop %v10196
        %v10213 = vtanh.pop %v10197
        %v10214 = vtanh.pop %v10198
        %10231 = vrot.lane.b32.xlu0 %v10199, 64
        %v10232 = vpop.permute.xlu0 %10231
        %10233 = vrot.lane.b32.xlu0 %v10200, 64
        %v10234 = vpop.permute.xlu0 %10233
        %10235 = vrot.lane.b32.xlu0 %v10201, 64
        %v10236 = vpop.permute.xlu0 %10235
        %10237 = vrot.lane.b32.xlu0 %v10202, 64
        %v10238 = vpop.permute.xlu0 %10237
        %10239 = vrot.lane.b32.xlu0 %v10203, 64
        %v10240 = vpop.permute.xlu0 %10239
        %10241 = vrot.lane.b32.xlu0 %v10204, 64
        %v10242 = vpop.permute.xlu0 %10241
        %10243 = vrot.lane.b32.xlu0 %v10205, 64
        %v10244 = vpop.permute.xlu0 %10243
        %10245 = vrot.lane.b32.xlu0 %v10206, 64
        %v10246 = vpop.permute.xlu0 %10245
        %10247 = vrot.lane.b32.xlu0 %v10207, 64
        %v10248 = vpop.permute.xlu0 %10247
        %10249 = vrot.lane.b32.xlu0 %v10208, 64
        %v10250 = vpop.permute.xlu0 %10249
        %10251 = vrot.lane.b32.xlu0 %v10209, 64
        %v10252 = vpop.permute.xlu0 %10251
        %10253 = vrot.lane.b32.xlu0 %v10210, 64
        %v10254 = vpop.permute.xlu0 %10253
        %10255 = vrot.lane.b32.xlu0 %v10211, 64
        %v10256 = vpop.permute.xlu0 %10255
        %10257 = vrot.lane.b32.xlu0 %v10212, 64
        %v10258 = vpop.permute.xlu0 %10257
        %10259 = vrot.lane.b32.xlu0 %v10213, 64
        %v10260 = vpop.permute.xlu0 %10259
        %10261 = vrot.lane.b32.xlu0 %v10214, 64
        %v10262 = vpop.permute.xlu0 %10261
        %v10279 = vmul.f32 %v9976, %v10232
        %v10280 = vmul.f32 %v9978, %v10234
        %v10281 = vmul.f32 %v9980, %v10236
        %v10282 = vmul.f32 %v9982, %v10238
        %v10283 = vmul.f32 %v9984, %v10240
        %v10284 = vmul.f32 %v9986, %v10242
        %v10285 = vmul.f32 %v9988, %v10244
        %v10286 = vmul.f32 %v9990, %v10246
        %v10287 = vmul.f32 %v9992, %v10248
        %v10288 = vmul.f32 %v9994, %v10250
        %v10289 = vmul.f32 %v9996, %v10252
        %v10290 = vmul.f32 %v9998, %v10254
        %v10291 = vmul.f32 %v10000, %v10256
        %v10292 = vmul.f32 %v10002, %v10258
        %v10293 = vmul.f32 %v10004, %v10260
        %v10294 = vmul.f32 %v10006, %v10262
        %vm10295 = vcmp.gt.s32.totalorder %v2520, 7
        %vm10296 = vcmp.gt.s32.totalorder %v2533, 7
        %vm10297 = vcmp.gt.s32.totalorder %v2546, 7
        %vm10298 = vcmp.gt.s32.totalorder %v2559, 7
        %vm10299 = vcmp.gt.s32.totalorder %v2572, 7
        %vm10300 = vcmp.gt.s32.totalorder %v2585, 7
        %vm10301 = vcmp.gt.s32.totalorder %v2598, 7
        %vm10302 = vcmp.gt.s32.totalorder %v2611, 7
        %vm10303 = vcmp.gt.s32.totalorder %v2624, 7
        %vm10304 = vcmp.gt.s32.totalorder %v2637, 7
        %vm10305 = vcmp.gt.s32.totalorder %v2650, 7
        %vm10306 = vcmp.gt.s32.totalorder %v2663, 7
        %vm10307 = vcmp.gt.s32.totalorder %v2676, 7
        %vm10308 = vcmp.gt.s32.totalorder %v2689, 7
        %vm10309 = vcmp.gt.s32.totalorder %v2702, 7
        %vm10310 = vcmp.gt.s32.totalorder %v2715, 7
        %v10311 = vsel %vm10295, 1, 0
        %v10312 = vsel %vm10296, 1, 0
        %v10313 = vsel %vm10297, 1, 0
        %v10314 = vsel %vm10298, 1, 0
        %v10315 = vsel %vm10299, 1, 0
        %v10316 = vsel %vm10300, 1, 0
        %v10317 = vsel %vm10301, 1, 0
        %v10318 = vsel %vm10302, 1, 0
        %v10319 = vsel %vm10303, 1, 0
        %v10320 = vsel %vm10304, 1, 0
        %v10321 = vsel %vm10305, 1, 0
        %v10322 = vsel %vm10306, 1, 0
        %v10323 = vsel %vm10307, 1, 0
        %v10324 = vsel %vm10308, 1, 0
        %v10325 = vsel %vm10309, 1, 0
        %v10326 = vsel %vm10310, 1, 0
        %vm10327 = vcmp.eq.s32.totalorder %v10311, 1
        %vm10328 = vcmp.eq.s32.totalorder %v10312, 1
        %vm10329 = vcmp.eq.s32.totalorder %v10313, 1
        %vm10330 = vcmp.eq.s32.totalorder %v10314, 1
        %vm10331 = vcmp.eq.s32.totalorder %v10315, 1
        %vm10332 = vcmp.eq.s32.totalorder %v10316, 1
        %vm10333 = vcmp.eq.s32.totalorder %v10317, 1
        %vm10334 = vcmp.eq.s32.totalorder %v10318, 1
        %vm10335 = vcmp.eq.s32.totalorder %v10319, 1
        %vm10336 = vcmp.eq.s32.totalorder %v10320, 1
        %vm10337 = vcmp.eq.s32.totalorder %v10321, 1
        %vm10338 = vcmp.eq.s32.totalorder %v10322, 1
        %vm10339 = vcmp.eq.s32.totalorder %v10323, 1
        %vm10340 = vcmp.eq.s32.totalorder %v10324, 1
        %vm10341 = vcmp.eq.s32.totalorder %v10325, 1
        %vm10342 = vcmp.eq.s32.totalorder %v10326, 1
        %v10343 = vsel %vm10327, %v10279, %v9638
        %v10344 = vsel %vm10328, %v10280, %v9639
        %v10345 = vsel %vm10329, %v10281, %v9640
        %v10346 = vsel %vm10330, %v10282, %v9641
        %v10347 = vsel %vm10331, %v10283, %v9642
        %v10348 = vsel %vm10332, %v10284, %v9643
        %v10349 = vsel %vm10333, %v10285, %v9644
        %v10350 = vsel %vm10334, %v10286, %v9645
        %v10351 = vsel %vm10335, %v10287, %v9646
        %v10352 = vsel %vm10336, %v10288, %v9647
        %v10353 = vsel %vm10337, %v10289, %v9648
        %v10354 = vsel %vm10338, %v10290, %v9649
        %v10355 = vsel %vm10339, %v10291, %v9650
        %v10356 = vsel %vm10340, %v10292, %v9651
        %v10357 = vsel %vm10341, %v10293, %v9652
        %v10358 = vsel %vm10342, %v10294, %v9653
        %v10359 = vld [vmem:[%s5] sm:$0xff]
        %v10360 = vld [vmem:[%s5 + $0x8] sm:$0xff]
        %v10361 = vld [vmem:[%s6] sm:$0xff]
        %v10362 = vld [vmem:[%s6 + $0x8] sm:$0xff]
        %v10363 = vld [vmem:[%s6 + $0x10] sm:$0xff]
        %v10364 = vld [vmem:[%s6 + $0x18] sm:$0xff]
        %10381 = vrot.lane.b32.xlu0 %v10343, 32
        %v10382 = vpop.permute.xlu0 %10381
        %10383 = vrot.lane.b32.xlu0 %v10344, 32
        %v10384 = vpop.permute.xlu0 %10383
        %10385 = vrot.lane.b32.xlu0 %v10345, 32
        %v10386 = vpop.permute.xlu0 %10385
        %10387 = vrot.lane.b32.xlu0 %v10346, 32
        %v10388 = vpop.permute.xlu0 %10387
        %10389 = vrot.lane.b32.xlu0 %v10347, 32
        %v10390 = vpop.permute.xlu0 %10389
        %10391 = vrot.lane.b32.xlu0 %v10348, 32
        %v10392 = vpop.permute.xlu0 %10391
        %10393 = vrot.lane.b32.xlu0 %v10349, 32
        %v10394 = vpop.permute.xlu0 %10393
        %10395 = vrot.lane.b32.xlu0 %v10350, 32
        %v10396 = vpop.permute.xlu0 %10395
        %10397 = vrot.lane.b32.xlu0 %v10351, 32
        %v10398 = vpop.permute.xlu0 %10397
        %10399 = vrot.lane.b32.xlu0 %v10352, 32
        %v10400 = vpop.permute.xlu0 %10399
        %10401 = vrot.lane.b32.xlu0 %v10353, 32
        %v10402 = vpop.permute.xlu0 %10401
        %10403 = vrot.lane.b32.xlu0 %v10354, 32
        %v10404 = vpop.permute.xlu0 %10403
        %10405 = vrot.lane.b32.xlu0 %v10355, 32
        %v10406 = vpop.permute.xlu0 %10405
        %10407 = vrot.lane.b32.xlu0 %v10356, 32
        %v10408 = vpop.permute.xlu0 %10407
        %10409 = vrot.lane.b32.xlu0 %v10357, 32
        %v10410 = vpop.permute.xlu0 %10409
        %10411 = vrot.lane.b32.xlu0 %v10358, 32
        %v10412 = vpop.permute.xlu0 %10411
        %v10413 = vsel %vm2153, %v10382, 0
        %v10415 = vsel %vm2153, %v10384, 0
        %v10417 = vsel %vm2153, %v10386, 0
        %v10419 = vsel %vm2153, %v10388, 0
        %v10421 = vsel %vm2153, %v10390, 0
        %v10423 = vsel %vm2153, %v10392, 0
        %v10425 = vsel %vm2153, %v10394, 0
        %v10427 = vsel %vm2153, %v10396, 0
        %v10429 = vsel %vm2153, %v10398, 0
        %v10431 = vsel %vm2153, %v10400, 0
        %v10433 = vsel %vm2153, %v10402, 0
        %v10435 = vsel %vm2153, %v10404, 0
        %v10437 = vsel %vm2153, %v10406, 0
        %v10439 = vsel %vm2153, %v10408, 0
        %v10441 = vsel %vm2153, %v10410, 0
        %v10443 = vsel %vm2153, %v10412, 0
        %10445 = vmatprep.subr.mxu0 0.0
        %10446 = vmatpush1.msra.mxu0 0.0
        %10447 = vmatprep.subr.mxu0 0.0
        %10448 = vmatpush1.msra.mxu0 0.0
        %10449 = vmatprep.subr.mxu0 0.0
        %10450 = vmatpush1.msra.mxu0 0.0
        %10451 = vmatprep.subr.mxu0 0.0
        %10452 = vmatpush1.msra.mxu0 0.0
        %10453 = vmatprep.subr.mxu0 0.0
        %10454 = vmatpush1.msra.mxu0 0.0
        %10455 = vmatprep.subr.mxu0 0.0
        %10456 = vmatpush1.msra.mxu0 0.0
        %10457 = vmatprep.subr.mxu0 0.0
        %10458 = vmatpush1.msra.mxu0 0.0
        %10459 = vmatprep.subr.mxu0 0.0
        %10460 = vmatpush1.msra.mxu0 0.0
        %10461 = vmatprep.subr.mxu0 0.0
        %10462 = vmatpush1.msra.mxu0 0.0
        %10463 = vmatprep.subr.mxu0 0.0
        %10464 = vmatpush1.msra.mxu0 0.0
        %10465 = vmatprep.subr.mxu0 0.0
        %10466 = vmatpush1.msra.mxu0 0.0
        %10467 = vmatprep.subr.mxu0 0.0
        %10468 = vmatpush1.msra.mxu0 0.0
        %10469 = vmatprep.subr.mxu0 0.0
        %10470 = vmatpush1.msra.mxu0 %v10364
        %10471 = vmatprep.subr.mxu0 0.0
        %10472 = vmatpush1.msra.mxu0 %v10363
        %10473 = vmatprep.subr.mxu0 0.0
        %10474 = vmatpush1.msra.mxu0 %v10362
        %10475 = vmatprep.subr.mxu0 0.0
        %10476 = vmatpush1.msra.mxu0 %v10361
        %10477 = vmatprep.subr.mxu0 0.0
        %10478 = vmatpush2.msra.mxu0 0.0
        %10479 = vmatprep.subr.mxu0 0.0
        %10480 = vmatpush2.msra.mxu0 0.0
        %10481 = vmatprep.subr.mxu0 0.0
        %10482 = vmatpush2.msra.mxu0 0.0
        %10483 = vmatprep.subr.mxu0 0.0
        %10484 = vmatpush2.msra.mxu0 0.0
        %10485 = vmatprep.subr.mxu0 0.0
        %10486 = vmatpush2.msra.mxu0 0.0
        %10487 = vmatprep.subr.mxu0 0.0
        %10488 = vmatpush2.msra.mxu0 0.0
        %10489 = vmatprep.subr.mxu0 0.0
        %10490 = vmatpush2.msra.mxu0 0.0
        %10491 = vmatprep.subr.mxu0 0.0
        %10492 = vmatpush2.msra.mxu0 0.0
        %10493 = vmatprep.subr.mxu0 0.0
        %10494 = vmatpush2.msra.mxu0 0.0
        %10495 = vmatprep.subr.mxu0 0.0
        %10496 = vmatpush2.msra.mxu0 0.0
        %10497 = vmatprep.subr.mxu0 0.0
        %10498 = vmatpush2.msra.mxu0 0.0
        %10499 = vmatprep.subr.mxu0 0.0
        %10500 = vmatpush2.msra.mxu0 0.0
        %10501 = vmatprep.subr.mxu0 0.0
        %10502 = vmatpush2.msra.mxu0 0.0
        %10503 = vmatprep.subr.mxu0 0.0
        %10504 = vmatpush2.msra.mxu0 0.0
        %10505 = vmatprep.subr.mxu0 0.0
        %10506 = vmatpush2.msra.mxu0 0.0
        %10507 = vmatprep.subr.mxu0 0.0
        %10508 = vmatpush2.msra.mxu0 0.0
        %10509 = vmatprep.mubr.f32.mxu0 0.0
        %10510 = vmatmul.mubr.f32.gmra.mxu0 %v10413
        %v10511 = vpop.f32.mrf.mxu0
        %v10512 = vadd.f32 0.0, %v10511
        %v10513 = vpop.f32.mrf.mxu0
        %10514 = vmatprep.mubr.f32.mxu0 0.0
        %10515 = vmatmul.mubr.f32.gmra.mxu0 %v10415
        %v10516 = vpop.f32.mrf.mxu0
        %v10517 = vadd.f32 0.0, %v10516
        %v10518 = vpop.f32.mrf.mxu0
        %10519 = vmatprep.mubr.f32.mxu0 0.0
        %10520 = vmatmul.mubr.f32.gmra.mxu0 %v10417
        %v10521 = vpop.f32.mrf.mxu0
        %v10522 = vadd.f32 0.0, %v10521
        %v10523 = vpop.f32.mrf.mxu0
        %10524 = vmatprep.mubr.f32.mxu0 0.0
        %10525 = vmatmul.mubr.f32.gmra.mxu0 %v10419
        %v10526 = vpop.f32.mrf.mxu0
        %v10527 = vadd.f32 0.0, %v10526
        %v10528 = vpop.f32.mrf.mxu0
        %10529 = vmatprep.mubr.f32.mxu0 0.0
        %10530 = vmatmul.mubr.f32.gmra.mxu0 %v10421
        %v10531 = vpop.f32.mrf.mxu0
        %v10532 = vadd.f32 0.0, %v10531
        %v10533 = vpop.f32.mrf.mxu0
        %10534 = vmatprep.mubr.f32.mxu0 0.0
        %10535 = vmatmul.mubr.f32.gmra.mxu0 %v10423
        %v10536 = vpop.f32.mrf.mxu0
        %v10537 = vadd.f32 0.0, %v10536
        %v10538 = vpop.f32.mrf.mxu0
        %10539 = vmatprep.mubr.f32.mxu0 0.0
        %10540 = vmatmul.mubr.f32.gmra.mxu0 %v10425
        %v10541 = vpop.f32.mrf.mxu0
        %v10542 = vadd.f32 0.0, %v10541
        %v10543 = vpop.f32.mrf.mxu0
        %10544 = vmatprep.mubr.f32.mxu0 0.0
        %10545 = vmatmul.mubr.f32.gmra.mxu0 %v10427
        %v10546 = vpop.f32.mrf.mxu0
        %v10547 = vadd.f32 0.0, %v10546
        %v10548 = vpop.f32.mrf.mxu0
        %10549 = vmatprep.mubr.f32.mxu0 0.0
        %10550 = vmatmul.mubr.f32.gmra.mxu0 %v10429
        %v10551 = vpop.f32.mrf.mxu0
        %v10552 = vadd.f32 0.0, %v10551
        %v10553 = vpop.f32.mrf.mxu0
        %10554 = vmatprep.mubr.f32.mxu0 0.0
        %10555 = vmatmul.mubr.f32.gmra.mxu0 %v10431
        %v10556 = vpop.f32.mrf.mxu0
        %v10557 = vadd.f32 0.0, %v10556
        %v10558 = vpop.f32.mrf.mxu0
        %10559 = vmatprep.mubr.f32.mxu0 0.0
        %10560 = vmatmul.mubr.f32.gmra.mxu0 %v10433
        %v10561 = vpop.f32.mrf.mxu0
        %v10562 = vadd.f32 0.0, %v10561
        %v10563 = vpop.f32.mrf.mxu0
        %10564 = vmatprep.mubr.f32.mxu0 0.0
        %10565 = vmatmul.mubr.f32.gmra.mxu0 %v10435
        %v10566 = vpop.f32.mrf.mxu0
        %v10567 = vadd.f32 0.0, %v10566
        %v10568 = vpop.f32.mrf.mxu0
        %10569 = vmatprep.mubr.f32.mxu0 0.0
        %10570 = vmatmul.mubr.f32.gmra.mxu0 %v10437
        %v10571 = vpop.f32.mrf.mxu0
        %v10572 = vadd.f32 0.0, %v10571
        %v10573 = vpop.f32.mrf.mxu0
        %10574 = vmatprep.mubr.f32.mxu0 0.0
        %10575 = vmatmul.mubr.f32.gmra.mxu0 %v10439
        %v10576 = vpop.f32.mrf.mxu0
        %v10577 = vadd.f32 0.0, %v10576
        %v10578 = vpop.f32.mrf.mxu0
        %10579 = vmatprep.mubr.f32.mxu0 0.0
        %10580 = vmatmul.mubr.f32.gmra.mxu0 %v10441
        %v10581 = vpop.f32.mrf.mxu0
        %v10582 = vadd.f32 0.0, %v10581
        %v10583 = vpop.f32.mrf.mxu0
        %10584 = vmatprep.mubr.f32.mxu0 0.0
        %10585 = vmatmul.mubr.f32.gmra.mxu0 %v10443
        %v10586 = vpop.f32.mrf.mxu0
        %v10587 = vadd.f32 0.0, %v10586
        %v10588 = vpop.f32.mrf.mxu0
        %10589 = vdwg.mxu0
        %vm10590 = vcmask 130048
        %v10592 = vsel %vm10590, %v2317, 0
        %v10595 = vsel %vm10590, %v2322, 0
        %v10598 = vsel %vm10590, %v2327, 0
        %v10601 = vsel %vm10590, %v2332, 0
        %v10604 = vsel %vm10590, %v2337, 0
        %v10607 = vsel %vm10590, %v2342, 0
        %v10610 = vsel %vm10590, %v2347, 0
        %v10613 = vsel %vm10590, %v2352, 0
        %v10616 = vsel %vm10590, %v2357, 0
        %v10619 = vsel %vm10590, %v2362, 0
        %v10622 = vsel %vm10590, %v2367, 0
        %v10625 = vsel %vm10590, %v2372, 0
        %v10628 = vsel %vm10590, %v2377, 0
        %v10631 = vsel %vm10590, %v2382, 0
        %v10634 = vsel %vm10590, %v2387, 0
        %v10637 = vsel %vm10590, %v2392, 0
        %10639 = vmatprep.subr.mxu0 0.0
        %10640 = vmatpush1.msra.mxu0 0.0
        %10641 = vmatprep.subr.mxu0 0.0
        %10642 = vmatpush1.msra.mxu0 0.0
        %10643 = vmatprep.subr.mxu0 0.0
        %10644 = vmatpush1.msra.mxu0 0.0
        %10645 = vmatprep.subr.mxu0 0.0
        %10646 = vmatpush1.msra.mxu0 0.0
        %10647 = vmatprep.subr.mxu0 0.0
        %10648 = vmatpush1.msra.mxu0 0.0
        %10649 = vmatprep.subr.mxu0 0.0
        %10650 = vmatpush1.msra.mxu0 0.0
        %10651 = vmatprep.subr.mxu0 0.0
        %10652 = vmatpush1.msra.mxu0 0.0
        %10653 = vmatprep.subr.mxu0 0.0
        %10654 = vmatpush1.msra.mxu0 0.0
        %10655 = vmatprep.subr.mxu0 0.0
        %10656 = vmatpush1.msra.mxu0 0.0
        %10657 = vmatprep.subr.mxu0 0.0
        %10658 = vmatpush1.msra.mxu0 0.0
        %10659 = vmatprep.subr.mxu0 0.0
        %10660 = vmatpush1.msra.mxu0 0.0
        %10661 = vmatprep.subr.mxu0 0.0
        %10662 = vmatpush1.msra.mxu0 0.0
        %10663 = vmatprep.subr.mxu0 0.0
        %10664 = vmatpush1.msra.mxu0 0.0
        %10665 = vmatprep.subr.mxu0 0.0
        %10666 = vmatpush1.msra.mxu0 0.0
        %10667 = vmatprep.subr.mxu0 0.0
        %10668 = vmatpush1.msra.mxu0 %v10360
        %10669 = vmatprep.subr.mxu0 0.0
        %10670 = vmatpush1.msra.mxu0 %v10359
        %10671 = vmatprep.subr.mxu0 0.0
        %10672 = vmatpush2.msra.mxu0 0.0
        %10673 = vmatprep.subr.mxu0 0.0
        %10674 = vmatpush2.msra.mxu0 0.0
        %10675 = vmatprep.subr.mxu0 0.0
        %10676 = vmatpush2.msra.mxu0 0.0
        %10677 = vmatprep.subr.mxu0 0.0
        %10678 = vmatpush2.msra.mxu0 0.0
        %10679 = vmatprep.subr.mxu0 0.0
        %10680 = vmatpush2.msra.mxu0 0.0
        %10681 = vmatprep.subr.mxu0 0.0
        %10682 = vmatpush2.msra.mxu0 0.0
        %10683 = vmatprep.subr.mxu0 0.0
        %10684 = vmatpush2.msra.mxu0 0.0
        %10685 = vmatprep.subr.mxu0 0.0
        %10686 = vmatpush2.msra.mxu0 0.0
        %10687 = vmatprep.subr.mxu0 0.0
        %10688 = vmatpush2.msra.mxu0 0.0
        %10689 = vmatprep.subr.mxu0 0.0
        %10690 = vmatpush2.msra.mxu0 0.0
        %10691 = vmatprep.subr.mxu0 0.0
        %10692 = vmatpush2.msra.mxu0 0.0
        %10693 = vmatprep.subr.mxu0 0.0
        %10694 = vmatpush2.msra.mxu0 0.0
        %10695 = vmatprep.subr.mxu0 0.0
        %10696 = vmatpush2.msra.mxu0 0.0
        %10697 = vmatprep.subr.mxu0 0.0
        %10698 = vmatpush2.msra.mxu0 0.0
        %10699 = vmatprep.subr.mxu0 0.0
        %10700 = vmatpush2.msra.mxu0 0.0
        %10701 = vmatprep.subr.mxu0 0.0
        %10702 = vmatpush2.msra.mxu0 0.0
        %10703 = vmatprep.mubr.f32.mxu0 0.0
        %10704 = vmatmul.mubr.f32.gmra.mxu0 %v10592
        %v10705 = vpop.f32.mrf.mxu0
        %v10706 = vadd.f32 %v10512, %v10705
        %v10707 = vpop.f32.mrf.mxu0
        %10708 = vmatprep.mubr.f32.mxu0 0.0
        %10709 = vmatmul.mubr.f32.gmra.mxu0 %v10595
        %v10710 = vpop.f32.mrf.mxu0
        %v10711 = vadd.f32 %v10517, %v10710
        %v10712 = vpop.f32.mrf.mxu0
        %10713 = vmatprep.mubr.f32.mxu0 0.0
        %10714 = vmatmul.mubr.f32.gmra.mxu0 %v10598
        %v10715 = vpop.f32.mrf.mxu0
        %v10716 = vadd.f32 %v10522, %v10715
        %v10717 = vpop.f32.mrf.mxu0
        %10718 = vmatprep.mubr.f32.mxu0 0.0
        %10719 = vmatmul.mubr.f32.gmra.mxu0 %v10601
        %v10720 = vpop.f32.mrf.mxu0
        %v10721 = vadd.f32 %v10527, %v10720
        %v10722 = vpop.f32.mrf.mxu0
        %10723 = vmatprep.mubr.f32.mxu0 0.0
        %10724 = vmatmul.mubr.f32.gmra.mxu0 %v10604
        %v10725 = vpop.f32.mrf.mxu0
        %v10726 = vadd.f32 %v10532, %v10725
        %v10727 = vpop.f32.mrf.mxu0
        %10728 = vmatprep.mubr.f32.mxu0 0.0
        %10729 = vmatmul.mubr.f32.gmra.mxu0 %v10607
        %v10730 = vpop.f32.mrf.mxu0
        %v10731 = vadd.f32 %v10537, %v10730
        %v10732 = vpop.f32.mrf.mxu0
        %10733 = vmatprep.mubr.f32.mxu0 0.0
        %10734 = vmatmul.mubr.f32.gmra.mxu0 %v10610
        %v10735 = vpop.f32.mrf.mxu0
        %v10736 = vadd.f32 %v10542, %v10735
        %v10737 = vpop.f32.mrf.mxu0
        %10738 = vmatprep.mubr.f32.mxu0 0.0
        %10739 = vmatmul.mubr.f32.gmra.mxu0 %v10613
        %v10740 = vpop.f32.mrf.mxu0
        %v10741 = vadd.f32 %v10547, %v10740
        %v10742 = vpop.f32.mrf.mxu0
        %10743 = vmatprep.mubr.f32.mxu0 0.0
        %10744 = vmatmul.mubr.f32.gmra.mxu0 %v10616
        %v10745 = vpop.f32.mrf.mxu0
        %v10746 = vadd.f32 %v10552, %v10745
        %v10747 = vpop.f32.mrf.mxu0
        %10748 = vmatprep.mubr.f32.mxu0 0.0
        %10749 = vmatmul.mubr.f32.gmra.mxu0 %v10619
        %v10750 = vpop.f32.mrf.mxu0
        %v10751 = vadd.f32 %v10557, %v10750
        %v10752 = vpop.f32.mrf.mxu0
        %10753 = vmatprep.mubr.f32.mxu0 0.0
        %10754 = vmatmul.mubr.f32.gmra.mxu0 %v10622
        %v10755 = vpop.f32.mrf.mxu0
        %v10756 = vadd.f32 %v10562, %v10755
        %v10757 = vpop.f32.mrf.mxu0
        %10758 = vmatprep.mubr.f32.mxu0 0.0
        %10759 = vmatmul.mubr.f32.gmra.mxu0 %v10625
        %v10760 = vpop.f32.mrf.mxu0
        %v10761 = vadd.f32 %v10567, %v10760
        %v10762 = vpop.f32.mrf.mxu0
        %10763 = vmatprep.mubr.f32.mxu0 0.0
        %10764 = vmatmul.mubr.f32.gmra.mxu0 %v10628
        %v10765 = vpop.f32.mrf.mxu0
        %v10766 = vadd.f32 %v10572, %v10765
        %v10767 = vpop.f32.mrf.mxu0
        %10768 = vmatprep.mubr.f32.mxu0 0.0
        %10769 = vmatmul.mubr.f32.gmra.mxu0 %v10631
        %v10770 = vpop.f32.mrf.mxu0
        %v10771 = vadd.f32 %v10577, %v10770
        %v10772 = vpop.f32.mrf.mxu0
        %10773 = vmatprep.mubr.f32.mxu0 0.0
        %10774 = vmatmul.mubr.f32.gmra.mxu0 %v10634
        %v10775 = vpop.f32.mrf.mxu0
        %v10776 = vadd.f32 %v10582, %v10775
        %v10777 = vpop.f32.mrf.mxu0
        %10778 = vmatprep.mubr.f32.mxu0 0.0
        %10779 = vmatmul.mubr.f32.gmra.mxu0 %v10637
        %v10780 = vpop.f32.mrf.mxu0
        %v10781 = vadd.f32 %v10587, %v10780
        %v10782 = vpop.f32.mrf.mxu0
        %10783 = vdwg.mxu0
        %v10784 = vld [vmem:[%s7] sm:$0xff]
        %v10785 = vld [vmem:[%s7 + $0x8] sm:$0xff]
        %v10787 = vsel %vm10590, %v2397, 0
        %v10790 = vsel %vm10590, %v2402, 0
        %v10793 = vsel %vm10590, %v2407, 0
        %v10796 = vsel %vm10590, %v2412, 0
        %v10799 = vsel %vm10590, %v2417, 0
        %v10802 = vsel %vm10590, %v2422, 0
        %v10805 = vsel %vm10590, %v2427, 0
        %v10808 = vsel %vm10590, %v2432, 0
        %v10811 = vsel %vm10590, %v2437, 0
        %v10814 = vsel %vm10590, %v2442, 0
        %v10817 = vsel %vm10590, %v2447, 0
        %v10820 = vsel %vm10590, %v2452, 0
        %v10823 = vsel %vm10590, %v2457, 0
        %v10826 = vsel %vm10590, %v2462, 0
        %v10829 = vsel %vm10590, %v2467, 0
        %v10832 = vsel %vm10590, %v2472, 0
        %10834 = vmatprep.subr.mxu0 0.0
        %10835 = vmatpush1.msra.mxu0 0.0
        %10836 = vmatprep.subr.mxu0 0.0
        %10837 = vmatpush1.msra.mxu0 0.0
        %10838 = vmatprep.subr.mxu0 0.0
        %10839 = vmatpush1.msra.mxu0 0.0
        %10840 = vmatprep.subr.mxu0 0.0
        %10841 = vmatpush1.msra.mxu0 0.0
        %10842 = vmatprep.subr.mxu0 0.0
        %10843 = vmatpush1.msra.mxu0 0.0
        %10844 = vmatprep.subr.mxu0 0.0
        %10845 = vmatpush1.msra.mxu0 0.0
        %10846 = vmatprep.subr.mxu0 0.0
        %10847 = vmatpush1.msra.mxu0 0.0
        %10848 = vmatprep.subr.mxu0 0.0
        %10849 = vmatpush1.msra.mxu0 0.0
        %10850 = vmatprep.subr.mxu0 0.0
        %10851 = vmatpush1.msra.mxu0 0.0
        %10852 = vmatprep.subr.mxu0 0.0
        %10853 = vmatpush1.msra.mxu0 0.0
        %10854 = vmatprep.subr.mxu0 0.0
        %10855 = vmatpush1.msra.mxu0 0.0
        %10856 = vmatprep.subr.mxu0 0.0
        %10857 = vmatpush1.msra.mxu0 0.0
        %10858 = vmatprep.subr.mxu0 0.0
        %10859 = vmatpush1.msra.mxu0 0.0
        %10860 = vmatprep.subr.mxu0 0.0
        %10861 = vmatpush1.msra.mxu0 0.0
        %10862 = vmatprep.subr.mxu0 0.0
        %10863 = vmatpush1.msra.mxu0 %v10785
        %10864 = vmatprep.subr.mxu0 0.0
        %10865 = vmatpush1.msra.mxu0 %v10784
        %10866 = vmatprep.subr.mxu0 0.0
        %10867 = vmatpush2.msra.mxu0 0.0
        %10868 = vmatprep.subr.mxu0 0.0
        %10869 = vmatpush2.msra.mxu0 0.0
        %10870 = vmatprep.subr.mxu0 0.0
        %10871 = vmatpush2.msra.mxu0 0.0
        %10872 = vmatprep.subr.mxu0 0.0
        %10873 = vmatpush2.msra.mxu0 0.0
        %10874 = vmatprep.subr.mxu0 0.0
        %10875 = vmatpush2.msra.mxu0 0.0
        %10876 = vmatprep.subr.mxu0 0.0
        %10877 = vmatpush2.msra.mxu0 0.0
        %10878 = vmatprep.subr.mxu0 0.0
        %10879 = vmatpush2.msra.mxu0 0.0
        %10880 = vmatprep.subr.mxu0 0.0
        %10881 = vmatpush2.msra.mxu0 0.0
        %10882 = vmatprep.subr.mxu0 0.0
        %10883 = vmatpush2.msra.mxu0 0.0
        %10884 = vmatprep.subr.mxu0 0.0
        %10885 = vmatpush2.msra.mxu0 0.0
        %10886 = vmatprep.subr.mxu0 0.0
        %10887 = vmatpush2.msra.mxu0 0.0
        %10888 = vmatprep.subr.mxu0 0.0
        %10889 = vmatpush2.msra.mxu0 0.0
        %10890 = vmatprep.subr.mxu0 0.0
        %10891 = vmatpush2.msra.mxu0 0.0
        %10892 = vmatprep.subr.mxu0 0.0
        %10893 = vmatpush2.msra.mxu0 0.0
        %10894 = vmatprep.subr.mxu0 0.0
        %10895 = vmatpush2.msra.mxu0 0.0
        %10896 = vmatprep.subr.mxu0 0.0
        %10897 = vmatpush2.msra.mxu0 0.0
        %10898 = vmatprep.mubr.f32.mxu0 0.0
        %10899 = vmatmul.mubr.f32.gmra.mxu0 %v10787
        %v10900 = vpop.f32.mrf.mxu0
        %v10901 = vadd.f32 0.0, %v10900
        %v10902 = vpop.f32.mrf.mxu0
        %10903 = vmatprep.mubr.f32.mxu0 0.0
        %10904 = vmatmul.mubr.f32.gmra.mxu0 %v10790
        %v10905 = vpop.f32.mrf.mxu0
        %v10906 = vadd.f32 0.0, %v10905
        %v10907 = vpop.f32.mrf.mxu0
        %10908 = vmatprep.mubr.f32.mxu0 0.0
        %10909 = vmatmul.mubr.f32.gmra.mxu0 %v10793
        %v10910 = vpop.f32.mrf.mxu0
        %v10911 = vadd.f32 0.0, %v10910
        %v10912 = vpop.f32.mrf.mxu0
        %10913 = vmatprep.mubr.f32.mxu0 0.0
        %10914 = vmatmul.mubr.f32.gmra.mxu0 %v10796
        %v10915 = vpop.f32.mrf.mxu0
        %v10916 = vadd.f32 0.0, %v10915
        %v10917 = vpop.f32.mrf.mxu0
        %10918 = vmatprep.mubr.f32.mxu0 0.0
        %10919 = vmatmul.mubr.f32.gmra.mxu0 %v10799
        %v10920 = vpop.f32.mrf.mxu0
        %v10921 = vadd.f32 0.0, %v10920
        %v10922 = vpop.f32.mrf.mxu0
        %10923 = vmatprep.mubr.f32.mxu0 0.0
        %10924 = vmatmul.mubr.f32.gmra.mxu0 %v10802
        %v10925 = vpop.f32.mrf.mxu0
        %v10926 = vadd.f32 0.0, %v10925
        %v10927 = vpop.f32.mrf.mxu0
        %10928 = vmatprep.mubr.f32.mxu0 0.0
        %10929 = vmatmul.mubr.f32.gmra.mxu0 %v10805
        %v10930 = vpop.f32.mrf.mxu0
        %v10931 = vadd.f32 0.0, %v10930
        %v10932 = vpop.f32.mrf.mxu0
        %10933 = vmatprep.mubr.f32.mxu0 0.0
        %10934 = vmatmul.mubr.f32.gmra.mxu0 %v10808
        %v10935 = vpop.f32.mrf.mxu0
        %v10936 = vadd.f32 0.0, %v10935
        %v10937 = vpop.f32.mrf.mxu0
        %10938 = vmatprep.mubr.f32.mxu0 0.0
        %10939 = vmatmul.mubr.f32.gmra.mxu0 %v10811
        %v10940 = vpop.f32.mrf.mxu0
        %v10941 = vadd.f32 0.0, %v10940
        %v10942 = vpop.f32.mrf.mxu0
        %10943 = vmatprep.mubr.f32.mxu0 0.0
        %10944 = vmatmul.mubr.f32.gmra.mxu0 %v10814
        %v10945 = vpop.f32.mrf.mxu0
        %v10946 = vadd.f32 0.0, %v10945
        %v10947 = vpop.f32.mrf.mxu0
        %10948 = vmatprep.mubr.f32.mxu0 0.0
        %10949 = vmatmul.mubr.f32.gmra.mxu0 %v10817
        %v10950 = vpop.f32.mrf.mxu0
        %v10951 = vadd.f32 0.0, %v10950
        %v10952 = vpop.f32.mrf.mxu0
        %10953 = vmatprep.mubr.f32.mxu0 0.0
        %10954 = vmatmul.mubr.f32.gmra.mxu0 %v10820
        %v10955 = vpop.f32.mrf.mxu0
        %v10956 = vadd.f32 0.0, %v10955
        %v10957 = vpop.f32.mrf.mxu0
        %10958 = vmatprep.mubr.f32.mxu0 0.0
        %10959 = vmatmul.mubr.f32.gmra.mxu0 %v10823
        %v10960 = vpop.f32.mrf.mxu0
        %v10961 = vadd.f32 0.0, %v10960
        %v10962 = vpop.f32.mrf.mxu0
        %10963 = vmatprep.mubr.f32.mxu0 0.0
        %10964 = vmatmul.mubr.f32.gmra.mxu0 %v10826
        %v10965 = vpop.f32.mrf.mxu0
        %v10966 = vadd.f32 0.0, %v10965
        %v10967 = vpop.f32.mrf.mxu0
        %10968 = vmatprep.mubr.f32.mxu0 0.0
        %10969 = vmatmul.mubr.f32.gmra.mxu0 %v10829
        %v10970 = vpop.f32.mrf.mxu0
        %v10971 = vadd.f32 0.0, %v10970
        %v10972 = vpop.f32.mrf.mxu0
        %10973 = vmatprep.mubr.f32.mxu0 0.0
        %10974 = vmatmul.mubr.f32.gmra.mxu0 %v10832
        %v10975 = vpop.f32.mrf.mxu0
        %v10976 = vadd.f32 0.0, %v10975
        %v10977 = vpop.f32.mrf.mxu0
        %10978 = vdwg.mxu0
        %v10979 = vadd.f32 %v10706, %v10901
        %v10980 = vadd.f32 %v10711, %v10906
        %v10981 = vadd.f32 %v10716, %v10911
        %v10982 = vadd.f32 %v10721, %v10916
        %v10983 = vadd.f32 %v10726, %v10921
        %v10984 = vadd.f32 %v10731, %v10926
        %v10985 = vadd.f32 %v10736, %v10931
        %v10986 = vadd.f32 %v10741, %v10936
        %v10987 = vadd.f32 %v10746, %v10941
        %v10988 = vadd.f32 %v10751, %v10946
        %v10989 = vadd.f32 %v10756, %v10951
        %v10990 = vadd.f32 %v10761, %v10956
        %v10991 = vadd.f32 %v10766, %v10961
        %v10992 = vadd.f32 %v10771, %v10966
        %v10993 = vadd.f32 %v10776, %v10971
        %v10994 = vadd.f32 %v10781, %v10976
        %10995 = vst [vmem:[%s299] sm:$0xff] %v10979
        %10996 = vst [vmem:[%s299 + $0x8] sm:$0xff] %v10980
        %10997 = vst [vmem:[%s299 + $0x10] sm:$0xff] %v10981
        %10998 = vst [vmem:[%s299 + $0x18] sm:$0xff] %v10982
        %10999 = vst [vmem:[%s299 + $0x20] sm:$0xff] %v10983
        %11000 = vst [vmem:[%s299 + $0x28] sm:$0xff] %v10984
        %11001 = vst [vmem:[%s299 + $0x30] sm:$0xff] %v10985
        %11002 = vst [vmem:[%s299 + $0x38] sm:$0xff] %v10986
        %11003 = vst [vmem:[%s299 + $0x40] sm:$0xff] %v10987
        %11004 = vst [vmem:[%s299 + $0x48] sm:$0xff] %v10988
        %11005 = vst [vmem:[%s299 + $0x50] sm:$0xff] %v10989
        %11006 = vst [vmem:[%s299 + $0x58] sm:$0xff] %v10990
        %11007 = vst [vmem:[%s299 + $0x60] sm:$0xff] %v10991
        %11008 = vst [vmem:[%s299 + $0x68] sm:$0xff] %v10992
        %11009 = vst [vmem:[%s299 + $0x70] sm:$0xff] %v10993
        %11010 = vst [vmem:[%s299 + $0x78] sm:$0xff] %v10994
        %s11011 = sand.u32 %s203, 1
        %s11012 = scalar_lea.sflag [#allocation3], %s11011
        %s11013 = sand.u32 %s203, 1
        %s11014 = smul.addr %s11013, 128
        %s11015 = scalar_lea.vmem [#allocation2], %s11014
        // Predicated region
        $region53: #{tpu_custom_call.1} parent=51 // pred_check
          %p11016 = pneg %p213
        $region54: #{tpu_custom_call.1} parent=51 // pred_check_branch
          %11018 = sbr.rel (%p11016) target = $region56
        $region55: #{tpu_custom_call.1} parent=51 // pred_region
          %s11019 = smul.u32 16, %s22
          %s11021 = ssub.s32 2048, 2048
          %11022 = vsyncadd %s11012, %s11021
          %s11023 = smul.addr %s11019, 128
          %s11024 = scalar_lea.hbm %s8, %s11023
          %s11025 = sshll.u32 %s11015, 4
          %s11026 = int_to_ptr.vmem [resolvable:$true] %s11025
          %11031 = dma.vmem_to_hbm [thread:$0]  %s11026, 2048, %s11024, %s11012, 128, 128, 8
        $region56: #{tpu_custom_call.1} parent=51 // pred_fallthru
          _
      $region52: #{tpu_custom_call.1} parent=5 // pred_fallthru
        _
      %p11032 = scmp.le.s32.totalorder 2, %s17
      // Predicated region
      $region57: #{tpu_custom_call.1} parent=5 // pred_check
        %p11033 = pneg %p11032
      $region58: #{tpu_custom_call.1} parent=5 // pred_check_branch
        %11035 = sbr.rel (%p11033) target = $region60
      $region59: #{tpu_custom_call.1} parent=5 // pred_region
        %s11036 = ssub.s32 %s17, 2
        // Predicated region
        $region61: #{tpu_custom_call.1} parent=59 // pred_check
          %p11037 = pneg %p219
        $region62: #{tpu_custom_call.1} parent=59 // pred_check_branch
          %11039 = sbr.rel (%p11037) target = $region64
        $region63: #{tpu_custom_call.1} parent=59 // pred_region
          %s11040 = sand.u32 %s204, 1
          %s11041 = scalar_lea.sflag [#allocation3], %s11040
          %s11042 = sand.u32 %s204, 1
          %s11043 = smul.addr %s11042, 128
          %s11044 = scalar_lea.vmem [#allocation2], %s11043
          %11045 = dma.done %s11041, 2048
        $region64: #{tpu_custom_call.1} parent=59 // pred_fallthru
          _
      $region60: #{tpu_custom_call.1} parent=5 // pred_fallthru
        _
    $region6: #{tpu_custom_call.1} parent=1 // loop_footer
      %s21 = sadd.s32 1, %s17
    $region7: #{tpu_custom_call.1} parent=1 // loop_footer_branch
      %16 = sbr.rel target = $region3
    $region8: #{tpu_custom_call.1} parent=1 // loop_exit
      _
    %11046 = vsyncpa [#allocation3], 1
    %s11047 = scalar_lea.sflag [#allocation3], 1
    %11048 = vsyncpa %s11047, 1

</llo_original>
